<compile_context>
chip_gen: v5e
topology: v5e:2x2
jax: 0.10.0
libtpu: 0.0.40
codegen_flags: <defaults>
</compile_context>

<pallas_src>
import functools

import jax
import jax.numpy as jnp
from jax.experimental import pallas as pl
from jax.experimental.pallas import tpu as pltpu


# ----------------------------- Pallas kernel --------------------------------

def basic_block_kernel(x_ref, w1_ref, w2_ref, o_ref, y1_ref, *, H, W):
    """Fused BasicBlock: o = relu(conv2'(relu(conv1(x))) + x).

    x_ref : (H+2, W+2, Cp) bf16   spatially 1-padded NHWC input tile
    w1_ref: (9, Cp, Cp)    bf16   conv1 taps, tap = kh*3+kw, layout [ci, co]
    w2_ref: (9, Cp, Cp)    bf16   conv2 taps with gc1 (in-ch) / gc2 (out-ch)
                                  already folded in
    o_ref : (H, W, Cp)     f32    block output
    y1_ref: (H+2, W+2, Cp) bf16   conv1 activation + zero ring (VMEM scratch)
    """
    Cp = x_ref.shape[-1]

    # Zero the y1 buffer up front (gives conv2 its zero padding).  Hoisted
    # before the matmuls so these stores hide under MXU work; re-done every
    # step for safety under megacore partitioning of the parallel grid axis.
    y1_ref[...] = jnp.zeros(y1_ref.shape, y1_ref.dtype)

    # ---- conv1 + ReLU: 9 shifted matmuls, bf16 operands, f32 accumulation ----
    acc1 = jnp.zeros((H * W, Cp), jnp.float32)
    for kh in range(3):
        for kw in range(3):
            a = x_ref[kh:kh + H, kw:kw + W, :].reshape(H * W, Cp)
            acc1 = acc1 + jnp.dot(a, w1_ref[kh * 3 + kw],
                                  preferred_element_type=jnp.float32)

    # Intermediate activation stays in VMEM (bf16); the untouched ring is the
    # zero padding for conv2.
    y1_ref[1:H + 1, 1:W + 1, :] = (
        jnp.maximum(acc1, 0.0).reshape(H, W, Cp).astype(y1_ref.dtype))

    # ---- conv2 (masks folded into weights) + residual + ReLU ----
    acc2 = jnp.zeros((H * W, Cp), jnp.float32)
    for kh in range(3):
        for kw in range(3):
            a = y1_ref[kh:kh + H, kw:kw + W, :].reshape(H * W, Cp)
            acc2 = acc2 + jnp.dot(a, w2_ref[kh * 3 + kw],
                                  preferred_element_type=jnp.float32)

    identity = x_ref[1:1 + H, 1:1 + W, :].reshape(H * W, Cp).astype(jnp.float32)
    out = jnp.maximum(acc2 + identity, 0.0)
    o_ref[...] = out.reshape(H, W, Cp).astype(o_ref.dtype)


# ------------------------------- JAX glue -----------------------------------

def _round_up(x, m):
    return (x + m - 1) // m * m


def _to_tap_matrices(w_oihw):
    """(Cout, Cin, 3, 3) -> (9, Cin, Cout), tap index = kh*3 + kw."""
    cout, cin = w_oihw.shape[0], w_oihw.shape[1]
    return jnp.transpose(w_oihw, (2, 3, 1, 0)).reshape(9, cin, cout)


def basic_block_forward(x_nchw, params, t, s=1.0, compute_dtype=jnp.bfloat16):
    """Pallas implementation of BasicBlock.forward (downsample=None, stride=1)."""
    N, Cin, H, W = x_nchw.shape
    planes = params["w_conv1"].shape[0]
    if Cin != planes:
        # TODO(synk): downsample branch needed when inplanes != planes.
        raise ValueError("downsample=None path requires inplanes == planes")

    Cp = max(128, _round_up(planes, 128))  # lane-dense channel padding

    # Channel masks (BasicBlock.mask): sigmoid(s * embedding(t)).  Folded into
    # conv2's weights: gc1 scales its input channels, gc2 its output channels.
    gc1 = jax.nn.sigmoid(s * params["ec1"][t])            # (planes,)
    gc2 = jax.nn.sigmoid(s * params["ec2"][t])            # (planes,)

    w1 = _to_tap_matrices(params["w_conv1"])                            # (9, Cin, planes)
    w2 = _to_tap_matrices(params["w_conv2"]) * gc1[None, :, None] * gc2[None, None, :]
    w1 = jnp.pad(w1, ((0, 0), (0, Cp - Cin), (0, Cp - planes))).astype(compute_dtype)
    w2 = jnp.pad(w2, ((0, 0), (0, Cp - planes), (0, Cp - planes))).astype(compute_dtype)

    # NCHW -> NHWC, zero-pad channels to Cp, spatial pad 1 (conv1 halo), bf16.
    # TODO(synk): transposes could be dropped if the surrounding model carries NHWC.
    x_nhwc = jnp.transpose(x_nchw, (0, 2, 3, 1))
    xp = jnp.pad(x_nhwc, ((0, 0), (1, 1), (1, 1), (0, Cp - Cin))).astype(compute_dtype)

    kernel = functools.partial(basic_block_kernel, H=H, W=W)
    out = pl.pallas_call(
        kernel,
        out_shape=jax.ShapeDtypeStruct((N, H, W, Cp), jnp.float32),
        grid=(N,),
        in_specs=[
            pl.BlockSpec((None, H + 2, W + 2, Cp), lambda n: (n, 0, 0, 0)),
            pl.BlockSpec((9, Cp, Cp), lambda n: (0, 0, 0)),   # resident weights
            pl.BlockSpec((9, Cp, Cp), lambda n: (0, 0, 0)),
        ],
        out_specs=pl.BlockSpec((None, H, W, Cp), lambda n: (n, 0, 0, 0)),
        scratch_shapes=[
            pltpu.VMEM((H + 2, W + 2, Cp), compute_dtype),    # y1 + zero ring
        ],
        compiler_params=pltpu.CompilerParams(
            dimension_semantics=("parallel",)),               # v7x: 2 TCs share N
    )(xp, w1, w2)

    out = out[..., :planes]
    return jnp.transpose(out, (0, 3, 1, 2))                   # back to NCHW


# ------------------------------ reference -----------------------------------

def _conv3x3_ref(x_nchw, w_oihw):
    return jax.lax.conv_general_dilated(
        x_nchw, w_oihw, window_strides=(1, 1), padding=((1, 1), (1, 1)),
        dimension_numbers=("NCHW", "OIHW", "NCHW"),
        precision=jax.lax.Precision.HIGHEST)


def basic_block_reference(x_nchw, params, t, s=1.0):
    planes = params["w_conv1"].shape[0]
    gc1 = jax.nn.sigmoid(s * params["ec1"][t]).reshape(1, planes, 1, 1)
    gc2 = jax.nn.sigmoid(s * params["ec2"][t]).reshape(1, planes, 1, 1)
    identity = x_nchw
    out = _conv3x3_ref(x_nchw, params["w_conv1"])
    out = jnp.maximum(out, 0.0) * gc1
    out = _conv3x3_ref(out, params["w_conv2"]) * gc2
    return jnp.maximum(out + identity, 0.0)


# --------------------------------- main --------------------------------------

if __name__ == "__main__":
    # Small config consistent with the module: inplanes = planes (downsample=None)
    N, inplanes, planes, H, W = 2, 8, 8, 16, 16
    num_tasks, t, s = 3, 1, 1.0

    key = jax.random.PRNGKey(0)
    k1, k2, k3, k4, kx = jax.random.split(key, 5)
    params = {
        "w_conv1": 0.1 * jax.random.normal(k1, (planes, inplanes, 3, 3), jnp.float32),
        "w_conv2": 0.1 * jax.random.normal(k2, (planes, planes, 3, 3), jnp.float32),
        "ec1": jax.random.normal(k3, (num_tasks, planes), jnp.float32),
        "ec2": jax.random.normal(k4, (num_tasks, planes), jnp.float32),
    }
    x = jax.random.normal(kx, (N, inplanes, H, W), jnp.float32)

    forward = jax.jit(basic_block_forward)
    out = jax.block_until_ready(forward(x, params, t))
    ref = jax.block_until_ready(basic_block_reference(x, params, t, s))

    assert out.shape == ref.shape == (N, planes, H, W)
    err = float(jnp.max(jnp.abs(out - ref)))
    # bf16 MXU operands with f32 accumulation vs f32 reference -> bf16 tolerance.
    assert jnp.allclose(out, ref, rtol=5e-2, atol=5e-2), f"max abs err = {err}"

    print("KERNEL_OK")
</pallas_src>

<mosaic_0001>
module attributes {stable_mosaic.version = 11 : i64} {
  func.func @basic_block_kernel(%arg0: i32, %arg1: memref<1x18x18x128xbf16, #tpu.memory_space<vmem>>, %arg2: memref<9x128x128xbf16, #tpu.memory_space<vmem>>, %arg3: memref<9x128x128xbf16, #tpu.memory_space<vmem>>, %arg4: memref<1x16x16x128xf32, #tpu.memory_space<vmem>>, %arg5: memref<18x18x128xbf16, #tpu.memory_space<vmem>>) attributes {dimension_semantics = [#tpu.dimension_semantics<parallel>], iteration_bounds = array<i64: 2>, scalar_prefetch = 0 : i64, scratch_operands = 1 : i64, tpu.core_type = #tpu.core_type<tc>, window_params = [{transform_indices = @transform_0, window_bounds = array<i64: 1, 18, 18, 128>}, {pipeline_mode = #tpu.pipeline_mode<synchronous>, transform_indices = @transform_1, window_bounds = array<i64: 9, 128, 128>}, {pipeline_mode = #tpu.pipeline_mode<synchronous>, transform_indices = @transform_2, window_bounds = array<i64: 9, 128, 128>}, {transform_indices = @transform_3, window_bounds = array<i64: 1, 16, 16, 128>}]} {
    %cst = arith.constant 0.000000e+00 : bf16
    %0 = vector.broadcast %cst : bf16 to vector<18x18x128xbf16>
    %c0 = arith.constant 0 : index
    %c0_0 = arith.constant 0 : index
    %c0_1 = arith.constant 0 : index
    %1 = vector.load %arg5[%c0, %c0_0, %c0_1] : memref<18x18x128xbf16, #tpu.memory_space<vmem>>, vector<18x18x128xbf16>
    tpu.vector_store %arg5[%c0, %c0_0, %c0_1], %0 {strides = array<i32>} : memref<18x18x128xbf16, #tpu.memory_space<vmem>>, vector<18x18x128xbf16>,
    %cst_2 = arith.constant 0.000000e+00 : f32
    %2 = vector.broadcast %cst_2 : f32 to vector<256x128xf32>
    %c0_3 = arith.constant 0 : index
    %c0_4 = arith.constant 0 : index
    %c0_5 = arith.constant 0 : index
    %c0_6 = arith.constant 0 : index
    %3 = vector.load %arg1[%c0_3, %c0_4, %c0_5, %c0_6] : memref<1x18x18x128xbf16, #tpu.memory_space<vmem>>, vector<1x16x16x128xbf16>
    %4 = vector.shape_cast %3 : vector<1x16x16x128xbf16> to vector<16x16x128xbf16>
    %5 = vector.shape_cast %4 : vector<16x16x128xbf16> to vector<256x128xbf16>
    %c0_7 = arith.constant 0 : index
    %c0_8 = arith.constant 0 : index
    %c0_9 = arith.constant 0 : index
    %6 = vector.load %arg2[%c0_7, %c0_8, %c0_9] : memref<9x128x128xbf16, #tpu.memory_space<vmem>>, vector<1x128x128xbf16>
    %7 = vector.shape_cast %6 : vector<1x128x128xbf16> to vector<128x128xbf16>
    %cst_10 = arith.constant dense<0.000000e+00> : vector<256x128xf32>
    %8 = tpu.matmul %5, %7, %cst_10 {dimension_numbers = #tpu.dot_dimension_numbers<[1], [0], [0], [1], [0, 0, 1, 1], [], []>} : vector<256x128xbf16>, vector<128x128xbf16>, vector<256x128xf32> -> vector<256x128xf32>
    %9 = arith.addf %2, %8 : vector<256x128xf32>
    %c0_11 = arith.constant 0 : index
    %c0_12 = arith.constant 0 : index
    %c1 = arith.constant 1 : index
    %c0_13 = arith.constant 0 : index
    %10 = vector.load %arg1[%c0_11, %c0_12, %c1, %c0_13] : memref<1x18x18x128xbf16, #tpu.memory_space<vmem>>, vector<1x16x16x128xbf16>
    %11 = vector.shape_cast %10 : vector<1x16x16x128xbf16> to vector<16x16x128xbf16>
    %12 = vector.shape_cast %11 : vector<16x16x128xbf16> to vector<256x128xbf16>
    %c1_14 = arith.constant 1 : index
    %c0_15 = arith.constant 0 : index
    %c0_16 = arith.constant 0 : index
    %13 = vector.load %arg2[%c1_14, %c0_15, %c0_16] : memref<9x128x128xbf16, #tpu.memory_space<vmem>>, vector<1x128x128xbf16>
    %14 = vector.shape_cast %13 : vector<1x128x128xbf16> to vector<128x128xbf16>
    %cst_17 = arith.constant dense<0.000000e+00> : vector<256x128xf32>
    %15 = tpu.matmul %12, %14, %cst_17 {dimension_numbers = #tpu.dot_dimension_numbers<[1], [0], [0], [1], [0, 0, 1, 1], [], []>} : vector<256x128xbf16>, vector<128x128xbf16>, vector<256x128xf32> -> vector<256x128xf32>
    %16 = arith.addf %9, %15 : vector<256x128xf32>
    %c0_18 = arith.constant 0 : index
    %c0_19 = arith.constant 0 : index
    %c2 = arith.constant 2 : index
    %c0_20 = arith.constant 0 : index
    %17 = vector.load %arg1[%c0_18, %c0_19, %c2, %c0_20] : memref<1x18x18x128xbf16, #tpu.memory_space<vmem>>, vector<1x16x16x128xbf16>
    %18 = vector.shape_cast %17 : vector<1x16x16x128xbf16> to vector<16x16x128xbf16>
    %19 = vector.shape_cast %18 : vector<16x16x128xbf16> to vector<256x128xbf16>
    %c2_21 = arith.constant 2 : index
    %c0_22 = arith.constant 0 : index
    %c0_23 = arith.constant 0 : index
    %20 = vector.load %arg2[%c2_21, %c0_22, %c0_23] : memref<9x128x128xbf16, #tpu.memory_space<vmem>>, vector<1x128x128xbf16>
    %21 = vector.shape_cast %20 : vector<1x128x128xbf16> to vector<128x128xbf16>
    %cst_24 = arith.constant dense<0.000000e+00> : vector<256x128xf32>
    %22 = tpu.matmul %19, %21, %cst_24 {dimension_numbers = #tpu.dot_dimension_numbers<[1], [0], [0], [1], [0, 0, 1, 1], [], []>} : vector<256x128xbf16>, vector<128x128xbf16>, vector<256x128xf32> -> vector<256x128xf32>
    %23 = arith.addf %16, %22 : vector<256x128xf32>
    %c0_25 = arith.constant 0 : index
    %c1_26 = arith.constant 1 : index
    %c0_27 = arith.constant 0 : index
    %c0_28 = arith.constant 0 : index
    %24 = vector.load %arg1[%c0_25, %c1_26, %c0_27, %c0_28] : memref<1x18x18x128xbf16, #tpu.memory_space<vmem>>, vector<1x16x16x128xbf16>
    %25 = vector.shape_cast %24 : vector<1x16x16x128xbf16> to vector<16x16x128xbf16>
    %26 = vector.shape_cast %25 : vector<16x16x128xbf16> to vector<256x128xbf16>
    %c3 = arith.constant 3 : index
    %c0_29 = arith.constant 0 : index
    %c0_30 = arith.constant 0 : index
    %27 = vector.load %arg2[%c3, %c0_29, %c0_30] : memref<9x128x128xbf16, #tpu.memory_space<vmem>>, vector<1x128x128xbf16>
    %28 = vector.shape_cast %27 : vector<1x128x128xbf16> to vector<128x128xbf16>
    %cst_31 = arith.constant dense<0.000000e+00> : vector<256x128xf32>
    %29 = tpu.matmul %26, %28, %cst_31 {dimension_numbers = #tpu.dot_dimension_numbers<[1], [0], [0], [1], [0, 0, 1, 1], [], []>} : vector<256x128xbf16>, vector<128x128xbf16>, vector<256x128xf32> -> vector<256x128xf32>
    %30 = arith.addf %23, %29 : vector<256x128xf32>
    %c0_32 = arith.constant 0 : index
    %c1_33 = arith.constant 1 : index
    %c1_34 = arith.constant 1 : index
    %c0_35 = arith.constant 0 : index
    %31 = vector.load %arg1[%c0_32, %c1_33, %c1_34, %c0_35] : memref<1x18x18x128xbf16, #tpu.memory_space<vmem>>, vector<1x16x16x128xbf16>
    %32 = vector.shape_cast %31 : vector<1x16x16x128xbf16> to vector<16x16x128xbf16>
    %33 = vector.shape_cast %32 : vector<16x16x128xbf16> to vector<256x128xbf16>
    %c4 = arith.constant 4 : index
    %c0_36 = arith.constant 0 : index
    %c0_37 = arith.constant 0 : index
    %34 = vector.load %arg2[%c4, %c0_36, %c0_37] : memref<9x128x128xbf16, #tpu.memory_space<vmem>>, vector<1x128x128xbf16>
    %35 = vector.shape_cast %34 : vector<1x128x128xbf16> to vector<128x128xbf16>
    %cst_38 = arith.constant dense<0.000000e+00> : vector<256x128xf32>
    %36 = tpu.matmul %33, %35, %cst_38 {dimension_numbers = #tpu.dot_dimension_numbers<[1], [0], [0], [1], [0, 0, 1, 1], [], []>} : vector<256x128xbf16>, vector<128x128xbf16>, vector<256x128xf32> -> vector<256x128xf32>
    %37 = arith.addf %30, %36 : vector<256x128xf32>
    %c0_39 = arith.constant 0 : index
    %c1_40 = arith.constant 1 : index
    %c2_41 = arith.constant 2 : index
    %c0_42 = arith.constant 0 : index
    %38 = vector.load %arg1[%c0_39, %c1_40, %c2_41, %c0_42] : memref<1x18x18x128xbf16, #tpu.memory_space<vmem>>, vector<1x16x16x128xbf16>
    %39 = vector.shape_cast %38 : vector<1x16x16x128xbf16> to vector<16x16x128xbf16>
    %40 = vector.shape_cast %39 : vector<16x16x128xbf16> to vector<256x128xbf16>
    %c5 = arith.constant 5 : index
    %c0_43 = arith.constant 0 : index
    %c0_44 = arith.constant 0 : index
    %41 = vector.load %arg2[%c5, %c0_43, %c0_44] : memref<9x128x128xbf16, #tpu.memory_space<vmem>>, vector<1x128x128xbf16>
    %42 = vector.shape_cast %41 : vector<1x128x128xbf16> to vector<128x128xbf16>
    %cst_45 = arith.constant dense<0.000000e+00> : vector<256x128xf32>
    %43 = tpu.matmul %40, %42, %cst_45 {dimension_numbers = #tpu.dot_dimension_numbers<[1], [0], [0], [1], [0, 0, 1, 1], [], []>} : vector<256x128xbf16>, vector<128x128xbf16>, vector<256x128xf32> -> vector<256x128xf32>
    %44 = arith.addf %37, %43 : vector<256x128xf32>
    %c0_46 = arith.constant 0 : index
    %c2_47 = arith.constant 2 : index
    %c0_48 = arith.constant 0 : index
    %c0_49 = arith.constant 0 : index
    %45 = vector.load %arg1[%c0_46, %c2_47, %c0_48, %c0_49] : memref<1x18x18x128xbf16, #tpu.memory_space<vmem>>, vector<1x16x16x128xbf16>
    %46 = vector.shape_cast %45 : vector<1x16x16x128xbf16> to vector<16x16x128xbf16>
    %47 = vector.shape_cast %46 : vector<16x16x128xbf16> to vector<256x128xbf16>
    %c6 = arith.constant 6 : index
    %c0_50 = arith.constant 0 : index
    %c0_51 = arith.constant 0 : index
    %48 = vector.load %arg2[%c6, %c0_50, %c0_51] : memref<9x128x128xbf16, #tpu.memory_space<vmem>>, vector<1x128x128xbf16>
    %49 = vector.shape_cast %48 : vector<1x128x128xbf16> to vector<128x128xbf16>
    %cst_52 = arith.constant dense<0.000000e+00> : vector<256x128xf32>
    %50 = tpu.matmul %47, %49, %cst_52 {dimension_numbers = #tpu.dot_dimension_numbers<[1], [0], [0], [1], [0, 0, 1, 1], [], []>} : vector<256x128xbf16>, vector<128x128xbf16>, vector<256x128xf32> -> vector<256x128xf32>
    %51 = arith.addf %44, %50 : vector<256x128xf32>
    %c0_53 = arith.constant 0 : index
    %c2_54 = arith.constant 2 : index
    %c1_55 = arith.constant 1 : index
    %c0_56 = arith.constant 0 : index
    %52 = vector.load %arg1[%c0_53, %c2_54, %c1_55, %c0_56] : memref<1x18x18x128xbf16, #tpu.memory_space<vmem>>, vector<1x16x16x128xbf16>
    %53 = vector.shape_cast %52 : vector<1x16x16x128xbf16> to vector<16x16x128xbf16>
    %54 = vector.shape_cast %53 : vector<16x16x128xbf16> to vector<256x128xbf16>
    %c7 = arith.constant 7 : index
    %c0_57 = arith.constant 0 : index
    %c0_58 = arith.constant 0 : index
    %55 = vector.load %arg2[%c7, %c0_57, %c0_58] : memref<9x128x128xbf16, #tpu.memory_space<vmem>>, vector<1x128x128xbf16>
    %56 = vector.shape_cast %55 : vector<1x128x128xbf16> to vector<128x128xbf16>
    %cst_59 = arith.constant dense<0.000000e+00> : vector<256x128xf32>
    %57 = tpu.matmul %54, %56, %cst_59 {dimension_numbers = #tpu.dot_dimension_numbers<[1], [0], [0], [1], [0, 0, 1, 1], [], []>} : vector<256x128xbf16>, vector<128x128xbf16>, vector<256x128xf32> -> vector<256x128xf32>
    %58 = arith.addf %51, %57 : vector<256x128xf32>
    %c0_60 = arith.constant 0 : index
    %c2_61 = arith.constant 2 : index
    %c2_62 = arith.constant 2 : index
    %c0_63 = arith.constant 0 : index
    %59 = vector.load %arg1[%c0_60, %c2_61, %c2_62, %c0_63] : memref<1x18x18x128xbf16, #tpu.memory_space<vmem>>, vector<1x16x16x128xbf16>
    %60 = vector.shape_cast %59 : vector<1x16x16x128xbf16> to vector<16x16x128xbf16>
    %61 = vector.shape_cast %60 : vector<16x16x128xbf16> to vector<256x128xbf16>
    %c8 = arith.constant 8 : index
    %c0_64 = arith.constant 0 : index
    %c0_65 = arith.constant 0 : index
    %62 = vector.load %arg2[%c8, %c0_64, %c0_65] : memref<9x128x128xbf16, #tpu.memory_space<vmem>>, vector<1x128x128xbf16>
    %63 = vector.shape_cast %62 : vector<1x128x128xbf16> to vector<128x128xbf16>
    %cst_66 = arith.constant dense<0.000000e+00> : vector<256x128xf32>
    %64 = tpu.matmul %61, %63, %cst_66 {dimension_numbers = #tpu.dot_dimension_numbers<[1], [0], [0], [1], [0, 0, 1, 1], [], []>} : vector<256x128xbf16>, vector<128x128xbf16>, vector<256x128xf32> -> vector<256x128xf32>
    %65 = arith.addf %58, %64 : vector<256x128xf32>
    %cst_67 = arith.constant 0.000000e+00 : f32
    %66 = vector.broadcast %cst_67 : f32 to vector<256x128xf32>
    %67 = arith.maximumf %65, %66 : vector<256x128xf32>
    %68 = vector.shape_cast %67 : vector<256x128xf32> to vector<16x16x128xf32>
    %69 = arith.truncf %68 : vector<16x16x128xf32> to vector<16x16x128xbf16>
    %c1_68 = arith.constant 1 : index
    %c1_69 = arith.constant 1 : index
    %c0_70 = arith.constant 0 : index
    %70 = vector.load %arg5[%c1_68, %c1_69, %c0_70] : memref<18x18x128xbf16, #tpu.memory_space<vmem>>, vector<16x16x128xbf16>
    tpu.vector_store %arg5[%c1_68, %c1_69, %c0_70], %69 {strides = array<i32>} : memref<18x18x128xbf16, #tpu.memory_space<vmem>>, vector<16x16x128xbf16>,
    %cst_71 = arith.constant 0.000000e+00 : f32
    %71 = vector.broadcast %cst_71 : f32 to vector<256x128xf32>
    %c0_72 = arith.constant 0 : index
    %c0_73 = arith.constant 0 : index
    %c0_74 = arith.constant 0 : index
    %72 = vector.load %arg5[%c0_72, %c0_73, %c0_74] : memref<18x18x128xbf16, #tpu.memory_space<vmem>>, vector<16x16x128xbf16>
    %73 = vector.shape_cast %72 : vector<16x16x128xbf16> to vector<256x128xbf16>
    %c0_75 = arith.constant 0 : index
    %c0_76 = arith.constant 0 : index
    %c0_77 = arith.constant 0 : index
    %74 = vector.load %arg3[%c0_75, %c0_76, %c0_77] : memref<9x128x128xbf16, #tpu.memory_space<vmem>>, vector<1x128x128xbf16>
    %75 = vector.shape_cast %74 : vector<1x128x128xbf16> to vector<128x128xbf16>
    %cst_78 = arith.constant dense<0.000000e+00> : vector<256x128xf32>
    %76 = tpu.matmul %73, %75, %cst_78 {dimension_numbers = #tpu.dot_dimension_numbers<[1], [0], [0], [1], [0, 0, 1, 1], [], []>} : vector<256x128xbf16>, vector<128x128xbf16>, vector<256x128xf32> -> vector<256x128xf32>
    %77 = arith.addf %71, %76 : vector<256x128xf32>
    %c0_79 = arith.constant 0 : index
    %c1_80 = arith.constant 1 : index
    %c0_81 = arith.constant 0 : index
    %78 = vector.load %arg5[%c0_79, %c1_80, %c0_81] : memref<18x18x128xbf16, #tpu.memory_space<vmem>>, vector<16x16x128xbf16>
    %79 = vector.shape_cast %78 : vector<16x16x128xbf16> to vector<256x128xbf16>
    %c1_82 = arith.constant 1 : index
    %c0_83 = arith.constant 0 : index
    %c0_84 = arith.constant 0 : index
    %80 = vector.load %arg3[%c1_82, %c0_83, %c0_84] : memref<9x128x128xbf16, #tpu.memory_space<vmem>>, vector<1x128x128xbf16>
    %81 = vector.shape_cast %80 : vector<1x128x128xbf16> to vector<128x128xbf16>
    %cst_85 = arith.constant dense<0.000000e+00> : vector<256x128xf32>
    %82 = tpu.matmul %79, %81, %cst_85 {dimension_numbers = #tpu.dot_dimension_numbers<[1], [0], [0], [1], [0, 0, 1, 1], [], []>} : vector<256x128xbf16>, vector<128x128xbf16>, vector<256x128xf32> -> vector<256x128xf32>
    %83 = arith.addf %77, %82 : vector<256x128xf32>
    %c0_86 = arith.constant 0 : index
    %c2_87 = arith.constant 2 : index
    %c0_88 = arith.constant 0 : index
    %84 = vector.load %arg5[%c0_86, %c2_87, %c0_88] : memref<18x18x128xbf16, #tpu.memory_space<vmem>>, vector<16x16x128xbf16>
    %85 = vector.shape_cast %84 : vector<16x16x128xbf16> to vector<256x128xbf16>
    %c2_89 = arith.constant 2 : index
    %c0_90 = arith.constant 0 : index
    %c0_91 = arith.constant 0 : index
    %86 = vector.load %arg3[%c2_89, %c0_90, %c0_91] : memref<9x128x128xbf16, #tpu.memory_space<vmem>>, vector<1x128x128xbf16>
    %87 = vector.shape_cast %86 : vector<1x128x128xbf16> to vector<128x128xbf16>
    %cst_92 = arith.constant dense<0.000000e+00> : vector<256x128xf32>
    %88 = tpu.matmul %85, %87, %cst_92 {dimension_numbers = #tpu.dot_dimension_numbers<[1], [0], [0], [1], [0, 0, 1, 1], [], []>} : vector<256x128xbf16>, vector<128x128xbf16>, vector<256x128xf32> -> vector<256x128xf32>
    %89 = arith.addf %83, %88 : vector<256x128xf32>
    %c1_93 = arith.constant 1 : index
    %c0_94 = arith.constant 0 : index
    %c0_95 = arith.constant 0 : index
    %90 = vector.load %arg5[%c1_93, %c0_94, %c0_95] : memref<18x18x128xbf16, #tpu.memory_space<vmem>>, vector<16x16x128xbf16>
    %91 = vector.shape_cast %90 : vector<16x16x128xbf16> to vector<256x128xbf16>
    %c3_96 = arith.constant 3 : index
    %c0_97 = arith.constant 0 : index
    %c0_98 = arith.constant 0 : index
    %92 = vector.load %arg3[%c3_96, %c0_97, %c0_98] : memref<9x128x128xbf16, #tpu.memory_space<vmem>>, vector<1x128x128xbf16>
    %93 = vector.shape_cast %92 : vector<1x128x128xbf16> to vector<128x128xbf16>
    %cst_99 = arith.constant dense<0.000000e+00> : vector<256x128xf32>
    %94 = tpu.matmul %91, %93, %cst_99 {dimension_numbers = #tpu.dot_dimension_numbers<[1], [0], [0], [1], [0, 0, 1, 1], [], []>} : vector<256x128xbf16>, vector<128x128xbf16>, vector<256x128xf32> -> vector<256x128xf32>
    %95 = arith.addf %89, %94 : vector<256x128xf32>
    %c1_100 = arith.constant 1 : index
    %c1_101 = arith.constant 1 : index
    %c0_102 = arith.constant 0 : index
    %96 = vector.load %arg5[%c1_100, %c1_101, %c0_102] : memref<18x18x128xbf16, #tpu.memory_space<vmem>>, vector<16x16x128xbf16>
    %97 = vector.shape_cast %96 : vector<16x16x128xbf16> to vector<256x128xbf16>
    %c4_103 = arith.constant 4 : index
    %c0_104 = arith.constant 0 : index
    %c0_105 = arith.constant 0 : index
    %98 = vector.load %arg3[%c4_103, %c0_104, %c0_105] : memref<9x128x128xbf16, #tpu.memory_space<vmem>>, vector<1x128x128xbf16>
    %99 = vector.shape_cast %98 : vector<1x128x128xbf16> to vector<128x128xbf16>
    %cst_106 = arith.constant dense<0.000000e+00> : vector<256x128xf32>
    %100 = tpu.matmul %97, %99, %cst_106 {dimension_numbers = #tpu.dot_dimension_numbers<[1], [0], [0], [1], [0, 0, 1, 1], [], []>} : vector<256x128xbf16>, vector<128x128xbf16>, vector<256x128xf32> -> vector<256x128xf32>
    %101 = arith.addf %95, %100 : vector<256x128xf32>
    %c1_107 = arith.constant 1 : index
    %c2_108 = arith.constant 2 : index
    %c0_109 = arith.constant 0 : index
    %102 = vector.load %arg5[%c1_107, %c2_108, %c0_109] : memref<18x18x128xbf16, #tpu.memory_space<vmem>>, vector<16x16x128xbf16>
    %103 = vector.shape_cast %102 : vector<16x16x128xbf16> to vector<256x128xbf16>
    %c5_110 = arith.constant 5 : index
    %c0_111 = arith.constant 0 : index
    %c0_112 = arith.constant 0 : index
    %104 = vector.load %arg3[%c5_110, %c0_111, %c0_112] : memref<9x128x128xbf16, #tpu.memory_space<vmem>>, vector<1x128x128xbf16>
    %105 = vector.shape_cast %104 : vector<1x128x128xbf16> to vector<128x128xbf16>
    %cst_113 = arith.constant dense<0.000000e+00> : vector<256x128xf32>
    %106 = tpu.matmul %103, %105, %cst_113 {dimension_numbers = #tpu.dot_dimension_numbers<[1], [0], [0], [1], [0, 0, 1, 1], [], []>} : vector<256x128xbf16>, vector<128x128xbf16>, vector<256x128xf32> -> vector<256x128xf32>
    %107 = arith.addf %101, %106 : vector<256x128xf32>
    %c2_114 = arith.constant 2 : index
    %c0_115 = arith.constant 0 : index
    %c0_116 = arith.constant 0 : index
    %108 = vector.load %arg5[%c2_114, %c0_115, %c0_116] : memref<18x18x128xbf16, #tpu.memory_space<vmem>>, vector<16x16x128xbf16>
    %109 = vector.shape_cast %108 : vector<16x16x128xbf16> to vector<256x128xbf16>
    %c6_117 = arith.constant 6 : index
    %c0_118 = arith.constant 0 : index
    %c0_119 = arith.constant 0 : index
    %110 = vector.load %arg3[%c6_117, %c0_118, %c0_119] : memref<9x128x128xbf16, #tpu.memory_space<vmem>>, vector<1x128x128xbf16>
    %111 = vector.shape_cast %110 : vector<1x128x128xbf16> to vector<128x128xbf16>
    %cst_120 = arith.constant dense<0.000000e+00> : vector<256x128xf32>
    %112 = tpu.matmul %109, %111, %cst_120 {dimension_numbers = #tpu.dot_dimension_numbers<[1], [0], [0], [1], [0, 0, 1, 1], [], []>} : vector<256x128xbf16>, vector<128x128xbf16>, vector<256x128xf32> -> vector<256x128xf32>
    %113 = arith.addf %107, %112 : vector<256x128xf32>
    %c2_121 = arith.constant 2 : index
    %c1_122 = arith.constant 1 : index
    %c0_123 = arith.constant 0 : index
    %114 = vector.load %arg5[%c2_121, %c1_122, %c0_123] : memref<18x18x128xbf16, #tpu.memory_space<vmem>>, vector<16x16x128xbf16>
    %115 = vector.shape_cast %114 : vector<16x16x128xbf16> to vector<256x128xbf16>
    %c7_124 = arith.constant 7 : index
    %c0_125 = arith.constant 0 : index
    %c0_126 = arith.constant 0 : index
    %116 = vector.load %arg3[%c7_124, %c0_125, %c0_126] : memref<9x128x128xbf16, #tpu.memory_space<vmem>>, vector<1x128x128xbf16>
    %117 = vector.shape_cast %116 : vector<1x128x128xbf16> to vector<128x128xbf16>
    %cst_127 = arith.constant dense<0.000000e+00> : vector<256x128xf32>
    %118 = tpu.matmul %115, %117, %cst_127 {dimension_numbers = #tpu.dot_dimension_numbers<[1], [0], [0], [1], [0, 0, 1, 1], [], []>} : vector<256x128xbf16>, vector<128x128xbf16>, vector<256x128xf32> -> vector<256x128xf32>
    %119 = arith.addf %113, %118 : vector<256x128xf32>
    %c2_128 = arith.constant 2 : index
    %c2_129 = arith.constant 2 : index
    %c0_130 = arith.constant 0 : index
    %120 = vector.load %arg5[%c2_128, %c2_129, %c0_130] : memref<18x18x128xbf16, #tpu.memory_space<vmem>>, vector<16x16x128xbf16>
    %121 = vector.shape_cast %120 : vector<16x16x128xbf16> to vector<256x128xbf16>
    %c8_131 = arith.constant 8 : index
    %c0_132 = arith.constant 0 : index
    %c0_133 = arith.constant 0 : index
    %122 = vector.load %arg3[%c8_131, %c0_132, %c0_133] : memref<9x128x128xbf16, #tpu.memory_space<vmem>>, vector<1x128x128xbf16>
    %123 = vector.shape_cast %122 : vector<1x128x128xbf16> to vector<128x128xbf16>
    %cst_134 = arith.constant dense<0.000000e+00> : vector<256x128xf32>
    %124 = tpu.matmul %121, %123, %cst_134 {dimension_numbers = #tpu.dot_dimension_numbers<[1], [0], [0], [1], [0, 0, 1, 1], [], []>} : vector<256x128xbf16>, vector<128x128xbf16>, vector<256x128xf32> -> vector<256x128xf32>
    %125 = arith.addf %119, %124 : vector<256x128xf32>
    %c0_135 = arith.constant 0 : index
    %c1_136 = arith.constant 1 : index
    %c1_137 = arith.constant 1 : index
    %c0_138 = arith.constant 0 : index
    %126 = vector.load %arg1[%c0_135, %c1_136, %c1_137, %c0_138] : memref<1x18x18x128xbf16, #tpu.memory_space<vmem>>, vector<1x16x16x128xbf16>
    %127 = vector.shape_cast %126 : vector<1x16x16x128xbf16> to vector<16x16x128xbf16>
    %128 = vector.shape_cast %127 : vector<16x16x128xbf16> to vector<256x128xbf16>
    %129 = arith.extf %128 : vector<256x128xbf16> to vector<256x128xf32>
    %130 = arith.addf %125, %129 : vector<256x128xf32>
    %cst_139 = arith.constant 0.000000e+00 : f32
    %131 = vector.broadcast %cst_139 : f32 to vector<256x128xf32>
    %132 = arith.maximumf %130, %131 : vector<256x128xf32>
    %133 = vector.shape_cast %132 : vector<256x128xf32> to vector<16x16x128xf32>
    %c0_140 = arith.constant 0 : index
    %c0_141 = arith.constant 0 : index
    %c0_142 = arith.constant 0 : index
    %c0_143 = arith.constant 0 : index
    %134 = vector.load %arg4[%c0_140, %c0_141, %c0_142, %c0_143] : memref<1x16x16x128xf32, #tpu.memory_space<vmem>>, vector<1x16x16x128xf32>
    %135 = vector.shape_cast %134 : vector<1x16x16x128xf32> to vector<16x16x128xf32>
    %136 = vector.shape_cast %133 : vector<16x16x128xf32> to vector<1x16x16x128xf32>
    tpu.vector_store %arg4[%c0_140, %c0_141, %c0_142, %c0_143], %136 {strides = array<i32>} : memref<1x16x16x128xf32, #tpu.memory_space<vmem>>, vector<1x16x16x128xf32>,
    return
  }
  func.func @transform_0(%arg0: i32) -> (i32, i32, i32, i32) {
    %c0_i32 = arith.constant 0 : i32
    %c0_i32_0 = arith.constant 0 : i32
    %c0_i32_1 = arith.constant 0 : i32
    %c0_i32_2 = arith.constant 0 : i32
    return %arg0, %c0_i32, %c0_i32_0, %c0_i32_1 : i32, i32, i32, i32
  }
  func.func @transform_1(%arg0: i32) -> (i32, i32, i32) {
    %c0_i32 = arith.constant 0 : i32
    %c0_i32_0 = arith.constant 0 : i32
    %c0_i32_1 = arith.constant 0 : i32
    %c0_i32_2 = arith.constant 0 : i32
    return %c0_i32, %c0_i32_0, %c0_i32_1 : i32, i32, i32
  }
  func.func @transform_2(%arg0: i32) -> (i32, i32, i32) {
    %c0_i32 = arith.constant 0 : i32
    %c0_i32_0 = arith.constant 0 : i32
    %c0_i32_1 = arith.constant 0 : i32
    %c0_i32_2 = arith.constant 0 : i32
    return %c0_i32, %c0_i32_0, %c0_i32_1 : i32, i32, i32
  }
  func.func @transform_3(%arg0: i32) -> (i32, i32, i32, i32) {
    %c0_i32 = arith.constant 0 : i32
    %c0_i32_0 = arith.constant 0 : i32
    %c0_i32_1 = arith.constant 0 : i32
    %c0_i32_2 = arith.constant 0 : i32
    return %arg0, %c0_i32, %c0_i32_0, %c0_i32_1 : i32, i32, i32, i32
  }
}

</mosaic_0001>

<llo_original>
// kernel: basic_block_forward.1
$region0: #{basic_block_forward.1}
  #allocation0 [shape = 'u32[]', space=smem, size = 0x4, offset = 0x4, fixed_abs, tag = 'smem constant byte address 0x4 - core index']
  #allocation1 [shape = 'u32[72,128]{1,0:T(1,128)}', space=vmem, size = 0x9000, scoped, tag = 'internal scratch']
  #allocation2 [shape = 'bf16[18,18,128]{2,1,0:T(8,128)(2,1)}', space=vmem, size = 0x1b000, scoped, tag = 'scratch operand']
  %s0 = inlined_call_operand.vmem [shape: bf16[2,18,18,128], index: 0, kind: input, shape index: {}]
  %s1 = inlined_call_operand.vmem [shape: bf16[9,128,128], index: 1, kind: input, shape index: {}]
  %s2 = inlined_call_operand.vmem [shape: bf16[9,128,128], index: 2, kind: input, shape index: {}]
  %s3 = inlined_call_operand.vmem [shape: f32[2,16,16,128], index: 3, kind: output, shape index: {}]
  %s4 = sld [smem:[#allocation0]]
  $region45: #{basic_block_forward.1} parent=0
    _
  %s6 = ssub.s32 1, %s4
  %s7 = scalar_select 0, %s6, %s4
  loop: start=0, step=1, limit=4
  $region2: #{basic_block_forward.1} parent=0 // loop_pre_header
    _
  $region3: #{basic_block_forward.1} parent=0 // loop_header
    %s9 = sphi 0, %s13
    %p10 = scmp.ge.s32.totalorder %s9, 4
    %s19 = sphi 0, %s21
    %s22 = sphi 0, %s19
    %s23 = sphi 0, %s22
    %s39 = sphi 0, %s23
    %s43 = sphi 0, %s43
    %s45 = sphi 0, %s43
    %s46 = sphi 0, %s45
    %s60 = sphi 0, %s46
    %s64 = sphi 0, %s64
    %s66 = sphi 0, %s64
    %s67 = sphi 0, %s66
    %s81 = sphi 0, %s67
    %s87 = sphi 0, %s89
    %s90 = sphi 0, %s87
    %s91 = sphi 0, %s90
    %s107 = sphi 0, %s91
  $region4: #{basic_block_forward.1} parent=0 // loop_header_branch
    %12 = sbr.rel (%p10) target = $region8
  $region5: #{basic_block_forward.1} parent=0 // loop_body
    %s14 = ssub.s32 %s9, 1
    %s15 = ssub.s32 %s9, 2
    %s16 = sadd.s32 %s9, 1
    %s17 = ssub.s32 %s9, %s16
    %p18 = scmp.eq.s32.totalorder %s17, 0
    %s20 = sadd.s32 %s19, 1
    %s21 = scalar_select %p18, %s19, %s20
    %p24 = pneg %p18
    %p25 = scmp.eq.s32.totalorder %s9, 1
    %p26 = por %p24, %p25
    %p27 = scmp.ne.s32.totalorder %s19, %s22
    %p28 = scmp.eq.s32.totalorder %s9, 0
    %p29 = por %p27, %p28
    %p30 = scmp.ne.s32.totalorder %s19, %s22
    %p31 = scmp.eq.s32.totalorder %s14, 1
    %p32 = por %p30, %p31
    %p33 = scmp.ne.s32.totalorder %s22, %s23
    %p34 = scmp.eq.s32.totalorder %s14, 0
    %p35 = por %p33, %p34
    %p36 = scmp.ne.s32.totalorder %s22, %s23
    %p37 = scmp.eq.s32.totalorder %s15, 1
    %p38 = por %p36, %p37
    %p40 = scmp.ne.s32.totalorder %s23, %s39
    %p41 = scmp.eq.s32.totalorder %s15, 0
    %p42 = por %p40, %p41
    %s44 = sadd.s32 %s43, 1
    %p47 = scmp.eq.s32.totalorder %s9, 1
    %p48 = scmp.ne.s32.totalorder %s43, %s45
    %p49 = scmp.eq.s32.totalorder %s9, 0
    %p50 = por %p48, %p49
    %p51 = scmp.ne.s32.totalorder %s43, %s45
    %p52 = scmp.eq.s32.totalorder %s14, 1
    %p53 = por %p51, %p52
    %p54 = scmp.ne.s32.totalorder %s45, %s46
    %p55 = scmp.eq.s32.totalorder %s14, 0
    %p56 = por %p54, %p55
    %p57 = scmp.ne.s32.totalorder %s45, %s46
    %p58 = scmp.eq.s32.totalorder %s15, 1
    %p59 = por %p57, %p58
    %p61 = scmp.ne.s32.totalorder %s46, %s60
    %p62 = scmp.eq.s32.totalorder %s15, 0
    %p63 = por %p61, %p62
    %s65 = sadd.s32 %s64, 1
    %p68 = scmp.eq.s32.totalorder %s9, 1
    %p69 = scmp.ne.s32.totalorder %s64, %s66
    %p70 = scmp.eq.s32.totalorder %s9, 0
    %p71 = por %p69, %p70
    %p72 = scmp.ne.s32.totalorder %s64, %s66
    %p73 = scmp.eq.s32.totalorder %s14, 1
    %p74 = por %p72, %p73
    %p75 = scmp.ne.s32.totalorder %s66, %s67
    %p76 = scmp.eq.s32.totalorder %s14, 0
    %p77 = por %p75, %p76
    %p78 = scmp.ne.s32.totalorder %s66, %s67
    %p79 = scmp.eq.s32.totalorder %s15, 1
    %p80 = por %p78, %p79
    %p82 = scmp.ne.s32.totalorder %s67, %s81
    %p83 = scmp.eq.s32.totalorder %s15, 0
    %p84 = por %p82, %p83
    %s85 = ssub.s32 %s9, %s16
    %p86 = scmp.eq.s32.totalorder %s85, 0
    %s88 = sadd.s32 %s87, 1
    %s89 = scalar_select %p86, %s87, %s88
    %p92 = pneg %p86
    %p93 = scmp.eq.s32.totalorder %s9, 1
    %p94 = por %p92, %p93
    %p95 = scmp.ne.s32.totalorder %s87, %s90
    %p96 = scmp.eq.s32.totalorder %s9, 0
    %p97 = por %p95, %p96
    %p98 = scmp.ne.s32.totalorder %s87, %s90
    %p99 = scmp.eq.s32.totalorder %s14, 1
    %p100 = por %p98, %p99
    %p101 = scmp.ne.s32.totalorder %s90, %s91
    %p102 = scmp.eq.s32.totalorder %s14, 0
    %p103 = por %p101, %p102
    %p104 = scmp.ne.s32.totalorder %s90, %s91
    %p105 = scmp.eq.s32.totalorder %s15, 1
    %p106 = por %p104, %p105
    %p108 = scmp.ne.s32.totalorder %s91, %s107
    %p109 = scmp.eq.s32.totalorder %s15, 0
    %p110 = por %p108, %p109
    %p111 = scmp.le.s32.totalorder 1, %s9
    %p112 = scmp.lt.s32.totalorder %s9, 3
    %p113 = pnand %p111, %p112
    %p114 = pneg %p113
    // Predicated region
    $region9: #{basic_block_forward.1} parent=5 // pred_check
      _
    $region10: #{basic_block_forward.1} parent=5 // pred_check_branch
      %116 = sbr.rel (%p113) target = $region12
    $region11: #{basic_block_forward.1} parent=5 // pred_region
      %s117 = ssub.s32 %s9, 1
      // Predicated region
      $region13: #{basic_block_forward.1} parent=11 // pred_check
        %p118 = pneg %p56
      $region14: #{basic_block_forward.1} parent=11 // pred_check_branch
        %120 = sbr.rel (%p118) target = $region16
      $region15: #{basic_block_forward.1} parent=11 // pred_region
        _
      $region16: #{basic_block_forward.1} parent=11 // pred_fallthru
        _
      // Predicated region
      $region17: #{basic_block_forward.1} parent=11 // pred_check
        %p121 = pneg %p77
      $region18: #{basic_block_forward.1} parent=11 // pred_check_branch
        %123 = sbr.rel (%p121) target = $region20
      $region19: #{basic_block_forward.1} parent=11 // pred_region
        _
      $region20: #{basic_block_forward.1} parent=11 // pred_fallthru
        _
    $region12: #{basic_block_forward.1} parent=5 // pred_fallthru
      _
    %p124 = scmp.lt.s32.totalorder %s9, 2
    // Predicated region
    $region21: #{basic_block_forward.1} parent=5 // pred_check
      %p125 = pneg %p124
    $region22: #{basic_block_forward.1} parent=5 // pred_check_branch
      %127 = sbr.rel (%p125) target = $region24
    $region23: #{basic_block_forward.1} parent=5 // pred_region
      // Predicated region
      $region25: #{basic_block_forward.1} parent=23 // pred_check
        %p128 = pneg %p29
      $region26: #{basic_block_forward.1} parent=23 // pred_check_branch
        %130 = sbr.rel (%p128) target = $region28
      $region27: #{basic_block_forward.1} parent=23 // pred_region
        %p131 = scmp.lt.s32.totalorder %s9, 1
        %s132 = scalar_select %p131, %s9, 1
        %s133 = smul.addr %s132, 54
        %s134 = smul.addr %s133, 4
        %s135 = scalar_lea.vmem %s0, %s134
      $region28: #{basic_block_forward.1} parent=23 // pred_fallthru
        _
    $region24: #{basic_block_forward.1} parent=5 // pred_fallthru
      _
    %p136 = scmp.le.s32.totalorder 1, %s9
    %p137 = scmp.lt.s32.totalorder %s9, 3
    %p138 = pnand %p136, %p137
    %p139 = pneg %p138
    // Predicated region
    $region29: #{basic_block_forward.1} parent=5 // pred_check
      _
    $region30: #{basic_block_forward.1} parent=5 // pred_check_branch
      %141 = sbr.rel (%p138) target = $region32
    $region31: #{basic_block_forward.1} parent=5 // pred_region
      %s142 = ssub.s32 %s9, 1
      %p143 = scmp.lt.s32.totalorder %s14, 1
      %s144 = scalar_select %p143, %s14, 1
      %s145 = smul.addr %s144, 54
      %s146 = smul.addr %s145, 4
      %s147 = scalar_lea.vmem %s0, %s146
      %p148 = pneg %p35
      %p149 = pneg %p32
      %p150 = pneg %p56
      %p151 = pneg %p53
      %p152 = pneg %p77
      %p153 = pneg %p74
      %p154 = pneg %p103
      %p155 = pneg %p100
      %p156 = scmp.lt.s32.totalorder %s14, 1
      %s157 = scalar_select %p156, %s14, 1
      %s158 = smul.addr %s157, 32
      %s159 = smul.addr %s158, 8
      %s160 = scalar_lea.vmem %s3, %s159
      %p161 = scmp.lt.s32.totalorder %s14, 1
      %s162 = scalar_select %p161, %s14, 1
      %s163 = smul.addr %s162, 54
      %s164 = smul.addr %s163, 4
      %s165 = scalar_lea.vmem %s0, %s164
      %p166 = scmp.lt.s32.totalorder %s14, 1
      %s167 = scalar_select %p166, %s14, 1
      %s168 = smul.addr %s167, 32
      %s169 = smul.addr %s168, 8
      %s170 = scalar_lea.vmem %s3, %s169
      %172 = vst [vmem:[#allocation2] sm:$0xf] 0
      %173 = vst [vmem:[#allocation2 + $0x4] sm:$0xf] 0
      %174 = vst [vmem:[#allocation2 + $0x8] sm:$0x1] 0
      %175 = vst [vmem:[#allocation2 + $0xc] sm:$0xf] 0
      %176 = vst [vmem:[#allocation2 + $0x10] sm:$0xf] 0
      %177 = vst [vmem:[#allocation2 + $0x14] sm:$0x1] 0
      %178 = vst [vmem:[#allocation2 + $0x18] sm:$0xf] 0
      %179 = vst [vmem:[#allocation2 + $0x1c] sm:$0xf] 0
      %180 = vst [vmem:[#allocation2 + $0x20] sm:$0x1] 0
      %181 = vst [vmem:[#allocation2 + $0x24] sm:$0xf] 0
      %182 = vst [vmem:[#allocation2 + $0x28] sm:$0xf] 0
      %183 = vst [vmem:[#allocation2 + $0x2c] sm:$0x1] 0
      %184 = vst [vmem:[#allocation2 + $0x30] sm:$0xf] 0
      %185 = vst [vmem:[#allocation2 + $0x34] sm:$0xf] 0
      %186 = vst [vmem:[#allocation2 + $0x38] sm:$0x1] 0
      %187 = vst [vmem:[#allocation2 + $0x3c] sm:$0xf] 0
      %188 = vst [vmem:[#allocation2 + $0x40] sm:$0xf] 0
      %189 = vst [vmem:[#allocation2 + $0x44] sm:$0x1] 0
      %190 = vst [vmem:[#allocation2 + $0x48] sm:$0xf] 0
      %191 = vst [vmem:[#allocation2 + $0x4c] sm:$0xf] 0
      %192 = vst [vmem:[#allocation2 + $0x50] sm:$0x1] 0
      %193 = vst [vmem:[#allocation2 + $0x54] sm:$0xf] 0
      %194 = vst [vmem:[#allocation2 + $0x58] sm:$0xf] 0
      %195 = vst [vmem:[#allocation2 + $0x5c] sm:$0x1] 0
      %196 = vst [vmem:[#allocation2 + $0x60] sm:$0xf] 0
      %197 = vst [vmem:[#allocation2 + $0x64] sm:$0xf] 0
      %198 = vst [vmem:[#allocation2 + $0x68] sm:$0x1] 0
      %199 = vst [vmem:[#allocation2 + $0x6c] sm:$0xf] 0
      %200 = vst [vmem:[#allocation2 + $0x70] sm:$0xf] 0
      %201 = vst [vmem:[#allocation2 + $0x74] sm:$0x1] 0
      %202 = vst [vmem:[#allocation2 + $0x78] sm:$0xf] 0
      %203 = vst [vmem:[#allocation2 + $0x7c] sm:$0xf] 0
      %204 = vst [vmem:[#allocation2 + $0x80] sm:$0x1] 0
      %205 = vst [vmem:[#allocation2 + $0x84] sm:$0xf] 0
      %206 = vst [vmem:[#allocation2 + $0x88] sm:$0xf] 0
      %207 = vst [vmem:[#allocation2 + $0x8c] sm:$0x1] 0
      %208 = vst [vmem:[#allocation2 + $0x90] sm:$0xf] 0
      %209 = vst [vmem:[#allocation2 + $0x94] sm:$0xf] 0
      %210 = vst [vmem:[#allocation2 + $0x98] sm:$0x1] 0
      %211 = vst [vmem:[#allocation2 + $0x9c] sm:$0xf] 0
      %212 = vst [vmem:[#allocation2 + $0xa0] sm:$0xf] 0
      %213 = vst [vmem:[#allocation2 + $0xa4] sm:$0x1] 0
      %214 = vst [vmem:[#allocation2 + $0xa8] sm:$0xf] 0
      %215 = vst [vmem:[#allocation2 + $0xac] sm:$0xf] 0
      %216 = vst [vmem:[#allocation2 + $0xb0] sm:$0x1] 0
      %217 = vst [vmem:[#allocation2 + $0xb4] sm:$0xf] 0
      %218 = vst [vmem:[#allocation2 + $0xb8] sm:$0xf] 0
      %219 = vst [vmem:[#allocation2 + $0xbc] sm:$0x1] 0
      %220 = vst [vmem:[#allocation2 + $0xc0] sm:$0xf] 0
      %221 = vst [vmem:[#allocation2 + $0xc4] sm:$0xf] 0
      %222 = vst [vmem:[#allocation2 + $0xc8] sm:$0x1] 0
      %223 = vst [vmem:[#allocation2 + $0xcc] sm:$0xf] 0
      %224 = vst [vmem:[#allocation2 + $0xd0] sm:$0xf] 0
      %225 = vst [vmem:[#allocation2 + $0xd4] sm:$0x1] 0
      %v226 = vld [vmem:[%s165] sm:$0xf]
      %v227 = vld [vmem:[%s165 + $0x4] sm:$0xf]
      %v228 = vld [vmem:[%s165 + $0xc] sm:$0xf]
      %v229 = vld [vmem:[%s165 + $0x10] sm:$0xf]
      %v230 = vld [vmem:[%s165 + $0x18] sm:$0xf]
      %v231 = vld [vmem:[%s165 + $0x1c] sm:$0xf]
      %v232 = vld [vmem:[%s165 + $0x24] sm:$0xf]
      %v233 = vld [vmem:[%s165 + $0x28] sm:$0xf]
      %v234 = vld [vmem:[%s165 + $0x30] sm:$0xf]
      %v235 = vld [vmem:[%s165 + $0x34] sm:$0xf]
      %v236 = vld [vmem:[%s165 + $0x3c] sm:$0xf]
      %v237 = vld [vmem:[%s165 + $0x40] sm:$0xf]
      %v238 = vld [vmem:[%s165 + $0x48] sm:$0xf]
      %v239 = vld [vmem:[%s165 + $0x4c] sm:$0xf]
      %v240 = vld [vmem:[%s165 + $0x54] sm:$0xf]
      %v241 = vld [vmem:[%s165 + $0x58] sm:$0xf]
      %v242 = vld [vmem:[%s165 + $0x60] sm:$0xf]
      %v243 = vld [vmem:[%s165 + $0x64] sm:$0xf]
      %v244 = vld [vmem:[%s165 + $0x6c] sm:$0xf]
      %v245 = vld [vmem:[%s165 + $0x70] sm:$0xf]
      %v246 = vld [vmem:[%s165 + $0x78] sm:$0xf]
      %v247 = vld [vmem:[%s165 + $0x7c] sm:$0xf]
      %v248 = vld [vmem:[%s165 + $0x84] sm:$0xf]
      %v249 = vld [vmem:[%s165 + $0x88] sm:$0xf]
      %v250 = vld [vmem:[%s165 + $0x90] sm:$0xf]
      %v251 = vld [vmem:[%s165 + $0x94] sm:$0xf]
      %v252 = vld [vmem:[%s165 + $0x9c] sm:$0xf]
      %v253 = vld [vmem:[%s165 + $0xa0] sm:$0xf]
      %v254 = vld [vmem:[%s165 + $0xa8] sm:$0xf]
      %v255 = vld [vmem:[%s165 + $0xac] sm:$0xf]
      %v256 = vld [vmem:[%s165 + $0xb4] sm:$0xf]
      %v257 = vld [vmem:[%s165 + $0xb8] sm:$0xf]
      %v258 = vld [vmem:[%s1] sm:$0xf]
      %v259 = vld [vmem:[%s1 + $0x4] sm:$0xf]
      %v260 = vld [vmem:[%s1 + $0x8] sm:$0xf]
      %v261 = vld [vmem:[%s1 + $0xc] sm:$0xf]
      %v262 = vld [vmem:[%s1 + $0x10] sm:$0xf]
      %v263 = vld [vmem:[%s1 + $0x14] sm:$0xf]
      %v264 = vld [vmem:[%s1 + $0x18] sm:$0xf]
      %v265 = vld [vmem:[%s1 + $0x1c] sm:$0xf]
      %v266 = vld [vmem:[%s1 + $0x20] sm:$0xf]
      %v267 = vld [vmem:[%s1 + $0x24] sm:$0xf]
      %v268 = vld [vmem:[%s1 + $0x28] sm:$0xf]
      %v269 = vld [vmem:[%s1 + $0x2c] sm:$0xf]
      %v270 = vld [vmem:[%s1 + $0x30] sm:$0xf]
      %v271 = vld [vmem:[%s1 + $0x34] sm:$0xf]
      %v272 = vld [vmem:[%s1 + $0x38] sm:$0xf]
      %v273 = vld [vmem:[%s1 + $0x3c] sm:$0xf]
      %v274 = vld [vmem:[%s165 + $0x8] sm:$0x1]
      %v275 = vld [vmem:[%s165 + $0x14] sm:$0x1]
      %v276 = vld [vmem:[%s165 + $0x20] sm:$0x1]
      %v277 = vld [vmem:[%s165 + $0x2c] sm:$0x1]
      %v278 = vld [vmem:[%s165 + $0x38] sm:$0x1]
      %v279 = vld [vmem:[%s165 + $0x44] sm:$0x1]
      %v280 = vld [vmem:[%s165 + $0x50] sm:$0x1]
      %v281 = vld [vmem:[%s165 + $0x5c] sm:$0x1]
      %v282 = vld [vmem:[%s165 + $0x68] sm:$0x1]
      %v283 = vld [vmem:[%s165 + $0x74] sm:$0x1]
      %v284 = vld [vmem:[%s165 + $0x80] sm:$0x1]
      %v285 = vld [vmem:[%s165 + $0x8c] sm:$0x1]
      %v286 = vld [vmem:[%s165 + $0x98] sm:$0x1]
      %v287 = vld [vmem:[%s165 + $0xa4] sm:$0x1]
      %v288 = vld [vmem:[%s165 + $0xb0] sm:$0x1]
      %v289 = vld [vmem:[%s165 + $0xbc] sm:$0x1]
      %vm290 = vsmask.f32 3328
      %vm291 = vsmask.f32 7440
      %vm292 = vmor %vm290, %vm291
      %v294 = vshrl.u32 %v226, 16
      %v296 = vrot.slane %v294, 4
      %v297 = vshll.u32 %v226, 16
      %v299 = vrot.slane %v297, 5
      %v300 = vor.u32 %v296, %v299
      %v301 = vrot.slane %v300, 4
      %v303 = vshll.u32 %v227, 16
      %v305 = vrot.slane %v303, 5
      %v306 = vsel %vm292, %v301, %v305
      %v307 = vshrl.u32 %v227, 16
      %v309 = vrot.slane %v307, 4
      %v310 = vor.u32 %v309, %v305
      %v311 = vrot.slane %v310, 4
      %v313 = vshll.u32 %v274, 16
      %v315 = vrot.slane %v313, 5
      %v316 = vsel %vm292, %v311, %v315
      %v318 = vshrl.u32 %v228, 16
      %v320 = vrot.slane %v318, 4
      %v321 = vshll.u32 %v228, 16
      %v323 = vrot.slane %v321, 5
      %v324 = vor.u32 %v320, %v323
      %v325 = vrot.slane %v324, 4
      %v327 = vshll.u32 %v229, 16
      %v329 = vrot.slane %v327, 5
      %v330 = vsel %vm292, %v325, %v329
      %v331 = vshrl.u32 %v229, 16
      %v333 = vrot.slane %v331, 4
      %v334 = vor.u32 %v333, %v329
      %v335 = vrot.slane %v334, 4
      %v337 = vshll.u32 %v275, 16
      %v339 = vrot.slane %v337, 5
      %v340 = vsel %vm292, %v335, %v339
      %v342 = vshrl.u32 %v230, 16
      %v344 = vrot.slane %v342, 4
      %v345 = vshll.u32 %v230, 16
      %v347 = vrot.slane %v345, 5
      %v348 = vor.u32 %v344, %v347
      %v349 = vrot.slane %v348, 4
      %v351 = vshll.u32 %v231, 16
      %v353 = vrot.slane %v351, 5
      %v354 = vsel %vm292, %v349, %v353
      %v355 = vshrl.u32 %v231, 16
      %v357 = vrot.slane %v355, 4
      %v358 = vor.u32 %v357, %v353
      %v359 = vrot.slane %v358, 4
      %v361 = vshll.u32 %v276, 16
      %v363 = vrot.slane %v361, 5
      %v364 = vsel %vm292, %v359, %v363
      %v366 = vshrl.u32 %v232, 16
      %v368 = vrot.slane %v366, 4
      %v369 = vshll.u32 %v232, 16
      %v371 = vrot.slane %v369, 5
      %v372 = vor.u32 %v368, %v371
      %v373 = vrot.slane %v372, 4
      %v375 = vshll.u32 %v233, 16
      %v377 = vrot.slane %v375, 5
      %v378 = vsel %vm292, %v373, %v377
      %v379 = vshrl.u32 %v233, 16
      %v381 = vrot.slane %v379, 4
      %v382 = vor.u32 %v381, %v377
      %v383 = vrot.slane %v382, 4
      %v385 = vshll.u32 %v277, 16
      %v387 = vrot.slane %v385, 5
      %v388 = vsel %vm292, %v383, %v387
      %v390 = vshrl.u32 %v234, 16
      %v392 = vrot.slane %v390, 4
      %v393 = vshll.u32 %v234, 16
      %v395 = vrot.slane %v393, 5
      %v396 = vor.u32 %v392, %v395
      %v397 = vrot.slane %v396, 4
      %v399 = vshll.u32 %v235, 16
      %v401 = vrot.slane %v399, 5
      %v402 = vsel %vm292, %v397, %v401
      %v403 = vshrl.u32 %v235, 16
      %v405 = vrot.slane %v403, 4
      %v406 = vor.u32 %v405, %v401
      %v407 = vrot.slane %v406, 4
      %v409 = vshll.u32 %v278, 16
      %v411 = vrot.slane %v409, 5
      %v412 = vsel %vm292, %v407, %v411
      %v414 = vshrl.u32 %v236, 16
      %v416 = vrot.slane %v414, 4
      %v417 = vshll.u32 %v236, 16
      %v419 = vrot.slane %v417, 5
      %v420 = vor.u32 %v416, %v419
      %v421 = vrot.slane %v420, 4
      %v423 = vshll.u32 %v237, 16
      %v425 = vrot.slane %v423, 5
      %v426 = vsel %vm292, %v421, %v425
      %v427 = vshrl.u32 %v237, 16
      %v429 = vrot.slane %v427, 4
      %v430 = vor.u32 %v429, %v425
      %v431 = vrot.slane %v430, 4
      %v433 = vshll.u32 %v279, 16
      %v435 = vrot.slane %v433, 5
      %v436 = vsel %vm292, %v431, %v435
      %v438 = vshrl.u32 %v238, 16
      %v440 = vrot.slane %v438, 4
      %v441 = vshll.u32 %v238, 16
      %v443 = vrot.slane %v441, 5
      %v444 = vor.u32 %v440, %v443
      %v445 = vrot.slane %v444, 4
      %v447 = vshll.u32 %v239, 16
      %v449 = vrot.slane %v447, 5
      %v450 = vsel %vm292, %v445, %v449
      %v451 = vshrl.u32 %v239, 16
      %v453 = vrot.slane %v451, 4
      %v454 = vor.u32 %v453, %v449
      %v455 = vrot.slane %v454, 4
      %v457 = vshll.u32 %v280, 16
      %v459 = vrot.slane %v457, 5
      %v460 = vsel %vm292, %v455, %v459
      %v462 = vshrl.u32 %v240, 16
      %v464 = vrot.slane %v462, 4
      %v465 = vshll.u32 %v240, 16
      %v467 = vrot.slane %v465, 5
      %v468 = vor.u32 %v464, %v467
      %v469 = vrot.slane %v468, 4
      %v471 = vshll.u32 %v241, 16
      %v473 = vrot.slane %v471, 5
      %v474 = vsel %vm292, %v469, %v473
      %v475 = vshrl.u32 %v241, 16
      %v477 = vrot.slane %v475, 4
      %v478 = vor.u32 %v477, %v473
      %v479 = vrot.slane %v478, 4
      %v481 = vshll.u32 %v281, 16
      %v483 = vrot.slane %v481, 5
      %v484 = vsel %vm292, %v479, %v483
      %v486 = vshrl.u32 %v242, 16
      %v488 = vrot.slane %v486, 4
      %v489 = vshll.u32 %v242, 16
      %v491 = vrot.slane %v489, 5
      %v492 = vor.u32 %v488, %v491
      %v493 = vrot.slane %v492, 4
      %v495 = vshll.u32 %v243, 16
      %v497 = vrot.slane %v495, 5
      %v498 = vsel %vm292, %v493, %v497
      %v499 = vshrl.u32 %v243, 16
      %v501 = vrot.slane %v499, 4
      %v502 = vor.u32 %v501, %v497
      %v503 = vrot.slane %v502, 4
      %v505 = vshll.u32 %v282, 16
      %v507 = vrot.slane %v505, 5
      %v508 = vsel %vm292, %v503, %v507
      %v510 = vshrl.u32 %v244, 16
      %v512 = vrot.slane %v510, 4
      %v513 = vshll.u32 %v244, 16
      %v515 = vrot.slane %v513, 5
      %v516 = vor.u32 %v512, %v515
      %v517 = vrot.slane %v516, 4
      %v519 = vshll.u32 %v245, 16
      %v521 = vrot.slane %v519, 5
      %v522 = vsel %vm292, %v517, %v521
      %v523 = vshrl.u32 %v245, 16
      %v525 = vrot.slane %v523, 4
      %v526 = vor.u32 %v525, %v521
      %v527 = vrot.slane %v526, 4
      %v529 = vshll.u32 %v283, 16
      %v531 = vrot.slane %v529, 5
      %v532 = vsel %vm292, %v527, %v531
      %v534 = vshrl.u32 %v246, 16
      %v536 = vrot.slane %v534, 4
      %v537 = vshll.u32 %v246, 16
      %v539 = vrot.slane %v537, 5
      %v540 = vor.u32 %v536, %v539
      %v541 = vrot.slane %v540, 4
      %v543 = vshll.u32 %v247, 16
      %v545 = vrot.slane %v543, 5
      %v546 = vsel %vm292, %v541, %v545
      %v547 = vshrl.u32 %v247, 16
      %v549 = vrot.slane %v547, 4
      %v550 = vor.u32 %v549, %v545
      %v551 = vrot.slane %v550, 4
      %v553 = vshll.u32 %v284, 16
      %v555 = vrot.slane %v553, 5
      %v556 = vsel %vm292, %v551, %v555
      %v558 = vshrl.u32 %v248, 16
      %v560 = vrot.slane %v558, 4
      %v561 = vshll.u32 %v248, 16
      %v563 = vrot.slane %v561, 5
      %v564 = vor.u32 %v560, %v563
      %v565 = vrot.slane %v564, 4
      %v567 = vshll.u32 %v249, 16
      %v569 = vrot.slane %v567, 5
      %v570 = vsel %vm292, %v565, %v569
      %v571 = vshrl.u32 %v249, 16
      %v573 = vrot.slane %v571, 4
      %v574 = vor.u32 %v573, %v569
      %v575 = vrot.slane %v574, 4
      %v577 = vshll.u32 %v285, 16
      %v579 = vrot.slane %v577, 5
      %v580 = vsel %vm292, %v575, %v579
      %v582 = vshrl.u32 %v250, 16
      %v584 = vrot.slane %v582, 4
      %v585 = vshll.u32 %v250, 16
      %v587 = vrot.slane %v585, 5
      %v588 = vor.u32 %v584, %v587
      %v589 = vrot.slane %v588, 4
      %v591 = vshll.u32 %v251, 16
      %v593 = vrot.slane %v591, 5
      %v594 = vsel %vm292, %v589, %v593
      %v595 = vshrl.u32 %v251, 16
      %v597 = vrot.slane %v595, 4
      %v598 = vor.u32 %v597, %v593
      %v599 = vrot.slane %v598, 4
      %v601 = vshll.u32 %v286, 16
      %v603 = vrot.slane %v601, 5
      %v604 = vsel %vm292, %v599, %v603
      %v606 = vshrl.u32 %v252, 16
      %v608 = vrot.slane %v606, 4
      %v609 = vshll.u32 %v252, 16
      %v611 = vrot.slane %v609, 5
      %v612 = vor.u32 %v608, %v611
      %v613 = vrot.slane %v612, 4
      %v615 = vshll.u32 %v253, 16
      %v617 = vrot.slane %v615, 5
      %v618 = vsel %vm292, %v613, %v617
      %v619 = vshrl.u32 %v253, 16
      %v621 = vrot.slane %v619, 4
      %v622 = vor.u32 %v621, %v617
      %v623 = vrot.slane %v622, 4
      %v625 = vshll.u32 %v287, 16
      %v627 = vrot.slane %v625, 5
      %v628 = vsel %vm292, %v623, %v627
      %v630 = vshrl.u32 %v254, 16
      %v632 = vrot.slane %v630, 4
      %v633 = vshll.u32 %v254, 16
      %v635 = vrot.slane %v633, 5
      %v636 = vor.u32 %v632, %v635
      %v637 = vrot.slane %v636, 4
      %v639 = vshll.u32 %v255, 16
      %v641 = vrot.slane %v639, 5
      %v642 = vsel %vm292, %v637, %v641
      %v643 = vshrl.u32 %v255, 16
      %v645 = vrot.slane %v643, 4
      %v646 = vor.u32 %v645, %v641
      %v647 = vrot.slane %v646, 4
      %v649 = vshll.u32 %v288, 16
      %v651 = vrot.slane %v649, 5
      %v652 = vsel %vm292, %v647, %v651
      %v654 = vshrl.u32 %v256, 16
      %v656 = vrot.slane %v654, 4
      %v657 = vshll.u32 %v256, 16
      %v659 = vrot.slane %v657, 5
      %v660 = vor.u32 %v656, %v659
      %v661 = vrot.slane %v660, 4
      %v663 = vshll.u32 %v257, 16
      %v665 = vrot.slane %v663, 5
      %v666 = vsel %vm292, %v661, %v665
      %v667 = vshrl.u32 %v257, 16
      %v669 = vrot.slane %v667, 4
      %v670 = vor.u32 %v669, %v665
      %v671 = vrot.slane %v670, 4
      %v673 = vshll.u32 %v289, 16
      %v675 = vrot.slane %v673, 5
      %v676 = vsel %vm292, %v671, %v675
      %s677 = scalar_lea.vmem %s1, 64
      %v678 = vld [vmem:[%s677] sm:$0xf]
      %v679 = vld [vmem:[%s677 + $0x4] sm:$0xf]
      %v680 = vld [vmem:[%s677 + $0x8] sm:$0xf]
      %v681 = vld [vmem:[%s677 + $0xc] sm:$0xf]
      %v682 = vld [vmem:[%s677 + $0x10] sm:$0xf]
      %v683 = vld [vmem:[%s677 + $0x14] sm:$0xf]
      %v684 = vld [vmem:[%s677 + $0x18] sm:$0xf]
      %v685 = vld [vmem:[%s677 + $0x1c] sm:$0xf]
      %v686 = vld [vmem:[%s677 + $0x20] sm:$0xf]
      %v687 = vld [vmem:[%s677 + $0x24] sm:$0xf]
      %v688 = vld [vmem:[%s677 + $0x28] sm:$0xf]
      %v689 = vld [vmem:[%s677 + $0x2c] sm:$0xf]
      %v690 = vld [vmem:[%s677 + $0x30] sm:$0xf]
      %v691 = vld [vmem:[%s677 + $0x34] sm:$0xf]
      %v692 = vld [vmem:[%s677 + $0x38] sm:$0xf]
      %v693 = vld [vmem:[%s677 + $0x3c] sm:$0xf]
      %v694 = vunpack.c.l.b16 %v306
      %v695 = vunpack.c.l.b16 %v316
      %v696 = vunpack.c.l.b16 %v330
      %v697 = vunpack.c.l.b16 %v340
      %v698 = vunpack.c.l.b16 %v354
      %v699 = vunpack.c.l.b16 %v364
      %v700 = vunpack.c.l.b16 %v378
      %v701 = vunpack.c.l.b16 %v388
      %v702 = vunpack.c.l.b16 %v402
      %v703 = vunpack.c.l.b16 %v412
      %v704 = vunpack.c.l.b16 %v426
      %v705 = vunpack.c.l.b16 %v436
      %v706 = vunpack.c.l.b16 %v450
      %v707 = vunpack.c.l.b16 %v460
      %v708 = vunpack.c.l.b16 %v474
      %v709 = vunpack.c.l.b16 %v484
      %v710 = vunpack.c.l.b16 %v498
      %v711 = vunpack.c.l.b16 %v508
      %v712 = vunpack.c.l.b16 %v522
      %v713 = vunpack.c.l.b16 %v532
      %v714 = vunpack.c.l.b16 %v546
      %v715 = vunpack.c.l.b16 %v556
      %v716 = vunpack.c.l.b16 %v570
      %v717 = vunpack.c.l.b16 %v580
      %v718 = vunpack.c.l.b16 %v594
      %v719 = vunpack.c.l.b16 %v604
      %v720 = vunpack.c.l.b16 %v618
      %v721 = vunpack.c.l.b16 %v628
      %v722 = vunpack.c.l.b16 %v642
      %v723 = vunpack.c.l.b16 %v652
      %v724 = vunpack.c.l.b16 %v666
      %v725 = vunpack.c.l.b16 %v676
      %v726 = vpack.c.b16 %v695, %v694
      %v727 = vpack.c.b16 %v697, %v696
      %v728 = vpack.c.b16 %v699, %v698
      %v729 = vpack.c.b16 %v701, %v700
      %v730 = vpack.c.b16 %v703, %v702
      %v731 = vpack.c.b16 %v705, %v704
      %v732 = vpack.c.b16 %v707, %v706
      %v733 = vpack.c.b16 %v709, %v708
      %v734 = vpack.c.b16 %v711, %v710
      %v735 = vpack.c.b16 %v713, %v712
      %v736 = vpack.c.b16 %v715, %v714
      %v737 = vpack.c.b16 %v717, %v716
      %v738 = vpack.c.b16 %v719, %v718
      %v739 = vpack.c.b16 %v721, %v720
      %v740 = vpack.c.b16 %v723, %v722
      %v741 = vpack.c.b16 %v725, %v724
      %v774 = vunpack.c.l.b16 %v678
      %v775 = vunpack.c.l.b16 %v679
      %v776 = vunpack.c.l.b16 %v680
      %v777 = vunpack.c.l.b16 %v681
      %v778 = vunpack.c.l.b16 %v682
      %v779 = vunpack.c.l.b16 %v683
      %v780 = vunpack.c.l.b16 %v684
      %v781 = vunpack.c.l.b16 %v685
      %v782 = vunpack.c.l.b16 %v686
      %v783 = vunpack.c.l.b16 %v687
      %v784 = vunpack.c.l.b16 %v688
      %v785 = vunpack.c.l.b16 %v689
      %v786 = vunpack.c.l.b16 %v690
      %v787 = vunpack.c.l.b16 %v691
      %v788 = vunpack.c.l.b16 %v692
      %v789 = vunpack.c.l.b16 %v693
      %v790 = vpack.c.b16 %v775, %v774
      %v791 = vpack.c.b16 %v777, %v776
      %v792 = vpack.c.b16 %v779, %v778
      %v793 = vpack.c.b16 %v781, %v780
      %v794 = vpack.c.b16 %v783, %v782
      %v795 = vpack.c.b16 %v785, %v784
      %v796 = vpack.c.b16 %v787, %v786
      %v797 = vpack.c.b16 %v789, %v788
      %806 = vmatpush.bf16.msra.mxu0 %v797
      %807 = vmatpush.bf16.msra.mxu0 %v796
      %808 = vmatpush.bf16.msra.mxu0 %v795
      %809 = vmatpush.bf16.msra.mxu0 %v794
      %810 = vmatpush.bf16.msra.mxu0 %v793
      %811 = vmatpush.bf16.msra.mxu0 %v792
      %812 = vmatpush.bf16.msra.mxu0 %v791
      %813 = vmatpush.bf16.msra.mxu0 %v790
      %814 = vmatmul.bf16.gmra.mxu0 %v726
      %v815 = vpop.f32.mrf.mxu0
      %v816 = vadd.f32 0.0, %v815
      %v817 = vpop.f32.mrf.mxu0
      %v818 = vadd.f32 0.0, %v817
      %819 = vmatmul.bf16.gmra.mxu0 %v727
      %v820 = vpop.f32.mrf.mxu0
      %v821 = vadd.f32 0.0, %v820
      %v822 = vpop.f32.mrf.mxu0
      %v823 = vadd.f32 0.0, %v822
      %824 = vmatmul.bf16.gmra.mxu0 %v728
      %v825 = vpop.f32.mrf.mxu0
      %v826 = vadd.f32 0.0, %v825
      %v827 = vpop.f32.mrf.mxu0
      %v828 = vadd.f32 0.0, %v827
      %829 = vmatmul.bf16.gmra.mxu0 %v729
      %v830 = vpop.f32.mrf.mxu0
      %v831 = vadd.f32 0.0, %v830
      %v832 = vpop.f32.mrf.mxu0
      %v833 = vadd.f32 0.0, %v832
      %834 = vmatmul.bf16.gmra.mxu0 %v730
      %v835 = vpop.f32.mrf.mxu0
      %v836 = vadd.f32 0.0, %v835
      %v837 = vpop.f32.mrf.mxu0
      %v838 = vadd.f32 0.0, %v837
      %839 = vmatmul.bf16.gmra.mxu0 %v731
      %v840 = vpop.f32.mrf.mxu0
      %v841 = vadd.f32 0.0, %v840
      %v842 = vpop.f32.mrf.mxu0
      %v843 = vadd.f32 0.0, %v842
      %844 = vmatmul.bf16.gmra.mxu0 %v732
      %v845 = vpop.f32.mrf.mxu0
      %v846 = vadd.f32 0.0, %v845
      %v847 = vpop.f32.mrf.mxu0
      %v848 = vadd.f32 0.0, %v847
      %849 = vmatmul.bf16.gmra.mxu0 %v733
      %v850 = vpop.f32.mrf.mxu0
      %v851 = vadd.f32 0.0, %v850
      %v852 = vpop.f32.mrf.mxu0
      %v853 = vadd.f32 0.0, %v852
      %854 = vmatmul.bf16.gmra.mxu0 %v734
      %v855 = vpop.f32.mrf.mxu0
      %v856 = vadd.f32 0.0, %v855
      %v857 = vpop.f32.mrf.mxu0
      %v858 = vadd.f32 0.0, %v857
      %859 = vmatmul.bf16.gmra.mxu0 %v735
      %v860 = vpop.f32.mrf.mxu0
      %v861 = vadd.f32 0.0, %v860
      %v862 = vpop.f32.mrf.mxu0
      %v863 = vadd.f32 0.0, %v862
      %864 = vmatmul.bf16.gmra.mxu0 %v736
      %v865 = vpop.f32.mrf.mxu0
      %v866 = vadd.f32 0.0, %v865
      %v867 = vpop.f32.mrf.mxu0
      %v868 = vadd.f32 0.0, %v867
      %869 = vmatmul.bf16.gmra.mxu0 %v737
      %v870 = vpop.f32.mrf.mxu0
      %v871 = vadd.f32 0.0, %v870
      %v872 = vpop.f32.mrf.mxu0
      %v873 = vadd.f32 0.0, %v872
      %874 = vmatmul.bf16.gmra.mxu0 %v738
      %v875 = vpop.f32.mrf.mxu0
      %v876 = vadd.f32 0.0, %v875
      %v877 = vpop.f32.mrf.mxu0
      %v878 = vadd.f32 0.0, %v877
      %879 = vmatmul.bf16.gmra.mxu0 %v739
      %v880 = vpop.f32.mrf.mxu0
      %v881 = vadd.f32 0.0, %v880
      %v882 = vpop.f32.mrf.mxu0
      %v883 = vadd.f32 0.0, %v882
      %884 = vmatmul.bf16.gmra.mxu0 %v740
      %v885 = vpop.f32.mrf.mxu0
      %v886 = vadd.f32 0.0, %v885
      %v887 = vpop.f32.mrf.mxu0
      %v888 = vadd.f32 0.0, %v887
      %889 = vmatmul.bf16.gmra.mxu0 %v741
      %v890 = vpop.f32.mrf.mxu0
      %v891 = vadd.f32 0.0, %v890
      %v892 = vpop.f32.mrf.mxu0
      %v893 = vadd.f32 0.0, %v892
      %894 = vdwg.mxu0
      %v927 = vunpack.c.l.b16 %v226
      %v928 = vunpack.c.l.b16 %v227
      %v929 = vunpack.c.l.b16 %v228
      %v930 = vunpack.c.l.b16 %v229
      %v931 = vunpack.c.l.b16 %v230
      %v932 = vunpack.c.l.b16 %v231
      %v933 = vunpack.c.l.b16 %v232
      %v934 = vunpack.c.l.b16 %v233
      %v935 = vunpack.c.l.b16 %v234
      %v936 = vunpack.c.l.b16 %v235
      %v937 = vunpack.c.l.b16 %v236
      %v938 = vunpack.c.l.b16 %v237
      %v939 = vunpack.c.l.b16 %v238
      %v940 = vunpack.c.l.b16 %v239
      %v941 = vunpack.c.l.b16 %v240
      %v942 = vunpack.c.l.b16 %v241
      %v943 = vunpack.c.l.b16 %v242
      %v944 = vunpack.c.l.b16 %v243
      %v945 = vunpack.c.l.b16 %v244
      %v946 = vunpack.c.l.b16 %v245
      %v947 = vunpack.c.l.b16 %v246
      %v948 = vunpack.c.l.b16 %v247
      %v949 = vunpack.c.l.b16 %v248
      %v950 = vunpack.c.l.b16 %v249
      %v951 = vunpack.c.l.b16 %v250
      %v952 = vunpack.c.l.b16 %v251
      %v953 = vunpack.c.l.b16 %v252
      %v954 = vunpack.c.l.b16 %v253
      %v955 = vunpack.c.l.b16 %v254
      %v956 = vunpack.c.l.b16 %v255
      %v957 = vunpack.c.l.b16 %v256
      %v958 = vunpack.c.l.b16 %v257
      %v959 = vpack.c.b16 %v928, %v927
      %v960 = vpack.c.b16 %v930, %v929
      %v961 = vpack.c.b16 %v932, %v931
      %v962 = vpack.c.b16 %v934, %v933
      %v963 = vpack.c.b16 %v936, %v935
      %v964 = vpack.c.b16 %v938, %v937
      %v965 = vpack.c.b16 %v940, %v939
      %v966 = vpack.c.b16 %v942, %v941
      %v967 = vpack.c.b16 %v944, %v943
      %v968 = vpack.c.b16 %v946, %v945
      %v969 = vpack.c.b16 %v948, %v947
      %v970 = vpack.c.b16 %v950, %v949
      %v971 = vpack.c.b16 %v952, %v951
      %v972 = vpack.c.b16 %v954, %v953
      %v973 = vpack.c.b16 %v956, %v955
      %v974 = vpack.c.b16 %v958, %v957
      %v1007 = vunpack.c.l.b16 %v258
      %v1008 = vunpack.c.l.b16 %v259
      %v1009 = vunpack.c.l.b16 %v260
      %v1010 = vunpack.c.l.b16 %v261
      %v1011 = vunpack.c.l.b16 %v262
      %v1012 = vunpack.c.l.b16 %v263
      %v1013 = vunpack.c.l.b16 %v264
      %v1014 = vunpack.c.l.b16 %v265
      %v1015 = vunpack.c.l.b16 %v266
      %v1016 = vunpack.c.l.b16 %v267
      %v1017 = vunpack.c.l.b16 %v268
      %v1018 = vunpack.c.l.b16 %v269
      %v1019 = vunpack.c.l.b16 %v270
      %v1020 = vunpack.c.l.b16 %v271
      %v1021 = vunpack.c.l.b16 %v272
      %v1022 = vunpack.c.l.b16 %v273
      %v1023 = vpack.c.b16 %v1008, %v1007
      %v1024 = vpack.c.b16 %v1010, %v1009
      %v1025 = vpack.c.b16 %v1012, %v1011
      %v1026 = vpack.c.b16 %v1014, %v1013
      %v1027 = vpack.c.b16 %v1016, %v1015
      %v1028 = vpack.c.b16 %v1018, %v1017
      %v1029 = vpack.c.b16 %v1020, %v1019
      %v1030 = vpack.c.b16 %v1022, %v1021
      %1039 = vmatpush.bf16.msra.mxu0 %v1030
      %1040 = vmatpush.bf16.msra.mxu0 %v1029
      %1041 = vmatpush.bf16.msra.mxu0 %v1028
      %1042 = vmatpush.bf16.msra.mxu0 %v1027
      %1043 = vmatpush.bf16.msra.mxu0 %v1026
      %1044 = vmatpush.bf16.msra.mxu0 %v1025
      %1045 = vmatpush.bf16.msra.mxu0 %v1024
      %1046 = vmatpush.bf16.msra.mxu0 %v1023
      %1047 = vmatmul.bf16.gmra.mxu0 %v959
      %v1048 = vpop.f32.mrf.mxu0
      %v1049 = vadd.f32 %v816, %v1048
      %v1050 = vpop.f32.mrf.mxu0
      %v1051 = vadd.f32 %v818, %v1050
      %1052 = vmatmul.bf16.gmra.mxu0 %v960
      %v1053 = vpop.f32.mrf.mxu0
      %v1054 = vadd.f32 %v821, %v1053
      %v1055 = vpop.f32.mrf.mxu0
      %v1056 = vadd.f32 %v823, %v1055
      %1057 = vmatmul.bf16.gmra.mxu0 %v961
      %v1058 = vpop.f32.mrf.mxu0
      %v1059 = vadd.f32 %v826, %v1058
      %v1060 = vpop.f32.mrf.mxu0
      %v1061 = vadd.f32 %v828, %v1060
      %1062 = vmatmul.bf16.gmra.mxu0 %v962
      %v1063 = vpop.f32.mrf.mxu0
      %v1064 = vadd.f32 %v831, %v1063
      %v1065 = vpop.f32.mrf.mxu0
      %v1066 = vadd.f32 %v833, %v1065
      %1067 = vmatmul.bf16.gmra.mxu0 %v963
      %v1068 = vpop.f32.mrf.mxu0
      %v1069 = vadd.f32 %v836, %v1068
      %v1070 = vpop.f32.mrf.mxu0
      %v1071 = vadd.f32 %v838, %v1070
      %1072 = vmatmul.bf16.gmra.mxu0 %v964
      %v1073 = vpop.f32.mrf.mxu0
      %v1074 = vadd.f32 %v841, %v1073
      %v1075 = vpop.f32.mrf.mxu0
      %v1076 = vadd.f32 %v843, %v1075
      %1077 = vmatmul.bf16.gmra.mxu0 %v965
      %v1078 = vpop.f32.mrf.mxu0
      %v1079 = vadd.f32 %v846, %v1078
      %v1080 = vpop.f32.mrf.mxu0
      %v1081 = vadd.f32 %v848, %v1080
      %1082 = vmatmul.bf16.gmra.mxu0 %v966
      %v1083 = vpop.f32.mrf.mxu0
      %v1084 = vadd.f32 %v851, %v1083
      %v1085 = vpop.f32.mrf.mxu0
      %v1086 = vadd.f32 %v853, %v1085
      %1087 = vmatmul.bf16.gmra.mxu0 %v967
      %v1088 = vpop.f32.mrf.mxu0
      %v1089 = vadd.f32 %v856, %v1088
      %v1090 = vpop.f32.mrf.mxu0
      %v1091 = vadd.f32 %v858, %v1090
      %1092 = vmatmul.bf16.gmra.mxu0 %v968
      %v1093 = vpop.f32.mrf.mxu0
      %v1094 = vadd.f32 %v861, %v1093
      %v1095 = vpop.f32.mrf.mxu0
      %v1096 = vadd.f32 %v863, %v1095
      %1097 = vmatmul.bf16.gmra.mxu0 %v969
      %v1098 = vpop.f32.mrf.mxu0
      %v1099 = vadd.f32 %v866, %v1098
      %v1100 = vpop.f32.mrf.mxu0
      %v1101 = vadd.f32 %v868, %v1100
      %1102 = vmatmul.bf16.gmra.mxu0 %v970
      %v1103 = vpop.f32.mrf.mxu0
      %v1104 = vadd.f32 %v871, %v1103
      %v1105 = vpop.f32.mrf.mxu0
      %v1106 = vadd.f32 %v873, %v1105
      %1107 = vmatmul.bf16.gmra.mxu0 %v971
      %v1108 = vpop.f32.mrf.mxu0
      %v1109 = vadd.f32 %v876, %v1108
      %v1110 = vpop.f32.mrf.mxu0
      %v1111 = vadd.f32 %v878, %v1110
      %1112 = vmatmul.bf16.gmra.mxu0 %v972
      %v1113 = vpop.f32.mrf.mxu0
      %v1114 = vadd.f32 %v881, %v1113
      %v1115 = vpop.f32.mrf.mxu0
      %v1116 = vadd.f32 %v883, %v1115
      %1117 = vmatmul.bf16.gmra.mxu0 %v973
      %v1118 = vpop.f32.mrf.mxu0
      %v1119 = vadd.f32 %v886, %v1118
      %v1120 = vpop.f32.mrf.mxu0
      %v1121 = vadd.f32 %v888, %v1120
      %1122 = vmatmul.bf16.gmra.mxu0 %v974
      %v1123 = vpop.f32.mrf.mxu0
      %v1124 = vadd.f32 %v891, %v1123
      %v1125 = vpop.f32.mrf.mxu0
      %v1126 = vadd.f32 %v893, %v1125
      %1127 = vdwg.mxu0
      %v1128 = vld [vmem:[%s165] sm:$0xe]
      %v1129 = vld [vmem:[%s165 + $0xc] sm:$0xe]
      %v1130 = vld [vmem:[%s165 + $0x18] sm:$0xe]
      %v1131 = vld [vmem:[%s165 + $0x24] sm:$0xe]
      %v1132 = vld [vmem:[%s165 + $0x30] sm:$0xe]
      %v1133 = vld [vmem:[%s165 + $0x3c] sm:$0xe]
      %v1134 = vld [vmem:[%s165 + $0x48] sm:$0xe]
      %v1135 = vld [vmem:[%s165 + $0x54] sm:$0xe]
      %v1136 = vld [vmem:[%s165 + $0x60] sm:$0xe]
      %v1137 = vld [vmem:[%s165 + $0x6c] sm:$0xe]
      %v1138 = vld [vmem:[%s165 + $0x78] sm:$0xe]
      %v1139 = vld [vmem:[%s165 + $0x84] sm:$0xe]
      %v1140 = vld [vmem:[%s165 + $0x90] sm:$0xe]
      %v1141 = vld [vmem:[%s165 + $0x9c] sm:$0xe]
      %v1142 = vld [vmem:[%s165 + $0xa8] sm:$0xe]
      %v1143 = vld [vmem:[%s165 + $0xb4] sm:$0xe]
      %vm1176 = vcmask 1042432
      %vm1177 = vcmask 1046532
      %vm1178 = vmor %vm1176, %vm1177
      %v1179 = vrot.slane %v1128, 5
      %v1180 = vrot.slane %v1179, 4
      %v1181 = vrot.slane %v227, 5
      %v1182 = vsel %vm1178, %v1180, %v1181
      %v1183 = vrot.slane %v1181, 4
      %v1184 = vrot.slane %v274, 5
      %v1185 = vsel %vm1178, %v1183, %v1184
      %v1186 = vrot.slane %v1129, 5
      %v1187 = vrot.slane %v1186, 4
      %v1188 = vrot.slane %v229, 5
      %v1189 = vsel %vm1178, %v1187, %v1188
      %v1190 = vrot.slane %v1188, 4
      %v1191 = vrot.slane %v275, 5
      %v1192 = vsel %vm1178, %v1190, %v1191
      %v1193 = vrot.slane %v1130, 5
      %v1194 = vrot.slane %v1193, 4
      %v1195 = vrot.slane %v231, 5
      %v1196 = vsel %vm1178, %v1194, %v1195
      %v1197 = vrot.slane %v1195, 4
      %v1198 = vrot.slane %v276, 5
      %v1199 = vsel %vm1178, %v1197, %v1198
      %v1200 = vrot.slane %v1131, 5
      %v1201 = vrot.slane %v1200, 4
      %v1202 = vrot.slane %v233, 5
      %v1203 = vsel %vm1178, %v1201, %v1202
      %v1204 = vrot.slane %v1202, 4
      %v1205 = vrot.slane %v277, 5
      %v1206 = vsel %vm1178, %v1204, %v1205
      %v1207 = vrot.slane %v1132, 5
      %v1208 = vrot.slane %v1207, 4
      %v1209 = vrot.slane %v235, 5
      %v1210 = vsel %vm1178, %v1208, %v1209
      %v1211 = vrot.slane %v1209, 4
      %v1212 = vrot.slane %v278, 5
      %v1213 = vsel %vm1178, %v1211, %v1212
      %v1214 = vrot.slane %v1133, 5
      %v1215 = vrot.slane %v1214, 4
      %v1216 = vrot.slane %v237, 5
      %v1217 = vsel %vm1178, %v1215, %v1216
      %v1218 = vrot.slane %v1216, 4
      %v1219 = vrot.slane %v279, 5
      %v1220 = vsel %vm1178, %v1218, %v1219
      %v1221 = vrot.slane %v1134, 5
      %v1222 = vrot.slane %v1221, 4
      %v1223 = vrot.slane %v239, 5
      %v1224 = vsel %vm1178, %v1222, %v1223
      %v1225 = vrot.slane %v1223, 4
      %v1226 = vrot.slane %v280, 5
      %v1227 = vsel %vm1178, %v1225, %v1226
      %v1228 = vrot.slane %v1135, 5
      %v1229 = vrot.slane %v1228, 4
      %v1230 = vrot.slane %v241, 5
      %v1231 = vsel %vm1178, %v1229, %v1230
      %v1232 = vrot.slane %v1230, 4
      %v1233 = vrot.slane %v281, 5
      %v1234 = vsel %vm1178, %v1232, %v1233
      %v1235 = vrot.slane %v1136, 5
      %v1236 = vrot.slane %v1235, 4
      %v1237 = vrot.slane %v243, 5
      %v1238 = vsel %vm1178, %v1236, %v1237
      %v1239 = vrot.slane %v1237, 4
      %v1240 = vrot.slane %v282, 5
      %v1241 = vsel %vm1178, %v1239, %v1240
      %v1242 = vrot.slane %v1137, 5
      %v1243 = vrot.slane %v1242, 4
      %v1244 = vrot.slane %v245, 5
      %v1245 = vsel %vm1178, %v1243, %v1244
      %v1246 = vrot.slane %v1244, 4
      %v1247 = vrot.slane %v283, 5
      %v1248 = vsel %vm1178, %v1246, %v1247
      %v1249 = vrot.slane %v1138, 5
      %v1250 = vrot.slane %v1249, 4
      %v1251 = vrot.slane %v247, 5
      %v1252 = vsel %vm1178, %v1250, %v1251
      %v1253 = vrot.slane %v1251, 4
      %v1254 = vrot.slane %v284, 5
      %v1255 = vsel %vm1178, %v1253, %v1254
      %v1256 = vrot.slane %v1139, 5
      %v1257 = vrot.slane %v1256, 4
      %v1258 = vrot.slane %v249, 5
      %v1259 = vsel %vm1178, %v1257, %v1258
      %v1260 = vrot.slane %v1258, 4
      %v1261 = vrot.slane %v285, 5
      %v1262 = vsel %vm1178, %v1260, %v1261
      %v1263 = vrot.slane %v1140, 5
      %v1264 = vrot.slane %v1263, 4
      %v1265 = vrot.slane %v251, 5
      %v1266 = vsel %vm1178, %v1264, %v1265
      %v1267 = vrot.slane %v1265, 4
      %v1268 = vrot.slane %v286, 5
      %v1269 = vsel %vm1178, %v1267, %v1268
      %v1270 = vrot.slane %v1141, 5
      %v1271 = vrot.slane %v1270, 4
      %v1272 = vrot.slane %v253, 5
      %v1273 = vsel %vm1178, %v1271, %v1272
      %v1274 = vrot.slane %v1272, 4
      %v1275 = vrot.slane %v287, 5
      %v1276 = vsel %vm1178, %v1274, %v1275
      %v1277 = vrot.slane %v1142, 5
      %v1278 = vrot.slane %v1277, 4
      %v1279 = vrot.slane %v255, 5
      %v1280 = vsel %vm1178, %v1278, %v1279
      %v1281 = vrot.slane %v1279, 4
      %v1282 = vrot.slane %v288, 5
      %v1283 = vsel %vm1178, %v1281, %v1282
      %v1284 = vrot.slane %v1143, 5
      %v1285 = vrot.slane %v1284, 4
      %v1286 = vrot.slane %v257, 5
      %v1287 = vsel %vm1178, %v1285, %v1286
      %v1288 = vrot.slane %v1286, 4
      %v1289 = vrot.slane %v289, 5
      %v1290 = vsel %vm1178, %v1288, %v1289
      %s1291 = scalar_lea.vmem %s1, 128
      %v1292 = vld [vmem:[%s1291] sm:$0xf]
      %v1293 = vld [vmem:[%s1291 + $0x4] sm:$0xf]
      %v1294 = vld [vmem:[%s1291 + $0x8] sm:$0xf]
      %v1295 = vld [vmem:[%s1291 + $0xc] sm:$0xf]
      %v1296 = vld [vmem:[%s1291 + $0x10] sm:$0xf]
      %v1297 = vld [vmem:[%s1291 + $0x14] sm:$0xf]
      %v1298 = vld [vmem:[%s1291 + $0x18] sm:$0xf]
      %v1299 = vld [vmem:[%s1291 + $0x1c] sm:$0xf]
      %v1300 = vld [vmem:[%s1291 + $0x20] sm:$0xf]
      %v1301 = vld [vmem:[%s1291 + $0x24] sm:$0xf]
      %v1302 = vld [vmem:[%s1291 + $0x28] sm:$0xf]
      %v1303 = vld [vmem:[%s1291 + $0x2c] sm:$0xf]
      %v1304 = vld [vmem:[%s1291 + $0x30] sm:$0xf]
      %v1305 = vld [vmem:[%s1291 + $0x34] sm:$0xf]
      %v1306 = vld [vmem:[%s1291 + $0x38] sm:$0xf]
      %v1307 = vld [vmem:[%s1291 + $0x3c] sm:$0xf]
      %v1308 = vunpack.c.l.b16 %v1182
      %v1309 = vunpack.c.l.b16 %v1185
      %v1310 = vunpack.c.l.b16 %v1189
      %v1311 = vunpack.c.l.b16 %v1192
      %v1312 = vunpack.c.l.b16 %v1196
      %v1313 = vunpack.c.l.b16 %v1199
      %v1314 = vunpack.c.l.b16 %v1203
      %v1315 = vunpack.c.l.b16 %v1206
      %v1316 = vunpack.c.l.b16 %v1210
      %v1317 = vunpack.c.l.b16 %v1213
      %v1318 = vunpack.c.l.b16 %v1217
      %v1319 = vunpack.c.l.b16 %v1220
      %v1320 = vunpack.c.l.b16 %v1224
      %v1321 = vunpack.c.l.b16 %v1227
      %v1322 = vunpack.c.l.b16 %v1231
      %v1323 = vunpack.c.l.b16 %v1234
      %v1324 = vunpack.c.l.b16 %v1238
      %v1325 = vunpack.c.l.b16 %v1241
      %v1326 = vunpack.c.l.b16 %v1245
      %v1327 = vunpack.c.l.b16 %v1248
      %v1328 = vunpack.c.l.b16 %v1252
      %v1329 = vunpack.c.l.b16 %v1255
      %v1330 = vunpack.c.l.b16 %v1259
      %v1331 = vunpack.c.l.b16 %v1262
      %v1332 = vunpack.c.l.b16 %v1266
      %v1333 = vunpack.c.l.b16 %v1269
      %v1334 = vunpack.c.l.b16 %v1273
      %v1335 = vunpack.c.l.b16 %v1276
      %v1336 = vunpack.c.l.b16 %v1280
      %v1337 = vunpack.c.l.b16 %v1283
      %v1338 = vunpack.c.l.b16 %v1287
      %v1339 = vunpack.c.l.b16 %v1290
      %v1340 = vpack.c.b16 %v1309, %v1308
      %v1341 = vpack.c.b16 %v1311, %v1310
      %v1342 = vpack.c.b16 %v1313, %v1312
      %v1343 = vpack.c.b16 %v1315, %v1314
      %v1344 = vpack.c.b16 %v1317, %v1316
      %v1345 = vpack.c.b16 %v1319, %v1318
      %v1346 = vpack.c.b16 %v1321, %v1320
      %v1347 = vpack.c.b16 %v1323, %v1322
      %v1348 = vpack.c.b16 %v1325, %v1324
      %v1349 = vpack.c.b16 %v1327, %v1326
      %v1350 = vpack.c.b16 %v1329, %v1328
      %v1351 = vpack.c.b16 %v1331, %v1330
      %v1352 = vpack.c.b16 %v1333, %v1332
      %v1353 = vpack.c.b16 %v1335, %v1334
      %v1354 = vpack.c.b16 %v1337, %v1336
      %v1355 = vpack.c.b16 %v1339, %v1338
      %v1388 = vunpack.c.l.b16 %v1292
      %v1389 = vunpack.c.l.b16 %v1293
      %v1390 = vunpack.c.l.b16 %v1294
      %v1391 = vunpack.c.l.b16 %v1295
      %v1392 = vunpack.c.l.b16 %v1296
      %v1393 = vunpack.c.l.b16 %v1297
      %v1394 = vunpack.c.l.b16 %v1298
      %v1395 = vunpack.c.l.b16 %v1299
      %v1396 = vunpack.c.l.b16 %v1300
      %v1397 = vunpack.c.l.b16 %v1301
      %v1398 = vunpack.c.l.b16 %v1302
      %v1399 = vunpack.c.l.b16 %v1303
      %v1400 = vunpack.c.l.b16 %v1304
      %v1401 = vunpack.c.l.b16 %v1305
      %v1402 = vunpack.c.l.b16 %v1306
      %v1403 = vunpack.c.l.b16 %v1307
      %v1404 = vpack.c.b16 %v1389, %v1388
      %v1405 = vpack.c.b16 %v1391, %v1390
      %v1406 = vpack.c.b16 %v1393, %v1392
      %v1407 = vpack.c.b16 %v1395, %v1394
      %v1408 = vpack.c.b16 %v1397, %v1396
      %v1409 = vpack.c.b16 %v1399, %v1398
      %v1410 = vpack.c.b16 %v1401, %v1400
      %v1411 = vpack.c.b16 %v1403, %v1402
      %1420 = vmatpush.bf16.msra.mxu0 %v1411
      %1421 = vmatpush.bf16.msra.mxu0 %v1410
      %1422 = vmatpush.bf16.msra.mxu0 %v1409
      %1423 = vmatpush.bf16.msra.mxu0 %v1408
      %1424 = vmatpush.bf16.msra.mxu0 %v1407
      %1425 = vmatpush.bf16.msra.mxu0 %v1406
      %1426 = vmatpush.bf16.msra.mxu0 %v1405
      %1427 = vmatpush.bf16.msra.mxu0 %v1404
      %1428 = vmatmul.bf16.gmra.mxu0 %v1340
      %v1429 = vpop.f32.mrf.mxu0
      %v1430 = vadd.f32 0.0, %v1429
      %v1431 = vpop.f32.mrf.mxu0
      %v1432 = vadd.f32 0.0, %v1431
      %1433 = vmatmul.bf16.gmra.mxu0 %v1341
      %v1434 = vpop.f32.mrf.mxu0
      %v1435 = vadd.f32 0.0, %v1434
      %v1436 = vpop.f32.mrf.mxu0
      %v1437 = vadd.f32 0.0, %v1436
      %1438 = vmatmul.bf16.gmra.mxu0 %v1342
      %v1439 = vpop.f32.mrf.mxu0
      %v1440 = vadd.f32 0.0, %v1439
      %v1441 = vpop.f32.mrf.mxu0
      %v1442 = vadd.f32 0.0, %v1441
      %1443 = vmatmul.bf16.gmra.mxu0 %v1343
      %v1444 = vpop.f32.mrf.mxu0
      %v1445 = vadd.f32 0.0, %v1444
      %v1446 = vpop.f32.mrf.mxu0
      %v1447 = vadd.f32 0.0, %v1446
      %1448 = vmatmul.bf16.gmra.mxu0 %v1344
      %v1449 = vpop.f32.mrf.mxu0
      %v1450 = vadd.f32 0.0, %v1449
      %v1451 = vpop.f32.mrf.mxu0
      %v1452 = vadd.f32 0.0, %v1451
      %1453 = vmatmul.bf16.gmra.mxu0 %v1345
      %v1454 = vpop.f32.mrf.mxu0
      %v1455 = vadd.f32 0.0, %v1454
      %v1456 = vpop.f32.mrf.mxu0
      %v1457 = vadd.f32 0.0, %v1456
      %1458 = vmatmul.bf16.gmra.mxu0 %v1346
      %v1459 = vpop.f32.mrf.mxu0
      %v1460 = vadd.f32 0.0, %v1459
      %v1461 = vpop.f32.mrf.mxu0
      %v1462 = vadd.f32 0.0, %v1461
      %1463 = vmatmul.bf16.gmra.mxu0 %v1347
      %v1464 = vpop.f32.mrf.mxu0
      %v1465 = vadd.f32 0.0, %v1464
      %v1466 = vpop.f32.mrf.mxu0
      %v1467 = vadd.f32 0.0, %v1466
      %1468 = vmatmul.bf16.gmra.mxu0 %v1348
      %v1469 = vpop.f32.mrf.mxu0
      %v1470 = vadd.f32 0.0, %v1469
      %v1471 = vpop.f32.mrf.mxu0
      %v1472 = vadd.f32 0.0, %v1471
      %1473 = vmatmul.bf16.gmra.mxu0 %v1349
      %v1474 = vpop.f32.mrf.mxu0
      %v1475 = vadd.f32 0.0, %v1474
      %v1476 = vpop.f32.mrf.mxu0
      %v1477 = vadd.f32 0.0, %v1476
      %1478 = vmatmul.bf16.gmra.mxu0 %v1350
      %v1479 = vpop.f32.mrf.mxu0
      %v1480 = vadd.f32 0.0, %v1479
      %v1481 = vpop.f32.mrf.mxu0
      %v1482 = vadd.f32 0.0, %v1481
      %1483 = vmatmul.bf16.gmra.mxu0 %v1351
      %v1484 = vpop.f32.mrf.mxu0
      %v1485 = vadd.f32 0.0, %v1484
      %v1486 = vpop.f32.mrf.mxu0
      %v1487 = vadd.f32 0.0, %v1486
      %1488 = vmatmul.bf16.gmra.mxu0 %v1352
      %v1489 = vpop.f32.mrf.mxu0
      %v1490 = vadd.f32 0.0, %v1489
      %v1491 = vpop.f32.mrf.mxu0
      %v1492 = vadd.f32 0.0, %v1491
      %1493 = vmatmul.bf16.gmra.mxu0 %v1353
      %v1494 = vpop.f32.mrf.mxu0
      %v1495 = vadd.f32 0.0, %v1494
      %v1496 = vpop.f32.mrf.mxu0
      %v1497 = vadd.f32 0.0, %v1496
      %1498 = vmatmul.bf16.gmra.mxu0 %v1354
      %v1499 = vpop.f32.mrf.mxu0
      %v1500 = vadd.f32 0.0, %v1499
      %v1501 = vpop.f32.mrf.mxu0
      %v1502 = vadd.f32 0.0, %v1501
      %1503 = vmatmul.bf16.gmra.mxu0 %v1355
      %v1504 = vpop.f32.mrf.mxu0
      %v1505 = vadd.f32 0.0, %v1504
      %v1506 = vpop.f32.mrf.mxu0
      %v1507 = vadd.f32 0.0, %v1506
      %1508 = vdwg.mxu0
      %v1509 = vadd.f32 %v1049, %v1430
      %v1510 = vadd.f32 %v1051, %v1432
      %v1511 = vadd.f32 %v1054, %v1435
      %v1512 = vadd.f32 %v1056, %v1437
      %v1513 = vadd.f32 %v1059, %v1440
      %v1514 = vadd.f32 %v1061, %v1442
      %v1515 = vadd.f32 %v1064, %v1445
      %v1516 = vadd.f32 %v1066, %v1447
      %v1517 = vadd.f32 %v1069, %v1450
      %v1518 = vadd.f32 %v1071, %v1452
      %v1519 = vadd.f32 %v1074, %v1455
      %v1520 = vadd.f32 %v1076, %v1457
      %v1521 = vadd.f32 %v1079, %v1460
      %v1522 = vadd.f32 %v1081, %v1462
      %v1523 = vadd.f32 %v1084, %v1465
      %v1524 = vadd.f32 %v1086, %v1467
      %v1525 = vadd.f32 %v1089, %v1470
      %v1526 = vadd.f32 %v1091, %v1472
      %v1527 = vadd.f32 %v1094, %v1475
      %v1528 = vadd.f32 %v1096, %v1477
      %v1529 = vadd.f32 %v1099, %v1480
      %v1530 = vadd.f32 %v1101, %v1482
      %v1531 = vadd.f32 %v1104, %v1485
      %v1532 = vadd.f32 %v1106, %v1487
      %v1533 = vadd.f32 %v1109, %v1490
      %v1534 = vadd.f32 %v1111, %v1492
      %v1535 = vadd.f32 %v1114, %v1495
      %v1536 = vadd.f32 %v1116, %v1497
      %v1537 = vadd.f32 %v1119, %v1500
      %v1538 = vadd.f32 %v1121, %v1502
      %v1539 = vadd.f32 %v1124, %v1505
      %v1540 = vadd.f32 %v1126, %v1507
      %s1541 = scalar_lea.vmem %s165, 12
      %v1542 = vld [vmem:[%s1541] sm:$0xf]
      %v1543 = vld [vmem:[%s1541 + $0x4] sm:$0xf]
      %v1544 = vld [vmem:[%s1541 + $0xc] sm:$0xf]
      %v1545 = vld [vmem:[%s1541 + $0x10] sm:$0xf]
      %v1546 = vld [vmem:[%s1541 + $0x18] sm:$0xf]
      %v1547 = vld [vmem:[%s1541 + $0x1c] sm:$0xf]
      %v1548 = vld [vmem:[%s1541 + $0x24] sm:$0xf]
      %v1549 = vld [vmem:[%s1541 + $0x28] sm:$0xf]
      %v1550 = vld [vmem:[%s1541 + $0x30] sm:$0xf]
      %v1551 = vld [vmem:[%s1541 + $0x34] sm:$0xf]
      %v1552 = vld [vmem:[%s1541 + $0x3c] sm:$0xf]
      %v1553 = vld [vmem:[%s1541 + $0x40] sm:$0xf]
      %v1554 = vld [vmem:[%s1541 + $0x48] sm:$0xf]
      %v1555 = vld [vmem:[%s1541 + $0x4c] sm:$0xf]
      %v1556 = vld [vmem:[%s1541 + $0x54] sm:$0xf]
      %v1557 = vld [vmem:[%s1541 + $0x58] sm:$0xf]
      %v1558 = vld [vmem:[%s1541 + $0x60] sm:$0xf]
      %v1559 = vld [vmem:[%s1541 + $0x64] sm:$0xf]
      %v1560 = vld [vmem:[%s1541 + $0x6c] sm:$0xf]
      %v1561 = vld [vmem:[%s1541 + $0x70] sm:$0xf]
      %v1562 = vld [vmem:[%s1541 + $0x78] sm:$0xf]
      %v1563 = vld [vmem:[%s1541 + $0x7c] sm:$0xf]
      %v1564 = vld [vmem:[%s1541 + $0x84] sm:$0xf]
      %v1565 = vld [vmem:[%s1541 + $0x88] sm:$0xf]
      %v1566 = vld [vmem:[%s1541 + $0x90] sm:$0xf]
      %v1567 = vld [vmem:[%s1541 + $0x94] sm:$0xf]
      %v1568 = vld [vmem:[%s1541 + $0x9c] sm:$0xf]
      %v1569 = vld [vmem:[%s1541 + $0xa0] sm:$0xf]
      %v1570 = vld [vmem:[%s1541 + $0xa8] sm:$0xf]
      %v1571 = vld [vmem:[%s1541 + $0xac] sm:$0xf]
      %v1572 = vld [vmem:[%s1541 + $0xb4] sm:$0xf]
      %v1573 = vld [vmem:[%s1541 + $0xb8] sm:$0xf]
      %s1574 = scalar_lea.vmem %s1, 192
      %v1575 = vld [vmem:[%s1574] sm:$0xf]
      %v1576 = vld [vmem:[%s1574 + $0x4] sm:$0xf]
      %v1577 = vld [vmem:[%s1574 + $0x8] sm:$0xf]
      %v1578 = vld [vmem:[%s1574 + $0xc] sm:$0xf]
      %v1579 = vld [vmem:[%s1574 + $0x10] sm:$0xf]
      %v1580 = vld [vmem:[%s1574 + $0x14] sm:$0xf]
      %v1581 = vld [vmem:[%s1574 + $0x18] sm:$0xf]
      %v1582 = vld [vmem:[%s1574 + $0x1c] sm:$0xf]
      %v1583 = vld [vmem:[%s1574 + $0x20] sm:$0xf]
      %v1584 = vld [vmem:[%s1574 + $0x24] sm:$0xf]
      %v1585 = vld [vmem:[%s1574 + $0x28] sm:$0xf]
      %v1586 = vld [vmem:[%s1574 + $0x2c] sm:$0xf]
      %v1587 = vld [vmem:[%s1574 + $0x30] sm:$0xf]
      %v1588 = vld [vmem:[%s1574 + $0x34] sm:$0xf]
      %v1589 = vld [vmem:[%s1574 + $0x38] sm:$0xf]
      %v1590 = vld [vmem:[%s1574 + $0x3c] sm:$0xf]
      %v1623 = vunpack.c.l.b16 %v1542
      %v1624 = vunpack.c.l.b16 %v1543
      %v1625 = vunpack.c.l.b16 %v1544
      %v1626 = vunpack.c.l.b16 %v1545
      %v1627 = vunpack.c.l.b16 %v1546
      %v1628 = vunpack.c.l.b16 %v1547
      %v1629 = vunpack.c.l.b16 %v1548
      %v1630 = vunpack.c.l.b16 %v1549
      %v1631 = vunpack.c.l.b16 %v1550
      %v1632 = vunpack.c.l.b16 %v1551
      %v1633 = vunpack.c.l.b16 %v1552
      %v1634 = vunpack.c.l.b16 %v1553
      %v1635 = vunpack.c.l.b16 %v1554
      %v1636 = vunpack.c.l.b16 %v1555
      %v1637 = vunpack.c.l.b16 %v1556
      %v1638 = vunpack.c.l.b16 %v1557
      %v1639 = vunpack.c.l.b16 %v1558
      %v1640 = vunpack.c.l.b16 %v1559
      %v1641 = vunpack.c.l.b16 %v1560
      %v1642 = vunpack.c.l.b16 %v1561
      %v1643 = vunpack.c.l.b16 %v1562
      %v1644 = vunpack.c.l.b16 %v1563
      %v1645 = vunpack.c.l.b16 %v1564
      %v1646 = vunpack.c.l.b16 %v1565
      %v1647 = vunpack.c.l.b16 %v1566
      %v1648 = vunpack.c.l.b16 %v1567
      %v1649 = vunpack.c.l.b16 %v1568
      %v1650 = vunpack.c.l.b16 %v1569
      %v1651 = vunpack.c.l.b16 %v1570
      %v1652 = vunpack.c.l.b16 %v1571
      %v1653 = vunpack.c.l.b16 %v1572
      %v1654 = vunpack.c.l.b16 %v1573
      %v1655 = vpack.c.b16 %v1624, %v1623
      %v1656 = vpack.c.b16 %v1626, %v1625
      %v1657 = vpack.c.b16 %v1628, %v1627
      %v1658 = vpack.c.b16 %v1630, %v1629
      %v1659 = vpack.c.b16 %v1632, %v1631
      %v1660 = vpack.c.b16 %v1634, %v1633
      %v1661 = vpack.c.b16 %v1636, %v1635
      %v1662 = vpack.c.b16 %v1638, %v1637
      %v1663 = vpack.c.b16 %v1640, %v1639
      %v1664 = vpack.c.b16 %v1642, %v1641
      %v1665 = vpack.c.b16 %v1644, %v1643
      %v1666 = vpack.c.b16 %v1646, %v1645
      %v1667 = vpack.c.b16 %v1648, %v1647
      %v1668 = vpack.c.b16 %v1650, %v1649
      %v1669 = vpack.c.b16 %v1652, %v1651
      %v1670 = vpack.c.b16 %v1654, %v1653
      %v1703 = vunpack.c.l.b16 %v1575
      %v1704 = vunpack.c.l.b16 %v1576
      %v1705 = vunpack.c.l.b16 %v1577
      %v1706 = vunpack.c.l.b16 %v1578
      %v1707 = vunpack.c.l.b16 %v1579
      %v1708 = vunpack.c.l.b16 %v1580
      %v1709 = vunpack.c.l.b16 %v1581
      %v1710 = vunpack.c.l.b16 %v1582
      %v1711 = vunpack.c.l.b16 %v1583
      %v1712 = vunpack.c.l.b16 %v1584
      %v1713 = vunpack.c.l.b16 %v1585
      %v1714 = vunpack.c.l.b16 %v1586
      %v1715 = vunpack.c.l.b16 %v1587
      %v1716 = vunpack.c.l.b16 %v1588
      %v1717 = vunpack.c.l.b16 %v1589
      %v1718 = vunpack.c.l.b16 %v1590
      %v1719 = vpack.c.b16 %v1704, %v1703
      %v1720 = vpack.c.b16 %v1706, %v1705
      %v1721 = vpack.c.b16 %v1708, %v1707
      %v1722 = vpack.c.b16 %v1710, %v1709
      %v1723 = vpack.c.b16 %v1712, %v1711
      %v1724 = vpack.c.b16 %v1714, %v1713
      %v1725 = vpack.c.b16 %v1716, %v1715
      %v1726 = vpack.c.b16 %v1718, %v1717
      %1735 = vmatpush.bf16.msra.mxu0 %v1726
      %1736 = vmatpush.bf16.msra.mxu0 %v1725
      %1737 = vmatpush.bf16.msra.mxu0 %v1724
      %1738 = vmatpush.bf16.msra.mxu0 %v1723
      %1739 = vmatpush.bf16.msra.mxu0 %v1722
      %1740 = vmatpush.bf16.msra.mxu0 %v1721
      %1741 = vmatpush.bf16.msra.mxu0 %v1720
      %1742 = vmatpush.bf16.msra.mxu0 %v1719
      %1743 = vmatmul.bf16.gmra.mxu0 %v1655
      %v1744 = vpop.f32.mrf.mxu0
      %v1745 = vadd.f32 0.0, %v1744
      %v1746 = vpop.f32.mrf.mxu0
      %v1747 = vadd.f32 0.0, %v1746
      %1748 = vmatmul.bf16.gmra.mxu0 %v1656
      %v1749 = vpop.f32.mrf.mxu0
      %v1750 = vadd.f32 0.0, %v1749
      %v1751 = vpop.f32.mrf.mxu0
      %v1752 = vadd.f32 0.0, %v1751
      %1753 = vmatmul.bf16.gmra.mxu0 %v1657
      %v1754 = vpop.f32.mrf.mxu0
      %v1755 = vadd.f32 0.0, %v1754
      %v1756 = vpop.f32.mrf.mxu0
      %v1757 = vadd.f32 0.0, %v1756
      %1758 = vmatmul.bf16.gmra.mxu0 %v1658
      %v1759 = vpop.f32.mrf.mxu0
      %v1760 = vadd.f32 0.0, %v1759
      %v1761 = vpop.f32.mrf.mxu0
      %v1762 = vadd.f32 0.0, %v1761
      %1763 = vmatmul.bf16.gmra.mxu0 %v1659
      %v1764 = vpop.f32.mrf.mxu0
      %v1765 = vadd.f32 0.0, %v1764
      %v1766 = vpop.f32.mrf.mxu0
      %v1767 = vadd.f32 0.0, %v1766
      %1768 = vmatmul.bf16.gmra.mxu0 %v1660
      %v1769 = vpop.f32.mrf.mxu0
      %v1770 = vadd.f32 0.0, %v1769
      %v1771 = vpop.f32.mrf.mxu0
      %v1772 = vadd.f32 0.0, %v1771
      %1773 = vmatmul.bf16.gmra.mxu0 %v1661
      %v1774 = vpop.f32.mrf.mxu0
      %v1775 = vadd.f32 0.0, %v1774
      %v1776 = vpop.f32.mrf.mxu0
      %v1777 = vadd.f32 0.0, %v1776
      %1778 = vmatmul.bf16.gmra.mxu0 %v1662
      %v1779 = vpop.f32.mrf.mxu0
      %v1780 = vadd.f32 0.0, %v1779
      %v1781 = vpop.f32.mrf.mxu0
      %v1782 = vadd.f32 0.0, %v1781
      %1783 = vmatmul.bf16.gmra.mxu0 %v1663
      %v1784 = vpop.f32.mrf.mxu0
      %v1785 = vadd.f32 0.0, %v1784
      %v1786 = vpop.f32.mrf.mxu0
      %v1787 = vadd.f32 0.0, %v1786
      %1788 = vmatmul.bf16.gmra.mxu0 %v1664
      %v1789 = vpop.f32.mrf.mxu0
      %v1790 = vadd.f32 0.0, %v1789
      %v1791 = vpop.f32.mrf.mxu0
      %v1792 = vadd.f32 0.0, %v1791
      %1793 = vmatmul.bf16.gmra.mxu0 %v1665
      %v1794 = vpop.f32.mrf.mxu0
      %v1795 = vadd.f32 0.0, %v1794
      %v1796 = vpop.f32.mrf.mxu0
      %v1797 = vadd.f32 0.0, %v1796
      %1798 = vmatmul.bf16.gmra.mxu0 %v1666
      %v1799 = vpop.f32.mrf.mxu0
      %v1800 = vadd.f32 0.0, %v1799
      %v1801 = vpop.f32.mrf.mxu0
      %v1802 = vadd.f32 0.0, %v1801
      %1803 = vmatmul.bf16.gmra.mxu0 %v1667
      %v1804 = vpop.f32.mrf.mxu0
      %v1805 = vadd.f32 0.0, %v1804
      %v1806 = vpop.f32.mrf.mxu0
      %v1807 = vadd.f32 0.0, %v1806
      %1808 = vmatmul.bf16.gmra.mxu0 %v1668
      %v1809 = vpop.f32.mrf.mxu0
      %v1810 = vadd.f32 0.0, %v1809
      %v1811 = vpop.f32.mrf.mxu0
      %v1812 = vadd.f32 0.0, %v1811
      %1813 = vmatmul.bf16.gmra.mxu0 %v1669
      %v1814 = vpop.f32.mrf.mxu0
      %v1815 = vadd.f32 0.0, %v1814
      %v1816 = vpop.f32.mrf.mxu0
      %v1817 = vadd.f32 0.0, %v1816
      %1818 = vmatmul.bf16.gmra.mxu0 %v1670
      %v1819 = vpop.f32.mrf.mxu0
      %v1820 = vadd.f32 0.0, %v1819
      %v1821 = vpop.f32.mrf.mxu0
      %v1822 = vadd.f32 0.0, %v1821
      %1823 = vdwg.mxu0
      %v1824 = vadd.f32 %v1509, %v1745
      %v1825 = vadd.f32 %v1510, %v1747
      %v1826 = vadd.f32 %v1511, %v1750
      %v1827 = vadd.f32 %v1512, %v1752
      %v1828 = vadd.f32 %v1513, %v1755
      %v1829 = vadd.f32 %v1514, %v1757
      %v1830 = vadd.f32 %v1515, %v1760
      %v1831 = vadd.f32 %v1516, %v1762
      %v1832 = vadd.f32 %v1517, %v1765
      %v1833 = vadd.f32 %v1518, %v1767
      %v1834 = vadd.f32 %v1519, %v1770
      %v1835 = vadd.f32 %v1520, %v1772
      %v1836 = vadd.f32 %v1521, %v1775
      %v1837 = vadd.f32 %v1522, %v1777
      %v1838 = vadd.f32 %v1523, %v1780
      %v1839 = vadd.f32 %v1524, %v1782
      %v1840 = vadd.f32 %v1525, %v1785
      %v1841 = vadd.f32 %v1526, %v1787
      %v1842 = vadd.f32 %v1527, %v1790
      %v1843 = vadd.f32 %v1528, %v1792
      %v1844 = vadd.f32 %v1529, %v1795
      %v1845 = vadd.f32 %v1530, %v1797
      %v1846 = vadd.f32 %v1531, %v1800
      %v1847 = vadd.f32 %v1532, %v1802
      %v1848 = vadd.f32 %v1533, %v1805
      %v1849 = vadd.f32 %v1534, %v1807
      %v1850 = vadd.f32 %v1535, %v1810
      %v1851 = vadd.f32 %v1536, %v1812
      %v1852 = vadd.f32 %v1537, %v1815
      %v1853 = vadd.f32 %v1538, %v1817
      %v1854 = vadd.f32 %v1539, %v1820
      %v1855 = vadd.f32 %v1540, %v1822
      %v1856 = vld [vmem:[%s1541] sm:$0xf]
      %v1857 = vld [vmem:[%s1541 + $0x4] sm:$0xf]
      %v1858 = vld [vmem:[%s1541 + $0x8] sm:$0x1]
      %v1859 = vld [vmem:[%s1541 + $0xc] sm:$0xf]
      %v1860 = vld [vmem:[%s1541 + $0x10] sm:$0xf]
      %v1861 = vld [vmem:[%s1541 + $0x14] sm:$0x1]
      %v1862 = vld [vmem:[%s1541 + $0x18] sm:$0xf]
      %v1863 = vld [vmem:[%s1541 + $0x1c] sm:$0xf]
      %v1864 = vld [vmem:[%s1541 + $0x20] sm:$0x1]
      %v1865 = vld [vmem:[%s1541 + $0x24] sm:$0xf]
      %v1866 = vld [vmem:[%s1541 + $0x28] sm:$0xf]
      %v1867 = vld [vmem:[%s1541 + $0x2c] sm:$0x1]
      %v1868 = vld [vmem:[%s1541 + $0x30] sm:$0xf]
      %v1869 = vld [vmem:[%s1541 + $0x34] sm:$0xf]
      %v1870 = vld [vmem:[%s1541 + $0x38] sm:$0x1]
      %v1871 = vld [vmem:[%s1541 + $0x3c] sm:$0xf]
      %v1872 = vld [vmem:[%s1541 + $0x40] sm:$0xf]
      %v1873 = vld [vmem:[%s1541 + $0x44] sm:$0x1]
      %v1874 = vld [vmem:[%s1541 + $0x48] sm:$0xf]
      %v1875 = vld [vmem:[%s1541 + $0x4c] sm:$0xf]
      %v1876 = vld [vmem:[%s1541 + $0x50] sm:$0x1]
      %v1877 = vld [vmem:[%s1541 + $0x54] sm:$0xf]
      %v1878 = vld [vmem:[%s1541 + $0x58] sm:$0xf]
      %v1879 = vld [vmem:[%s1541 + $0x5c] sm:$0x1]
      %v1880 = vld [vmem:[%s1541 + $0x60] sm:$0xf]
      %v1881 = vld [vmem:[%s1541 + $0x64] sm:$0xf]
      %v1882 = vld [vmem:[%s1541 + $0x68] sm:$0x1]
      %v1883 = vld [vmem:[%s1541 + $0x6c] sm:$0xf]
      %v1884 = vld [vmem:[%s1541 + $0x70] sm:$0xf]
      %v1885 = vld [vmem:[%s1541 + $0x74] sm:$0x1]
      %v1886 = vld [vmem:[%s1541 + $0x78] sm:$0xf]
      %v1887 = vld [vmem:[%s1541 + $0x7c] sm:$0xf]
      %v1888 = vld [vmem:[%s1541 + $0x80] sm:$0x1]
      %v1889 = vld [vmem:[%s1541 + $0x84] sm:$0xf]
      %v1890 = vld [vmem:[%s1541 + $0x88] sm:$0xf]
      %v1891 = vld [vmem:[%s1541 + $0x8c] sm:$0x1]
      %v1892 = vld [vmem:[%s1541 + $0x90] sm:$0xf]
      %v1893 = vld [vmem:[%s1541 + $0x94] sm:$0xf]
      %v1894 = vld [vmem:[%s1541 + $0x98] sm:$0x1]
      %v1895 = vld [vmem:[%s1541 + $0x9c] sm:$0xf]
      %v1896 = vld [vmem:[%s1541 + $0xa0] sm:$0xf]
      %v1897 = vld [vmem:[%s1541 + $0xa4] sm:$0x1]
      %v1898 = vld [vmem:[%s1541 + $0xa8] sm:$0xf]
      %v1899 = vld [vmem:[%s1541 + $0xac] sm:$0xf]
      %v1900 = vld [vmem:[%s1541 + $0xb0] sm:$0x1]
      %v1901 = vld [vmem:[%s1541 + $0xb4] sm:$0xf]
      %v1902 = vld [vmem:[%s1541 + $0xb8] sm:$0xf]
      %v1903 = vld [vmem:[%s1541 + $0xbc] sm:$0x1]
      %v1905 = vshrl.u32 %v1856, 16
      %v1907 = vrot.slane %v1905, 4
      %v1908 = vshll.u32 %v1856, 16
      %v1910 = vrot.slane %v1908, 5
      %v1911 = vor.u32 %v1907, %v1910
      %v1912 = vrot.slane %v1911, 4
      %v1914 = vshll.u32 %v1857, 16
      %v1916 = vrot.slane %v1914, 5
      %v1917 = vsel %vm292, %v1912, %v1916
      %v1918 = vshrl.u32 %v1857, 16
      %v1920 = vrot.slane %v1918, 4
      %v1921 = vor.u32 %v1920, %v1916
      %v1922 = vrot.slane %v1921, 4
      %v1924 = vshll.u32 %v1858, 16
      %v1926 = vrot.slane %v1924, 5
      %v1927 = vsel %vm292, %v1922, %v1926
      %v1929 = vshrl.u32 %v1859, 16
      %v1931 = vrot.slane %v1929, 4
      %v1932 = vshll.u32 %v1859, 16
      %v1934 = vrot.slane %v1932, 5
      %v1935 = vor.u32 %v1931, %v1934
      %v1936 = vrot.slane %v1935, 4
      %v1938 = vshll.u32 %v1860, 16
      %v1940 = vrot.slane %v1938, 5
      %v1941 = vsel %vm292, %v1936, %v1940
      %v1942 = vshrl.u32 %v1860, 16
      %v1944 = vrot.slane %v1942, 4
      %v1945 = vor.u32 %v1944, %v1940
      %v1946 = vrot.slane %v1945, 4
      %v1948 = vshll.u32 %v1861, 16
      %v1950 = vrot.slane %v1948, 5
      %v1951 = vsel %vm292, %v1946, %v1950
      %v1953 = vshrl.u32 %v1862, 16
      %v1955 = vrot.slane %v1953, 4
      %v1956 = vshll.u32 %v1862, 16
      %v1958 = vrot.slane %v1956, 5
      %v1959 = vor.u32 %v1955, %v1958
      %v1960 = vrot.slane %v1959, 4
      %v1962 = vshll.u32 %v1863, 16
      %v1964 = vrot.slane %v1962, 5
      %v1965 = vsel %vm292, %v1960, %v1964
      %v1966 = vshrl.u32 %v1863, 16
      %v1968 = vrot.slane %v1966, 4
      %v1969 = vor.u32 %v1968, %v1964
      %v1970 = vrot.slane %v1969, 4
      %v1972 = vshll.u32 %v1864, 16
      %v1974 = vrot.slane %v1972, 5
      %v1975 = vsel %vm292, %v1970, %v1974
      %v1977 = vshrl.u32 %v1865, 16
      %v1979 = vrot.slane %v1977, 4
      %v1980 = vshll.u32 %v1865, 16
      %v1982 = vrot.slane %v1980, 5
      %v1983 = vor.u32 %v1979, %v1982
      %v1984 = vrot.slane %v1983, 4
      %v1986 = vshll.u32 %v1866, 16
      %v1988 = vrot.slane %v1986, 5
      %v1989 = vsel %vm292, %v1984, %v1988
      %v1990 = vshrl.u32 %v1866, 16
      %v1992 = vrot.slane %v1990, 4
      %v1993 = vor.u32 %v1992, %v1988
      %v1994 = vrot.slane %v1993, 4
      %v1996 = vshll.u32 %v1867, 16
      %v1998 = vrot.slane %v1996, 5
      %v1999 = vsel %vm292, %v1994, %v1998
      %v2001 = vshrl.u32 %v1868, 16
      %v2003 = vrot.slane %v2001, 4
      %v2004 = vshll.u32 %v1868, 16
      %v2006 = vrot.slane %v2004, 5
      %v2007 = vor.u32 %v2003, %v2006
      %v2008 = vrot.slane %v2007, 4
      %v2010 = vshll.u32 %v1869, 16
      %v2012 = vrot.slane %v2010, 5
      %v2013 = vsel %vm292, %v2008, %v2012
      %v2014 = vshrl.u32 %v1869, 16
      %v2016 = vrot.slane %v2014, 4
      %v2017 = vor.u32 %v2016, %v2012
      %v2018 = vrot.slane %v2017, 4
      %v2020 = vshll.u32 %v1870, 16
      %v2022 = vrot.slane %v2020, 5
      %v2023 = vsel %vm292, %v2018, %v2022
      %v2025 = vshrl.u32 %v1871, 16
      %v2027 = vrot.slane %v2025, 4
      %v2028 = vshll.u32 %v1871, 16
      %v2030 = vrot.slane %v2028, 5
      %v2031 = vor.u32 %v2027, %v2030
      %v2032 = vrot.slane %v2031, 4
      %v2034 = vshll.u32 %v1872, 16
      %v2036 = vrot.slane %v2034, 5
      %v2037 = vsel %vm292, %v2032, %v2036
      %v2038 = vshrl.u32 %v1872, 16
      %v2040 = vrot.slane %v2038, 4
      %v2041 = vor.u32 %v2040, %v2036
      %v2042 = vrot.slane %v2041, 4
      %v2044 = vshll.u32 %v1873, 16
      %v2046 = vrot.slane %v2044, 5
      %v2047 = vsel %vm292, %v2042, %v2046
      %v2049 = vshrl.u32 %v1874, 16
      %v2051 = vrot.slane %v2049, 4
      %v2052 = vshll.u32 %v1874, 16
      %v2054 = vrot.slane %v2052, 5
      %v2055 = vor.u32 %v2051, %v2054
      %v2056 = vrot.slane %v2055, 4
      %v2058 = vshll.u32 %v1875, 16
      %v2060 = vrot.slane %v2058, 5
      %v2061 = vsel %vm292, %v2056, %v2060
      %v2062 = vshrl.u32 %v1875, 16
      %v2064 = vrot.slane %v2062, 4
      %v2065 = vor.u32 %v2064, %v2060
      %v2066 = vrot.slane %v2065, 4
      %v2068 = vshll.u32 %v1876, 16
      %v2070 = vrot.slane %v2068, 5
      %v2071 = vsel %vm292, %v2066, %v2070
      %v2073 = vshrl.u32 %v1877, 16
      %v2075 = vrot.slane %v2073, 4
      %v2076 = vshll.u32 %v1877, 16
      %v2078 = vrot.slane %v2076, 5
      %v2079 = vor.u32 %v2075, %v2078
      %v2080 = vrot.slane %v2079, 4
      %v2082 = vshll.u32 %v1878, 16
      %v2084 = vrot.slane %v2082, 5
      %v2085 = vsel %vm292, %v2080, %v2084
      %v2086 = vshrl.u32 %v1878, 16
      %v2088 = vrot.slane %v2086, 4
      %v2089 = vor.u32 %v2088, %v2084
      %v2090 = vrot.slane %v2089, 4
      %v2092 = vshll.u32 %v1879, 16
      %v2094 = vrot.slane %v2092, 5
      %v2095 = vsel %vm292, %v2090, %v2094
      %v2097 = vshrl.u32 %v1880, 16
      %v2099 = vrot.slane %v2097, 4
      %v2100 = vshll.u32 %v1880, 16
      %v2102 = vrot.slane %v2100, 5
      %v2103 = vor.u32 %v2099, %v2102
      %v2104 = vrot.slane %v2103, 4
      %v2106 = vshll.u32 %v1881, 16
      %v2108 = vrot.slane %v2106, 5
      %v2109 = vsel %vm292, %v2104, %v2108
      %v2110 = vshrl.u32 %v1881, 16
      %v2112 = vrot.slane %v2110, 4
      %v2113 = vor.u32 %v2112, %v2108
      %v2114 = vrot.slane %v2113, 4
      %v2116 = vshll.u32 %v1882, 16
      %v2118 = vrot.slane %v2116, 5
      %v2119 = vsel %vm292, %v2114, %v2118
      %v2121 = vshrl.u32 %v1883, 16
      %v2123 = vrot.slane %v2121, 4
      %v2124 = vshll.u32 %v1883, 16
      %v2126 = vrot.slane %v2124, 5
      %v2127 = vor.u32 %v2123, %v2126
      %v2128 = vrot.slane %v2127, 4
      %v2130 = vshll.u32 %v1884, 16
      %v2132 = vrot.slane %v2130, 5
      %v2133 = vsel %vm292, %v2128, %v2132
      %v2134 = vshrl.u32 %v1884, 16
      %v2136 = vrot.slane %v2134, 4
      %v2137 = vor.u32 %v2136, %v2132
      %v2138 = vrot.slane %v2137, 4
      %v2140 = vshll.u32 %v1885, 16
      %v2142 = vrot.slane %v2140, 5
      %v2143 = vsel %vm292, %v2138, %v2142
      %v2145 = vshrl.u32 %v1886, 16
      %v2147 = vrot.slane %v2145, 4
      %v2148 = vshll.u32 %v1886, 16
      %v2150 = vrot.slane %v2148, 5
      %v2151 = vor.u32 %v2147, %v2150
      %v2152 = vrot.slane %v2151, 4
      %v2154 = vshll.u32 %v1887, 16
      %v2156 = vrot.slane %v2154, 5
      %v2157 = vsel %vm292, %v2152, %v2156
      %v2158 = vshrl.u32 %v1887, 16
      %v2160 = vrot.slane %v2158, 4
      %v2161 = vor.u32 %v2160, %v2156
      %v2162 = vrot.slane %v2161, 4
      %v2164 = vshll.u32 %v1888, 16
      %v2166 = vrot.slane %v2164, 5
      %v2167 = vsel %vm292, %v2162, %v2166
      %v2169 = vshrl.u32 %v1889, 16
      %v2171 = vrot.slane %v2169, 4
      %v2172 = vshll.u32 %v1889, 16
      %v2174 = vrot.slane %v2172, 5
      %v2175 = vor.u32 %v2171, %v2174
      %v2176 = vrot.slane %v2175, 4
      %v2178 = vshll.u32 %v1890, 16
      %v2180 = vrot.slane %v2178, 5
      %v2181 = vsel %vm292, %v2176, %v2180
      %v2182 = vshrl.u32 %v1890, 16
      %v2184 = vrot.slane %v2182, 4
      %v2185 = vor.u32 %v2184, %v2180
      %v2186 = vrot.slane %v2185, 4
      %v2188 = vshll.u32 %v1891, 16
      %v2190 = vrot.slane %v2188, 5
      %v2191 = vsel %vm292, %v2186, %v2190
      %v2193 = vshrl.u32 %v1892, 16
      %v2195 = vrot.slane %v2193, 4
      %v2196 = vshll.u32 %v1892, 16
      %v2198 = vrot.slane %v2196, 5
      %v2199 = vor.u32 %v2195, %v2198
      %v2200 = vrot.slane %v2199, 4
      %v2202 = vshll.u32 %v1893, 16
      %v2204 = vrot.slane %v2202, 5
      %v2205 = vsel %vm292, %v2200, %v2204
      %v2206 = vshrl.u32 %v1893, 16
      %v2208 = vrot.slane %v2206, 4
      %v2209 = vor.u32 %v2208, %v2204
      %v2210 = vrot.slane %v2209, 4
      %v2212 = vshll.u32 %v1894, 16
      %v2214 = vrot.slane %v2212, 5
      %v2215 = vsel %vm292, %v2210, %v2214
      %v2217 = vshrl.u32 %v1895, 16
      %v2219 = vrot.slane %v2217, 4
      %v2220 = vshll.u32 %v1895, 16
      %v2222 = vrot.slane %v2220, 5
      %v2223 = vor.u32 %v2219, %v2222
      %v2224 = vrot.slane %v2223, 4
      %v2226 = vshll.u32 %v1896, 16
      %v2228 = vrot.slane %v2226, 5
      %v2229 = vsel %vm292, %v2224, %v2228
      %v2230 = vshrl.u32 %v1896, 16
      %v2232 = vrot.slane %v2230, 4
      %v2233 = vor.u32 %v2232, %v2228
      %v2234 = vrot.slane %v2233, 4
      %v2236 = vshll.u32 %v1897, 16
      %v2238 = vrot.slane %v2236, 5
      %v2239 = vsel %vm292, %v2234, %v2238
      %v2241 = vshrl.u32 %v1898, 16
      %v2243 = vrot.slane %v2241, 4
      %v2244 = vshll.u32 %v1898, 16
      %v2246 = vrot.slane %v2244, 5
      %v2247 = vor.u32 %v2243, %v2246
      %v2248 = vrot.slane %v2247, 4
      %v2250 = vshll.u32 %v1899, 16
      %v2252 = vrot.slane %v2250, 5
      %v2253 = vsel %vm292, %v2248, %v2252
      %v2254 = vshrl.u32 %v1899, 16
      %v2256 = vrot.slane %v2254, 4
      %v2257 = vor.u32 %v2256, %v2252
      %v2258 = vrot.slane %v2257, 4
      %v2260 = vshll.u32 %v1900, 16
      %v2262 = vrot.slane %v2260, 5
      %v2263 = vsel %vm292, %v2258, %v2262
      %v2265 = vshrl.u32 %v1901, 16
      %v2267 = vrot.slane %v2265, 4
      %v2268 = vshll.u32 %v1901, 16
      %v2270 = vrot.slane %v2268, 5
      %v2271 = vor.u32 %v2267, %v2270
      %v2272 = vrot.slane %v2271, 4
      %v2274 = vshll.u32 %v1902, 16
      %v2276 = vrot.slane %v2274, 5
      %v2277 = vsel %vm292, %v2272, %v2276
      %v2278 = vshrl.u32 %v1902, 16
      %v2280 = vrot.slane %v2278, 4
      %v2281 = vor.u32 %v2280, %v2276
      %v2282 = vrot.slane %v2281, 4
      %v2284 = vshll.u32 %v1903, 16
      %v2286 = vrot.slane %v2284, 5
      %v2287 = vsel %vm292, %v2282, %v2286
      %s2288 = scalar_lea.vmem %s1, 256
      %v2289 = vld [vmem:[%s2288] sm:$0xf]
      %v2290 = vld [vmem:[%s2288 + $0x4] sm:$0xf]
      %v2291 = vld [vmem:[%s2288 + $0x8] sm:$0xf]
      %v2292 = vld [vmem:[%s2288 + $0xc] sm:$0xf]
      %v2293 = vld [vmem:[%s2288 + $0x10] sm:$0xf]
      %v2294 = vld [vmem:[%s2288 + $0x14] sm:$0xf]
      %v2295 = vld [vmem:[%s2288 + $0x18] sm:$0xf]
      %v2296 = vld [vmem:[%s2288 + $0x1c] sm:$0xf]
      %v2297 = vld [vmem:[%s2288 + $0x20] sm:$0xf]
      %v2298 = vld [vmem:[%s2288 + $0x24] sm:$0xf]
      %v2299 = vld [vmem:[%s2288 + $0x28] sm:$0xf]
      %v2300 = vld [vmem:[%s2288 + $0x2c] sm:$0xf]
      %v2301 = vld [vmem:[%s2288 + $0x30] sm:$0xf]
      %v2302 = vld [vmem:[%s2288 + $0x34] sm:$0xf]
      %v2303 = vld [vmem:[%s2288 + $0x38] sm:$0xf]
      %v2304 = vld [vmem:[%s2288 + $0x3c] sm:$0xf]
      %v2305 = vunpack.c.l.b16 %v1917
      %v2306 = vunpack.c.l.b16 %v1927
      %v2307 = vunpack.c.l.b16 %v1941
      %v2308 = vunpack.c.l.b16 %v1951
      %v2309 = vunpack.c.l.b16 %v1965
      %v2310 = vunpack.c.l.b16 %v1975
      %v2311 = vunpack.c.l.b16 %v1989
      %v2312 = vunpack.c.l.b16 %v1999
      %v2313 = vunpack.c.l.b16 %v2013
      %v2314 = vunpack.c.l.b16 %v2023
      %v2315 = vunpack.c.l.b16 %v2037
      %v2316 = vunpack.c.l.b16 %v2047
      %v2317 = vunpack.c.l.b16 %v2061
      %v2318 = vunpack.c.l.b16 %v2071
      %v2319 = vunpack.c.l.b16 %v2085
      %v2320 = vunpack.c.l.b16 %v2095
      %v2321 = vunpack.c.l.b16 %v2109
      %v2322 = vunpack.c.l.b16 %v2119
      %v2323 = vunpack.c.l.b16 %v2133
      %v2324 = vunpack.c.l.b16 %v2143
      %v2325 = vunpack.c.l.b16 %v2157
      %v2326 = vunpack.c.l.b16 %v2167
      %v2327 = vunpack.c.l.b16 %v2181
      %v2328 = vunpack.c.l.b16 %v2191
      %v2329 = vunpack.c.l.b16 %v2205
      %v2330 = vunpack.c.l.b16 %v2215
      %v2331 = vunpack.c.l.b16 %v2229
      %v2332 = vunpack.c.l.b16 %v2239
      %v2333 = vunpack.c.l.b16 %v2253
      %v2334 = vunpack.c.l.b16 %v2263
      %v2335 = vunpack.c.l.b16 %v2277
      %v2336 = vunpack.c.l.b16 %v2287
      %v2337 = vpack.c.b16 %v2306, %v2305
      %v2338 = vpack.c.b16 %v2308, %v2307
      %v2339 = vpack.c.b16 %v2310, %v2309
      %v2340 = vpack.c.b16 %v2312, %v2311
      %v2341 = vpack.c.b16 %v2314, %v2313
      %v2342 = vpack.c.b16 %v2316, %v2315
      %v2343 = vpack.c.b16 %v2318, %v2317
      %v2344 = vpack.c.b16 %v2320, %v2319
      %v2345 = vpack.c.b16 %v2322, %v2321
      %v2346 = vpack.c.b16 %v2324, %v2323
      %v2347 = vpack.c.b16 %v2326, %v2325
      %v2348 = vpack.c.b16 %v2328, %v2327
      %v2349 = vpack.c.b16 %v2330, %v2329
      %v2350 = vpack.c.b16 %v2332, %v2331
      %v2351 = vpack.c.b16 %v2334, %v2333
      %v2352 = vpack.c.b16 %v2336, %v2335
      %v2385 = vunpack.c.l.b16 %v2289
      %v2386 = vunpack.c.l.b16 %v2290
      %v2387 = vunpack.c.l.b16 %v2291
      %v2388 = vunpack.c.l.b16 %v2292
      %v2389 = vunpack.c.l.b16 %v2293
      %v2390 = vunpack.c.l.b16 %v2294
      %v2391 = vunpack.c.l.b16 %v2295
      %v2392 = vunpack.c.l.b16 %v2296
      %v2393 = vunpack.c.l.b16 %v2297
      %v2394 = vunpack.c.l.b16 %v2298
      %v2395 = vunpack.c.l.b16 %v2299
      %v2396 = vunpack.c.l.b16 %v2300
      %v2397 = vunpack.c.l.b16 %v2301
      %v2398 = vunpack.c.l.b16 %v2302
      %v2399 = vunpack.c.l.b16 %v2303
      %v2400 = vunpack.c.l.b16 %v2304
      %v2401 = vpack.c.b16 %v2386, %v2385
      %v2402 = vpack.c.b16 %v2388, %v2387
      %v2403 = vpack.c.b16 %v2390, %v2389
      %v2404 = vpack.c.b16 %v2392, %v2391
      %v2405 = vpack.c.b16 %v2394, %v2393
      %v2406 = vpack.c.b16 %v2396, %v2395
      %v2407 = vpack.c.b16 %v2398, %v2397
      %v2408 = vpack.c.b16 %v2400, %v2399
      %2417 = vmatpush.bf16.msra.mxu0 %v2408
      %2418 = vmatpush.bf16.msra.mxu0 %v2407
      %2419 = vmatpush.bf16.msra.mxu0 %v2406
      %2420 = vmatpush.bf16.msra.mxu0 %v2405
      %2421 = vmatpush.bf16.msra.mxu0 %v2404
      %2422 = vmatpush.bf16.msra.mxu0 %v2403
      %2423 = vmatpush.bf16.msra.mxu0 %v2402
      %2424 = vmatpush.bf16.msra.mxu0 %v2401
      %2425 = vmatmul.bf16.gmra.mxu0 %v2337
      %v2426 = vpop.f32.mrf.mxu0
      %v2427 = vadd.f32 0.0, %v2426
      %v2428 = vpop.f32.mrf.mxu0
      %v2429 = vadd.f32 0.0, %v2428
      %2430 = vmatmul.bf16.gmra.mxu0 %v2338
      %v2431 = vpop.f32.mrf.mxu0
      %v2432 = vadd.f32 0.0, %v2431
      %v2433 = vpop.f32.mrf.mxu0
      %v2434 = vadd.f32 0.0, %v2433
      %2435 = vmatmul.bf16.gmra.mxu0 %v2339
      %v2436 = vpop.f32.mrf.mxu0
      %v2437 = vadd.f32 0.0, %v2436
      %v2438 = vpop.f32.mrf.mxu0
      %v2439 = vadd.f32 0.0, %v2438
      %2440 = vmatmul.bf16.gmra.mxu0 %v2340
      %v2441 = vpop.f32.mrf.mxu0
      %v2442 = vadd.f32 0.0, %v2441
      %v2443 = vpop.f32.mrf.mxu0
      %v2444 = vadd.f32 0.0, %v2443
      %2445 = vmatmul.bf16.gmra.mxu0 %v2341
      %v2446 = vpop.f32.mrf.mxu0
      %v2447 = vadd.f32 0.0, %v2446
      %v2448 = vpop.f32.mrf.mxu0
      %v2449 = vadd.f32 0.0, %v2448
      %2450 = vmatmul.bf16.gmra.mxu0 %v2342
      %v2451 = vpop.f32.mrf.mxu0
      %v2452 = vadd.f32 0.0, %v2451
      %v2453 = vpop.f32.mrf.mxu0
      %v2454 = vadd.f32 0.0, %v2453
      %2455 = vmatmul.bf16.gmra.mxu0 %v2343
      %v2456 = vpop.f32.mrf.mxu0
      %v2457 = vadd.f32 0.0, %v2456
      %v2458 = vpop.f32.mrf.mxu0
      %v2459 = vadd.f32 0.0, %v2458
      %2460 = vmatmul.bf16.gmra.mxu0 %v2344
      %v2461 = vpop.f32.mrf.mxu0
      %v2462 = vadd.f32 0.0, %v2461
      %v2463 = vpop.f32.mrf.mxu0
      %v2464 = vadd.f32 0.0, %v2463
      %2465 = vmatmul.bf16.gmra.mxu0 %v2345
      %v2466 = vpop.f32.mrf.mxu0
      %v2467 = vadd.f32 0.0, %v2466
      %v2468 = vpop.f32.mrf.mxu0
      %v2469 = vadd.f32 0.0, %v2468
      %2470 = vmatmul.bf16.gmra.mxu0 %v2346
      %v2471 = vpop.f32.mrf.mxu0
      %v2472 = vadd.f32 0.0, %v2471
      %v2473 = vpop.f32.mrf.mxu0
      %v2474 = vadd.f32 0.0, %v2473
      %2475 = vmatmul.bf16.gmra.mxu0 %v2347
      %v2476 = vpop.f32.mrf.mxu0
      %v2477 = vadd.f32 0.0, %v2476
      %v2478 = vpop.f32.mrf.mxu0
      %v2479 = vadd.f32 0.0, %v2478
      %2480 = vmatmul.bf16.gmra.mxu0 %v2348
      %v2481 = vpop.f32.mrf.mxu0
      %v2482 = vadd.f32 0.0, %v2481
      %v2483 = vpop.f32.mrf.mxu0
      %v2484 = vadd.f32 0.0, %v2483
      %2485 = vmatmul.bf16.gmra.mxu0 %v2349
      %v2486 = vpop.f32.mrf.mxu0
      %v2487 = vadd.f32 0.0, %v2486
      %v2488 = vpop.f32.mrf.mxu0
      %v2489 = vadd.f32 0.0, %v2488
      %2490 = vmatmul.bf16.gmra.mxu0 %v2350
      %v2491 = vpop.f32.mrf.mxu0
      %v2492 = vadd.f32 0.0, %v2491
      %v2493 = vpop.f32.mrf.mxu0
      %v2494 = vadd.f32 0.0, %v2493
      %2495 = vmatmul.bf16.gmra.mxu0 %v2351
      %v2496 = vpop.f32.mrf.mxu0
      %v2497 = vadd.f32 0.0, %v2496
      %v2498 = vpop.f32.mrf.mxu0
      %v2499 = vadd.f32 0.0, %v2498
      %2500 = vmatmul.bf16.gmra.mxu0 %v2352
      %v2501 = vpop.f32.mrf.mxu0
      %v2502 = vadd.f32 0.0, %v2501
      %v2503 = vpop.f32.mrf.mxu0
      %v2504 = vadd.f32 0.0, %v2503
      %2505 = vdwg.mxu0
      %v2506 = vadd.f32 %v1824, %v2427
      %v2507 = vadd.f32 %v1825, %v2429
      %v2508 = vadd.f32 %v1826, %v2432
      %v2509 = vadd.f32 %v1827, %v2434
      %v2510 = vadd.f32 %v1828, %v2437
      %v2511 = vadd.f32 %v1829, %v2439
      %v2512 = vadd.f32 %v1830, %v2442
      %v2513 = vadd.f32 %v1831, %v2444
      %v2514 = vadd.f32 %v1832, %v2447
      %v2515 = vadd.f32 %v1833, %v2449
      %v2516 = vadd.f32 %v1834, %v2452
      %v2517 = vadd.f32 %v1835, %v2454
      %v2518 = vadd.f32 %v1836, %v2457
      %v2519 = vadd.f32 %v1837, %v2459
      %v2520 = vadd.f32 %v1838, %v2462
      %v2521 = vadd.f32 %v1839, %v2464
      %v2522 = vadd.f32 %v1840, %v2467
      %v2523 = vadd.f32 %v1841, %v2469
      %v2524 = vadd.f32 %v1842, %v2472
      %v2525 = vadd.f32 %v1843, %v2474
      %v2526 = vadd.f32 %v1844, %v2477
      %v2527 = vadd.f32 %v1845, %v2479
      %v2528 = vadd.f32 %v1846, %v2482
      %v2529 = vadd.f32 %v1847, %v2484
      %v2530 = vadd.f32 %v1848, %v2487
      %v2531 = vadd.f32 %v1849, %v2489
      %v2532 = vadd.f32 %v1850, %v2492
      %v2533 = vadd.f32 %v1851, %v2494
      %v2534 = vadd.f32 %v1852, %v2497
      %v2535 = vadd.f32 %v1853, %v2499
      %v2536 = vadd.f32 %v1854, %v2502
      %v2537 = vadd.f32 %v1855, %v2504
      %v2538 = vld [vmem:[%s1541] sm:$0xe]
      %v2539 = vld [vmem:[%s1541 + $0xc] sm:$0xe]
      %v2540 = vld [vmem:[%s1541 + $0x18] sm:$0xe]
      %v2541 = vld [vmem:[%s1541 + $0x24] sm:$0xe]
      %v2542 = vld [vmem:[%s1541 + $0x30] sm:$0xe]
      %v2543 = vld [vmem:[%s1541 + $0x3c] sm:$0xe]
      %v2544 = vld [vmem:[%s1541 + $0x48] sm:$0xe]
      %v2545 = vld [vmem:[%s1541 + $0x54] sm:$0xe]
      %v2546 = vld [vmem:[%s1541 + $0x60] sm:$0xe]
      %v2547 = vld [vmem:[%s1541 + $0x6c] sm:$0xe]
      %v2548 = vld [vmem:[%s1541 + $0x78] sm:$0xe]
      %v2549 = vld [vmem:[%s1541 + $0x84] sm:$0xe]
      %v2550 = vld [vmem:[%s1541 + $0x90] sm:$0xe]
      %v2551 = vld [vmem:[%s1541 + $0x9c] sm:$0xe]
      %v2552 = vld [vmem:[%s1541 + $0xa8] sm:$0xe]
      %v2553 = vld [vmem:[%s1541 + $0xb4] sm:$0xe]
      %v2602 = vrot.slane %v2538, 5
      %v2603 = vrot.slane %v2602, 4
      %v2604 = vrot.slane %v1857, 5
      %v2605 = vsel %vm1178, %v2603, %v2604
      %v2606 = vrot.slane %v2604, 4
      %v2607 = vrot.slane %v1858, 5
      %v2608 = vsel %vm1178, %v2606, %v2607
      %v2609 = vrot.slane %v2539, 5
      %v2610 = vrot.slane %v2609, 4
      %v2611 = vrot.slane %v1860, 5
      %v2612 = vsel %vm1178, %v2610, %v2611
      %v2613 = vrot.slane %v2611, 4
      %v2614 = vrot.slane %v1861, 5
      %v2615 = vsel %vm1178, %v2613, %v2614
      %v2616 = vrot.slane %v2540, 5
      %v2617 = vrot.slane %v2616, 4
      %v2618 = vrot.slane %v1863, 5
      %v2619 = vsel %vm1178, %v2617, %v2618
      %v2620 = vrot.slane %v2618, 4
      %v2621 = vrot.slane %v1864, 5
      %v2622 = vsel %vm1178, %v2620, %v2621
      %v2623 = vrot.slane %v2541, 5
      %v2624 = vrot.slane %v2623, 4
      %v2625 = vrot.slane %v1866, 5
      %v2626 = vsel %vm1178, %v2624, %v2625
      %v2627 = vrot.slane %v2625, 4
      %v2628 = vrot.slane %v1867, 5
      %v2629 = vsel %vm1178, %v2627, %v2628
      %v2630 = vrot.slane %v2542, 5
      %v2631 = vrot.slane %v2630, 4
      %v2632 = vrot.slane %v1869, 5
      %v2633 = vsel %vm1178, %v2631, %v2632
      %v2634 = vrot.slane %v2632, 4
      %v2635 = vrot.slane %v1870, 5
      %v2636 = vsel %vm1178, %v2634, %v2635
      %v2637 = vrot.slane %v2543, 5
      %v2638 = vrot.slane %v2637, 4
      %v2639 = vrot.slane %v1872, 5
      %v2640 = vsel %vm1178, %v2638, %v2639
      %v2641 = vrot.slane %v2639, 4
      %v2642 = vrot.slane %v1873, 5
      %v2643 = vsel %vm1178, %v2641, %v2642
      %v2644 = vrot.slane %v2544, 5
      %v2645 = vrot.slane %v2644, 4
      %v2646 = vrot.slane %v1875, 5
      %v2647 = vsel %vm1178, %v2645, %v2646
      %v2648 = vrot.slane %v2646, 4
      %v2649 = vrot.slane %v1876, 5
      %v2650 = vsel %vm1178, %v2648, %v2649
      %v2651 = vrot.slane %v2545, 5
      %v2652 = vrot.slane %v2651, 4
      %v2653 = vrot.slane %v1878, 5
      %v2654 = vsel %vm1178, %v2652, %v2653
      %v2655 = vrot.slane %v2653, 4
      %v2656 = vrot.slane %v1879, 5
      %v2657 = vsel %vm1178, %v2655, %v2656
      %v2658 = vrot.slane %v2546, 5
      %v2659 = vrot.slane %v2658, 4
      %v2660 = vrot.slane %v1881, 5
      %v2661 = vsel %vm1178, %v2659, %v2660
      %v2662 = vrot.slane %v2660, 4
      %v2663 = vrot.slane %v1882, 5
      %v2664 = vsel %vm1178, %v2662, %v2663
      %v2665 = vrot.slane %v2547, 5
      %v2666 = vrot.slane %v2665, 4
      %v2667 = vrot.slane %v1884, 5
      %v2668 = vsel %vm1178, %v2666, %v2667
      %v2669 = vrot.slane %v2667, 4
      %v2670 = vrot.slane %v1885, 5
      %v2671 = vsel %vm1178, %v2669, %v2670
      %v2672 = vrot.slane %v2548, 5
      %v2673 = vrot.slane %v2672, 4
      %v2674 = vrot.slane %v1887, 5
      %v2675 = vsel %vm1178, %v2673, %v2674
      %v2676 = vrot.slane %v2674, 4
      %v2677 = vrot.slane %v1888, 5
      %v2678 = vsel %vm1178, %v2676, %v2677
      %v2679 = vrot.slane %v2549, 5
      %v2680 = vrot.slane %v2679, 4
      %v2681 = vrot.slane %v1890, 5
      %v2682 = vsel %vm1178, %v2680, %v2681
      %v2683 = vrot.slane %v2681, 4
      %v2684 = vrot.slane %v1891, 5
      %v2685 = vsel %vm1178, %v2683, %v2684
      %v2686 = vrot.slane %v2550, 5
      %v2687 = vrot.slane %v2686, 4
      %v2688 = vrot.slane %v1893, 5
      %v2689 = vsel %vm1178, %v2687, %v2688
      %v2690 = vrot.slane %v2688, 4
      %v2691 = vrot.slane %v1894, 5
      %v2692 = vsel %vm1178, %v2690, %v2691
      %v2693 = vrot.slane %v2551, 5
      %v2694 = vrot.slane %v2693, 4
      %v2695 = vrot.slane %v1896, 5
      %v2696 = vsel %vm1178, %v2694, %v2695
      %v2697 = vrot.slane %v2695, 4
      %v2698 = vrot.slane %v1897, 5
      %v2699 = vsel %vm1178, %v2697, %v2698
      %v2700 = vrot.slane %v2552, 5
      %v2701 = vrot.slane %v2700, 4
      %v2702 = vrot.slane %v1899, 5
      %v2703 = vsel %vm1178, %v2701, %v2702
      %v2704 = vrot.slane %v2702, 4
      %v2705 = vrot.slane %v1900, 5
      %v2706 = vsel %vm1178, %v2704, %v2705
      %v2707 = vrot.slane %v2553, 5
      %v2708 = vrot.slane %v2707, 4
      %v2709 = vrot.slane %v1902, 5
      %v2710 = vsel %vm1178, %v2708, %v2709
      %v2711 = vrot.slane %v2709, 4
      %v2712 = vrot.slane %v1903, 5
      %v2713 = vsel %vm1178, %v2711, %v2712
      %s2714 = scalar_lea.vmem %s1, 320
      %v2715 = vld [vmem:[%s2714] sm:$0xf]
      %v2716 = vld [vmem:[%s2714 + $0x4] sm:$0xf]
      %v2717 = vld [vmem:[%s2714 + $0x8] sm:$0xf]
      %v2718 = vld [vmem:[%s2714 + $0xc] sm:$0xf]
      %v2719 = vld [vmem:[%s2714 + $0x10] sm:$0xf]
      %v2720 = vld [vmem:[%s2714 + $0x14] sm:$0xf]
      %v2721 = vld [vmem:[%s2714 + $0x18] sm:$0xf]
      %v2722 = vld [vmem:[%s2714 + $0x1c] sm:$0xf]
      %v2723 = vld [vmem:[%s2714 + $0x20] sm:$0xf]
      %v2724 = vld [vmem:[%s2714 + $0x24] sm:$0xf]
      %v2725 = vld [vmem:[%s2714 + $0x28] sm:$0xf]
      %v2726 = vld [vmem:[%s2714 + $0x2c] sm:$0xf]
      %v2727 = vld [vmem:[%s2714 + $0x30] sm:$0xf]
      %v2728 = vld [vmem:[%s2714 + $0x34] sm:$0xf]
      %v2729 = vld [vmem:[%s2714 + $0x38] sm:$0xf]
      %v2730 = vld [vmem:[%s2714 + $0x3c] sm:$0xf]
      %v2731 = vunpack.c.l.b16 %v2605
      %v2732 = vunpack.c.l.b16 %v2608
      %v2733 = vunpack.c.l.b16 %v2612
      %v2734 = vunpack.c.l.b16 %v2615
      %v2735 = vunpack.c.l.b16 %v2619
      %v2736 = vunpack.c.l.b16 %v2622
      %v2737 = vunpack.c.l.b16 %v2626
      %v2738 = vunpack.c.l.b16 %v2629
      %v2739 = vunpack.c.l.b16 %v2633
      %v2740 = vunpack.c.l.b16 %v2636
      %v2741 = vunpack.c.l.b16 %v2640
      %v2742 = vunpack.c.l.b16 %v2643
      %v2743 = vunpack.c.l.b16 %v2647
      %v2744 = vunpack.c.l.b16 %v2650
      %v2745 = vunpack.c.l.b16 %v2654
      %v2746 = vunpack.c.l.b16 %v2657
      %v2747 = vunpack.c.l.b16 %v2661
      %v2748 = vunpack.c.l.b16 %v2664
      %v2749 = vunpack.c.l.b16 %v2668
      %v2750 = vunpack.c.l.b16 %v2671
      %v2751 = vunpack.c.l.b16 %v2675
      %v2752 = vunpack.c.l.b16 %v2678
      %v2753 = vunpack.c.l.b16 %v2682
      %v2754 = vunpack.c.l.b16 %v2685
      %v2755 = vunpack.c.l.b16 %v2689
      %v2756 = vunpack.c.l.b16 %v2692
      %v2757 = vunpack.c.l.b16 %v2696
      %v2758 = vunpack.c.l.b16 %v2699
      %v2759 = vunpack.c.l.b16 %v2703
      %v2760 = vunpack.c.l.b16 %v2706
      %v2761 = vunpack.c.l.b16 %v2710
      %v2762 = vunpack.c.l.b16 %v2713
      %v2763 = vpack.c.b16 %v2732, %v2731
      %v2764 = vpack.c.b16 %v2734, %v2733
      %v2765 = vpack.c.b16 %v2736, %v2735
      %v2766 = vpack.c.b16 %v2738, %v2737
      %v2767 = vpack.c.b16 %v2740, %v2739
      %v2768 = vpack.c.b16 %v2742, %v2741
      %v2769 = vpack.c.b16 %v2744, %v2743
      %v2770 = vpack.c.b16 %v2746, %v2745
      %v2771 = vpack.c.b16 %v2748, %v2747
      %v2772 = vpack.c.b16 %v2750, %v2749
      %v2773 = vpack.c.b16 %v2752, %v2751
      %v2774 = vpack.c.b16 %v2754, %v2753
      %v2775 = vpack.c.b16 %v2756, %v2755
      %v2776 = vpack.c.b16 %v2758, %v2757
      %v2777 = vpack.c.b16 %v2760, %v2759
      %v2778 = vpack.c.b16 %v2762, %v2761
      %v2811 = vunpack.c.l.b16 %v2715
      %v2812 = vunpack.c.l.b16 %v2716
      %v2813 = vunpack.c.l.b16 %v2717
      %v2814 = vunpack.c.l.b16 %v2718
      %v2815 = vunpack.c.l.b16 %v2719
      %v2816 = vunpack.c.l.b16 %v2720
      %v2817 = vunpack.c.l.b16 %v2721
      %v2818 = vunpack.c.l.b16 %v2722
      %v2819 = vunpack.c.l.b16 %v2723
      %v2820 = vunpack.c.l.b16 %v2724
      %v2821 = vunpack.c.l.b16 %v2725
      %v2822 = vunpack.c.l.b16 %v2726
      %v2823 = vunpack.c.l.b16 %v2727
      %v2824 = vunpack.c.l.b16 %v2728
      %v2825 = vunpack.c.l.b16 %v2729
      %v2826 = vunpack.c.l.b16 %v2730
      %v2827 = vpack.c.b16 %v2812, %v2811
      %v2828 = vpack.c.b16 %v2814, %v2813
      %v2829 = vpack.c.b16 %v2816, %v2815
      %v2830 = vpack.c.b16 %v2818, %v2817
      %v2831 = vpack.c.b16 %v2820, %v2819
      %v2832 = vpack.c.b16 %v2822, %v2821
      %v2833 = vpack.c.b16 %v2824, %v2823
      %v2834 = vpack.c.b16 %v2826, %v2825
      %2843 = vmatpush.bf16.msra.mxu0 %v2834
      %2844 = vmatpush.bf16.msra.mxu0 %v2833
      %2845 = vmatpush.bf16.msra.mxu0 %v2832
      %2846 = vmatpush.bf16.msra.mxu0 %v2831
      %2847 = vmatpush.bf16.msra.mxu0 %v2830
      %2848 = vmatpush.bf16.msra.mxu0 %v2829
      %2849 = vmatpush.bf16.msra.mxu0 %v2828
      %2850 = vmatpush.bf16.msra.mxu0 %v2827
      %2851 = vmatmul.bf16.gmra.mxu0 %v2763
      %v2852 = vpop.f32.mrf.mxu0
      %v2853 = vadd.f32 0.0, %v2852
      %v2854 = vpop.f32.mrf.mxu0
      %v2855 = vadd.f32 0.0, %v2854
      %2856 = vmatmul.bf16.gmra.mxu0 %v2764
      %v2857 = vpop.f32.mrf.mxu0
      %v2858 = vadd.f32 0.0, %v2857
      %v2859 = vpop.f32.mrf.mxu0
      %v2860 = vadd.f32 0.0, %v2859
      %2861 = vmatmul.bf16.gmra.mxu0 %v2765
      %v2862 = vpop.f32.mrf.mxu0
      %v2863 = vadd.f32 0.0, %v2862
      %v2864 = vpop.f32.mrf.mxu0
      %v2865 = vadd.f32 0.0, %v2864
      %2866 = vmatmul.bf16.gmra.mxu0 %v2766
      %v2867 = vpop.f32.mrf.mxu0
      %v2868 = vadd.f32 0.0, %v2867
      %v2869 = vpop.f32.mrf.mxu0
      %v2870 = vadd.f32 0.0, %v2869
      %2871 = vmatmul.bf16.gmra.mxu0 %v2767
      %v2872 = vpop.f32.mrf.mxu0
      %v2873 = vadd.f32 0.0, %v2872
      %v2874 = vpop.f32.mrf.mxu0
      %v2875 = vadd.f32 0.0, %v2874
      %2876 = vmatmul.bf16.gmra.mxu0 %v2768
      %v2877 = vpop.f32.mrf.mxu0
      %v2878 = vadd.f32 0.0, %v2877
      %v2879 = vpop.f32.mrf.mxu0
      %v2880 = vadd.f32 0.0, %v2879
      %2881 = vmatmul.bf16.gmra.mxu0 %v2769
      %v2882 = vpop.f32.mrf.mxu0
      %v2883 = vadd.f32 0.0, %v2882
      %v2884 = vpop.f32.mrf.mxu0
      %v2885 = vadd.f32 0.0, %v2884
      %2886 = vmatmul.bf16.gmra.mxu0 %v2770
      %v2887 = vpop.f32.mrf.mxu0
      %v2888 = vadd.f32 0.0, %v2887
      %v2889 = vpop.f32.mrf.mxu0
      %v2890 = vadd.f32 0.0, %v2889
      %2891 = vmatmul.bf16.gmra.mxu0 %v2771
      %v2892 = vpop.f32.mrf.mxu0
      %v2893 = vadd.f32 0.0, %v2892
      %v2894 = vpop.f32.mrf.mxu0
      %v2895 = vadd.f32 0.0, %v2894
      %2896 = vmatmul.bf16.gmra.mxu0 %v2772
      %v2897 = vpop.f32.mrf.mxu0
      %v2898 = vadd.f32 0.0, %v2897
      %v2899 = vpop.f32.mrf.mxu0
      %v2900 = vadd.f32 0.0, %v2899
      %2901 = vmatmul.bf16.gmra.mxu0 %v2773
      %v2902 = vpop.f32.mrf.mxu0
      %v2903 = vadd.f32 0.0, %v2902
      %v2904 = vpop.f32.mrf.mxu0
      %v2905 = vadd.f32 0.0, %v2904
      %2906 = vmatmul.bf16.gmra.mxu0 %v2774
      %v2907 = vpop.f32.mrf.mxu0
      %v2908 = vadd.f32 0.0, %v2907
      %v2909 = vpop.f32.mrf.mxu0
      %v2910 = vadd.f32 0.0, %v2909
      %2911 = vmatmul.bf16.gmra.mxu0 %v2775
      %v2912 = vpop.f32.mrf.mxu0
      %v2913 = vadd.f32 0.0, %v2912
      %v2914 = vpop.f32.mrf.mxu0
      %v2915 = vadd.f32 0.0, %v2914
      %2916 = vmatmul.bf16.gmra.mxu0 %v2776
      %v2917 = vpop.f32.mrf.mxu0
      %v2918 = vadd.f32 0.0, %v2917
      %v2919 = vpop.f32.mrf.mxu0
      %v2920 = vadd.f32 0.0, %v2919
      %2921 = vmatmul.bf16.gmra.mxu0 %v2777
      %v2922 = vpop.f32.mrf.mxu0
      %v2923 = vadd.f32 0.0, %v2922
      %v2924 = vpop.f32.mrf.mxu0
      %v2925 = vadd.f32 0.0, %v2924
      %2926 = vmatmul.bf16.gmra.mxu0 %v2778
      %v2927 = vpop.f32.mrf.mxu0
      %v2928 = vadd.f32 0.0, %v2927
      %v2929 = vpop.f32.mrf.mxu0
      %v2930 = vadd.f32 0.0, %v2929
      %2931 = vdwg.mxu0
      %v2932 = vadd.f32 %v2506, %v2853
      %v2933 = vadd.f32 %v2507, %v2855
      %v2934 = vadd.f32 %v2508, %v2858
      %v2935 = vadd.f32 %v2509, %v2860
      %v2936 = vadd.f32 %v2510, %v2863
      %v2937 = vadd.f32 %v2511, %v2865
      %v2938 = vadd.f32 %v2512, %v2868
      %v2939 = vadd.f32 %v2513, %v2870
      %v2940 = vadd.f32 %v2514, %v2873
      %v2941 = vadd.f32 %v2515, %v2875
      %v2942 = vadd.f32 %v2516, %v2878
      %v2943 = vadd.f32 %v2517, %v2880
      %v2944 = vadd.f32 %v2518, %v2883
      %v2945 = vadd.f32 %v2519, %v2885
      %v2946 = vadd.f32 %v2520, %v2888
      %v2947 = vadd.f32 %v2521, %v2890
      %v2948 = vadd.f32 %v2522, %v2893
      %v2949 = vadd.f32 %v2523, %v2895
      %v2950 = vadd.f32 %v2524, %v2898
      %v2951 = vadd.f32 %v2525, %v2900
      %v2952 = vadd.f32 %v2526, %v2903
      %v2953 = vadd.f32 %v2527, %v2905
      %v2954 = vadd.f32 %v2528, %v2908
      %v2955 = vadd.f32 %v2529, %v2910
      %v2956 = vadd.f32 %v2530, %v2913
      %v2957 = vadd.f32 %v2531, %v2915
      %v2958 = vadd.f32 %v2532, %v2918
      %v2959 = vadd.f32 %v2533, %v2920
      %v2960 = vadd.f32 %v2534, %v2923
      %v2961 = vadd.f32 %v2535, %v2925
      %v2962 = vadd.f32 %v2536, %v2928
      %v2963 = vadd.f32 %v2537, %v2930
      %s2964 = scalar_lea.vmem %s165, 24
      %v2965 = vld [vmem:[%s2964] sm:$0xf]
      %v2966 = vld [vmem:[%s2964 + $0x4] sm:$0xf]
      %v2967 = vld [vmem:[%s2964 + $0xc] sm:$0xf]
      %v2968 = vld [vmem:[%s2964 + $0x10] sm:$0xf]
      %v2969 = vld [vmem:[%s2964 + $0x18] sm:$0xf]
      %v2970 = vld [vmem:[%s2964 + $0x1c] sm:$0xf]
      %v2971 = vld [vmem:[%s2964 + $0x24] sm:$0xf]
      %v2972 = vld [vmem:[%s2964 + $0x28] sm:$0xf]
      %v2973 = vld [vmem:[%s2964 + $0x30] sm:$0xf]
      %v2974 = vld [vmem:[%s2964 + $0x34] sm:$0xf]
      %v2975 = vld [vmem:[%s2964 + $0x3c] sm:$0xf]
      %v2976 = vld [vmem:[%s2964 + $0x40] sm:$0xf]
      %v2977 = vld [vmem:[%s2964 + $0x48] sm:$0xf]
      %v2978 = vld [vmem:[%s2964 + $0x4c] sm:$0xf]
      %v2979 = vld [vmem:[%s2964 + $0x54] sm:$0xf]
      %v2980 = vld [vmem:[%s2964 + $0x58] sm:$0xf]
      %v2981 = vld [vmem:[%s2964 + $0x60] sm:$0xf]
      %v2982 = vld [vmem:[%s2964 + $0x64] sm:$0xf]
      %v2983 = vld [vmem:[%s2964 + $0x6c] sm:$0xf]
      %v2984 = vld [vmem:[%s2964 + $0x70] sm:$0xf]
      %v2985 = vld [vmem:[%s2964 + $0x78] sm:$0xf]
      %v2986 = vld [vmem:[%s2964 + $0x7c] sm:$0xf]
      %v2987 = vld [vmem:[%s2964 + $0x84] sm:$0xf]
      %v2988 = vld [vmem:[%s2964 + $0x88] sm:$0xf]
      %v2989 = vld [vmem:[%s2964 + $0x90] sm:$0xf]
      %v2990 = vld [vmem:[%s2964 + $0x94] sm:$0xf]
      %v2991 = vld [vmem:[%s2964 + $0x9c] sm:$0xf]
      %v2992 = vld [vmem:[%s2964 + $0xa0] sm:$0xf]
      %v2993 = vld [vmem:[%s2964 + $0xa8] sm:$0xf]
      %v2994 = vld [vmem:[%s2964 + $0xac] sm:$0xf]
      %v2995 = vld [vmem:[%s2964 + $0xb4] sm:$0xf]
      %v2996 = vld [vmem:[%s2964 + $0xb8] sm:$0xf]
      %s2997 = scalar_lea.vmem %s1, 384
      %v2998 = vld [vmem:[%s2997] sm:$0xf]
      %v2999 = vld [vmem:[%s2997 + $0x4] sm:$0xf]
      %v3000 = vld [vmem:[%s2997 + $0x8] sm:$0xf]
      %v3001 = vld [vmem:[%s2997 + $0xc] sm:$0xf]
      %v3002 = vld [vmem:[%s2997 + $0x10] sm:$0xf]
      %v3003 = vld [vmem:[%s2997 + $0x14] sm:$0xf]
      %v3004 = vld [vmem:[%s2997 + $0x18] sm:$0xf]
      %v3005 = vld [vmem:[%s2997 + $0x1c] sm:$0xf]
      %v3006 = vld [vmem:[%s2997 + $0x20] sm:$0xf]
      %v3007 = vld [vmem:[%s2997 + $0x24] sm:$0xf]
      %v3008 = vld [vmem:[%s2997 + $0x28] sm:$0xf]
      %v3009 = vld [vmem:[%s2997 + $0x2c] sm:$0xf]
      %v3010 = vld [vmem:[%s2997 + $0x30] sm:$0xf]
      %v3011 = vld [vmem:[%s2997 + $0x34] sm:$0xf]
      %v3012 = vld [vmem:[%s2997 + $0x38] sm:$0xf]
      %v3013 = vld [vmem:[%s2997 + $0x3c] sm:$0xf]
      %v3046 = vunpack.c.l.b16 %v2965
      %v3047 = vunpack.c.l.b16 %v2966
      %v3048 = vunpack.c.l.b16 %v2967
      %v3049 = vunpack.c.l.b16 %v2968
      %v3050 = vunpack.c.l.b16 %v2969
      %v3051 = vunpack.c.l.b16 %v2970
      %v3052 = vunpack.c.l.b16 %v2971
      %v3053 = vunpack.c.l.b16 %v2972
      %v3054 = vunpack.c.l.b16 %v2973
      %v3055 = vunpack.c.l.b16 %v2974
      %v3056 = vunpack.c.l.b16 %v2975
      %v3057 = vunpack.c.l.b16 %v2976
      %v3058 = vunpack.c.l.b16 %v2977
      %v3059 = vunpack.c.l.b16 %v2978
      %v3060 = vunpack.c.l.b16 %v2979
      %v3061 = vunpack.c.l.b16 %v2980
      %v3062 = vunpack.c.l.b16 %v2981
      %v3063 = vunpack.c.l.b16 %v2982
      %v3064 = vunpack.c.l.b16 %v2983
      %v3065 = vunpack.c.l.b16 %v2984
      %v3066 = vunpack.c.l.b16 %v2985
      %v3067 = vunpack.c.l.b16 %v2986
      %v3068 = vunpack.c.l.b16 %v2987
      %v3069 = vunpack.c.l.b16 %v2988
      %v3070 = vunpack.c.l.b16 %v2989
      %v3071 = vunpack.c.l.b16 %v2990
      %v3072 = vunpack.c.l.b16 %v2991
      %v3073 = vunpack.c.l.b16 %v2992
      %v3074 = vunpack.c.l.b16 %v2993
      %v3075 = vunpack.c.l.b16 %v2994
      %v3076 = vunpack.c.l.b16 %v2995
      %v3077 = vunpack.c.l.b16 %v2996
      %v3078 = vpack.c.b16 %v3047, %v3046
      %v3079 = vpack.c.b16 %v3049, %v3048
      %v3080 = vpack.c.b16 %v3051, %v3050
      %v3081 = vpack.c.b16 %v3053, %v3052
      %v3082 = vpack.c.b16 %v3055, %v3054
      %v3083 = vpack.c.b16 %v3057, %v3056
      %v3084 = vpack.c.b16 %v3059, %v3058
      %v3085 = vpack.c.b16 %v3061, %v3060
      %v3086 = vpack.c.b16 %v3063, %v3062
      %v3087 = vpack.c.b16 %v3065, %v3064
      %v3088 = vpack.c.b16 %v3067, %v3066
      %v3089 = vpack.c.b16 %v3069, %v3068
      %v3090 = vpack.c.b16 %v3071, %v3070
      %v3091 = vpack.c.b16 %v3073, %v3072
      %v3092 = vpack.c.b16 %v3075, %v3074
      %v3093 = vpack.c.b16 %v3077, %v3076
      %v3126 = vunpack.c.l.b16 %v2998
      %v3127 = vunpack.c.l.b16 %v2999
      %v3128 = vunpack.c.l.b16 %v3000
      %v3129 = vunpack.c.l.b16 %v3001
      %v3130 = vunpack.c.l.b16 %v3002
      %v3131 = vunpack.c.l.b16 %v3003
      %v3132 = vunpack.c.l.b16 %v3004
      %v3133 = vunpack.c.l.b16 %v3005
      %v3134 = vunpack.c.l.b16 %v3006
      %v3135 = vunpack.c.l.b16 %v3007
      %v3136 = vunpack.c.l.b16 %v3008
      %v3137 = vunpack.c.l.b16 %v3009
      %v3138 = vunpack.c.l.b16 %v3010
      %v3139 = vunpack.c.l.b16 %v3011
      %v3140 = vunpack.c.l.b16 %v3012
      %v3141 = vunpack.c.l.b16 %v3013
      %v3142 = vpack.c.b16 %v3127, %v3126
      %v3143 = vpack.c.b16 %v3129, %v3128
      %v3144 = vpack.c.b16 %v3131, %v3130
      %v3145 = vpack.c.b16 %v3133, %v3132
      %v3146 = vpack.c.b16 %v3135, %v3134
      %v3147 = vpack.c.b16 %v3137, %v3136
      %v3148 = vpack.c.b16 %v3139, %v3138
      %v3149 = vpack.c.b16 %v3141, %v3140
      %3158 = vmatpush.bf16.msra.mxu0 %v3149
      %3159 = vmatpush.bf16.msra.mxu0 %v3148
      %3160 = vmatpush.bf16.msra.mxu0 %v3147
      %3161 = vmatpush.bf16.msra.mxu0 %v3146
      %3162 = vmatpush.bf16.msra.mxu0 %v3145
      %3163 = vmatpush.bf16.msra.mxu0 %v3144
      %3164 = vmatpush.bf16.msra.mxu0 %v3143
      %3165 = vmatpush.bf16.msra.mxu0 %v3142
      %3166 = vmatmul.bf16.gmra.mxu0 %v3078
      %v3167 = vpop.f32.mrf.mxu0
      %v3168 = vadd.f32 0.0, %v3167
      %v3169 = vpop.f32.mrf.mxu0
      %v3170 = vadd.f32 0.0, %v3169
      %3171 = vmatmul.bf16.gmra.mxu0 %v3079
      %v3172 = vpop.f32.mrf.mxu0
      %v3173 = vadd.f32 0.0, %v3172
      %v3174 = vpop.f32.mrf.mxu0
      %v3175 = vadd.f32 0.0, %v3174
      %3176 = vmatmul.bf16.gmra.mxu0 %v3080
      %v3177 = vpop.f32.mrf.mxu0
      %v3178 = vadd.f32 0.0, %v3177
      %v3179 = vpop.f32.mrf.mxu0
      %v3180 = vadd.f32 0.0, %v3179
      %3181 = vmatmul.bf16.gmra.mxu0 %v3081
      %v3182 = vpop.f32.mrf.mxu0
      %v3183 = vadd.f32 0.0, %v3182
      %v3184 = vpop.f32.mrf.mxu0
      %v3185 = vadd.f32 0.0, %v3184
      %3186 = vmatmul.bf16.gmra.mxu0 %v3082
      %v3187 = vpop.f32.mrf.mxu0
      %v3188 = vadd.f32 0.0, %v3187
      %v3189 = vpop.f32.mrf.mxu0
      %v3190 = vadd.f32 0.0, %v3189
      %3191 = vmatmul.bf16.gmra.mxu0 %v3083
      %v3192 = vpop.f32.mrf.mxu0
      %v3193 = vadd.f32 0.0, %v3192
      %v3194 = vpop.f32.mrf.mxu0
      %v3195 = vadd.f32 0.0, %v3194
      %3196 = vmatmul.bf16.gmra.mxu0 %v3084
      %v3197 = vpop.f32.mrf.mxu0
      %v3198 = vadd.f32 0.0, %v3197
      %v3199 = vpop.f32.mrf.mxu0
      %v3200 = vadd.f32 0.0, %v3199
      %3201 = vmatmul.bf16.gmra.mxu0 %v3085
      %v3202 = vpop.f32.mrf.mxu0
      %v3203 = vadd.f32 0.0, %v3202
      %v3204 = vpop.f32.mrf.mxu0
      %v3205 = vadd.f32 0.0, %v3204
      %3206 = vmatmul.bf16.gmra.mxu0 %v3086
      %v3207 = vpop.f32.mrf.mxu0
      %v3208 = vadd.f32 0.0, %v3207
      %v3209 = vpop.f32.mrf.mxu0
      %v3210 = vadd.f32 0.0, %v3209
      %3211 = vmatmul.bf16.gmra.mxu0 %v3087
      %v3212 = vpop.f32.mrf.mxu0
      %v3213 = vadd.f32 0.0, %v3212
      %v3214 = vpop.f32.mrf.mxu0
      %v3215 = vadd.f32 0.0, %v3214
      %3216 = vmatmul.bf16.gmra.mxu0 %v3088
      %v3217 = vpop.f32.mrf.mxu0
      %v3218 = vadd.f32 0.0, %v3217
      %v3219 = vpop.f32.mrf.mxu0
      %v3220 = vadd.f32 0.0, %v3219
      %3221 = vmatmul.bf16.gmra.mxu0 %v3089
      %v3222 = vpop.f32.mrf.mxu0
      %v3223 = vadd.f32 0.0, %v3222
      %v3224 = vpop.f32.mrf.mxu0
      %v3225 = vadd.f32 0.0, %v3224
      %3226 = vmatmul.bf16.gmra.mxu0 %v3090
      %v3227 = vpop.f32.mrf.mxu0
      %v3228 = vadd.f32 0.0, %v3227
      %v3229 = vpop.f32.mrf.mxu0
      %v3230 = vadd.f32 0.0, %v3229
      %3231 = vmatmul.bf16.gmra.mxu0 %v3091
      %v3232 = vpop.f32.mrf.mxu0
      %v3233 = vadd.f32 0.0, %v3232
      %v3234 = vpop.f32.mrf.mxu0
      %v3235 = vadd.f32 0.0, %v3234
      %3236 = vmatmul.bf16.gmra.mxu0 %v3092
      %v3237 = vpop.f32.mrf.mxu0
      %v3238 = vadd.f32 0.0, %v3237
      %v3239 = vpop.f32.mrf.mxu0
      %v3240 = vadd.f32 0.0, %v3239
      %3241 = vmatmul.bf16.gmra.mxu0 %v3093
      %v3242 = vpop.f32.mrf.mxu0
      %v3243 = vadd.f32 0.0, %v3242
      %v3244 = vpop.f32.mrf.mxu0
      %v3245 = vadd.f32 0.0, %v3244
      %3246 = vdwg.mxu0
      %v3247 = vadd.f32 %v2932, %v3168
      %v3248 = vadd.f32 %v2933, %v3170
      %v3249 = vadd.f32 %v2934, %v3173
      %v3250 = vadd.f32 %v2935, %v3175
      %v3251 = vadd.f32 %v2936, %v3178
      %v3252 = vadd.f32 %v2937, %v3180
      %v3253 = vadd.f32 %v2938, %v3183
      %v3254 = vadd.f32 %v2939, %v3185
      %v3255 = vadd.f32 %v2940, %v3188
      %v3256 = vadd.f32 %v2941, %v3190
      %v3257 = vadd.f32 %v2942, %v3193
      %v3258 = vadd.f32 %v2943, %v3195
      %v3259 = vadd.f32 %v2944, %v3198
      %v3260 = vadd.f32 %v2945, %v3200
      %v3261 = vadd.f32 %v2946, %v3203
      %v3262 = vadd.f32 %v2947, %v3205
      %v3263 = vadd.f32 %v2948, %v3208
      %v3264 = vadd.f32 %v2949, %v3210
      %v3265 = vadd.f32 %v2950, %v3213
      %v3266 = vadd.f32 %v2951, %v3215
      %v3267 = vadd.f32 %v2952, %v3218
      %v3268 = vadd.f32 %v2953, %v3220
      %v3269 = vadd.f32 %v2954, %v3223
      %v3270 = vadd.f32 %v2955, %v3225
      %v3271 = vadd.f32 %v2956, %v3228
      %v3272 = vadd.f32 %v2957, %v3230
      %v3273 = vadd.f32 %v2958, %v3233
      %v3274 = vadd.f32 %v2959, %v3235
      %v3275 = vadd.f32 %v2960, %v3238
      %v3276 = vadd.f32 %v2961, %v3240
      %v3277 = vadd.f32 %v2962, %v3243
      %v3278 = vadd.f32 %v2963, %v3245
      %v3279 = vld [vmem:[%s2964] sm:$0xf]
      %v3280 = vld [vmem:[%s2964 + $0x4] sm:$0xf]
      %v3281 = vld [vmem:[%s2964 + $0x8] sm:$0x1]
      %v3282 = vld [vmem:[%s2964 + $0xc] sm:$0xf]
      %v3283 = vld [vmem:[%s2964 + $0x10] sm:$0xf]
      %v3284 = vld [vmem:[%s2964 + $0x14] sm:$0x1]
      %v3285 = vld [vmem:[%s2964 + $0x18] sm:$0xf]
      %v3286 = vld [vmem:[%s2964 + $0x1c] sm:$0xf]
      %v3287 = vld [vmem:[%s2964 + $0x20] sm:$0x1]
      %v3288 = vld [vmem:[%s2964 + $0x24] sm:$0xf]
      %v3289 = vld [vmem:[%s2964 + $0x28] sm:$0xf]
      %v3290 = vld [vmem:[%s2964 + $0x2c] sm:$0x1]
      %v3291 = vld [vmem:[%s2964 + $0x30] sm:$0xf]
      %v3292 = vld [vmem:[%s2964 + $0x34] sm:$0xf]
      %v3293 = vld [vmem:[%s2964 + $0x38] sm:$0x1]
      %v3294 = vld [vmem:[%s2964 + $0x3c] sm:$0xf]
      %v3295 = vld [vmem:[%s2964 + $0x40] sm:$0xf]
      %v3296 = vld [vmem:[%s2964 + $0x44] sm:$0x1]
      %v3297 = vld [vmem:[%s2964 + $0x48] sm:$0xf]
      %v3298 = vld [vmem:[%s2964 + $0x4c] sm:$0xf]
      %v3299 = vld [vmem:[%s2964 + $0x50] sm:$0x1]
      %v3300 = vld [vmem:[%s2964 + $0x54] sm:$0xf]
      %v3301 = vld [vmem:[%s2964 + $0x58] sm:$0xf]
      %v3302 = vld [vmem:[%s2964 + $0x5c] sm:$0x1]
      %v3303 = vld [vmem:[%s2964 + $0x60] sm:$0xf]
      %v3304 = vld [vmem:[%s2964 + $0x64] sm:$0xf]
      %v3305 = vld [vmem:[%s2964 + $0x68] sm:$0x1]
      %v3306 = vld [vmem:[%s2964 + $0x6c] sm:$0xf]
      %v3307 = vld [vmem:[%s2964 + $0x70] sm:$0xf]
      %v3308 = vld [vmem:[%s2964 + $0x74] sm:$0x1]
      %v3309 = vld [vmem:[%s2964 + $0x78] sm:$0xf]
      %v3310 = vld [vmem:[%s2964 + $0x7c] sm:$0xf]
      %v3311 = vld [vmem:[%s2964 + $0x80] sm:$0x1]
      %v3312 = vld [vmem:[%s2964 + $0x84] sm:$0xf]
      %v3313 = vld [vmem:[%s2964 + $0x88] sm:$0xf]
      %v3314 = vld [vmem:[%s2964 + $0x8c] sm:$0x1]
      %v3315 = vld [vmem:[%s2964 + $0x90] sm:$0xf]
      %v3316 = vld [vmem:[%s2964 + $0x94] sm:$0xf]
      %v3317 = vld [vmem:[%s2964 + $0x98] sm:$0x1]
      %v3318 = vld [vmem:[%s2964 + $0x9c] sm:$0xf]
      %v3319 = vld [vmem:[%s2964 + $0xa0] sm:$0xf]
      %v3320 = vld [vmem:[%s2964 + $0xa4] sm:$0x1]
      %v3321 = vld [vmem:[%s2964 + $0xa8] sm:$0xf]
      %v3322 = vld [vmem:[%s2964 + $0xac] sm:$0xf]
      %v3323 = vld [vmem:[%s2964 + $0xb0] sm:$0x1]
      %v3324 = vld [vmem:[%s2964 + $0xb4] sm:$0xf]
      %v3325 = vld [vmem:[%s2964 + $0xb8] sm:$0xf]
      %v3326 = vld [vmem:[%s2964 + $0xbc] sm:$0x1]
      %v3328 = vshrl.u32 %v3279, 16
      %v3330 = vrot.slane %v3328, 4
      %v3331 = vshll.u32 %v3279, 16
      %v3333 = vrot.slane %v3331, 5
      %v3334 = vor.u32 %v3330, %v3333
      %v3335 = vrot.slane %v3334, 4
      %v3337 = vshll.u32 %v3280, 16
      %v3339 = vrot.slane %v3337, 5
      %v3340 = vsel %vm292, %v3335, %v3339
      %v3341 = vshrl.u32 %v3280, 16
      %v3343 = vrot.slane %v3341, 4
      %v3344 = vor.u32 %v3343, %v3339
      %v3345 = vrot.slane %v3344, 4
      %v3347 = vshll.u32 %v3281, 16
      %v3349 = vrot.slane %v3347, 5
      %v3350 = vsel %vm292, %v3345, %v3349
      %v3352 = vshrl.u32 %v3282, 16
      %v3354 = vrot.slane %v3352, 4
      %v3355 = vshll.u32 %v3282, 16
      %v3357 = vrot.slane %v3355, 5
      %v3358 = vor.u32 %v3354, %v3357
      %v3359 = vrot.slane %v3358, 4
      %v3361 = vshll.u32 %v3283, 16
      %v3363 = vrot.slane %v3361, 5
      %v3364 = vsel %vm292, %v3359, %v3363
      %v3365 = vshrl.u32 %v3283, 16
      %v3367 = vrot.slane %v3365, 4
      %v3368 = vor.u32 %v3367, %v3363
      %v3369 = vrot.slane %v3368, 4
      %v3371 = vshll.u32 %v3284, 16
      %v3373 = vrot.slane %v3371, 5
      %v3374 = vsel %vm292, %v3369, %v3373
      %v3376 = vshrl.u32 %v3285, 16
      %v3378 = vrot.slane %v3376, 4
      %v3379 = vshll.u32 %v3285, 16
      %v3381 = vrot.slane %v3379, 5
      %v3382 = vor.u32 %v3378, %v3381
      %v3383 = vrot.slane %v3382, 4
      %v3385 = vshll.u32 %v3286, 16
      %v3387 = vrot.slane %v3385, 5
      %v3388 = vsel %vm292, %v3383, %v3387
      %v3389 = vshrl.u32 %v3286, 16
      %v3391 = vrot.slane %v3389, 4
      %v3392 = vor.u32 %v3391, %v3387
      %v3393 = vrot.slane %v3392, 4
      %v3395 = vshll.u32 %v3287, 16
      %v3397 = vrot.slane %v3395, 5
      %v3398 = vsel %vm292, %v3393, %v3397
      %v3400 = vshrl.u32 %v3288, 16
      %v3402 = vrot.slane %v3400, 4
      %v3403 = vshll.u32 %v3288, 16
      %v3405 = vrot.slane %v3403, 5
      %v3406 = vor.u32 %v3402, %v3405
      %v3407 = vrot.slane %v3406, 4
      %v3409 = vshll.u32 %v3289, 16
      %v3411 = vrot.slane %v3409, 5
      %v3412 = vsel %vm292, %v3407, %v3411
      %v3413 = vshrl.u32 %v3289, 16
      %v3415 = vrot.slane %v3413, 4
      %v3416 = vor.u32 %v3415, %v3411
      %v3417 = vrot.slane %v3416, 4
      %v3419 = vshll.u32 %v3290, 16
      %v3421 = vrot.slane %v3419, 5
      %v3422 = vsel %vm292, %v3417, %v3421
      %v3424 = vshrl.u32 %v3291, 16
      %v3426 = vrot.slane %v3424, 4
      %v3427 = vshll.u32 %v3291, 16
      %v3429 = vrot.slane %v3427, 5
      %v3430 = vor.u32 %v3426, %v3429
      %v3431 = vrot.slane %v3430, 4
      %v3433 = vshll.u32 %v3292, 16
      %v3435 = vrot.slane %v3433, 5
      %v3436 = vsel %vm292, %v3431, %v3435
      %v3437 = vshrl.u32 %v3292, 16
      %v3439 = vrot.slane %v3437, 4
      %v3440 = vor.u32 %v3439, %v3435
      %v3441 = vrot.slane %v3440, 4
      %v3443 = vshll.u32 %v3293, 16
      %v3445 = vrot.slane %v3443, 5
      %v3446 = vsel %vm292, %v3441, %v3445
      %v3448 = vshrl.u32 %v3294, 16
      %v3450 = vrot.slane %v3448, 4
      %v3451 = vshll.u32 %v3294, 16
      %v3453 = vrot.slane %v3451, 5
      %v3454 = vor.u32 %v3450, %v3453
      %v3455 = vrot.slane %v3454, 4
      %v3457 = vshll.u32 %v3295, 16
      %v3459 = vrot.slane %v3457, 5
      %v3460 = vsel %vm292, %v3455, %v3459
      %v3461 = vshrl.u32 %v3295, 16
      %v3463 = vrot.slane %v3461, 4
      %v3464 = vor.u32 %v3463, %v3459
      %v3465 = vrot.slane %v3464, 4
      %v3467 = vshll.u32 %v3296, 16
      %v3469 = vrot.slane %v3467, 5
      %v3470 = vsel %vm292, %v3465, %v3469
      %v3472 = vshrl.u32 %v3297, 16
      %v3474 = vrot.slane %v3472, 4
      %v3475 = vshll.u32 %v3297, 16
      %v3477 = vrot.slane %v3475, 5
      %v3478 = vor.u32 %v3474, %v3477
      %v3479 = vrot.slane %v3478, 4
      %v3481 = vshll.u32 %v3298, 16
      %v3483 = vrot.slane %v3481, 5
      %v3484 = vsel %vm292, %v3479, %v3483
      %v3485 = vshrl.u32 %v3298, 16
      %v3487 = vrot.slane %v3485, 4
      %v3488 = vor.u32 %v3487, %v3483
      %v3489 = vrot.slane %v3488, 4
      %v3491 = vshll.u32 %v3299, 16
      %v3493 = vrot.slane %v3491, 5
      %v3494 = vsel %vm292, %v3489, %v3493
      %v3496 = vshrl.u32 %v3300, 16
      %v3498 = vrot.slane %v3496, 4
      %v3499 = vshll.u32 %v3300, 16
      %v3501 = vrot.slane %v3499, 5
      %v3502 = vor.u32 %v3498, %v3501
      %v3503 = vrot.slane %v3502, 4
      %v3505 = vshll.u32 %v3301, 16
      %v3507 = vrot.slane %v3505, 5
      %v3508 = vsel %vm292, %v3503, %v3507
      %v3509 = vshrl.u32 %v3301, 16
      %v3511 = vrot.slane %v3509, 4
      %v3512 = vor.u32 %v3511, %v3507
      %v3513 = vrot.slane %v3512, 4
      %v3515 = vshll.u32 %v3302, 16
      %v3517 = vrot.slane %v3515, 5
      %v3518 = vsel %vm292, %v3513, %v3517
      %v3520 = vshrl.u32 %v3303, 16
      %v3522 = vrot.slane %v3520, 4
      %v3523 = vshll.u32 %v3303, 16
      %v3525 = vrot.slane %v3523, 5
      %v3526 = vor.u32 %v3522, %v3525
      %v3527 = vrot.slane %v3526, 4
      %v3529 = vshll.u32 %v3304, 16
      %v3531 = vrot.slane %v3529, 5
      %v3532 = vsel %vm292, %v3527, %v3531
      %v3533 = vshrl.u32 %v3304, 16
      %v3535 = vrot.slane %v3533, 4
      %v3536 = vor.u32 %v3535, %v3531
      %v3537 = vrot.slane %v3536, 4
      %v3539 = vshll.u32 %v3305, 16
      %v3541 = vrot.slane %v3539, 5
      %v3542 = vsel %vm292, %v3537, %v3541
      %v3544 = vshrl.u32 %v3306, 16
      %v3546 = vrot.slane %v3544, 4
      %v3547 = vshll.u32 %v3306, 16
      %v3549 = vrot.slane %v3547, 5
      %v3550 = vor.u32 %v3546, %v3549
      %v3551 = vrot.slane %v3550, 4
      %v3553 = vshll.u32 %v3307, 16
      %v3555 = vrot.slane %v3553, 5
      %v3556 = vsel %vm292, %v3551, %v3555
      %v3557 = vshrl.u32 %v3307, 16
      %v3559 = vrot.slane %v3557, 4
      %v3560 = vor.u32 %v3559, %v3555
      %v3561 = vrot.slane %v3560, 4
      %v3563 = vshll.u32 %v3308, 16
      %v3565 = vrot.slane %v3563, 5
      %v3566 = vsel %vm292, %v3561, %v3565
      %v3568 = vshrl.u32 %v3309, 16
      %v3570 = vrot.slane %v3568, 4
      %v3571 = vshll.u32 %v3309, 16
      %v3573 = vrot.slane %v3571, 5
      %v3574 = vor.u32 %v3570, %v3573
      %v3575 = vrot.slane %v3574, 4
      %v3577 = vshll.u32 %v3310, 16
      %v3579 = vrot.slane %v3577, 5
      %v3580 = vsel %vm292, %v3575, %v3579
      %v3581 = vshrl.u32 %v3310, 16
      %v3583 = vrot.slane %v3581, 4
      %v3584 = vor.u32 %v3583, %v3579
      %v3585 = vrot.slane %v3584, 4
      %v3587 = vshll.u32 %v3311, 16
      %v3589 = vrot.slane %v3587, 5
      %v3590 = vsel %vm292, %v3585, %v3589
      %v3592 = vshrl.u32 %v3312, 16
      %v3594 = vrot.slane %v3592, 4
      %v3595 = vshll.u32 %v3312, 16
      %v3597 = vrot.slane %v3595, 5
      %v3598 = vor.u32 %v3594, %v3597
      %v3599 = vrot.slane %v3598, 4
      %v3601 = vshll.u32 %v3313, 16
      %v3603 = vrot.slane %v3601, 5
      %v3604 = vsel %vm292, %v3599, %v3603
      %v3605 = vshrl.u32 %v3313, 16
      %v3607 = vrot.slane %v3605, 4
      %v3608 = vor.u32 %v3607, %v3603
      %v3609 = vrot.slane %v3608, 4
      %v3611 = vshll.u32 %v3314, 16
      %v3613 = vrot.slane %v3611, 5
      %v3614 = vsel %vm292, %v3609, %v3613
      %v3616 = vshrl.u32 %v3315, 16
      %v3618 = vrot.slane %v3616, 4
      %v3619 = vshll.u32 %v3315, 16
      %v3621 = vrot.slane %v3619, 5
      %v3622 = vor.u32 %v3618, %v3621
      %v3623 = vrot.slane %v3622, 4
      %v3625 = vshll.u32 %v3316, 16
      %v3627 = vrot.slane %v3625, 5
      %v3628 = vsel %vm292, %v3623, %v3627
      %v3629 = vshrl.u32 %v3316, 16
      %v3631 = vrot.slane %v3629, 4
      %v3632 = vor.u32 %v3631, %v3627
      %v3633 = vrot.slane %v3632, 4
      %v3635 = vshll.u32 %v3317, 16
      %v3637 = vrot.slane %v3635, 5
      %v3638 = vsel %vm292, %v3633, %v3637
      %v3640 = vshrl.u32 %v3318, 16
      %v3642 = vrot.slane %v3640, 4
      %v3643 = vshll.u32 %v3318, 16
      %v3645 = vrot.slane %v3643, 5
      %v3646 = vor.u32 %v3642, %v3645
      %v3647 = vrot.slane %v3646, 4
      %v3649 = vshll.u32 %v3319, 16
      %v3651 = vrot.slane %v3649, 5
      %v3652 = vsel %vm292, %v3647, %v3651
      %v3653 = vshrl.u32 %v3319, 16
      %v3655 = vrot.slane %v3653, 4
      %v3656 = vor.u32 %v3655, %v3651
      %v3657 = vrot.slane %v3656, 4
      %v3659 = vshll.u32 %v3320, 16
      %v3661 = vrot.slane %v3659, 5
      %v3662 = vsel %vm292, %v3657, %v3661
      %v3664 = vshrl.u32 %v3321, 16
      %v3666 = vrot.slane %v3664, 4
      %v3667 = vshll.u32 %v3321, 16
      %v3669 = vrot.slane %v3667, 5
      %v3670 = vor.u32 %v3666, %v3669
      %v3671 = vrot.slane %v3670, 4
      %v3673 = vshll.u32 %v3322, 16
      %v3675 = vrot.slane %v3673, 5
      %v3676 = vsel %vm292, %v3671, %v3675
      %v3677 = vshrl.u32 %v3322, 16
      %v3679 = vrot.slane %v3677, 4
      %v3680 = vor.u32 %v3679, %v3675
      %v3681 = vrot.slane %v3680, 4
      %v3683 = vshll.u32 %v3323, 16
      %v3685 = vrot.slane %v3683, 5
      %v3686 = vsel %vm292, %v3681, %v3685
      %v3688 = vshrl.u32 %v3324, 16
      %v3690 = vrot.slane %v3688, 4
      %v3691 = vshll.u32 %v3324, 16
      %v3693 = vrot.slane %v3691, 5
      %v3694 = vor.u32 %v3690, %v3693
      %v3695 = vrot.slane %v3694, 4
      %v3697 = vshll.u32 %v3325, 16
      %v3699 = vrot.slane %v3697, 5
      %v3700 = vsel %vm292, %v3695, %v3699
      %v3701 = vshrl.u32 %v3325, 16
      %v3703 = vrot.slane %v3701, 4
      %v3704 = vor.u32 %v3703, %v3699
      %v3705 = vrot.slane %v3704, 4
      %v3707 = vshll.u32 %v3326, 16
      %v3709 = vrot.slane %v3707, 5
      %v3710 = vsel %vm292, %v3705, %v3709
      %s3711 = scalar_lea.vmem %s1, 448
      %v3712 = vld [vmem:[%s3711] sm:$0xf]
      %v3713 = vld [vmem:[%s3711 + $0x4] sm:$0xf]
      %v3714 = vld [vmem:[%s3711 + $0x8] sm:$0xf]
      %v3715 = vld [vmem:[%s3711 + $0xc] sm:$0xf]
      %v3716 = vld [vmem:[%s3711 + $0x10] sm:$0xf]
      %v3717 = vld [vmem:[%s3711 + $0x14] sm:$0xf]
      %v3718 = vld [vmem:[%s3711 + $0x18] sm:$0xf]
      %v3719 = vld [vmem:[%s3711 + $0x1c] sm:$0xf]
      %v3720 = vld [vmem:[%s3711 + $0x20] sm:$0xf]
      %v3721 = vld [vmem:[%s3711 + $0x24] sm:$0xf]
      %v3722 = vld [vmem:[%s3711 + $0x28] sm:$0xf]
      %v3723 = vld [vmem:[%s3711 + $0x2c] sm:$0xf]
      %v3724 = vld [vmem:[%s3711 + $0x30] sm:$0xf]
      %v3725 = vld [vmem:[%s3711 + $0x34] sm:$0xf]
      %v3726 = vld [vmem:[%s3711 + $0x38] sm:$0xf]
      %v3727 = vld [vmem:[%s3711 + $0x3c] sm:$0xf]
      %v3728 = vunpack.c.l.b16 %v3340
      %v3729 = vunpack.c.l.b16 %v3350
      %v3730 = vunpack.c.l.b16 %v3364
      %v3731 = vunpack.c.l.b16 %v3374
      %v3732 = vunpack.c.l.b16 %v3388
      %v3733 = vunpack.c.l.b16 %v3398
      %v3734 = vunpack.c.l.b16 %v3412
      %v3735 = vunpack.c.l.b16 %v3422
      %v3736 = vunpack.c.l.b16 %v3436
      %v3737 = vunpack.c.l.b16 %v3446
      %v3738 = vunpack.c.l.b16 %v3460
      %v3739 = vunpack.c.l.b16 %v3470
      %v3740 = vunpack.c.l.b16 %v3484
      %v3741 = vunpack.c.l.b16 %v3494
      %v3742 = vunpack.c.l.b16 %v3508
      %v3743 = vunpack.c.l.b16 %v3518
      %v3744 = vunpack.c.l.b16 %v3532
      %v3745 = vunpack.c.l.b16 %v3542
      %v3746 = vunpack.c.l.b16 %v3556
      %v3747 = vunpack.c.l.b16 %v3566
      %v3748 = vunpack.c.l.b16 %v3580
      %v3749 = vunpack.c.l.b16 %v3590
      %v3750 = vunpack.c.l.b16 %v3604
      %v3751 = vunpack.c.l.b16 %v3614
      %v3752 = vunpack.c.l.b16 %v3628
      %v3753 = vunpack.c.l.b16 %v3638
      %v3754 = vunpack.c.l.b16 %v3652
      %v3755 = vunpack.c.l.b16 %v3662
      %v3756 = vunpack.c.l.b16 %v3676
      %v3757 = vunpack.c.l.b16 %v3686
      %v3758 = vunpack.c.l.b16 %v3700
      %v3759 = vunpack.c.l.b16 %v3710
      %v3760 = vpack.c.b16 %v3729, %v3728
      %v3761 = vpack.c.b16 %v3731, %v3730
      %v3762 = vpack.c.b16 %v3733, %v3732
      %v3763 = vpack.c.b16 %v3735, %v3734
      %v3764 = vpack.c.b16 %v3737, %v3736
      %v3765 = vpack.c.b16 %v3739, %v3738
      %v3766 = vpack.c.b16 %v3741, %v3740
      %v3767 = vpack.c.b16 %v3743, %v3742
      %v3768 = vpack.c.b16 %v3745, %v3744
      %v3769 = vpack.c.b16 %v3747, %v3746
      %v3770 = vpack.c.b16 %v3749, %v3748
      %v3771 = vpack.c.b16 %v3751, %v3750
      %v3772 = vpack.c.b16 %v3753, %v3752
      %v3773 = vpack.c.b16 %v3755, %v3754
      %v3774 = vpack.c.b16 %v3757, %v3756
      %v3775 = vpack.c.b16 %v3759, %v3758
      %v3808 = vunpack.c.l.b16 %v3712
      %v3809 = vunpack.c.l.b16 %v3713
      %v3810 = vunpack.c.l.b16 %v3714
      %v3811 = vunpack.c.l.b16 %v3715
      %v3812 = vunpack.c.l.b16 %v3716
      %v3813 = vunpack.c.l.b16 %v3717
      %v3814 = vunpack.c.l.b16 %v3718
      %v3815 = vunpack.c.l.b16 %v3719
      %v3816 = vunpack.c.l.b16 %v3720
      %v3817 = vunpack.c.l.b16 %v3721
      %v3818 = vunpack.c.l.b16 %v3722
      %v3819 = vunpack.c.l.b16 %v3723
      %v3820 = vunpack.c.l.b16 %v3724
      %v3821 = vunpack.c.l.b16 %v3725
      %v3822 = vunpack.c.l.b16 %v3726
      %v3823 = vunpack.c.l.b16 %v3727
      %v3824 = vpack.c.b16 %v3809, %v3808
      %v3825 = vpack.c.b16 %v3811, %v3810
      %v3826 = vpack.c.b16 %v3813, %v3812
      %v3827 = vpack.c.b16 %v3815, %v3814
      %v3828 = vpack.c.b16 %v3817, %v3816
      %v3829 = vpack.c.b16 %v3819, %v3818
      %v3830 = vpack.c.b16 %v3821, %v3820
      %v3831 = vpack.c.b16 %v3823, %v3822
      %3840 = vmatpush.bf16.msra.mxu0 %v3831
      %3841 = vmatpush.bf16.msra.mxu0 %v3830
      %3842 = vmatpush.bf16.msra.mxu0 %v3829
      %3843 = vmatpush.bf16.msra.mxu0 %v3828
      %3844 = vmatpush.bf16.msra.mxu0 %v3827
      %3845 = vmatpush.bf16.msra.mxu0 %v3826
      %3846 = vmatpush.bf16.msra.mxu0 %v3825
      %3847 = vmatpush.bf16.msra.mxu0 %v3824
      %3848 = vmatmul.bf16.gmra.mxu0 %v3760
      %v3849 = vpop.f32.mrf.mxu0
      %v3850 = vadd.f32 0.0, %v3849
      %v3851 = vpop.f32.mrf.mxu0
      %v3852 = vadd.f32 0.0, %v3851
      %3853 = vmatmul.bf16.gmra.mxu0 %v3761
      %v3854 = vpop.f32.mrf.mxu0
      %v3855 = vadd.f32 0.0, %v3854
      %v3856 = vpop.f32.mrf.mxu0
      %v3857 = vadd.f32 0.0, %v3856
      %3858 = vmatmul.bf16.gmra.mxu0 %v3762
      %v3859 = vpop.f32.mrf.mxu0
      %v3860 = vadd.f32 0.0, %v3859
      %v3861 = vpop.f32.mrf.mxu0
      %v3862 = vadd.f32 0.0, %v3861
      %3863 = vmatmul.bf16.gmra.mxu0 %v3763
      %v3864 = vpop.f32.mrf.mxu0
      %v3865 = vadd.f32 0.0, %v3864
      %v3866 = vpop.f32.mrf.mxu0
      %v3867 = vadd.f32 0.0, %v3866
      %3868 = vmatmul.bf16.gmra.mxu0 %v3764
      %v3869 = vpop.f32.mrf.mxu0
      %v3870 = vadd.f32 0.0, %v3869
      %v3871 = vpop.f32.mrf.mxu0
      %v3872 = vadd.f32 0.0, %v3871
      %3873 = vmatmul.bf16.gmra.mxu0 %v3765
      %v3874 = vpop.f32.mrf.mxu0
      %v3875 = vadd.f32 0.0, %v3874
      %v3876 = vpop.f32.mrf.mxu0
      %v3877 = vadd.f32 0.0, %v3876
      %3878 = vmatmul.bf16.gmra.mxu0 %v3766
      %v3879 = vpop.f32.mrf.mxu0
      %v3880 = vadd.f32 0.0, %v3879
      %v3881 = vpop.f32.mrf.mxu0
      %v3882 = vadd.f32 0.0, %v3881
      %3883 = vmatmul.bf16.gmra.mxu0 %v3767
      %v3884 = vpop.f32.mrf.mxu0
      %v3885 = vadd.f32 0.0, %v3884
      %v3886 = vpop.f32.mrf.mxu0
      %v3887 = vadd.f32 0.0, %v3886
      %3888 = vmatmul.bf16.gmra.mxu0 %v3768
      %v3889 = vpop.f32.mrf.mxu0
      %v3890 = vadd.f32 0.0, %v3889
      %v3891 = vpop.f32.mrf.mxu0
      %v3892 = vadd.f32 0.0, %v3891
      %3893 = vmatmul.bf16.gmra.mxu0 %v3769
      %v3894 = vpop.f32.mrf.mxu0
      %v3895 = vadd.f32 0.0, %v3894
      %v3896 = vpop.f32.mrf.mxu0
      %v3897 = vadd.f32 0.0, %v3896
      %3898 = vmatmul.bf16.gmra.mxu0 %v3770
      %v3899 = vpop.f32.mrf.mxu0
      %v3900 = vadd.f32 0.0, %v3899
      %v3901 = vpop.f32.mrf.mxu0
      %v3902 = vadd.f32 0.0, %v3901
      %3903 = vmatmul.bf16.gmra.mxu0 %v3771
      %v3904 = vpop.f32.mrf.mxu0
      %v3905 = vadd.f32 0.0, %v3904
      %v3906 = vpop.f32.mrf.mxu0
      %v3907 = vadd.f32 0.0, %v3906
      %3908 = vmatmul.bf16.gmra.mxu0 %v3772
      %v3909 = vpop.f32.mrf.mxu0
      %v3910 = vadd.f32 0.0, %v3909
      %v3911 = vpop.f32.mrf.mxu0
      %v3912 = vadd.f32 0.0, %v3911
      %3913 = vmatmul.bf16.gmra.mxu0 %v3773
      %v3914 = vpop.f32.mrf.mxu0
      %v3915 = vadd.f32 0.0, %v3914
      %v3916 = vpop.f32.mrf.mxu0
      %v3917 = vadd.f32 0.0, %v3916
      %3918 = vmatmul.bf16.gmra.mxu0 %v3774
      %v3919 = vpop.f32.mrf.mxu0
      %v3920 = vadd.f32 0.0, %v3919
      %v3921 = vpop.f32.mrf.mxu0
      %v3922 = vadd.f32 0.0, %v3921
      %3923 = vmatmul.bf16.gmra.mxu0 %v3775
      %v3924 = vpop.f32.mrf.mxu0
      %v3925 = vadd.f32 0.0, %v3924
      %v3926 = vpop.f32.mrf.mxu0
      %v3927 = vadd.f32 0.0, %v3926
      %3928 = vdwg.mxu0
      %v3929 = vadd.f32 %v3247, %v3850
      %v3930 = vadd.f32 %v3248, %v3852
      %v3931 = vadd.f32 %v3249, %v3855
      %v3932 = vadd.f32 %v3250, %v3857
      %v3933 = vadd.f32 %v3251, %v3860
      %v3934 = vadd.f32 %v3252, %v3862
      %v3935 = vadd.f32 %v3253, %v3865
      %v3936 = vadd.f32 %v3254, %v3867
      %v3937 = vadd.f32 %v3255, %v3870
      %v3938 = vadd.f32 %v3256, %v3872
      %v3939 = vadd.f32 %v3257, %v3875
      %v3940 = vadd.f32 %v3258, %v3877
      %v3941 = vadd.f32 %v3259, %v3880
      %v3942 = vadd.f32 %v3260, %v3882
      %v3943 = vadd.f32 %v3261, %v3885
      %v3944 = vadd.f32 %v3262, %v3887
      %v3945 = vadd.f32 %v3263, %v3890
      %v3946 = vadd.f32 %v3264, %v3892
      %v3947 = vadd.f32 %v3265, %v3895
      %v3948 = vadd.f32 %v3266, %v3897
      %v3949 = vadd.f32 %v3267, %v3900
      %v3950 = vadd.f32 %v3268, %v3902
      %v3951 = vadd.f32 %v3269, %v3905
      %v3952 = vadd.f32 %v3270, %v3907
      %v3953 = vadd.f32 %v3271, %v3910
      %v3954 = vadd.f32 %v3272, %v3912
      %v3955 = vadd.f32 %v3273, %v3915
      %v3956 = vadd.f32 %v3274, %v3917
      %v3957 = vadd.f32 %v3275, %v3920
      %v3958 = vadd.f32 %v3276, %v3922
      %v3959 = vadd.f32 %v3277, %v3925
      %v3960 = vadd.f32 %v3278, %v3927
      %v3961 = vld [vmem:[%s2964] sm:$0xe]
      %v3962 = vld [vmem:[%s2964 + $0xc] sm:$0xe]
      %v3963 = vld [vmem:[%s2964 + $0x18] sm:$0xe]
      %v3964 = vld [vmem:[%s2964 + $0x24] sm:$0xe]
      %v3965 = vld [vmem:[%s2964 + $0x30] sm:$0xe]
      %v3966 = vld [vmem:[%s2964 + $0x3c] sm:$0xe]
      %v3967 = vld [vmem:[%s2964 + $0x48] sm:$0xe]
      %v3968 = vld [vmem:[%s2964 + $0x54] sm:$0xe]
      %v3969 = vld [vmem:[%s2964 + $0x60] sm:$0xe]
      %v3970 = vld [vmem:[%s2964 + $0x6c] sm:$0xe]
      %v3971 = vld [vmem:[%s2964 + $0x78] sm:$0xe]
      %v3972 = vld [vmem:[%s2964 + $0x84] sm:$0xe]
      %v3973 = vld [vmem:[%s2964 + $0x90] sm:$0xe]
      %v3974 = vld [vmem:[%s2964 + $0x9c] sm:$0xe]
      %v3975 = vld [vmem:[%s2964 + $0xa8] sm:$0xe]
      %v3976 = vld [vmem:[%s2964 + $0xb4] sm:$0xe]
      %v4025 = vrot.slane %v3961, 5
      %v4026 = vrot.slane %v4025, 4
      %v4027 = vrot.slane %v3280, 5
      %v4028 = vsel %vm1178, %v4026, %v4027
      %v4029 = vrot.slane %v4027, 4
      %v4030 = vrot.slane %v3281, 5
      %v4031 = vsel %vm1178, %v4029, %v4030
      %v4032 = vrot.slane %v3962, 5
      %v4033 = vrot.slane %v4032, 4
      %v4034 = vrot.slane %v3283, 5
      %v4035 = vsel %vm1178, %v4033, %v4034
      %v4036 = vrot.slane %v4034, 4
      %v4037 = vrot.slane %v3284, 5
      %v4038 = vsel %vm1178, %v4036, %v4037
      %v4039 = vrot.slane %v3963, 5
      %v4040 = vrot.slane %v4039, 4
      %v4041 = vrot.slane %v3286, 5
      %v4042 = vsel %vm1178, %v4040, %v4041
      %v4043 = vrot.slane %v4041, 4
      %v4044 = vrot.slane %v3287, 5
      %v4045 = vsel %vm1178, %v4043, %v4044
      %v4046 = vrot.slane %v3964, 5
      %v4047 = vrot.slane %v4046, 4
      %v4048 = vrot.slane %v3289, 5
      %v4049 = vsel %vm1178, %v4047, %v4048
      %v4050 = vrot.slane %v4048, 4
      %v4051 = vrot.slane %v3290, 5
      %v4052 = vsel %vm1178, %v4050, %v4051
      %v4053 = vrot.slane %v3965, 5
      %v4054 = vrot.slane %v4053, 4
      %v4055 = vrot.slane %v3292, 5
      %v4056 = vsel %vm1178, %v4054, %v4055
      %v4057 = vrot.slane %v4055, 4
      %v4058 = vrot.slane %v3293, 5
      %v4059 = vsel %vm1178, %v4057, %v4058
      %v4060 = vrot.slane %v3966, 5
      %v4061 = vrot.slane %v4060, 4
      %v4062 = vrot.slane %v3295, 5
      %v4063 = vsel %vm1178, %v4061, %v4062
      %v4064 = vrot.slane %v4062, 4
      %v4065 = vrot.slane %v3296, 5
      %v4066 = vsel %vm1178, %v4064, %v4065
      %v4067 = vrot.slane %v3967, 5
      %v4068 = vrot.slane %v4067, 4
      %v4069 = vrot.slane %v3298, 5
      %v4070 = vsel %vm1178, %v4068, %v4069
      %v4071 = vrot.slane %v4069, 4
      %v4072 = vrot.slane %v3299, 5
      %v4073 = vsel %vm1178, %v4071, %v4072
      %v4074 = vrot.slane %v3968, 5
      %v4075 = vrot.slane %v4074, 4
      %v4076 = vrot.slane %v3301, 5
      %v4077 = vsel %vm1178, %v4075, %v4076
      %v4078 = vrot.slane %v4076, 4
      %v4079 = vrot.slane %v3302, 5
      %v4080 = vsel %vm1178, %v4078, %v4079
      %v4081 = vrot.slane %v3969, 5
      %v4082 = vrot.slane %v4081, 4
      %v4083 = vrot.slane %v3304, 5
      %v4084 = vsel %vm1178, %v4082, %v4083
      %v4085 = vrot.slane %v4083, 4
      %v4086 = vrot.slane %v3305, 5
      %v4087 = vsel %vm1178, %v4085, %v4086
      %v4088 = vrot.slane %v3970, 5
      %v4089 = vrot.slane %v4088, 4
      %v4090 = vrot.slane %v3307, 5
      %v4091 = vsel %vm1178, %v4089, %v4090
      %v4092 = vrot.slane %v4090, 4
      %v4093 = vrot.slane %v3308, 5
      %v4094 = vsel %vm1178, %v4092, %v4093
      %v4095 = vrot.slane %v3971, 5
      %v4096 = vrot.slane %v4095, 4
      %v4097 = vrot.slane %v3310, 5
      %v4098 = vsel %vm1178, %v4096, %v4097
      %v4099 = vrot.slane %v4097, 4
      %v4100 = vrot.slane %v3311, 5
      %v4101 = vsel %vm1178, %v4099, %v4100
      %v4102 = vrot.slane %v3972, 5
      %v4103 = vrot.slane %v4102, 4
      %v4104 = vrot.slane %v3313, 5
      %v4105 = vsel %vm1178, %v4103, %v4104
      %v4106 = vrot.slane %v4104, 4
      %v4107 = vrot.slane %v3314, 5
      %v4108 = vsel %vm1178, %v4106, %v4107
      %v4109 = vrot.slane %v3973, 5
      %v4110 = vrot.slane %v4109, 4
      %v4111 = vrot.slane %v3316, 5
      %v4112 = vsel %vm1178, %v4110, %v4111
      %v4113 = vrot.slane %v4111, 4
      %v4114 = vrot.slane %v3317, 5
      %v4115 = vsel %vm1178, %v4113, %v4114
      %v4116 = vrot.slane %v3974, 5
      %v4117 = vrot.slane %v4116, 4
      %v4118 = vrot.slane %v3319, 5
      %v4119 = vsel %vm1178, %v4117, %v4118
      %v4120 = vrot.slane %v4118, 4
      %v4121 = vrot.slane %v3320, 5
      %v4122 = vsel %vm1178, %v4120, %v4121
      %v4123 = vrot.slane %v3975, 5
      %v4124 = vrot.slane %v4123, 4
      %v4125 = vrot.slane %v3322, 5
      %v4126 = vsel %vm1178, %v4124, %v4125
      %v4127 = vrot.slane %v4125, 4
      %v4128 = vrot.slane %v3323, 5
      %v4129 = vsel %vm1178, %v4127, %v4128
      %v4130 = vrot.slane %v3976, 5
      %v4131 = vrot.slane %v4130, 4
      %v4132 = vrot.slane %v3325, 5
      %v4133 = vsel %vm1178, %v4131, %v4132
      %v4134 = vrot.slane %v4132, 4
      %v4135 = vrot.slane %v3326, 5
      %v4136 = vsel %vm1178, %v4134, %v4135
      %s4137 = scalar_lea.vmem %s1, 512
      %v4138 = vld [vmem:[%s4137] sm:$0xf]
      %v4139 = vld [vmem:[%s4137 + $0x4] sm:$0xf]
      %v4140 = vld [vmem:[%s4137 + $0x8] sm:$0xf]
      %v4141 = vld [vmem:[%s4137 + $0xc] sm:$0xf]
      %v4142 = vld [vmem:[%s4137 + $0x10] sm:$0xf]
      %v4143 = vld [vmem:[%s4137 + $0x14] sm:$0xf]
      %v4144 = vld [vmem:[%s4137 + $0x18] sm:$0xf]
      %v4145 = vld [vmem:[%s4137 + $0x1c] sm:$0xf]
      %v4146 = vld [vmem:[%s4137 + $0x20] sm:$0xf]
      %v4147 = vld [vmem:[%s4137 + $0x24] sm:$0xf]
      %v4148 = vld [vmem:[%s4137 + $0x28] sm:$0xf]
      %v4149 = vld [vmem:[%s4137 + $0x2c] sm:$0xf]
      %v4150 = vld [vmem:[%s4137 + $0x30] sm:$0xf]
      %v4151 = vld [vmem:[%s4137 + $0x34] sm:$0xf]
      %v4152 = vld [vmem:[%s4137 + $0x38] sm:$0xf]
      %v4153 = vld [vmem:[%s4137 + $0x3c] sm:$0xf]
      %v4154 = vunpack.c.l.b16 %v4028
      %v4155 = vunpack.c.l.b16 %v4031
      %v4156 = vunpack.c.l.b16 %v4035
      %v4157 = vunpack.c.l.b16 %v4038
      %v4158 = vunpack.c.l.b16 %v4042
      %v4159 = vunpack.c.l.b16 %v4045
      %v4160 = vunpack.c.l.b16 %v4049
      %v4161 = vunpack.c.l.b16 %v4052
      %v4162 = vunpack.c.l.b16 %v4056
      %v4163 = vunpack.c.l.b16 %v4059
      %v4164 = vunpack.c.l.b16 %v4063
      %v4165 = vunpack.c.l.b16 %v4066
      %v4166 = vunpack.c.l.b16 %v4070
      %v4167 = vunpack.c.l.b16 %v4073
      %v4168 = vunpack.c.l.b16 %v4077
      %v4169 = vunpack.c.l.b16 %v4080
      %v4170 = vunpack.c.l.b16 %v4084
      %v4171 = vunpack.c.l.b16 %v4087
      %v4172 = vunpack.c.l.b16 %v4091
      %v4173 = vunpack.c.l.b16 %v4094
      %v4174 = vunpack.c.l.b16 %v4098
      %v4175 = vunpack.c.l.b16 %v4101
      %v4176 = vunpack.c.l.b16 %v4105
      %v4177 = vunpack.c.l.b16 %v4108
      %v4178 = vunpack.c.l.b16 %v4112
      %v4179 = vunpack.c.l.b16 %v4115
      %v4180 = vunpack.c.l.b16 %v4119
      %v4181 = vunpack.c.l.b16 %v4122
      %v4182 = vunpack.c.l.b16 %v4126
      %v4183 = vunpack.c.l.b16 %v4129
      %v4184 = vunpack.c.l.b16 %v4133
      %v4185 = vunpack.c.l.b16 %v4136
      %v4186 = vpack.c.b16 %v4155, %v4154
      %v4187 = vpack.c.b16 %v4157, %v4156
      %v4188 = vpack.c.b16 %v4159, %v4158
      %v4189 = vpack.c.b16 %v4161, %v4160
      %v4190 = vpack.c.b16 %v4163, %v4162
      %v4191 = vpack.c.b16 %v4165, %v4164
      %v4192 = vpack.c.b16 %v4167, %v4166
      %v4193 = vpack.c.b16 %v4169, %v4168
      %v4194 = vpack.c.b16 %v4171, %v4170
      %v4195 = vpack.c.b16 %v4173, %v4172
      %v4196 = vpack.c.b16 %v4175, %v4174
      %v4197 = vpack.c.b16 %v4177, %v4176
      %v4198 = vpack.c.b16 %v4179, %v4178
      %v4199 = vpack.c.b16 %v4181, %v4180
      %v4200 = vpack.c.b16 %v4183, %v4182
      %v4201 = vpack.c.b16 %v4185, %v4184
      %v4234 = vunpack.c.l.b16 %v4138
      %v4235 = vunpack.c.l.b16 %v4139
      %v4236 = vunpack.c.l.b16 %v4140
      %v4237 = vunpack.c.l.b16 %v4141
      %v4238 = vunpack.c.l.b16 %v4142
      %v4239 = vunpack.c.l.b16 %v4143
      %v4240 = vunpack.c.l.b16 %v4144
      %v4241 = vunpack.c.l.b16 %v4145
      %v4242 = vunpack.c.l.b16 %v4146
      %v4243 = vunpack.c.l.b16 %v4147
      %v4244 = vunpack.c.l.b16 %v4148
      %v4245 = vunpack.c.l.b16 %v4149
      %v4246 = vunpack.c.l.b16 %v4150
      %v4247 = vunpack.c.l.b16 %v4151
      %v4248 = vunpack.c.l.b16 %v4152
      %v4249 = vunpack.c.l.b16 %v4153
      %v4250 = vpack.c.b16 %v4235, %v4234
      %v4251 = vpack.c.b16 %v4237, %v4236
      %v4252 = vpack.c.b16 %v4239, %v4238
      %v4253 = vpack.c.b16 %v4241, %v4240
      %v4254 = vpack.c.b16 %v4243, %v4242
      %v4255 = vpack.c.b16 %v4245, %v4244
      %v4256 = vpack.c.b16 %v4247, %v4246
      %v4257 = vpack.c.b16 %v4249, %v4248
      %4266 = vmatpush.bf16.msra.mxu0 %v4257
      %4267 = vmatpush.bf16.msra.mxu0 %v4256
      %4268 = vmatpush.bf16.msra.mxu0 %v4255
      %4269 = vmatpush.bf16.msra.mxu0 %v4254
      %4270 = vmatpush.bf16.msra.mxu0 %v4253
      %4271 = vmatpush.bf16.msra.mxu0 %v4252
      %4272 = vmatpush.bf16.msra.mxu0 %v4251
      %4273 = vmatpush.bf16.msra.mxu0 %v4250
      %4274 = vmatmul.bf16.gmra.mxu0 %v4186
      %v4275 = vpop.f32.mrf.mxu0
      %v4276 = vadd.f32 0.0, %v4275
      %v4277 = vpop.f32.mrf.mxu0
      %v4278 = vadd.f32 0.0, %v4277
      %4279 = vmatmul.bf16.gmra.mxu0 %v4187
      %v4280 = vpop.f32.mrf.mxu0
      %v4281 = vadd.f32 0.0, %v4280
      %v4282 = vpop.f32.mrf.mxu0
      %v4283 = vadd.f32 0.0, %v4282
      %4284 = vmatmul.bf16.gmra.mxu0 %v4188
      %v4285 = vpop.f32.mrf.mxu0
      %v4286 = vadd.f32 0.0, %v4285
      %v4287 = vpop.f32.mrf.mxu0
      %v4288 = vadd.f32 0.0, %v4287
      %4289 = vmatmul.bf16.gmra.mxu0 %v4189
      %v4290 = vpop.f32.mrf.mxu0
      %v4291 = vadd.f32 0.0, %v4290
      %v4292 = vpop.f32.mrf.mxu0
      %v4293 = vadd.f32 0.0, %v4292
      %4294 = vmatmul.bf16.gmra.mxu0 %v4190
      %v4295 = vpop.f32.mrf.mxu0
      %v4296 = vadd.f32 0.0, %v4295
      %v4297 = vpop.f32.mrf.mxu0
      %v4298 = vadd.f32 0.0, %v4297
      %4299 = vmatmul.bf16.gmra.mxu0 %v4191
      %v4300 = vpop.f32.mrf.mxu0
      %v4301 = vadd.f32 0.0, %v4300
      %v4302 = vpop.f32.mrf.mxu0
      %v4303 = vadd.f32 0.0, %v4302
      %4304 = vmatmul.bf16.gmra.mxu0 %v4192
      %v4305 = vpop.f32.mrf.mxu0
      %v4306 = vadd.f32 0.0, %v4305
      %v4307 = vpop.f32.mrf.mxu0
      %v4308 = vadd.f32 0.0, %v4307
      %4309 = vmatmul.bf16.gmra.mxu0 %v4193
      %v4310 = vpop.f32.mrf.mxu0
      %v4311 = vadd.f32 0.0, %v4310
      %v4312 = vpop.f32.mrf.mxu0
      %v4313 = vadd.f32 0.0, %v4312
      %4314 = vmatmul.bf16.gmra.mxu0 %v4194
      %v4315 = vpop.f32.mrf.mxu0
      %v4316 = vadd.f32 0.0, %v4315
      %v4317 = vpop.f32.mrf.mxu0
      %v4318 = vadd.f32 0.0, %v4317
      %4319 = vmatmul.bf16.gmra.mxu0 %v4195
      %v4320 = vpop.f32.mrf.mxu0
      %v4321 = vadd.f32 0.0, %v4320
      %v4322 = vpop.f32.mrf.mxu0
      %v4323 = vadd.f32 0.0, %v4322
      %4324 = vmatmul.bf16.gmra.mxu0 %v4196
      %v4325 = vpop.f32.mrf.mxu0
      %v4326 = vadd.f32 0.0, %v4325
      %v4327 = vpop.f32.mrf.mxu0
      %v4328 = vadd.f32 0.0, %v4327
      %4329 = vmatmul.bf16.gmra.mxu0 %v4197
      %v4330 = vpop.f32.mrf.mxu0
      %v4331 = vadd.f32 0.0, %v4330
      %v4332 = vpop.f32.mrf.mxu0
      %v4333 = vadd.f32 0.0, %v4332
      %4334 = vmatmul.bf16.gmra.mxu0 %v4198
      %v4335 = vpop.f32.mrf.mxu0
      %v4336 = vadd.f32 0.0, %v4335
      %v4337 = vpop.f32.mrf.mxu0
      %v4338 = vadd.f32 0.0, %v4337
      %4339 = vmatmul.bf16.gmra.mxu0 %v4199
      %v4340 = vpop.f32.mrf.mxu0
      %v4341 = vadd.f32 0.0, %v4340
      %v4342 = vpop.f32.mrf.mxu0
      %v4343 = vadd.f32 0.0, %v4342
      %4344 = vmatmul.bf16.gmra.mxu0 %v4200
      %v4345 = vpop.f32.mrf.mxu0
      %v4346 = vadd.f32 0.0, %v4345
      %v4347 = vpop.f32.mrf.mxu0
      %v4348 = vadd.f32 0.0, %v4347
      %4349 = vmatmul.bf16.gmra.mxu0 %v4201
      %v4350 = vpop.f32.mrf.mxu0
      %v4351 = vadd.f32 0.0, %v4350
      %v4352 = vpop.f32.mrf.mxu0
      %v4353 = vadd.f32 0.0, %v4352
      %4354 = vdwg.mxu0
      %v4355 = vadd.f32 %v3929, %v4276
      %v4356 = vadd.f32 %v3930, %v4278
      %v4357 = vadd.f32 %v3931, %v4281
      %v4358 = vadd.f32 %v3932, %v4283
      %v4359 = vadd.f32 %v3933, %v4286
      %v4360 = vadd.f32 %v3934, %v4288
      %v4361 = vadd.f32 %v3935, %v4291
      %v4362 = vadd.f32 %v3936, %v4293
      %v4363 = vadd.f32 %v3937, %v4296
      %v4364 = vadd.f32 %v3938, %v4298
      %v4365 = vadd.f32 %v3939, %v4301
      %v4366 = vadd.f32 %v3940, %v4303
      %v4367 = vadd.f32 %v3941, %v4306
      %v4368 = vadd.f32 %v3942, %v4308
      %v4369 = vadd.f32 %v3943, %v4311
      %v4370 = vadd.f32 %v3944, %v4313
      %v4371 = vadd.f32 %v3945, %v4316
      %v4372 = vadd.f32 %v3946, %v4318
      %v4373 = vadd.f32 %v3947, %v4321
      %v4374 = vadd.f32 %v3948, %v4323
      %v4375 = vadd.f32 %v3949, %v4326
      %v4376 = vadd.f32 %v3950, %v4328
      %v4377 = vadd.f32 %v3951, %v4331
      %v4378 = vadd.f32 %v3952, %v4333
      %v4379 = vadd.f32 %v3953, %v4336
      %v4380 = vadd.f32 %v3954, %v4338
      %v4381 = vadd.f32 %v3955, %v4341
      %v4382 = vadd.f32 %v3956, %v4343
      %v4383 = vadd.f32 %v3957, %v4346
      %v4384 = vadd.f32 %v3958, %v4348
      %v4385 = vadd.f32 %v3959, %v4351
      %v4386 = vadd.f32 %v3960, %v4353
      %v4387 = vmax.f32 %v4355, 0.0
      %v4388 = vmax.f32 %v4356, 0.0
      %v4389 = vmax.f32 %v4357, 0.0
      %v4390 = vmax.f32 %v4358, 0.0
      %v4391 = vmax.f32 %v4359, 0.0
      %v4392 = vmax.f32 %v4360, 0.0
      %v4393 = vmax.f32 %v4361, 0.0
      %v4394 = vmax.f32 %v4362, 0.0
      %v4395 = vmax.f32 %v4363, 0.0
      %v4396 = vmax.f32 %v4364, 0.0
      %v4397 = vmax.f32 %v4365, 0.0
      %v4398 = vmax.f32 %v4366, 0.0
      %v4399 = vmax.f32 %v4367, 0.0
      %v4400 = vmax.f32 %v4368, 0.0
      %v4401 = vmax.f32 %v4369, 0.0
      %v4402 = vmax.f32 %v4370, 0.0
      %v4403 = vmax.f32 %v4371, 0.0
      %v4404 = vmax.f32 %v4372, 0.0
      %v4405 = vmax.f32 %v4373, 0.0
      %v4406 = vmax.f32 %v4374, 0.0
      %v4407 = vmax.f32 %v4375, 0.0
      %v4408 = vmax.f32 %v4376, 0.0
      %v4409 = vmax.f32 %v4377, 0.0
      %v4410 = vmax.f32 %v4378, 0.0
      %v4411 = vmax.f32 %v4379, 0.0
      %v4412 = vmax.f32 %v4380, 0.0
      %v4413 = vmax.f32 %v4381, 0.0
      %v4414 = vmax.f32 %v4382, 0.0
      %v4415 = vmax.f32 %v4383, 0.0
      %v4416 = vmax.f32 %v4384, 0.0
      %v4417 = vmax.f32 %v4385, 0.0
      %v4418 = vmax.f32 %v4386, 0.0
      %v4419 = vpack.c.bf16 %v4387, %v4387
      %v4420 = vpack.c.bf16 %v4388, %v4388
      %v4421 = vpack.c.bf16 %v4389, %v4389
      %v4422 = vpack.c.bf16 %v4390, %v4390
      %v4423 = vpack.c.bf16 %v4391, %v4391
      %v4424 = vpack.c.bf16 %v4392, %v4392
      %v4425 = vpack.c.bf16 %v4393, %v4393
      %v4426 = vpack.c.bf16 %v4394, %v4394
      %v4427 = vpack.c.bf16 %v4395, %v4395
      %v4428 = vpack.c.bf16 %v4396, %v4396
      %v4429 = vpack.c.bf16 %v4397, %v4397
      %v4430 = vpack.c.bf16 %v4398, %v4398
      %v4431 = vpack.c.bf16 %v4399, %v4399
      %v4432 = vpack.c.bf16 %v4400, %v4400
      %v4433 = vpack.c.bf16 %v4401, %v4401
      %v4434 = vpack.c.bf16 %v4402, %v4402
      %v4435 = vpack.c.bf16 %v4403, %v4403
      %v4436 = vpack.c.bf16 %v4404, %v4404
      %v4437 = vpack.c.bf16 %v4405, %v4405
      %v4438 = vpack.c.bf16 %v4406, %v4406
      %v4439 = vpack.c.bf16 %v4407, %v4407
      %v4440 = vpack.c.bf16 %v4408, %v4408
      %v4441 = vpack.c.bf16 %v4409, %v4409
      %v4442 = vpack.c.bf16 %v4410, %v4410
      %v4443 = vpack.c.bf16 %v4411, %v4411
      %v4444 = vpack.c.bf16 %v4412, %v4412
      %v4445 = vpack.c.bf16 %v4413, %v4413
      %v4446 = vpack.c.bf16 %v4414, %v4414
      %v4447 = vpack.c.bf16 %v4415, %v4415
      %v4448 = vpack.c.bf16 %v4416, %v4416
      %v4449 = vpack.c.bf16 %v4417, %v4417
      %v4450 = vpack.c.bf16 %v4418, %v4418
      %vm4451 = vsmask.f32 256
      %vm4452 = vsmask.f32 4368
      %vm4453 = vmor %vm4451, %vm4452
      %v4455 = vshrl.u32 %v4419, 16
      %v4457 = vrot.slane %v4455, 7
      %v4458 = vshll.u32 %v4419, 16
      %v4460 = vor.u32 %v4457, %v4458
      %v4461 = vrot.slane %v4457, 4
      %v4463 = vshrl.u32 %v4420, 16
      %v4465 = vrot.slane %v4463, 7
      %v4466 = vshll.u32 %v4420, 16
      %v4468 = vor.u32 %v4465, %v4466
      %v4469 = vsel %vm4453, %v4461, %v4468
      %v4470 = vrot.slane %v4465, 4
      %v4472 = vshrl.u32 %v4421, 16
      %v4474 = vrot.slane %v4472, 7
      %v4475 = vshll.u32 %v4421, 16
      %v4477 = vor.u32 %v4474, %v4475
      %v4478 = vrot.slane %v4474, 4
      %v4480 = vshrl.u32 %v4422, 16
      %v4482 = vrot.slane %v4480, 7
      %v4483 = vshll.u32 %v4422, 16
      %v4485 = vor.u32 %v4482, %v4483
      %v4486 = vsel %vm4453, %v4478, %v4485
      %v4487 = vrot.slane %v4482, 4
      %v4489 = vshrl.u32 %v4423, 16
      %v4491 = vrot.slane %v4489, 7
      %v4492 = vshll.u32 %v4423, 16
      %v4494 = vor.u32 %v4491, %v4492
      %v4495 = vrot.slane %v4491, 4
      %v4497 = vshrl.u32 %v4424, 16
      %v4499 = vrot.slane %v4497, 7
      %v4500 = vshll.u32 %v4424, 16
      %v4502 = vor.u32 %v4499, %v4500
      %v4503 = vsel %vm4453, %v4495, %v4502
      %v4504 = vrot.slane %v4499, 4
      %v4506 = vshrl.u32 %v4425, 16
      %v4508 = vrot.slane %v4506, 7
      %v4509 = vshll.u32 %v4425, 16
      %v4511 = vor.u32 %v4508, %v4509
      %v4512 = vrot.slane %v4508, 4
      %v4514 = vshrl.u32 %v4426, 16
      %v4516 = vrot.slane %v4514, 7
      %v4517 = vshll.u32 %v4426, 16
      %v4519 = vor.u32 %v4516, %v4517
      %v4520 = vsel %vm4453, %v4512, %v4519
      %v4521 = vrot.slane %v4516, 4
      %v4523 = vshrl.u32 %v4427, 16
      %v4525 = vrot.slane %v4523, 7
      %v4526 = vshll.u32 %v4427, 16
      %v4528 = vor.u32 %v4525, %v4526
      %v4529 = vrot.slane %v4525, 4
      %v4531 = vshrl.u32 %v4428, 16
      %v4533 = vrot.slane %v4531, 7
      %v4534 = vshll.u32 %v4428, 16
      %v4536 = vor.u32 %v4533, %v4534
      %v4537 = vsel %vm4453, %v4529, %v4536
      %v4538 = vrot.slane %v4533, 4
      %v4540 = vshrl.u32 %v4429, 16
      %v4542 = vrot.slane %v4540, 7
      %v4543 = vshll.u32 %v4429, 16
      %v4545 = vor.u32 %v4542, %v4543
      %v4546 = vrot.slane %v4542, 4
      %v4548 = vshrl.u32 %v4430, 16
      %v4550 = vrot.slane %v4548, 7
      %v4551 = vshll.u32 %v4430, 16
      %v4553 = vor.u32 %v4550, %v4551
      %v4554 = vsel %vm4453, %v4546, %v4553
      %v4555 = vrot.slane %v4550, 4
      %v4557 = vshrl.u32 %v4431, 16
      %v4559 = vrot.slane %v4557, 7
      %v4560 = vshll.u32 %v4431, 16
      %v4562 = vor.u32 %v4559, %v4560
      %v4563 = vrot.slane %v4559, 4
      %v4565 = vshrl.u32 %v4432, 16
      %v4567 = vrot.slane %v4565, 7
      %v4568 = vshll.u32 %v4432, 16
      %v4570 = vor.u32 %v4567, %v4568
      %v4571 = vsel %vm4453, %v4563, %v4570
      %v4572 = vrot.slane %v4567, 4
      %v4574 = vshrl.u32 %v4433, 16
      %v4576 = vrot.slane %v4574, 7
      %v4577 = vshll.u32 %v4433, 16
      %v4579 = vor.u32 %v4576, %v4577
      %v4580 = vrot.slane %v4576, 4
      %v4582 = vshrl.u32 %v4434, 16
      %v4584 = vrot.slane %v4582, 7
      %v4585 = vshll.u32 %v4434, 16
      %v4587 = vor.u32 %v4584, %v4585
      %v4588 = vsel %vm4453, %v4580, %v4587
      %v4589 = vrot.slane %v4584, 4
      %v4591 = vshrl.u32 %v4435, 16
      %v4593 = vrot.slane %v4591, 7
      %v4594 = vshll.u32 %v4435, 16
      %v4596 = vor.u32 %v4593, %v4594
      %v4597 = vrot.slane %v4593, 4
      %v4599 = vshrl.u32 %v4436, 16
      %v4601 = vrot.slane %v4599, 7
      %v4602 = vshll.u32 %v4436, 16
      %v4604 = vor.u32 %v4601, %v4602
      %v4605 = vsel %vm4453, %v4597, %v4604
      %v4606 = vrot.slane %v4601, 4
      %v4608 = vshrl.u32 %v4437, 16
      %v4610 = vrot.slane %v4608, 7
      %v4611 = vshll.u32 %v4437, 16
      %v4613 = vor.u32 %v4610, %v4611
      %v4614 = vrot.slane %v4610, 4
      %v4616 = vshrl.u32 %v4438, 16
      %v4618 = vrot.slane %v4616, 7
      %v4619 = vshll.u32 %v4438, 16
      %v4621 = vor.u32 %v4618, %v4619
      %v4622 = vsel %vm4453, %v4614, %v4621
      %v4623 = vrot.slane %v4618, 4
      %v4625 = vshrl.u32 %v4439, 16
      %v4627 = vrot.slane %v4625, 7
      %v4628 = vshll.u32 %v4439, 16
      %v4630 = vor.u32 %v4627, %v4628
      %v4631 = vrot.slane %v4627, 4
      %v4633 = vshrl.u32 %v4440, 16
      %v4635 = vrot.slane %v4633, 7
      %v4636 = vshll.u32 %v4440, 16
      %v4638 = vor.u32 %v4635, %v4636
      %v4639 = vsel %vm4453, %v4631, %v4638
      %v4640 = vrot.slane %v4635, 4
      %v4642 = vshrl.u32 %v4441, 16
      %v4644 = vrot.slane %v4642, 7
      %v4645 = vshll.u32 %v4441, 16
      %v4647 = vor.u32 %v4644, %v4645
      %v4648 = vrot.slane %v4644, 4
      %v4650 = vshrl.u32 %v4442, 16
      %v4652 = vrot.slane %v4650, 7
      %v4653 = vshll.u32 %v4442, 16
      %v4655 = vor.u32 %v4652, %v4653
      %v4656 = vsel %vm4453, %v4648, %v4655
      %v4657 = vrot.slane %v4652, 4
      %v4659 = vshrl.u32 %v4443, 16
      %v4661 = vrot.slane %v4659, 7
      %v4662 = vshll.u32 %v4443, 16
      %v4664 = vor.u32 %v4661, %v4662
      %v4665 = vrot.slane %v4661, 4
      %v4667 = vshrl.u32 %v4444, 16
      %v4669 = vrot.slane %v4667, 7
      %v4670 = vshll.u32 %v4444, 16
      %v4672 = vor.u32 %v4669, %v4670
      %v4673 = vsel %vm4453, %v4665, %v4672
      %v4674 = vrot.slane %v4669, 4
      %v4676 = vshrl.u32 %v4445, 16
      %v4678 = vrot.slane %v4676, 7
      %v4679 = vshll.u32 %v4445, 16
      %v4681 = vor.u32 %v4678, %v4679
      %v4682 = vrot.slane %v4678, 4
      %v4684 = vshrl.u32 %v4446, 16
      %v4686 = vrot.slane %v4684, 7
      %v4687 = vshll.u32 %v4446, 16
      %v4689 = vor.u32 %v4686, %v4687
      %v4690 = vsel %vm4453, %v4682, %v4689
      %v4691 = vrot.slane %v4686, 4
      %v4693 = vshrl.u32 %v4447, 16
      %v4695 = vrot.slane %v4693, 7
      %v4696 = vshll.u32 %v4447, 16
      %v4698 = vor.u32 %v4695, %v4696
      %v4699 = vrot.slane %v4695, 4
      %v4701 = vshrl.u32 %v4448, 16
      %v4703 = vrot.slane %v4701, 7
      %v4704 = vshll.u32 %v4448, 16
      %v4706 = vor.u32 %v4703, %v4704
      %v4707 = vsel %vm4453, %v4699, %v4706
      %v4708 = vrot.slane %v4703, 4
      %v4710 = vshrl.u32 %v4449, 16
      %v4712 = vrot.slane %v4710, 7
      %v4713 = vshll.u32 %v4449, 16
      %v4715 = vor.u32 %v4712, %v4713
      %v4716 = vrot.slane %v4712, 4
      %v4718 = vshrl.u32 %v4450, 16
      %v4720 = vrot.slane %v4718, 7
      %v4721 = vshll.u32 %v4450, 16
      %v4723 = vor.u32 %v4720, %v4721
      %v4724 = vsel %vm4453, %v4716, %v4723
      %v4725 = vrot.slane %v4720, 4
      %s4774 = scalar_lea.vmem [#allocation2], 12
      %vm4775 = vcmask 1043456
      %vm4776 = vsmask.f32 7938
      %vm4777 = vmand %vm4775, %vm4776
      %v4778 = vld [vmem:[%s4774] sm:$0xf]
      %v4779 = vsel %vm4777, %v4460, %v4778
      %4780 = vst [vmem:[%s4774] sm:$0xf] %v4779
      %4781 = vst [vmem:[%s4774 + $0x4] sm:$0xf] %v4469
      %vm4782 = vcmask 1040384
      %vm4783 = vmand %vm4782, %vm4451
      %v4784 = vld [vmem:[%s4774 + $0x8] sm:$0x1]
      %v4785 = vsel %vm4783, %v4470, %v4784
      %4786 = vst [vmem:[%s4774 + $0x8] sm:$0x1] %v4785
      %v4787 = vld [vmem:[%s4774 + $0xc] sm:$0xf]
      %v4788 = vsel %vm4777, %v4477, %v4787
      %4789 = vst [vmem:[%s4774 + $0xc] sm:$0xf] %v4788
      %4790 = vst [vmem:[%s4774 + $0x10] sm:$0xf] %v4486
      %v4791 = vld [vmem:[%s4774 + $0x14] sm:$0x1]
      %v4792 = vsel %vm4783, %v4487, %v4791
      %4793 = vst [vmem:[%s4774 + $0x14] sm:$0x1] %v4792
      %v4794 = vld [vmem:[%s4774 + $0x18] sm:$0xf]
      %v4795 = vsel %vm4777, %v4494, %v4794
      %4796 = vst [vmem:[%s4774 + $0x18] sm:$0xf] %v4795
      %4797 = vst [vmem:[%s4774 + $0x1c] sm:$0xf] %v4503
      %v4798 = vld [vmem:[%s4774 + $0x20] sm:$0x1]
      %v4799 = vsel %vm4783, %v4504, %v4798
      %4800 = vst [vmem:[%s4774 + $0x20] sm:$0x1] %v4799
      %v4801 = vld [vmem:[%s4774 + $0x24] sm:$0xf]
      %v4802 = vsel %vm4777, %v4511, %v4801
      %4803 = vst [vmem:[%s4774 + $0x24] sm:$0xf] %v4802
      %4804 = vst [vmem:[%s4774 + $0x28] sm:$0xf] %v4520
      %v4805 = vld [vmem:[%s4774 + $0x2c] sm:$0x1]
      %v4806 = vsel %vm4783, %v4521, %v4805
      %4807 = vst [vmem:[%s4774 + $0x2c] sm:$0x1] %v4806
      %v4808 = vld [vmem:[%s4774 + $0x30] sm:$0xf]
      %v4809 = vsel %vm4777, %v4528, %v4808
      %4810 = vst [vmem:[%s4774 + $0x30] sm:$0xf] %v4809
      %4811 = vst [vmem:[%s4774 + $0x34] sm:$0xf] %v4537
      %v4812 = vld [vmem:[%s4774 + $0x38] sm:$0x1]
      %v4813 = vsel %vm4783, %v4538, %v4812
      %4814 = vst [vmem:[%s4774 + $0x38] sm:$0x1] %v4813
      %v4815 = vld [vmem:[%s4774 + $0x3c] sm:$0xf]
      %v4816 = vsel %vm4777, %v4545, %v4815
      %4817 = vst [vmem:[%s4774 + $0x3c] sm:$0xf] %v4816
      %4818 = vst [vmem:[%s4774 + $0x40] sm:$0xf] %v4554
      %v4819 = vld [vmem:[%s4774 + $0x44] sm:$0x1]
      %v4820 = vsel %vm4783, %v4555, %v4819
      %4821 = vst [vmem:[%s4774 + $0x44] sm:$0x1] %v4820
      %v4822 = vld [vmem:[%s4774 + $0x48] sm:$0xf]
      %v4823 = vsel %vm4777, %v4562, %v4822
      %4824 = vst [vmem:[%s4774 + $0x48] sm:$0xf] %v4823
      %4825 = vst [vmem:[%s4774 + $0x4c] sm:$0xf] %v4571
      %v4826 = vld [vmem:[%s4774 + $0x50] sm:$0x1]
      %v4827 = vsel %vm4783, %v4572, %v4826
      %4828 = vst [vmem:[%s4774 + $0x50] sm:$0x1] %v4827
      %v4829 = vld [vmem:[%s4774 + $0x54] sm:$0xf]
      %v4830 = vsel %vm4777, %v4579, %v4829
      %4831 = vst [vmem:[%s4774 + $0x54] sm:$0xf] %v4830
      %4832 = vst [vmem:[%s4774 + $0x58] sm:$0xf] %v4588
      %v4833 = vld [vmem:[%s4774 + $0x5c] sm:$0x1]
      %v4834 = vsel %vm4783, %v4589, %v4833
      %4835 = vst [vmem:[%s4774 + $0x5c] sm:$0x1] %v4834
      %v4836 = vld [vmem:[%s4774 + $0x60] sm:$0xf]
      %v4837 = vsel %vm4777, %v4596, %v4836
      %4838 = vst [vmem:[%s4774 + $0x60] sm:$0xf] %v4837
      %4839 = vst [vmem:[%s4774 + $0x64] sm:$0xf] %v4605
      %v4840 = vld [vmem:[%s4774 + $0x68] sm:$0x1]
      %v4841 = vsel %vm4783, %v4606, %v4840
      %4842 = vst [vmem:[%s4774 + $0x68] sm:$0x1] %v4841
      %v4843 = vld [vmem:[%s4774 + $0x6c] sm:$0xf]
      %v4844 = vsel %vm4777, %v4613, %v4843
      %4845 = vst [vmem:[%s4774 + $0x6c] sm:$0xf] %v4844
      %4846 = vst [vmem:[%s4774 + $0x70] sm:$0xf] %v4622
      %v4847 = vld [vmem:[%s4774 + $0x74] sm:$0x1]
      %v4848 = vsel %vm4783, %v4623, %v4847
      %4849 = vst [vmem:[%s4774 + $0x74] sm:$0x1] %v4848
      %v4850 = vld [vmem:[%s4774 + $0x78] sm:$0xf]
      %v4851 = vsel %vm4777, %v4630, %v4850
      %4852 = vst [vmem:[%s4774 + $0x78] sm:$0xf] %v4851
      %4853 = vst [vmem:[%s4774 + $0x7c] sm:$0xf] %v4639
      %v4854 = vld [vmem:[%s4774 + $0x80] sm:$0x1]
      %v4855 = vsel %vm4783, %v4640, %v4854
      %4856 = vst [vmem:[%s4774 + $0x80] sm:$0x1] %v4855
      %v4857 = vld [vmem:[%s4774 + $0x84] sm:$0xf]
      %v4858 = vsel %vm4777, %v4647, %v4857
      %4859 = vst [vmem:[%s4774 + $0x84] sm:$0xf] %v4858
      %4860 = vst [vmem:[%s4774 + $0x88] sm:$0xf] %v4656
      %v4861 = vld [vmem:[%s4774 + $0x8c] sm:$0x1]
      %v4862 = vsel %vm4783, %v4657, %v4861
      %4863 = vst [vmem:[%s4774 + $0x8c] sm:$0x1] %v4862
      %v4864 = vld [vmem:[%s4774 + $0x90] sm:$0xf]
      %v4865 = vsel %vm4777, %v4664, %v4864
      %4866 = vst [vmem:[%s4774 + $0x90] sm:$0xf] %v4865
      %4867 = vst [vmem:[%s4774 + $0x94] sm:$0xf] %v4673
      %v4868 = vld [vmem:[%s4774 + $0x98] sm:$0x1]
      %v4869 = vsel %vm4783, %v4674, %v4868
      %4870 = vst [vmem:[%s4774 + $0x98] sm:$0x1] %v4869
      %v4871 = vld [vmem:[%s4774 + $0x9c] sm:$0xf]
      %v4872 = vsel %vm4777, %v4681, %v4871
      %4873 = vst [vmem:[%s4774 + $0x9c] sm:$0xf] %v4872
      %4874 = vst [vmem:[%s4774 + $0xa0] sm:$0xf] %v4690
      %v4875 = vld [vmem:[%s4774 + $0xa4] sm:$0x1]
      %v4876 = vsel %vm4783, %v4691, %v4875
      %4877 = vst [vmem:[%s4774 + $0xa4] sm:$0x1] %v4876
      %v4878 = vld [vmem:[%s4774 + $0xa8] sm:$0xf]
      %v4879 = vsel %vm4777, %v4698, %v4878
      %4880 = vst [vmem:[%s4774 + $0xa8] sm:$0xf] %v4879
      %4881 = vst [vmem:[%s4774 + $0xac] sm:$0xf] %v4707
      %v4882 = vld [vmem:[%s4774 + $0xb0] sm:$0x1]
      %v4883 = vsel %vm4783, %v4708, %v4882
      %4884 = vst [vmem:[%s4774 + $0xb0] sm:$0x1] %v4883
      %v4885 = vld [vmem:[%s4774 + $0xb4] sm:$0xf]
      %v4886 = vsel %vm4777, %v4715, %v4885
      %4887 = vst [vmem:[%s4774 + $0xb4] sm:$0xf] %v4886
      %4888 = vst [vmem:[%s4774 + $0xb8] sm:$0xf] %v4724
      %v4889 = vld [vmem:[%s4774 + $0xbc] sm:$0x1]
      %v4890 = vsel %vm4783, %v4725, %v4889
      %4891 = vst [vmem:[%s4774 + $0xbc] sm:$0x1] %v4890
      %v4892 = vld [vmem:[#allocation2] sm:$0xf]
      %v4893 = vld [vmem:[#allocation2 + $0x4] sm:$0xf]
      %v4894 = vld [vmem:[#allocation2 + $0xc] sm:$0xf]
      %v4895 = vld [vmem:[#allocation2 + $0x10] sm:$0xf]
      %v4896 = vld [vmem:[#allocation2 + $0x18] sm:$0xf]
      %v4897 = vld [vmem:[#allocation2 + $0x1c] sm:$0xf]
      %v4898 = vld [vmem:[#allocation2 + $0x24] sm:$0xf]
      %v4899 = vld [vmem:[#allocation2 + $0x28] sm:$0xf]
      %v4900 = vld [vmem:[#allocation2 + $0x30] sm:$0xf]
      %v4901 = vld [vmem:[#allocation2 + $0x34] sm:$0xf]
      %v4902 = vld [vmem:[#allocation2 + $0x3c] sm:$0xf]
      %v4903 = vld [vmem:[#allocation2 + $0x40] sm:$0xf]
      %v4904 = vld [vmem:[#allocation2 + $0x48] sm:$0xf]
      %v4905 = vld [vmem:[#allocation2 + $0x4c] sm:$0xf]
      %v4906 = vld [vmem:[#allocation2 + $0x54] sm:$0xf]
      %v4907 = vld [vmem:[#allocation2 + $0x58] sm:$0xf]
      %v4908 = vld [vmem:[#allocation2 + $0x60] sm:$0xf]
      %v4909 = vld [vmem:[#allocation2 + $0x64] sm:$0xf]
      %v4910 = vld [vmem:[#allocation2 + $0x6c] sm:$0xf]
      %v4911 = vld [vmem:[#allocation2 + $0x70] sm:$0xf]
      %v4912 = vld [vmem:[#allocation2 + $0x78] sm:$0xf]
      %v4913 = vld [vmem:[#allocation2 + $0x7c] sm:$0xf]
      %v4914 = vld [vmem:[#allocation2 + $0x84] sm:$0xf]
      %v4915 = vld [vmem:[#allocation2 + $0x88] sm:$0xf]
      %v4916 = vld [vmem:[#allocation2 + $0x90] sm:$0xf]
      %v4917 = vld [vmem:[#allocation2 + $0x94] sm:$0xf]
      %v4918 = vld [vmem:[#allocation2 + $0x9c] sm:$0xf]
      %v4919 = vld [vmem:[#allocation2 + $0xa0] sm:$0xf]
      %v4920 = vld [vmem:[#allocation2 + $0xa8] sm:$0xf]
      %v4921 = vld [vmem:[#allocation2 + $0xac] sm:$0xf]
      %v4922 = vld [vmem:[#allocation2 + $0xb4] sm:$0xf]
      %v4923 = vld [vmem:[#allocation2 + $0xb8] sm:$0xf]
      %v4924 = vld [vmem:[%s2] sm:$0xf]
      %v4925 = vld [vmem:[%s2 + $0x4] sm:$0xf]
      %v4926 = vld [vmem:[%s2 + $0x8] sm:$0xf]
      %v4927 = vld [vmem:[%s2 + $0xc] sm:$0xf]
      %v4928 = vld [vmem:[%s2 + $0x10] sm:$0xf]
      %v4929 = vld [vmem:[%s2 + $0x14] sm:$0xf]
      %v4930 = vld [vmem:[%s2 + $0x18] sm:$0xf]
      %v4931 = vld [vmem:[%s2 + $0x1c] sm:$0xf]
      %v4932 = vld [vmem:[%s2 + $0x20] sm:$0xf]
      %v4933 = vld [vmem:[%s2 + $0x24] sm:$0xf]
      %v4934 = vld [vmem:[%s2 + $0x28] sm:$0xf]
      %v4935 = vld [vmem:[%s2 + $0x2c] sm:$0xf]
      %v4936 = vld [vmem:[%s2 + $0x30] sm:$0xf]
      %v4937 = vld [vmem:[%s2 + $0x34] sm:$0xf]
      %v4938 = vld [vmem:[%s2 + $0x38] sm:$0xf]
      %v4939 = vld [vmem:[%s2 + $0x3c] sm:$0xf]
      %v4940 = vld [vmem:[#allocation2 + $0x8] sm:$0x1]
      %v4941 = vld [vmem:[#allocation2 + $0x14] sm:$0x1]
      %v4942 = vld [vmem:[#allocation2 + $0x20] sm:$0x1]
      %v4943 = vld [vmem:[#allocation2 + $0x2c] sm:$0x1]
      %v4944 = vld [vmem:[#allocation2 + $0x38] sm:$0x1]
      %v4945 = vld [vmem:[#allocation2 + $0x44] sm:$0x1]
      %v4946 = vld [vmem:[#allocation2 + $0x50] sm:$0x1]
      %v4947 = vld [vmem:[#allocation2 + $0x5c] sm:$0x1]
      %v4948 = vld [vmem:[#allocation2 + $0x68] sm:$0x1]
      %v4949 = vld [vmem:[#allocation2 + $0x74] sm:$0x1]
      %v4950 = vld [vmem:[#allocation2 + $0x80] sm:$0x1]
      %v4951 = vld [vmem:[#allocation2 + $0x8c] sm:$0x1]
      %v4952 = vld [vmem:[#allocation2 + $0x98] sm:$0x1]
      %v4953 = vld [vmem:[#allocation2 + $0xa4] sm:$0x1]
      %v4954 = vld [vmem:[#allocation2 + $0xb0] sm:$0x1]
      %v4955 = vld [vmem:[#allocation2 + $0xbc] sm:$0x1]
      %v4957 = vshrl.u32 %v4892, 16
      %v4959 = vrot.slane %v4957, 4
      %v4960 = vshll.u32 %v4892, 16
      %v4962 = vrot.slane %v4960, 5
      %v4963 = vor.u32 %v4959, %v4962
      %v4964 = vrot.slane %v4963, 4
      %v4966 = vshll.u32 %v4893, 16
      %v4968 = vrot.slane %v4966, 5
      %v4969 = vsel %vm292, %v4964, %v4968
      %v4970 = vshrl.u32 %v4893, 16
      %v4972 = vrot.slane %v4970, 4
      %v4973 = vor.u32 %v4972, %v4968
      %v4974 = vrot.slane %v4973, 4
      %v4976 = vshll.u32 %v4940, 16
      %v4978 = vrot.slane %v4976, 5
      %v4979 = vsel %vm292, %v4974, %v4978
      %v4981 = vshrl.u32 %v4894, 16
      %v4983 = vrot.slane %v4981, 4
      %v4984 = vshll.u32 %v4894, 16
      %v4986 = vrot.slane %v4984, 5
      %v4987 = vor.u32 %v4983, %v4986
      %v4988 = vrot.slane %v4987, 4
      %v4990 = vshll.u32 %v4895, 16
      %v4992 = vrot.slane %v4990, 5
      %v4993 = vsel %vm292, %v4988, %v4992
      %v4994 = vshrl.u32 %v4895, 16
      %v4996 = vrot.slane %v4994, 4
      %v4997 = vor.u32 %v4996, %v4992
      %v4998 = vrot.slane %v4997, 4
      %v5000 = vshll.u32 %v4941, 16
      %v5002 = vrot.slane %v5000, 5
      %v5003 = vsel %vm292, %v4998, %v5002
      %v5005 = vshrl.u32 %v4896, 16
      %v5007 = vrot.slane %v5005, 4
      %v5008 = vshll.u32 %v4896, 16
      %v5010 = vrot.slane %v5008, 5
      %v5011 = vor.u32 %v5007, %v5010
      %v5012 = vrot.slane %v5011, 4
      %v5014 = vshll.u32 %v4897, 16
      %v5016 = vrot.slane %v5014, 5
      %v5017 = vsel %vm292, %v5012, %v5016
      %v5018 = vshrl.u32 %v4897, 16
      %v5020 = vrot.slane %v5018, 4
      %v5021 = vor.u32 %v5020, %v5016
      %v5022 = vrot.slane %v5021, 4
      %v5024 = vshll.u32 %v4942, 16
      %v5026 = vrot.slane %v5024, 5
      %v5027 = vsel %vm292, %v5022, %v5026
      %v5029 = vshrl.u32 %v4898, 16
      %v5031 = vrot.slane %v5029, 4
      %v5032 = vshll.u32 %v4898, 16
      %v5034 = vrot.slane %v5032, 5
      %v5035 = vor.u32 %v5031, %v5034
      %v5036 = vrot.slane %v5035, 4
      %v5038 = vshll.u32 %v4899, 16
      %v5040 = vrot.slane %v5038, 5
      %v5041 = vsel %vm292, %v5036, %v5040
      %v5042 = vshrl.u32 %v4899, 16
      %v5044 = vrot.slane %v5042, 4
      %v5045 = vor.u32 %v5044, %v5040
      %v5046 = vrot.slane %v5045, 4
      %v5048 = vshll.u32 %v4943, 16
      %v5050 = vrot.slane %v5048, 5
      %v5051 = vsel %vm292, %v5046, %v5050
      %v5053 = vshrl.u32 %v4900, 16
      %v5055 = vrot.slane %v5053, 4
      %v5056 = vshll.u32 %v4900, 16
      %v5058 = vrot.slane %v5056, 5
      %v5059 = vor.u32 %v5055, %v5058
      %v5060 = vrot.slane %v5059, 4
      %v5062 = vshll.u32 %v4901, 16
      %v5064 = vrot.slane %v5062, 5
      %v5065 = vsel %vm292, %v5060, %v5064
      %v5066 = vshrl.u32 %v4901, 16
      %v5068 = vrot.slane %v5066, 4
      %v5069 = vor.u32 %v5068, %v5064
      %v5070 = vrot.slane %v5069, 4
      %v5072 = vshll.u32 %v4944, 16
      %v5074 = vrot.slane %v5072, 5
      %v5075 = vsel %vm292, %v5070, %v5074
      %v5077 = vshrl.u32 %v4902, 16
      %v5079 = vrot.slane %v5077, 4
      %v5080 = vshll.u32 %v4902, 16
      %v5082 = vrot.slane %v5080, 5
      %v5083 = vor.u32 %v5079, %v5082
      %v5084 = vrot.slane %v5083, 4
      %v5086 = vshll.u32 %v4903, 16
      %v5088 = vrot.slane %v5086, 5
      %v5089 = vsel %vm292, %v5084, %v5088
      %v5090 = vshrl.u32 %v4903, 16
      %v5092 = vrot.slane %v5090, 4
      %v5093 = vor.u32 %v5092, %v5088
      %v5094 = vrot.slane %v5093, 4
      %v5096 = vshll.u32 %v4945, 16
      %v5098 = vrot.slane %v5096, 5
      %v5099 = vsel %vm292, %v5094, %v5098
      %v5101 = vshrl.u32 %v4904, 16
      %v5103 = vrot.slane %v5101, 4
      %v5104 = vshll.u32 %v4904, 16
      %v5106 = vrot.slane %v5104, 5
      %v5107 = vor.u32 %v5103, %v5106
      %v5108 = vrot.slane %v5107, 4
      %v5110 = vshll.u32 %v4905, 16
      %v5112 = vrot.slane %v5110, 5
      %v5113 = vsel %vm292, %v5108, %v5112
      %v5114 = vshrl.u32 %v4905, 16
      %v5116 = vrot.slane %v5114, 4
      %v5117 = vor.u32 %v5116, %v5112
      %v5118 = vrot.slane %v5117, 4
      %v5120 = vshll.u32 %v4946, 16
      %v5122 = vrot.slane %v5120, 5
      %v5123 = vsel %vm292, %v5118, %v5122
      %v5125 = vshrl.u32 %v4906, 16
      %v5127 = vrot.slane %v5125, 4
      %v5128 = vshll.u32 %v4906, 16
      %v5130 = vrot.slane %v5128, 5
      %v5131 = vor.u32 %v5127, %v5130
      %v5132 = vrot.slane %v5131, 4
      %v5134 = vshll.u32 %v4907, 16
      %v5136 = vrot.slane %v5134, 5
      %v5137 = vsel %vm292, %v5132, %v5136
      %v5138 = vshrl.u32 %v4907, 16
      %v5140 = vrot.slane %v5138, 4
      %v5141 = vor.u32 %v5140, %v5136
      %v5142 = vrot.slane %v5141, 4
      %v5144 = vshll.u32 %v4947, 16
      %v5146 = vrot.slane %v5144, 5
      %v5147 = vsel %vm292, %v5142, %v5146
      %v5149 = vshrl.u32 %v4908, 16
      %v5151 = vrot.slane %v5149, 4
      %v5152 = vshll.u32 %v4908, 16
      %v5154 = vrot.slane %v5152, 5
      %v5155 = vor.u32 %v5151, %v5154
      %v5156 = vrot.slane %v5155, 4
      %v5158 = vshll.u32 %v4909, 16
      %v5160 = vrot.slane %v5158, 5
      %v5161 = vsel %vm292, %v5156, %v5160
      %v5162 = vshrl.u32 %v4909, 16
      %v5164 = vrot.slane %v5162, 4
      %v5165 = vor.u32 %v5164, %v5160
      %v5166 = vrot.slane %v5165, 4
      %v5168 = vshll.u32 %v4948, 16
      %v5170 = vrot.slane %v5168, 5
      %v5171 = vsel %vm292, %v5166, %v5170
      %v5173 = vshrl.u32 %v4910, 16
      %v5175 = vrot.slane %v5173, 4
      %v5176 = vshll.u32 %v4910, 16
      %v5178 = vrot.slane %v5176, 5
      %v5179 = vor.u32 %v5175, %v5178
      %v5180 = vrot.slane %v5179, 4
      %v5182 = vshll.u32 %v4911, 16
      %v5184 = vrot.slane %v5182, 5
      %v5185 = vsel %vm292, %v5180, %v5184
      %v5186 = vshrl.u32 %v4911, 16
      %v5188 = vrot.slane %v5186, 4
      %v5189 = vor.u32 %v5188, %v5184
      %v5190 = vrot.slane %v5189, 4
      %v5192 = vshll.u32 %v4949, 16
      %v5194 = vrot.slane %v5192, 5
      %v5195 = vsel %vm292, %v5190, %v5194
      %v5197 = vshrl.u32 %v4912, 16
      %v5199 = vrot.slane %v5197, 4
      %v5200 = vshll.u32 %v4912, 16
      %v5202 = vrot.slane %v5200, 5
      %v5203 = vor.u32 %v5199, %v5202
      %v5204 = vrot.slane %v5203, 4
      %v5206 = vshll.u32 %v4913, 16
      %v5208 = vrot.slane %v5206, 5
      %v5209 = vsel %vm292, %v5204, %v5208
      %v5210 = vshrl.u32 %v4913, 16
      %v5212 = vrot.slane %v5210, 4
      %v5213 = vor.u32 %v5212, %v5208
      %v5214 = vrot.slane %v5213, 4
      %v5216 = vshll.u32 %v4950, 16
      %v5218 = vrot.slane %v5216, 5
      %v5219 = vsel %vm292, %v5214, %v5218
      %v5221 = vshrl.u32 %v4914, 16
      %v5223 = vrot.slane %v5221, 4
      %v5224 = vshll.u32 %v4914, 16
      %v5226 = vrot.slane %v5224, 5
      %v5227 = vor.u32 %v5223, %v5226
      %v5228 = vrot.slane %v5227, 4
      %v5230 = vshll.u32 %v4915, 16
      %v5232 = vrot.slane %v5230, 5
      %v5233 = vsel %vm292, %v5228, %v5232
      %v5234 = vshrl.u32 %v4915, 16
      %v5236 = vrot.slane %v5234, 4
      %v5237 = vor.u32 %v5236, %v5232
      %v5238 = vrot.slane %v5237, 4
      %v5240 = vshll.u32 %v4951, 16
      %v5242 = vrot.slane %v5240, 5
      %v5243 = vsel %vm292, %v5238, %v5242
      %v5245 = vshrl.u32 %v4916, 16
      %v5247 = vrot.slane %v5245, 4
      %v5248 = vshll.u32 %v4916, 16
      %v5250 = vrot.slane %v5248, 5
      %v5251 = vor.u32 %v5247, %v5250
      %v5252 = vrot.slane %v5251, 4
      %v5254 = vshll.u32 %v4917, 16
      %v5256 = vrot.slane %v5254, 5
      %v5257 = vsel %vm292, %v5252, %v5256
      %v5258 = vshrl.u32 %v4917, 16
      %v5260 = vrot.slane %v5258, 4
      %v5261 = vor.u32 %v5260, %v5256
      %v5262 = vrot.slane %v5261, 4
      %v5264 = vshll.u32 %v4952, 16
      %v5266 = vrot.slane %v5264, 5
      %v5267 = vsel %vm292, %v5262, %v5266
      %v5269 = vshrl.u32 %v4918, 16
      %v5271 = vrot.slane %v5269, 4
      %v5272 = vshll.u32 %v4918, 16
      %v5274 = vrot.slane %v5272, 5
      %v5275 = vor.u32 %v5271, %v5274
      %v5276 = vrot.slane %v5275, 4
      %v5278 = vshll.u32 %v4919, 16
      %v5280 = vrot.slane %v5278, 5
      %v5281 = vsel %vm292, %v5276, %v5280
      %v5282 = vshrl.u32 %v4919, 16
      %v5284 = vrot.slane %v5282, 4
      %v5285 = vor.u32 %v5284, %v5280
      %v5286 = vrot.slane %v5285, 4
      %v5288 = vshll.u32 %v4953, 16
      %v5290 = vrot.slane %v5288, 5
      %v5291 = vsel %vm292, %v5286, %v5290
      %v5293 = vshrl.u32 %v4920, 16
      %v5295 = vrot.slane %v5293, 4
      %v5296 = vshll.u32 %v4920, 16
      %v5298 = vrot.slane %v5296, 5
      %v5299 = vor.u32 %v5295, %v5298
      %v5300 = vrot.slane %v5299, 4
      %v5302 = vshll.u32 %v4921, 16
      %v5304 = vrot.slane %v5302, 5
      %v5305 = vsel %vm292, %v5300, %v5304
      %v5306 = vshrl.u32 %v4921, 16
      %v5308 = vrot.slane %v5306, 4
      %v5309 = vor.u32 %v5308, %v5304
      %v5310 = vrot.slane %v5309, 4
      %v5312 = vshll.u32 %v4954, 16
      %v5314 = vrot.slane %v5312, 5
      %v5315 = vsel %vm292, %v5310, %v5314
      %v5317 = vshrl.u32 %v4922, 16
      %v5319 = vrot.slane %v5317, 4
      %v5320 = vshll.u32 %v4922, 16
      %v5322 = vrot.slane %v5320, 5
      %v5323 = vor.u32 %v5319, %v5322
      %v5324 = vrot.slane %v5323, 4
      %v5326 = vshll.u32 %v4923, 16
      %v5328 = vrot.slane %v5326, 5
      %v5329 = vsel %vm292, %v5324, %v5328
      %v5330 = vshrl.u32 %v4923, 16
      %v5332 = vrot.slane %v5330, 4
      %v5333 = vor.u32 %v5332, %v5328
      %v5334 = vrot.slane %v5333, 4
      %v5336 = vshll.u32 %v4955, 16
      %v5338 = vrot.slane %v5336, 5
      %v5339 = vsel %vm292, %v5334, %v5338
      %s5340 = scalar_lea.vmem %s2, 64
      %v5341 = vld [vmem:[%s5340] sm:$0xf]
      %v5342 = vld [vmem:[%s5340 + $0x4] sm:$0xf]
      %v5343 = vld [vmem:[%s5340 + $0x8] sm:$0xf]
      %v5344 = vld [vmem:[%s5340 + $0xc] sm:$0xf]
      %v5345 = vld [vmem:[%s5340 + $0x10] sm:$0xf]
      %v5346 = vld [vmem:[%s5340 + $0x14] sm:$0xf]
      %v5347 = vld [vmem:[%s5340 + $0x18] sm:$0xf]
      %v5348 = vld [vmem:[%s5340 + $0x1c] sm:$0xf]
      %v5349 = vld [vmem:[%s5340 + $0x20] sm:$0xf]
      %v5350 = vld [vmem:[%s5340 + $0x24] sm:$0xf]
      %v5351 = vld [vmem:[%s5340 + $0x28] sm:$0xf]
      %v5352 = vld [vmem:[%s5340 + $0x2c] sm:$0xf]
      %v5353 = vld [vmem:[%s5340 + $0x30] sm:$0xf]
      %v5354 = vld [vmem:[%s5340 + $0x34] sm:$0xf]
      %v5355 = vld [vmem:[%s5340 + $0x38] sm:$0xf]
      %v5356 = vld [vmem:[%s5340 + $0x3c] sm:$0xf]
      %v5357 = vunpack.c.l.b16 %v4969
      %v5358 = vunpack.c.l.b16 %v4979
      %v5359 = vunpack.c.l.b16 %v4993
      %v5360 = vunpack.c.l.b16 %v5003
      %v5361 = vunpack.c.l.b16 %v5017
      %v5362 = vunpack.c.l.b16 %v5027
      %v5363 = vunpack.c.l.b16 %v5041
      %v5364 = vunpack.c.l.b16 %v5051
      %v5365 = vunpack.c.l.b16 %v5065
      %v5366 = vunpack.c.l.b16 %v5075
      %v5367 = vunpack.c.l.b16 %v5089
      %v5368 = vunpack.c.l.b16 %v5099
      %v5369 = vunpack.c.l.b16 %v5113
      %v5370 = vunpack.c.l.b16 %v5123
      %v5371 = vunpack.c.l.b16 %v5137
      %v5372 = vunpack.c.l.b16 %v5147
      %v5373 = vunpack.c.l.b16 %v5161
      %v5374 = vunpack.c.l.b16 %v5171
      %v5375 = vunpack.c.l.b16 %v5185
      %v5376 = vunpack.c.l.b16 %v5195
      %v5377 = vunpack.c.l.b16 %v5209
      %v5378 = vunpack.c.l.b16 %v5219
      %v5379 = vunpack.c.l.b16 %v5233
      %v5380 = vunpack.c.l.b16 %v5243
      %v5381 = vunpack.c.l.b16 %v5257
      %v5382 = vunpack.c.l.b16 %v5267
      %v5383 = vunpack.c.l.b16 %v5281
      %v5384 = vunpack.c.l.b16 %v5291
      %v5385 = vunpack.c.l.b16 %v5305
      %v5386 = vunpack.c.l.b16 %v5315
      %v5387 = vunpack.c.l.b16 %v5329
      %v5388 = vunpack.c.l.b16 %v5339
      %v5389 = vpack.c.b16 %v5358, %v5357
      %v5390 = vpack.c.b16 %v5360, %v5359
      %v5391 = vpack.c.b16 %v5362, %v5361
      %v5392 = vpack.c.b16 %v5364, %v5363
      %v5393 = vpack.c.b16 %v5366, %v5365
      %v5394 = vpack.c.b16 %v5368, %v5367
      %v5395 = vpack.c.b16 %v5370, %v5369
      %v5396 = vpack.c.b16 %v5372, %v5371
      %v5397 = vpack.c.b16 %v5374, %v5373
      %v5398 = vpack.c.b16 %v5376, %v5375
      %v5399 = vpack.c.b16 %v5378, %v5377
      %v5400 = vpack.c.b16 %v5380, %v5379
      %v5401 = vpack.c.b16 %v5382, %v5381
      %v5402 = vpack.c.b16 %v5384, %v5383
      %v5403 = vpack.c.b16 %v5386, %v5385
      %v5404 = vpack.c.b16 %v5388, %v5387
      %v5437 = vunpack.c.l.b16 %v5341
      %v5438 = vunpack.c.l.b16 %v5342
      %v5439 = vunpack.c.l.b16 %v5343
      %v5440 = vunpack.c.l.b16 %v5344
      %v5441 = vunpack.c.l.b16 %v5345
      %v5442 = vunpack.c.l.b16 %v5346
      %v5443 = vunpack.c.l.b16 %v5347
      %v5444 = vunpack.c.l.b16 %v5348
      %v5445 = vunpack.c.l.b16 %v5349
      %v5446 = vunpack.c.l.b16 %v5350
      %v5447 = vunpack.c.l.b16 %v5351
      %v5448 = vunpack.c.l.b16 %v5352
      %v5449 = vunpack.c.l.b16 %v5353
      %v5450 = vunpack.c.l.b16 %v5354
      %v5451 = vunpack.c.l.b16 %v5355
      %v5452 = vunpack.c.l.b16 %v5356
      %v5453 = vpack.c.b16 %v5438, %v5437
      %v5454 = vpack.c.b16 %v5440, %v5439
      %v5455 = vpack.c.b16 %v5442, %v5441
      %v5456 = vpack.c.b16 %v5444, %v5443
      %v5457 = vpack.c.b16 %v5446, %v5445
      %v5458 = vpack.c.b16 %v5448, %v5447
      %v5459 = vpack.c.b16 %v5450, %v5449
      %v5460 = vpack.c.b16 %v5452, %v5451
      %5469 = vmatpush.bf16.msra.mxu0 %v5460
      %5470 = vmatpush.bf16.msra.mxu0 %v5459
      %5471 = vmatpush.bf16.msra.mxu0 %v5458
      %5472 = vmatpush.bf16.msra.mxu0 %v5457
      %5473 = vmatpush.bf16.msra.mxu0 %v5456
      %5474 = vmatpush.bf16.msra.mxu0 %v5455
      %5475 = vmatpush.bf16.msra.mxu0 %v5454
      %5476 = vmatpush.bf16.msra.mxu0 %v5453
      %5477 = vmatmul.bf16.gmra.mxu0 %v5389
      %v5478 = vpop.f32.mrf.mxu0
      %v5479 = vadd.f32 0.0, %v5478
      %v5480 = vpop.f32.mrf.mxu0
      %v5481 = vadd.f32 0.0, %v5480
      %5482 = vmatmul.bf16.gmra.mxu0 %v5390
      %v5483 = vpop.f32.mrf.mxu0
      %v5484 = vadd.f32 0.0, %v5483
      %v5485 = vpop.f32.mrf.mxu0
      %v5486 = vadd.f32 0.0, %v5485
      %5487 = vmatmul.bf16.gmra.mxu0 %v5391
      %v5488 = vpop.f32.mrf.mxu0
      %v5489 = vadd.f32 0.0, %v5488
      %v5490 = vpop.f32.mrf.mxu0
      %v5491 = vadd.f32 0.0, %v5490
      %5492 = vmatmul.bf16.gmra.mxu0 %v5392
      %v5493 = vpop.f32.mrf.mxu0
      %v5494 = vadd.f32 0.0, %v5493
      %v5495 = vpop.f32.mrf.mxu0
      %v5496 = vadd.f32 0.0, %v5495
      %5497 = vmatmul.bf16.gmra.mxu0 %v5393
      %v5498 = vpop.f32.mrf.mxu0
      %v5499 = vadd.f32 0.0, %v5498
      %v5500 = vpop.f32.mrf.mxu0
      %v5501 = vadd.f32 0.0, %v5500
      %5502 = vmatmul.bf16.gmra.mxu0 %v5394
      %v5503 = vpop.f32.mrf.mxu0
      %v5504 = vadd.f32 0.0, %v5503
      %v5505 = vpop.f32.mrf.mxu0
      %v5506 = vadd.f32 0.0, %v5505
      %5507 = vmatmul.bf16.gmra.mxu0 %v5395
      %v5508 = vpop.f32.mrf.mxu0
      %v5509 = vadd.f32 0.0, %v5508
      %v5510 = vpop.f32.mrf.mxu0
      %v5511 = vadd.f32 0.0, %v5510
      %5512 = vmatmul.bf16.gmra.mxu0 %v5396
      %v5513 = vpop.f32.mrf.mxu0
      %v5514 = vadd.f32 0.0, %v5513
      %v5515 = vpop.f32.mrf.mxu0
      %v5516 = vadd.f32 0.0, %v5515
      %5517 = vmatmul.bf16.gmra.mxu0 %v5397
      %v5518 = vpop.f32.mrf.mxu0
      %v5519 = vadd.f32 0.0, %v5518
      %v5520 = vpop.f32.mrf.mxu0
      %v5521 = vadd.f32 0.0, %v5520
      %5522 = vmatmul.bf16.gmra.mxu0 %v5398
      %v5523 = vpop.f32.mrf.mxu0
      %v5524 = vadd.f32 0.0, %v5523
      %v5525 = vpop.f32.mrf.mxu0
      %v5526 = vadd.f32 0.0, %v5525
      %5527 = vmatmul.bf16.gmra.mxu0 %v5399
      %v5528 = vpop.f32.mrf.mxu0
      %v5529 = vadd.f32 0.0, %v5528
      %v5530 = vpop.f32.mrf.mxu0
      %v5531 = vadd.f32 0.0, %v5530
      %5532 = vmatmul.bf16.gmra.mxu0 %v5400
      %v5533 = vpop.f32.mrf.mxu0
      %v5534 = vadd.f32 0.0, %v5533
      %v5535 = vpop.f32.mrf.mxu0
      %v5536 = vadd.f32 0.0, %v5535
      %5537 = vmatmul.bf16.gmra.mxu0 %v5401
      %v5538 = vpop.f32.mrf.mxu0
      %v5539 = vadd.f32 0.0, %v5538
      %v5540 = vpop.f32.mrf.mxu0
      %v5541 = vadd.f32 0.0, %v5540
      %5542 = vmatmul.bf16.gmra.mxu0 %v5402
      %v5543 = vpop.f32.mrf.mxu0
      %v5544 = vadd.f32 0.0, %v5543
      %v5545 = vpop.f32.mrf.mxu0
      %v5546 = vadd.f32 0.0, %v5545
      %5547 = vmatmul.bf16.gmra.mxu0 %v5403
      %v5548 = vpop.f32.mrf.mxu0
      %v5549 = vadd.f32 0.0, %v5548
      %v5550 = vpop.f32.mrf.mxu0
      %v5551 = vadd.f32 0.0, %v5550
      %5552 = vmatmul.bf16.gmra.mxu0 %v5404
      %v5553 = vpop.f32.mrf.mxu0
      %v5554 = vadd.f32 0.0, %v5553
      %v5555 = vpop.f32.mrf.mxu0
      %v5556 = vadd.f32 0.0, %v5555
      %5557 = vdwg.mxu0
      %v5590 = vunpack.c.l.b16 %v4892
      %v5591 = vunpack.c.l.b16 %v4893
      %v5592 = vunpack.c.l.b16 %v4894
      %v5593 = vunpack.c.l.b16 %v4895
      %v5594 = vunpack.c.l.b16 %v4896
      %v5595 = vunpack.c.l.b16 %v4897
      %v5596 = vunpack.c.l.b16 %v4898
      %v5597 = vunpack.c.l.b16 %v4899
      %v5598 = vunpack.c.l.b16 %v4900
      %v5599 = vunpack.c.l.b16 %v4901
      %v5600 = vunpack.c.l.b16 %v4902
      %v5601 = vunpack.c.l.b16 %v4903
      %v5602 = vunpack.c.l.b16 %v4904
      %v5603 = vunpack.c.l.b16 %v4905
      %v5604 = vunpack.c.l.b16 %v4906
      %v5605 = vunpack.c.l.b16 %v4907
      %v5606 = vunpack.c.l.b16 %v4908
      %v5607 = vunpack.c.l.b16 %v4909
      %v5608 = vunpack.c.l.b16 %v4910
      %v5609 = vunpack.c.l.b16 %v4911
      %v5610 = vunpack.c.l.b16 %v4912
      %v5611 = vunpack.c.l.b16 %v4913
      %v5612 = vunpack.c.l.b16 %v4914
      %v5613 = vunpack.c.l.b16 %v4915
      %v5614 = vunpack.c.l.b16 %v4916
      %v5615 = vunpack.c.l.b16 %v4917
      %v5616 = vunpack.c.l.b16 %v4918
      %v5617 = vunpack.c.l.b16 %v4919
      %v5618 = vunpack.c.l.b16 %v4920
      %v5619 = vunpack.c.l.b16 %v4921
      %v5620 = vunpack.c.l.b16 %v4922
      %v5621 = vunpack.c.l.b16 %v4923
      %v5622 = vpack.c.b16 %v5591, %v5590
      %v5623 = vpack.c.b16 %v5593, %v5592
      %v5624 = vpack.c.b16 %v5595, %v5594
      %v5625 = vpack.c.b16 %v5597, %v5596
      %v5626 = vpack.c.b16 %v5599, %v5598
      %v5627 = vpack.c.b16 %v5601, %v5600
      %v5628 = vpack.c.b16 %v5603, %v5602
      %v5629 = vpack.c.b16 %v5605, %v5604
      %v5630 = vpack.c.b16 %v5607, %v5606
      %v5631 = vpack.c.b16 %v5609, %v5608
      %v5632 = vpack.c.b16 %v5611, %v5610
      %v5633 = vpack.c.b16 %v5613, %v5612
      %v5634 = vpack.c.b16 %v5615, %v5614
      %v5635 = vpack.c.b16 %v5617, %v5616
      %v5636 = vpack.c.b16 %v5619, %v5618
      %v5637 = vpack.c.b16 %v5621, %v5620
      %v5670 = vunpack.c.l.b16 %v4924
      %v5671 = vunpack.c.l.b16 %v4925
      %v5672 = vunpack.c.l.b16 %v4926
      %v5673 = vunpack.c.l.b16 %v4927
      %v5674 = vunpack.c.l.b16 %v4928
      %v5675 = vunpack.c.l.b16 %v4929
      %v5676 = vunpack.c.l.b16 %v4930
      %v5677 = vunpack.c.l.b16 %v4931
      %v5678 = vunpack.c.l.b16 %v4932
      %v5679 = vunpack.c.l.b16 %v4933
      %v5680 = vunpack.c.l.b16 %v4934
      %v5681 = vunpack.c.l.b16 %v4935
      %v5682 = vunpack.c.l.b16 %v4936
      %v5683 = vunpack.c.l.b16 %v4937
      %v5684 = vunpack.c.l.b16 %v4938
      %v5685 = vunpack.c.l.b16 %v4939
      %v5686 = vpack.c.b16 %v5671, %v5670
      %v5687 = vpack.c.b16 %v5673, %v5672
      %v5688 = vpack.c.b16 %v5675, %v5674
      %v5689 = vpack.c.b16 %v5677, %v5676
      %v5690 = vpack.c.b16 %v5679, %v5678
      %v5691 = vpack.c.b16 %v5681, %v5680
      %v5692 = vpack.c.b16 %v5683, %v5682
      %v5693 = vpack.c.b16 %v5685, %v5684
      %5702 = vmatpush.bf16.msra.mxu0 %v5693
      %5703 = vmatpush.bf16.msra.mxu0 %v5692
      %5704 = vmatpush.bf16.msra.mxu0 %v5691
      %5705 = vmatpush.bf16.msra.mxu0 %v5690
      %5706 = vmatpush.bf16.msra.mxu0 %v5689
      %5707 = vmatpush.bf16.msra.mxu0 %v5688
      %5708 = vmatpush.bf16.msra.mxu0 %v5687
      %5709 = vmatpush.bf16.msra.mxu0 %v5686
      %5710 = vmatmul.bf16.gmra.mxu0 %v5622
      %v5711 = vpop.f32.mrf.mxu0
      %v5712 = vadd.f32 %v5479, %v5711
      %v5713 = vpop.f32.mrf.mxu0
      %v5714 = vadd.f32 %v5481, %v5713
      %5715 = vmatmul.bf16.gmra.mxu0 %v5623
      %v5716 = vpop.f32.mrf.mxu0
      %v5717 = vadd.f32 %v5484, %v5716
      %v5718 = vpop.f32.mrf.mxu0
      %v5719 = vadd.f32 %v5486, %v5718
      %5720 = vmatmul.bf16.gmra.mxu0 %v5624
      %v5721 = vpop.f32.mrf.mxu0
      %v5722 = vadd.f32 %v5489, %v5721
      %v5723 = vpop.f32.mrf.mxu0
      %v5724 = vadd.f32 %v5491, %v5723
      %5725 = vmatmul.bf16.gmra.mxu0 %v5625
      %v5726 = vpop.f32.mrf.mxu0
      %v5727 = vadd.f32 %v5494, %v5726
      %v5728 = vpop.f32.mrf.mxu0
      %v5729 = vadd.f32 %v5496, %v5728
      %5730 = vmatmul.bf16.gmra.mxu0 %v5626
      %v5731 = vpop.f32.mrf.mxu0
      %v5732 = vadd.f32 %v5499, %v5731
      %v5733 = vpop.f32.mrf.mxu0
      %v5734 = vadd.f32 %v5501, %v5733
      %5735 = vmatmul.bf16.gmra.mxu0 %v5627
      %v5736 = vpop.f32.mrf.mxu0
      %v5737 = vadd.f32 %v5504, %v5736
      %v5738 = vpop.f32.mrf.mxu0
      %v5739 = vadd.f32 %v5506, %v5738
      %5740 = vmatmul.bf16.gmra.mxu0 %v5628
      %v5741 = vpop.f32.mrf.mxu0
      %v5742 = vadd.f32 %v5509, %v5741
      %v5743 = vpop.f32.mrf.mxu0
      %v5744 = vadd.f32 %v5511, %v5743
      %5745 = vmatmul.bf16.gmra.mxu0 %v5629
      %v5746 = vpop.f32.mrf.mxu0
      %v5747 = vadd.f32 %v5514, %v5746
      %v5748 = vpop.f32.mrf.mxu0
      %v5749 = vadd.f32 %v5516, %v5748
      %5750 = vmatmul.bf16.gmra.mxu0 %v5630
      %v5751 = vpop.f32.mrf.mxu0
      %v5752 = vadd.f32 %v5519, %v5751
      %v5753 = vpop.f32.mrf.mxu0
      %v5754 = vadd.f32 %v5521, %v5753
      %5755 = vmatmul.bf16.gmra.mxu0 %v5631
      %v5756 = vpop.f32.mrf.mxu0
      %v5757 = vadd.f32 %v5524, %v5756
      %v5758 = vpop.f32.mrf.mxu0
      %v5759 = vadd.f32 %v5526, %v5758
      %5760 = vmatmul.bf16.gmra.mxu0 %v5632
      %v5761 = vpop.f32.mrf.mxu0
      %v5762 = vadd.f32 %v5529, %v5761
      %v5763 = vpop.f32.mrf.mxu0
      %v5764 = vadd.f32 %v5531, %v5763
      %5765 = vmatmul.bf16.gmra.mxu0 %v5633
      %v5766 = vpop.f32.mrf.mxu0
      %v5767 = vadd.f32 %v5534, %v5766
      %v5768 = vpop.f32.mrf.mxu0
      %v5769 = vadd.f32 %v5536, %v5768
      %5770 = vmatmul.bf16.gmra.mxu0 %v5634
      %v5771 = vpop.f32.mrf.mxu0
      %v5772 = vadd.f32 %v5539, %v5771
      %v5773 = vpop.f32.mrf.mxu0
      %v5774 = vadd.f32 %v5541, %v5773
      %5775 = vmatmul.bf16.gmra.mxu0 %v5635
      %v5776 = vpop.f32.mrf.mxu0
      %v5777 = vadd.f32 %v5544, %v5776
      %v5778 = vpop.f32.mrf.mxu0
      %v5779 = vadd.f32 %v5546, %v5778
      %5780 = vmatmul.bf16.gmra.mxu0 %v5636
      %v5781 = vpop.f32.mrf.mxu0
      %v5782 = vadd.f32 %v5549, %v5781
      %v5783 = vpop.f32.mrf.mxu0
      %v5784 = vadd.f32 %v5551, %v5783
      %5785 = vmatmul.bf16.gmra.mxu0 %v5637
      %v5786 = vpop.f32.mrf.mxu0
      %v5787 = vadd.f32 %v5554, %v5786
      %v5788 = vpop.f32.mrf.mxu0
      %v5789 = vadd.f32 %v5556, %v5788
      %5790 = vdwg.mxu0
      %v5791 = vld [vmem:[#allocation2] sm:$0xe]
      %v5792 = vld [vmem:[#allocation2 + $0xc] sm:$0xe]
      %v5793 = vld [vmem:[#allocation2 + $0x18] sm:$0xe]
      %v5794 = vld [vmem:[#allocation2 + $0x24] sm:$0xe]
      %v5795 = vld [vmem:[#allocation2 + $0x30] sm:$0xe]
      %v5796 = vld [vmem:[#allocation2 + $0x3c] sm:$0xe]
      %v5797 = vld [vmem:[#allocation2 + $0x48] sm:$0xe]
      %v5798 = vld [vmem:[#allocation2 + $0x54] sm:$0xe]
      %v5799 = vld [vmem:[#allocation2 + $0x60] sm:$0xe]
      %v5800 = vld [vmem:[#allocation2 + $0x6c] sm:$0xe]
      %v5801 = vld [vmem:[#allocation2 + $0x78] sm:$0xe]
      %v5802 = vld [vmem:[#allocation2 + $0x84] sm:$0xe]
      %v5803 = vld [vmem:[#allocation2 + $0x90] sm:$0xe]
      %v5804 = vld [vmem:[#allocation2 + $0x9c] sm:$0xe]
      %v5805 = vld [vmem:[#allocation2 + $0xa8] sm:$0xe]
      %v5806 = vld [vmem:[#allocation2 + $0xb4] sm:$0xe]
      %v5839 = vrot.slane %v5791, 5
      %v5840 = vrot.slane %v5839, 4
      %v5841 = vrot.slane %v4893, 5
      %v5842 = vsel %vm1178, %v5840, %v5841
      %v5843 = vrot.slane %v5841, 4
      %v5844 = vrot.slane %v4940, 5
      %v5845 = vsel %vm1178, %v5843, %v5844
      %v5846 = vrot.slane %v5792, 5
      %v5847 = vrot.slane %v5846, 4
      %v5848 = vrot.slane %v4895, 5
      %v5849 = vsel %vm1178, %v5847, %v5848
      %v5850 = vrot.slane %v5848, 4
      %v5851 = vrot.slane %v4941, 5
      %v5852 = vsel %vm1178, %v5850, %v5851
      %v5853 = vrot.slane %v5793, 5
      %v5854 = vrot.slane %v5853, 4
      %v5855 = vrot.slane %v4897, 5
      %v5856 = vsel %vm1178, %v5854, %v5855
      %v5857 = vrot.slane %v5855, 4
      %v5858 = vrot.slane %v4942, 5
      %v5859 = vsel %vm1178, %v5857, %v5858
      %v5860 = vrot.slane %v5794, 5
      %v5861 = vrot.slane %v5860, 4
      %v5862 = vrot.slane %v4899, 5
      %v5863 = vsel %vm1178, %v5861, %v5862
      %v5864 = vrot.slane %v5862, 4
      %v5865 = vrot.slane %v4943, 5
      %v5866 = vsel %vm1178, %v5864, %v5865
      %v5867 = vrot.slane %v5795, 5
      %v5868 = vrot.slane %v5867, 4
      %v5869 = vrot.slane %v4901, 5
      %v5870 = vsel %vm1178, %v5868, %v5869
      %v5871 = vrot.slane %v5869, 4
      %v5872 = vrot.slane %v4944, 5
      %v5873 = vsel %vm1178, %v5871, %v5872
      %v5874 = vrot.slane %v5796, 5
      %v5875 = vrot.slane %v5874, 4
      %v5876 = vrot.slane %v4903, 5
      %v5877 = vsel %vm1178, %v5875, %v5876
      %v5878 = vrot.slane %v5876, 4
      %v5879 = vrot.slane %v4945, 5
      %v5880 = vsel %vm1178, %v5878, %v5879
      %v5881 = vrot.slane %v5797, 5
      %v5882 = vrot.slane %v5881, 4
      %v5883 = vrot.slane %v4905, 5
      %v5884 = vsel %vm1178, %v5882, %v5883
      %v5885 = vrot.slane %v5883, 4
      %v5886 = vrot.slane %v4946, 5
      %v5887 = vsel %vm1178, %v5885, %v5886
      %v5888 = vrot.slane %v5798, 5
      %v5889 = vrot.slane %v5888, 4
      %v5890 = vrot.slane %v4907, 5
      %v5891 = vsel %vm1178, %v5889, %v5890
      %v5892 = vrot.slane %v5890, 4
      %v5893 = vrot.slane %v4947, 5
      %v5894 = vsel %vm1178, %v5892, %v5893
      %v5895 = vrot.slane %v5799, 5
      %v5896 = vrot.slane %v5895, 4
      %v5897 = vrot.slane %v4909, 5
      %v5898 = vsel %vm1178, %v5896, %v5897
      %v5899 = vrot.slane %v5897, 4
      %v5900 = vrot.slane %v4948, 5
      %v5901 = vsel %vm1178, %v5899, %v5900
      %v5902 = vrot.slane %v5800, 5
      %v5903 = vrot.slane %v5902, 4
      %v5904 = vrot.slane %v4911, 5
      %v5905 = vsel %vm1178, %v5903, %v5904
      %v5906 = vrot.slane %v5904, 4
      %v5907 = vrot.slane %v4949, 5
      %v5908 = vsel %vm1178, %v5906, %v5907
      %v5909 = vrot.slane %v5801, 5
      %v5910 = vrot.slane %v5909, 4
      %v5911 = vrot.slane %v4913, 5
      %v5912 = vsel %vm1178, %v5910, %v5911
      %v5913 = vrot.slane %v5911, 4
      %v5914 = vrot.slane %v4950, 5
      %v5915 = vsel %vm1178, %v5913, %v5914
      %v5916 = vrot.slane %v5802, 5
      %v5917 = vrot.slane %v5916, 4
      %v5918 = vrot.slane %v4915, 5
      %v5919 = vsel %vm1178, %v5917, %v5918
      %v5920 = vrot.slane %v5918, 4
      %v5921 = vrot.slane %v4951, 5
      %v5922 = vsel %vm1178, %v5920, %v5921
      %v5923 = vrot.slane %v5803, 5
      %v5924 = vrot.slane %v5923, 4
      %v5925 = vrot.slane %v4917, 5
      %v5926 = vsel %vm1178, %v5924, %v5925
      %v5927 = vrot.slane %v5925, 4
      %v5928 = vrot.slane %v4952, 5
      %v5929 = vsel %vm1178, %v5927, %v5928
      %v5930 = vrot.slane %v5804, 5
      %v5931 = vrot.slane %v5930, 4
      %v5932 = vrot.slane %v4919, 5
      %v5933 = vsel %vm1178, %v5931, %v5932
      %v5934 = vrot.slane %v5932, 4
      %v5935 = vrot.slane %v4953, 5
      %v5936 = vsel %vm1178, %v5934, %v5935
      %v5937 = vrot.slane %v5805, 5
      %v5938 = vrot.slane %v5937, 4
      %v5939 = vrot.slane %v4921, 5
      %v5940 = vsel %vm1178, %v5938, %v5939
      %v5941 = vrot.slane %v5939, 4
      %v5942 = vrot.slane %v4954, 5
      %v5943 = vsel %vm1178, %v5941, %v5942
      %v5944 = vrot.slane %v5806, 5
      %v5945 = vrot.slane %v5944, 4
      %v5946 = vrot.slane %v4923, 5
      %v5947 = vsel %vm1178, %v5945, %v5946
      %v5948 = vrot.slane %v5946, 4
      %v5949 = vrot.slane %v4955, 5
      %v5950 = vsel %vm1178, %v5948, %v5949
      %s5951 = scalar_lea.vmem %s2, 128
      %v5952 = vld [vmem:[%s5951] sm:$0xf]
      %v5953 = vld [vmem:[%s5951 + $0x4] sm:$0xf]
      %v5954 = vld [vmem:[%s5951 + $0x8] sm:$0xf]
      %v5955 = vld [vmem:[%s5951 + $0xc] sm:$0xf]
      %v5956 = vld [vmem:[%s5951 + $0x10] sm:$0xf]
      %v5957 = vld [vmem:[%s5951 + $0x14] sm:$0xf]
      %v5958 = vld [vmem:[%s5951 + $0x18] sm:$0xf]
      %v5959 = vld [vmem:[%s5951 + $0x1c] sm:$0xf]
      %v5960 = vld [vmem:[%s5951 + $0x20] sm:$0xf]
      %v5961 = vld [vmem:[%s5951 + $0x24] sm:$0xf]
      %v5962 = vld [vmem:[%s5951 + $0x28] sm:$0xf]
      %v5963 = vld [vmem:[%s5951 + $0x2c] sm:$0xf]
      %v5964 = vld [vmem:[%s5951 + $0x30] sm:$0xf]
      %v5965 = vld [vmem:[%s5951 + $0x34] sm:$0xf]
      %v5966 = vld [vmem:[%s5951 + $0x38] sm:$0xf]
      %v5967 = vld [vmem:[%s5951 + $0x3c] sm:$0xf]
      %v5968 = vunpack.c.l.b16 %v5842
      %v5969 = vunpack.c.l.b16 %v5845
      %v5970 = vunpack.c.l.b16 %v5849
      %v5971 = vunpack.c.l.b16 %v5852
      %v5972 = vunpack.c.l.b16 %v5856
      %v5973 = vunpack.c.l.b16 %v5859
      %v5974 = vunpack.c.l.b16 %v5863
      %v5975 = vunpack.c.l.b16 %v5866
      %v5976 = vunpack.c.l.b16 %v5870
      %v5977 = vunpack.c.l.b16 %v5873
      %v5978 = vunpack.c.l.b16 %v5877
      %v5979 = vunpack.c.l.b16 %v5880
      %v5980 = vunpack.c.l.b16 %v5884
      %v5981 = vunpack.c.l.b16 %v5887
      %v5982 = vunpack.c.l.b16 %v5891
      %v5983 = vunpack.c.l.b16 %v5894
      %v5984 = vunpack.c.l.b16 %v5898
      %v5985 = vunpack.c.l.b16 %v5901
      %v5986 = vunpack.c.l.b16 %v5905
      %v5987 = vunpack.c.l.b16 %v5908
      %v5988 = vunpack.c.l.b16 %v5912
      %v5989 = vunpack.c.l.b16 %v5915
      %v5990 = vunpack.c.l.b16 %v5919
      %v5991 = vunpack.c.l.b16 %v5922
      %v5992 = vunpack.c.l.b16 %v5926
      %v5993 = vunpack.c.l.b16 %v5929
      %v5994 = vunpack.c.l.b16 %v5933
      %v5995 = vunpack.c.l.b16 %v5936
      %v5996 = vunpack.c.l.b16 %v5940
      %v5997 = vunpack.c.l.b16 %v5943
      %v5998 = vunpack.c.l.b16 %v5947
      %v5999 = vunpack.c.l.b16 %v5950
      %v6000 = vpack.c.b16 %v5969, %v5968
      %v6001 = vpack.c.b16 %v5971, %v5970
      %v6002 = vpack.c.b16 %v5973, %v5972
      %v6003 = vpack.c.b16 %v5975, %v5974
      %v6004 = vpack.c.b16 %v5977, %v5976
      %v6005 = vpack.c.b16 %v5979, %v5978
      %v6006 = vpack.c.b16 %v5981, %v5980
      %v6007 = vpack.c.b16 %v5983, %v5982
      %v6008 = vpack.c.b16 %v5985, %v5984
      %v6009 = vpack.c.b16 %v5987, %v5986
      %v6010 = vpack.c.b16 %v5989, %v5988
      %v6011 = vpack.c.b16 %v5991, %v5990
      %v6012 = vpack.c.b16 %v5993, %v5992
      %v6013 = vpack.c.b16 %v5995, %v5994
      %v6014 = vpack.c.b16 %v5997, %v5996
      %v6015 = vpack.c.b16 %v5999, %v5998
      %v6048 = vunpack.c.l.b16 %v5952
      %v6049 = vunpack.c.l.b16 %v5953
      %v6050 = vunpack.c.l.b16 %v5954
      %v6051 = vunpack.c.l.b16 %v5955
      %v6052 = vunpack.c.l.b16 %v5956
      %v6053 = vunpack.c.l.b16 %v5957
      %v6054 = vunpack.c.l.b16 %v5958
      %v6055 = vunpack.c.l.b16 %v5959
      %v6056 = vunpack.c.l.b16 %v5960
      %v6057 = vunpack.c.l.b16 %v5961
      %v6058 = vunpack.c.l.b16 %v5962
      %v6059 = vunpack.c.l.b16 %v5963
      %v6060 = vunpack.c.l.b16 %v5964
      %v6061 = vunpack.c.l.b16 %v5965
      %v6062 = vunpack.c.l.b16 %v5966
      %v6063 = vunpack.c.l.b16 %v5967
      %v6064 = vpack.c.b16 %v6049, %v6048
      %v6065 = vpack.c.b16 %v6051, %v6050
      %v6066 = vpack.c.b16 %v6053, %v6052
      %v6067 = vpack.c.b16 %v6055, %v6054
      %v6068 = vpack.c.b16 %v6057, %v6056
      %v6069 = vpack.c.b16 %v6059, %v6058
      %v6070 = vpack.c.b16 %v6061, %v6060
      %v6071 = vpack.c.b16 %v6063, %v6062
      %6080 = vmatpush.bf16.msra.mxu0 %v6071
      %6081 = vmatpush.bf16.msra.mxu0 %v6070
      %6082 = vmatpush.bf16.msra.mxu0 %v6069
      %6083 = vmatpush.bf16.msra.mxu0 %v6068
      %6084 = vmatpush.bf16.msra.mxu0 %v6067
      %6085 = vmatpush.bf16.msra.mxu0 %v6066
      %6086 = vmatpush.bf16.msra.mxu0 %v6065
      %6087 = vmatpush.bf16.msra.mxu0 %v6064
      %6088 = vmatmul.bf16.gmra.mxu0 %v6000
      %v6089 = vpop.f32.mrf.mxu0
      %v6090 = vadd.f32 0.0, %v6089
      %v6091 = vpop.f32.mrf.mxu0
      %v6092 = vadd.f32 0.0, %v6091
      %6093 = vmatmul.bf16.gmra.mxu0 %v6001
      %v6094 = vpop.f32.mrf.mxu0
      %v6095 = vadd.f32 0.0, %v6094
      %v6096 = vpop.f32.mrf.mxu0
      %v6097 = vadd.f32 0.0, %v6096
      %6098 = vmatmul.bf16.gmra.mxu0 %v6002
      %v6099 = vpop.f32.mrf.mxu0
      %v6100 = vadd.f32 0.0, %v6099
      %v6101 = vpop.f32.mrf.mxu0
      %v6102 = vadd.f32 0.0, %v6101
      %6103 = vmatmul.bf16.gmra.mxu0 %v6003
      %v6104 = vpop.f32.mrf.mxu0
      %v6105 = vadd.f32 0.0, %v6104
      %v6106 = vpop.f32.mrf.mxu0
      %v6107 = vadd.f32 0.0, %v6106
      %6108 = vmatmul.bf16.gmra.mxu0 %v6004
      %v6109 = vpop.f32.mrf.mxu0
      %v6110 = vadd.f32 0.0, %v6109
      %v6111 = vpop.f32.mrf.mxu0
      %v6112 = vadd.f32 0.0, %v6111
      %6113 = vmatmul.bf16.gmra.mxu0 %v6005
      %v6114 = vpop.f32.mrf.mxu0
      %v6115 = vadd.f32 0.0, %v6114
      %v6116 = vpop.f32.mrf.mxu0
      %v6117 = vadd.f32 0.0, %v6116
      %6118 = vmatmul.bf16.gmra.mxu0 %v6006
      %v6119 = vpop.f32.mrf.mxu0
      %v6120 = vadd.f32 0.0, %v6119
      %v6121 = vpop.f32.mrf.mxu0
      %v6122 = vadd.f32 0.0, %v6121
      %6123 = vmatmul.bf16.gmra.mxu0 %v6007
      %v6124 = vpop.f32.mrf.mxu0
      %v6125 = vadd.f32 0.0, %v6124
      %v6126 = vpop.f32.mrf.mxu0
      %v6127 = vadd.f32 0.0, %v6126
      %6128 = vmatmul.bf16.gmra.mxu0 %v6008
      %v6129 = vpop.f32.mrf.mxu0
      %v6130 = vadd.f32 0.0, %v6129
      %v6131 = vpop.f32.mrf.mxu0
      %v6132 = vadd.f32 0.0, %v6131
      %6133 = vmatmul.bf16.gmra.mxu0 %v6009
      %v6134 = vpop.f32.mrf.mxu0
      %v6135 = vadd.f32 0.0, %v6134
      %v6136 = vpop.f32.mrf.mxu0
      %v6137 = vadd.f32 0.0, %v6136
      %6138 = vmatmul.bf16.gmra.mxu0 %v6010
      %v6139 = vpop.f32.mrf.mxu0
      %v6140 = vadd.f32 0.0, %v6139
      %v6141 = vpop.f32.mrf.mxu0
      %v6142 = vadd.f32 0.0, %v6141
      %6143 = vmatmul.bf16.gmra.mxu0 %v6011
      %v6144 = vpop.f32.mrf.mxu0
      %v6145 = vadd.f32 0.0, %v6144
      %v6146 = vpop.f32.mrf.mxu0
      %v6147 = vadd.f32 0.0, %v6146
      %6148 = vmatmul.bf16.gmra.mxu0 %v6012
      %v6149 = vpop.f32.mrf.mxu0
      %v6150 = vadd.f32 0.0, %v6149
      %v6151 = vpop.f32.mrf.mxu0
      %v6152 = vadd.f32 0.0, %v6151
      %6153 = vmatmul.bf16.gmra.mxu0 %v6013
      %v6154 = vpop.f32.mrf.mxu0
      %v6155 = vadd.f32 0.0, %v6154
      %v6156 = vpop.f32.mrf.mxu0
      %v6157 = vadd.f32 0.0, %v6156
      %6158 = vmatmul.bf16.gmra.mxu0 %v6014
      %v6159 = vpop.f32.mrf.mxu0
      %v6160 = vadd.f32 0.0, %v6159
      %v6161 = vpop.f32.mrf.mxu0
      %v6162 = vadd.f32 0.0, %v6161
      %6163 = vmatmul.bf16.gmra.mxu0 %v6015
      %v6164 = vpop.f32.mrf.mxu0
      %v6165 = vadd.f32 0.0, %v6164
      %v6166 = vpop.f32.mrf.mxu0
      %v6167 = vadd.f32 0.0, %v6166
      %6168 = vdwg.mxu0
      %v6169 = vadd.f32 %v5712, %v6090
      %v6170 = vadd.f32 %v5714, %v6092
      %v6171 = vadd.f32 %v5717, %v6095
      %v6172 = vadd.f32 %v5719, %v6097
      %v6173 = vadd.f32 %v5722, %v6100
      %v6174 = vadd.f32 %v5724, %v6102
      %v6175 = vadd.f32 %v5727, %v6105
      %v6176 = vadd.f32 %v5729, %v6107
      %v6177 = vadd.f32 %v5732, %v6110
      %v6178 = vadd.f32 %v5734, %v6112
      %v6179 = vadd.f32 %v5737, %v6115
      %v6180 = vadd.f32 %v5739, %v6117
      %v6181 = vadd.f32 %v5742, %v6120
      %v6182 = vadd.f32 %v5744, %v6122
      %v6183 = vadd.f32 %v5747, %v6125
      %v6184 = vadd.f32 %v5749, %v6127
      %v6185 = vadd.f32 %v5752, %v6130
      %v6186 = vadd.f32 %v5754, %v6132
      %v6187 = vadd.f32 %v5757, %v6135
      %v6188 = vadd.f32 %v5759, %v6137
      %v6189 = vadd.f32 %v5762, %v6140
      %v6190 = vadd.f32 %v5764, %v6142
      %v6191 = vadd.f32 %v5767, %v6145
      %v6192 = vadd.f32 %v5769, %v6147
      %v6193 = vadd.f32 %v5772, %v6150
      %v6194 = vadd.f32 %v5774, %v6152
      %v6195 = vadd.f32 %v5777, %v6155
      %v6196 = vadd.f32 %v5779, %v6157
      %v6197 = vadd.f32 %v5782, %v6160
      %v6198 = vadd.f32 %v5784, %v6162
      %v6199 = vadd.f32 %v5787, %v6165
      %v6200 = vadd.f32 %v5789, %v6167
      %v6201 = vld [vmem:[%s4774] sm:$0xf]
      %v6202 = vld [vmem:[%s4774 + $0x4] sm:$0xf]
      %v6203 = vld [vmem:[%s4774 + $0xc] sm:$0xf]
      %v6204 = vld [vmem:[%s4774 + $0x10] sm:$0xf]
      %v6205 = vld [vmem:[%s4774 + $0x18] sm:$0xf]
      %v6206 = vld [vmem:[%s4774 + $0x1c] sm:$0xf]
      %v6207 = vld [vmem:[%s4774 + $0x24] sm:$0xf]
      %v6208 = vld [vmem:[%s4774 + $0x28] sm:$0xf]
      %v6209 = vld [vmem:[%s4774 + $0x30] sm:$0xf]
      %v6210 = vld [vmem:[%s4774 + $0x34] sm:$0xf]
      %v6211 = vld [vmem:[%s4774 + $0x3c] sm:$0xf]
      %v6212 = vld [vmem:[%s4774 + $0x40] sm:$0xf]
      %v6213 = vld [vmem:[%s4774 + $0x48] sm:$0xf]
      %v6214 = vld [vmem:[%s4774 + $0x4c] sm:$0xf]
      %v6215 = vld [vmem:[%s4774 + $0x54] sm:$0xf]
      %v6216 = vld [vmem:[%s4774 + $0x58] sm:$0xf]
      %v6217 = vld [vmem:[%s4774 + $0x60] sm:$0xf]
      %v6218 = vld [vmem:[%s4774 + $0x64] sm:$0xf]
      %v6219 = vld [vmem:[%s4774 + $0x6c] sm:$0xf]
      %v6220 = vld [vmem:[%s4774 + $0x70] sm:$0xf]
      %v6221 = vld [vmem:[%s4774 + $0x78] sm:$0xf]
      %v6222 = vld [vmem:[%s4774 + $0x7c] sm:$0xf]
      %v6223 = vld [vmem:[%s4774 + $0x84] sm:$0xf]
      %v6224 = vld [vmem:[%s4774 + $0x88] sm:$0xf]
      %v6225 = vld [vmem:[%s4774 + $0x90] sm:$0xf]
      %v6226 = vld [vmem:[%s4774 + $0x94] sm:$0xf]
      %v6227 = vld [vmem:[%s4774 + $0x9c] sm:$0xf]
      %v6228 = vld [vmem:[%s4774 + $0xa0] sm:$0xf]
      %v6229 = vld [vmem:[%s4774 + $0xa8] sm:$0xf]
      %v6230 = vld [vmem:[%s4774 + $0xac] sm:$0xf]
      %v6231 = vld [vmem:[%s4774 + $0xb4] sm:$0xf]
      %v6232 = vld [vmem:[%s4774 + $0xb8] sm:$0xf]
      %s6233 = scalar_lea.vmem %s2, 192
      %v6234 = vld [vmem:[%s6233] sm:$0xf]
      %v6235 = vld [vmem:[%s6233 + $0x4] sm:$0xf]
      %v6236 = vld [vmem:[%s6233 + $0x8] sm:$0xf]
      %v6237 = vld [vmem:[%s6233 + $0xc] sm:$0xf]
      %v6238 = vld [vmem:[%s6233 + $0x10] sm:$0xf]
      %v6239 = vld [vmem:[%s6233 + $0x14] sm:$0xf]
      %v6240 = vld [vmem:[%s6233 + $0x18] sm:$0xf]
      %v6241 = vld [vmem:[%s6233 + $0x1c] sm:$0xf]
      %v6242 = vld [vmem:[%s6233 + $0x20] sm:$0xf]
      %v6243 = vld [vmem:[%s6233 + $0x24] sm:$0xf]
      %v6244 = vld [vmem:[%s6233 + $0x28] sm:$0xf]
      %v6245 = vld [vmem:[%s6233 + $0x2c] sm:$0xf]
      %v6246 = vld [vmem:[%s6233 + $0x30] sm:$0xf]
      %v6247 = vld [vmem:[%s6233 + $0x34] sm:$0xf]
      %v6248 = vld [vmem:[%s6233 + $0x38] sm:$0xf]
      %v6249 = vld [vmem:[%s6233 + $0x3c] sm:$0xf]
      %v6282 = vunpack.c.l.b16 %v6201
      %v6283 = vunpack.c.l.b16 %v6202
      %v6284 = vunpack.c.l.b16 %v6203
      %v6285 = vunpack.c.l.b16 %v6204
      %v6286 = vunpack.c.l.b16 %v6205
      %v6287 = vunpack.c.l.b16 %v6206
      %v6288 = vunpack.c.l.b16 %v6207
      %v6289 = vunpack.c.l.b16 %v6208
      %v6290 = vunpack.c.l.b16 %v6209
      %v6291 = vunpack.c.l.b16 %v6210
      %v6292 = vunpack.c.l.b16 %v6211
      %v6293 = vunpack.c.l.b16 %v6212
      %v6294 = vunpack.c.l.b16 %v6213
      %v6295 = vunpack.c.l.b16 %v6214
      %v6296 = vunpack.c.l.b16 %v6215
      %v6297 = vunpack.c.l.b16 %v6216
      %v6298 = vunpack.c.l.b16 %v6217
      %v6299 = vunpack.c.l.b16 %v6218
      %v6300 = vunpack.c.l.b16 %v6219
      %v6301 = vunpack.c.l.b16 %v6220
      %v6302 = vunpack.c.l.b16 %v6221
      %v6303 = vunpack.c.l.b16 %v6222
      %v6304 = vunpack.c.l.b16 %v6223
      %v6305 = vunpack.c.l.b16 %v6224
      %v6306 = vunpack.c.l.b16 %v6225
      %v6307 = vunpack.c.l.b16 %v6226
      %v6308 = vunpack.c.l.b16 %v6227
      %v6309 = vunpack.c.l.b16 %v6228
      %v6310 = vunpack.c.l.b16 %v6229
      %v6311 = vunpack.c.l.b16 %v6230
      %v6312 = vunpack.c.l.b16 %v6231
      %v6313 = vunpack.c.l.b16 %v6232
      %v6314 = vpack.c.b16 %v6283, %v6282
      %v6315 = vpack.c.b16 %v6285, %v6284
      %v6316 = vpack.c.b16 %v6287, %v6286
      %v6317 = vpack.c.b16 %v6289, %v6288
      %v6318 = vpack.c.b16 %v6291, %v6290
      %v6319 = vpack.c.b16 %v6293, %v6292
      %v6320 = vpack.c.b16 %v6295, %v6294
      %v6321 = vpack.c.b16 %v6297, %v6296
      %v6322 = vpack.c.b16 %v6299, %v6298
      %v6323 = vpack.c.b16 %v6301, %v6300
      %v6324 = vpack.c.b16 %v6303, %v6302
      %v6325 = vpack.c.b16 %v6305, %v6304
      %v6326 = vpack.c.b16 %v6307, %v6306
      %v6327 = vpack.c.b16 %v6309, %v6308
      %v6328 = vpack.c.b16 %v6311, %v6310
      %v6329 = vpack.c.b16 %v6313, %v6312
      %v6362 = vunpack.c.l.b16 %v6234
      %v6363 = vunpack.c.l.b16 %v6235
      %v6364 = vunpack.c.l.b16 %v6236
      %v6365 = vunpack.c.l.b16 %v6237
      %v6366 = vunpack.c.l.b16 %v6238
      %v6367 = vunpack.c.l.b16 %v6239
      %v6368 = vunpack.c.l.b16 %v6240
      %v6369 = vunpack.c.l.b16 %v6241
      %v6370 = vunpack.c.l.b16 %v6242
      %v6371 = vunpack.c.l.b16 %v6243
      %v6372 = vunpack.c.l.b16 %v6244
      %v6373 = vunpack.c.l.b16 %v6245
      %v6374 = vunpack.c.l.b16 %v6246
      %v6375 = vunpack.c.l.b16 %v6247
      %v6376 = vunpack.c.l.b16 %v6248
      %v6377 = vunpack.c.l.b16 %v6249
      %v6378 = vpack.c.b16 %v6363, %v6362
      %v6379 = vpack.c.b16 %v6365, %v6364
      %v6380 = vpack.c.b16 %v6367, %v6366
      %v6381 = vpack.c.b16 %v6369, %v6368
      %v6382 = vpack.c.b16 %v6371, %v6370
      %v6383 = vpack.c.b16 %v6373, %v6372
      %v6384 = vpack.c.b16 %v6375, %v6374
      %v6385 = vpack.c.b16 %v6377, %v6376
      %6394 = vmatpush.bf16.msra.mxu0 %v6385
      %6395 = vmatpush.bf16.msra.mxu0 %v6384
      %6396 = vmatpush.bf16.msra.mxu0 %v6383
      %6397 = vmatpush.bf16.msra.mxu0 %v6382
      %6398 = vmatpush.bf16.msra.mxu0 %v6381
      %6399 = vmatpush.bf16.msra.mxu0 %v6380
      %6400 = vmatpush.bf16.msra.mxu0 %v6379
      %6401 = vmatpush.bf16.msra.mxu0 %v6378
      %6402 = vmatmul.bf16.gmra.mxu0 %v6314
      %v6403 = vpop.f32.mrf.mxu0
      %v6404 = vadd.f32 0.0, %v6403
      %v6405 = vpop.f32.mrf.mxu0
      %v6406 = vadd.f32 0.0, %v6405
      %6407 = vmatmul.bf16.gmra.mxu0 %v6315
      %v6408 = vpop.f32.mrf.mxu0
      %v6409 = vadd.f32 0.0, %v6408
      %v6410 = vpop.f32.mrf.mxu0
      %v6411 = vadd.f32 0.0, %v6410
      %6412 = vmatmul.bf16.gmra.mxu0 %v6316
      %v6413 = vpop.f32.mrf.mxu0
      %v6414 = vadd.f32 0.0, %v6413
      %v6415 = vpop.f32.mrf.mxu0
      %v6416 = vadd.f32 0.0, %v6415
      %6417 = vmatmul.bf16.gmra.mxu0 %v6317
      %v6418 = vpop.f32.mrf.mxu0
      %v6419 = vadd.f32 0.0, %v6418
      %v6420 = vpop.f32.mrf.mxu0
      %v6421 = vadd.f32 0.0, %v6420
      %6422 = vmatmul.bf16.gmra.mxu0 %v6318
      %v6423 = vpop.f32.mrf.mxu0
      %v6424 = vadd.f32 0.0, %v6423
      %v6425 = vpop.f32.mrf.mxu0
      %v6426 = vadd.f32 0.0, %v6425
      %6427 = vmatmul.bf16.gmra.mxu0 %v6319
      %v6428 = vpop.f32.mrf.mxu0
      %v6429 = vadd.f32 0.0, %v6428
      %v6430 = vpop.f32.mrf.mxu0
      %v6431 = vadd.f32 0.0, %v6430
      %6432 = vmatmul.bf16.gmra.mxu0 %v6320
      %v6433 = vpop.f32.mrf.mxu0
      %v6434 = vadd.f32 0.0, %v6433
      %v6435 = vpop.f32.mrf.mxu0
      %v6436 = vadd.f32 0.0, %v6435
      %6437 = vmatmul.bf16.gmra.mxu0 %v6321
      %v6438 = vpop.f32.mrf.mxu0
      %v6439 = vadd.f32 0.0, %v6438
      %v6440 = vpop.f32.mrf.mxu0
      %v6441 = vadd.f32 0.0, %v6440
      %6442 = vmatmul.bf16.gmra.mxu0 %v6322
      %v6443 = vpop.f32.mrf.mxu0
      %v6444 = vadd.f32 0.0, %v6443
      %v6445 = vpop.f32.mrf.mxu0
      %v6446 = vadd.f32 0.0, %v6445
      %6447 = vmatmul.bf16.gmra.mxu0 %v6323
      %v6448 = vpop.f32.mrf.mxu0
      %v6449 = vadd.f32 0.0, %v6448
      %v6450 = vpop.f32.mrf.mxu0
      %v6451 = vadd.f32 0.0, %v6450
      %6452 = vmatmul.bf16.gmra.mxu0 %v6324
      %v6453 = vpop.f32.mrf.mxu0
      %v6454 = vadd.f32 0.0, %v6453
      %v6455 = vpop.f32.mrf.mxu0
      %v6456 = vadd.f32 0.0, %v6455
      %6457 = vmatmul.bf16.gmra.mxu0 %v6325
      %v6458 = vpop.f32.mrf.mxu0
      %v6459 = vadd.f32 0.0, %v6458
      %v6460 = vpop.f32.mrf.mxu0
      %v6461 = vadd.f32 0.0, %v6460
      %6462 = vmatmul.bf16.gmra.mxu0 %v6326
      %v6463 = vpop.f32.mrf.mxu0
      %v6464 = vadd.f32 0.0, %v6463
      %v6465 = vpop.f32.mrf.mxu0
      %v6466 = vadd.f32 0.0, %v6465
      %6467 = vmatmul.bf16.gmra.mxu0 %v6327
      %v6468 = vpop.f32.mrf.mxu0
      %v6469 = vadd.f32 0.0, %v6468
      %v6470 = vpop.f32.mrf.mxu0
      %v6471 = vadd.f32 0.0, %v6470
      %6472 = vmatmul.bf16.gmra.mxu0 %v6328
      %v6473 = vpop.f32.mrf.mxu0
      %v6474 = vadd.f32 0.0, %v6473
      %v6475 = vpop.f32.mrf.mxu0
      %v6476 = vadd.f32 0.0, %v6475
      %6477 = vmatmul.bf16.gmra.mxu0 %v6329
      %v6478 = vpop.f32.mrf.mxu0
      %v6479 = vadd.f32 0.0, %v6478
      %v6480 = vpop.f32.mrf.mxu0
      %v6481 = vadd.f32 0.0, %v6480
      %6482 = vdwg.mxu0
      %v6483 = vadd.f32 %v6169, %v6404
      %v6484 = vadd.f32 %v6170, %v6406
      %v6485 = vadd.f32 %v6171, %v6409
      %v6486 = vadd.f32 %v6172, %v6411
      %v6487 = vadd.f32 %v6173, %v6414
      %v6488 = vadd.f32 %v6174, %v6416
      %v6489 = vadd.f32 %v6175, %v6419
      %v6490 = vadd.f32 %v6176, %v6421
      %v6491 = vadd.f32 %v6177, %v6424
      %v6492 = vadd.f32 %v6178, %v6426
      %v6493 = vadd.f32 %v6179, %v6429
      %v6494 = vadd.f32 %v6180, %v6431
      %v6495 = vadd.f32 %v6181, %v6434
      %v6496 = vadd.f32 %v6182, %v6436
      %v6497 = vadd.f32 %v6183, %v6439
      %v6498 = vadd.f32 %v6184, %v6441
      %v6499 = vadd.f32 %v6185, %v6444
      %v6500 = vadd.f32 %v6186, %v6446
      %v6501 = vadd.f32 %v6187, %v6449
      %v6502 = vadd.f32 %v6188, %v6451
      %v6503 = vadd.f32 %v6189, %v6454
      %v6504 = vadd.f32 %v6190, %v6456
      %v6505 = vadd.f32 %v6191, %v6459
      %v6506 = vadd.f32 %v6192, %v6461
      %v6507 = vadd.f32 %v6193, %v6464
      %v6508 = vadd.f32 %v6194, %v6466
      %v6509 = vadd.f32 %v6195, %v6469
      %v6510 = vadd.f32 %v6196, %v6471
      %v6511 = vadd.f32 %v6197, %v6474
      %v6512 = vadd.f32 %v6198, %v6476
      %v6513 = vadd.f32 %v6199, %v6479
      %v6514 = vadd.f32 %v6200, %v6481
      %v6515 = vld [vmem:[%s4774] sm:$0xf]
      %v6516 = vld [vmem:[%s4774 + $0x4] sm:$0xf]
      %v6517 = vld [vmem:[%s4774 + $0x8] sm:$0x1]
      %v6518 = vld [vmem:[%s4774 + $0xc] sm:$0xf]
      %v6519 = vld [vmem:[%s4774 + $0x10] sm:$0xf]
      %v6520 = vld [vmem:[%s4774 + $0x14] sm:$0x1]
      %v6521 = vld [vmem:[%s4774 + $0x18] sm:$0xf]
      %v6522 = vld [vmem:[%s4774 + $0x1c] sm:$0xf]
      %v6523 = vld [vmem:[%s4774 + $0x20] sm:$0x1]
      %v6524 = vld [vmem:[%s4774 + $0x24] sm:$0xf]
      %v6525 = vld [vmem:[%s4774 + $0x28] sm:$0xf]
      %v6526 = vld [vmem:[%s4774 + $0x2c] sm:$0x1]
      %v6527 = vld [vmem:[%s4774 + $0x30] sm:$0xf]
      %v6528 = vld [vmem:[%s4774 + $0x34] sm:$0xf]
      %v6529 = vld [vmem:[%s4774 + $0x38] sm:$0x1]
      %v6530 = vld [vmem:[%s4774 + $0x3c] sm:$0xf]
      %v6531 = vld [vmem:[%s4774 + $0x40] sm:$0xf]
      %v6532 = vld [vmem:[%s4774 + $0x44] sm:$0x1]
      %v6533 = vld [vmem:[%s4774 + $0x48] sm:$0xf]
      %v6534 = vld [vmem:[%s4774 + $0x4c] sm:$0xf]
      %v6535 = vld [vmem:[%s4774 + $0x50] sm:$0x1]
      %v6536 = vld [vmem:[%s4774 + $0x54] sm:$0xf]
      %v6537 = vld [vmem:[%s4774 + $0x58] sm:$0xf]
      %v6538 = vld [vmem:[%s4774 + $0x5c] sm:$0x1]
      %v6539 = vld [vmem:[%s4774 + $0x60] sm:$0xf]
      %v6540 = vld [vmem:[%s4774 + $0x64] sm:$0xf]
      %v6541 = vld [vmem:[%s4774 + $0x68] sm:$0x1]
      %v6542 = vld [vmem:[%s4774 + $0x6c] sm:$0xf]
      %v6543 = vld [vmem:[%s4774 + $0x70] sm:$0xf]
      %v6544 = vld [vmem:[%s4774 + $0x74] sm:$0x1]
      %v6545 = vld [vmem:[%s4774 + $0x78] sm:$0xf]
      %v6546 = vld [vmem:[%s4774 + $0x7c] sm:$0xf]
      %v6547 = vld [vmem:[%s4774 + $0x80] sm:$0x1]
      %v6548 = vld [vmem:[%s4774 + $0x84] sm:$0xf]
      %v6549 = vld [vmem:[%s4774 + $0x88] sm:$0xf]
      %v6550 = vld [vmem:[%s4774 + $0x8c] sm:$0x1]
      %v6551 = vld [vmem:[%s4774 + $0x90] sm:$0xf]
      %v6552 = vld [vmem:[%s4774 + $0x94] sm:$0xf]
      %v6553 = vld [vmem:[%s4774 + $0x98] sm:$0x1]
      %v6554 = vld [vmem:[%s4774 + $0x9c] sm:$0xf]
      %v6555 = vld [vmem:[%s4774 + $0xa0] sm:$0xf]
      %v6556 = vld [vmem:[%s4774 + $0xa4] sm:$0x1]
      %v6557 = vld [vmem:[%s4774 + $0xa8] sm:$0xf]
      %v6558 = vld [vmem:[%s4774 + $0xac] sm:$0xf]
      %v6559 = vld [vmem:[%s4774 + $0xb0] sm:$0x1]
      %v6560 = vld [vmem:[%s4774 + $0xb4] sm:$0xf]
      %v6561 = vld [vmem:[%s4774 + $0xb8] sm:$0xf]
      %v6562 = vld [vmem:[%s4774 + $0xbc] sm:$0x1]
      %v6564 = vshrl.u32 %v6515, 16
      %v6566 = vrot.slane %v6564, 4
      %v6567 = vshll.u32 %v6515, 16
      %v6569 = vrot.slane %v6567, 5
      %v6570 = vor.u32 %v6566, %v6569
      %v6571 = vrot.slane %v6570, 4
      %v6573 = vshll.u32 %v6516, 16
      %v6575 = vrot.slane %v6573, 5
      %v6576 = vsel %vm292, %v6571, %v6575
      %v6577 = vshrl.u32 %v6516, 16
      %v6579 = vrot.slane %v6577, 4
      %v6580 = vor.u32 %v6579, %v6575
      %v6581 = vrot.slane %v6580, 4
      %v6583 = vshll.u32 %v6517, 16
      %v6585 = vrot.slane %v6583, 5
      %v6586 = vsel %vm292, %v6581, %v6585
      %v6588 = vshrl.u32 %v6518, 16
      %v6590 = vrot.slane %v6588, 4
      %v6591 = vshll.u32 %v6518, 16
      %v6593 = vrot.slane %v6591, 5
      %v6594 = vor.u32 %v6590, %v6593
      %v6595 = vrot.slane %v6594, 4
      %v6597 = vshll.u32 %v6519, 16
      %v6599 = vrot.slane %v6597, 5
      %v6600 = vsel %vm292, %v6595, %v6599
      %v6601 = vshrl.u32 %v6519, 16
      %v6603 = vrot.slane %v6601, 4
      %v6604 = vor.u32 %v6603, %v6599
      %v6605 = vrot.slane %v6604, 4
      %v6607 = vshll.u32 %v6520, 16
      %v6609 = vrot.slane %v6607, 5
      %v6610 = vsel %vm292, %v6605, %v6609
      %v6612 = vshrl.u32 %v6521, 16
      %v6614 = vrot.slane %v6612, 4
      %v6615 = vshll.u32 %v6521, 16
      %v6617 = vrot.slane %v6615, 5
      %v6618 = vor.u32 %v6614, %v6617
      %v6619 = vrot.slane %v6618, 4
      %v6621 = vshll.u32 %v6522, 16
      %v6623 = vrot.slane %v6621, 5
      %v6624 = vsel %vm292, %v6619, %v6623
      %v6625 = vshrl.u32 %v6522, 16
      %v6627 = vrot.slane %v6625, 4
      %v6628 = vor.u32 %v6627, %v6623
      %v6629 = vrot.slane %v6628, 4
      %v6631 = vshll.u32 %v6523, 16
      %v6633 = vrot.slane %v6631, 5
      %v6634 = vsel %vm292, %v6629, %v6633
      %v6636 = vshrl.u32 %v6524, 16
      %v6638 = vrot.slane %v6636, 4
      %v6639 = vshll.u32 %v6524, 16
      %v6641 = vrot.slane %v6639, 5
      %v6642 = vor.u32 %v6638, %v6641
      %v6643 = vrot.slane %v6642, 4
      %v6645 = vshll.u32 %v6525, 16
      %v6647 = vrot.slane %v6645, 5
      %v6648 = vsel %vm292, %v6643, %v6647
      %v6649 = vshrl.u32 %v6525, 16
      %v6651 = vrot.slane %v6649, 4
      %v6652 = vor.u32 %v6651, %v6647
      %v6653 = vrot.slane %v6652, 4
      %v6655 = vshll.u32 %v6526, 16
      %v6657 = vrot.slane %v6655, 5
      %v6658 = vsel %vm292, %v6653, %v6657
      %v6660 = vshrl.u32 %v6527, 16
      %v6662 = vrot.slane %v6660, 4
      %v6663 = vshll.u32 %v6527, 16
      %v6665 = vrot.slane %v6663, 5
      %v6666 = vor.u32 %v6662, %v6665
      %v6667 = vrot.slane %v6666, 4
      %v6669 = vshll.u32 %v6528, 16
      %v6671 = vrot.slane %v6669, 5
      %v6672 = vsel %vm292, %v6667, %v6671
      %v6673 = vshrl.u32 %v6528, 16
      %v6675 = vrot.slane %v6673, 4
      %v6676 = vor.u32 %v6675, %v6671
      %v6677 = vrot.slane %v6676, 4
      %v6679 = vshll.u32 %v6529, 16
      %v6681 = vrot.slane %v6679, 5
      %v6682 = vsel %vm292, %v6677, %v6681
      %v6684 = vshrl.u32 %v6530, 16
      %v6686 = vrot.slane %v6684, 4
      %v6687 = vshll.u32 %v6530, 16
      %v6689 = vrot.slane %v6687, 5
      %v6690 = vor.u32 %v6686, %v6689
      %v6691 = vrot.slane %v6690, 4
      %v6693 = vshll.u32 %v6531, 16
      %v6695 = vrot.slane %v6693, 5
      %v6696 = vsel %vm292, %v6691, %v6695
      %v6697 = vshrl.u32 %v6531, 16
      %v6699 = vrot.slane %v6697, 4
      %v6700 = vor.u32 %v6699, %v6695
      %v6701 = vrot.slane %v6700, 4
      %v6703 = vshll.u32 %v6532, 16
      %v6705 = vrot.slane %v6703, 5
      %v6706 = vsel %vm292, %v6701, %v6705
      %v6708 = vshrl.u32 %v6533, 16
      %v6710 = vrot.slane %v6708, 4
      %v6711 = vshll.u32 %v6533, 16
      %v6713 = vrot.slane %v6711, 5
      %v6714 = vor.u32 %v6710, %v6713
      %v6715 = vrot.slane %v6714, 4
      %v6717 = vshll.u32 %v6534, 16
      %v6719 = vrot.slane %v6717, 5
      %v6720 = vsel %vm292, %v6715, %v6719
      %v6721 = vshrl.u32 %v6534, 16
      %v6723 = vrot.slane %v6721, 4
      %v6724 = vor.u32 %v6723, %v6719
      %v6725 = vrot.slane %v6724, 4
      %v6727 = vshll.u32 %v6535, 16
      %v6729 = vrot.slane %v6727, 5
      %v6730 = vsel %vm292, %v6725, %v6729
      %v6732 = vshrl.u32 %v6536, 16
      %v6734 = vrot.slane %v6732, 4
      %v6735 = vshll.u32 %v6536, 16
      %v6737 = vrot.slane %v6735, 5
      %v6738 = vor.u32 %v6734, %v6737
      %v6739 = vrot.slane %v6738, 4
      %v6741 = vshll.u32 %v6537, 16
      %v6743 = vrot.slane %v6741, 5
      %v6744 = vsel %vm292, %v6739, %v6743
      %v6745 = vshrl.u32 %v6537, 16
      %v6747 = vrot.slane %v6745, 4
      %v6748 = vor.u32 %v6747, %v6743
      %v6749 = vrot.slane %v6748, 4
      %v6751 = vshll.u32 %v6538, 16
      %v6753 = vrot.slane %v6751, 5
      %v6754 = vsel %vm292, %v6749, %v6753
      %v6756 = vshrl.u32 %v6539, 16
      %v6758 = vrot.slane %v6756, 4
      %v6759 = vshll.u32 %v6539, 16
      %v6761 = vrot.slane %v6759, 5
      %v6762 = vor.u32 %v6758, %v6761
      %v6763 = vrot.slane %v6762, 4
      %v6765 = vshll.u32 %v6540, 16
      %v6767 = vrot.slane %v6765, 5
      %v6768 = vsel %vm292, %v6763, %v6767
      %v6769 = vshrl.u32 %v6540, 16
      %v6771 = vrot.slane %v6769, 4
      %v6772 = vor.u32 %v6771, %v6767
      %v6773 = vrot.slane %v6772, 4
      %v6775 = vshll.u32 %v6541, 16
      %v6777 = vrot.slane %v6775, 5
      %v6778 = vsel %vm292, %v6773, %v6777
      %v6780 = vshrl.u32 %v6542, 16
      %v6782 = vrot.slane %v6780, 4
      %v6783 = vshll.u32 %v6542, 16
      %v6785 = vrot.slane %v6783, 5
      %v6786 = vor.u32 %v6782, %v6785
      %v6787 = vrot.slane %v6786, 4
      %v6789 = vshll.u32 %v6543, 16
      %v6791 = vrot.slane %v6789, 5
      %v6792 = vsel %vm292, %v6787, %v6791
      %v6793 = vshrl.u32 %v6543, 16
      %v6795 = vrot.slane %v6793, 4
      %v6796 = vor.u32 %v6795, %v6791
      %v6797 = vrot.slane %v6796, 4
      %v6799 = vshll.u32 %v6544, 16
      %v6801 = vrot.slane %v6799, 5
      %v6802 = vsel %vm292, %v6797, %v6801
      %v6804 = vshrl.u32 %v6545, 16
      %v6806 = vrot.slane %v6804, 4
      %v6807 = vshll.u32 %v6545, 16
      %v6809 = vrot.slane %v6807, 5
      %v6810 = vor.u32 %v6806, %v6809
      %v6811 = vrot.slane %v6810, 4
      %v6813 = vshll.u32 %v6546, 16
      %v6815 = vrot.slane %v6813, 5
      %v6816 = vsel %vm292, %v6811, %v6815
      %v6817 = vshrl.u32 %v6546, 16
      %v6819 = vrot.slane %v6817, 4
      %v6820 = vor.u32 %v6819, %v6815
      %v6821 = vrot.slane %v6820, 4
      %v6823 = vshll.u32 %v6547, 16
      %v6825 = vrot.slane %v6823, 5
      %v6826 = vsel %vm292, %v6821, %v6825
      %v6828 = vshrl.u32 %v6548, 16
      %v6830 = vrot.slane %v6828, 4
      %v6831 = vshll.u32 %v6548, 16
      %v6833 = vrot.slane %v6831, 5
      %v6834 = vor.u32 %v6830, %v6833
      %v6835 = vrot.slane %v6834, 4
      %v6837 = vshll.u32 %v6549, 16
      %v6839 = vrot.slane %v6837, 5
      %v6840 = vsel %vm292, %v6835, %v6839
      %v6841 = vshrl.u32 %v6549, 16
      %v6843 = vrot.slane %v6841, 4
      %v6844 = vor.u32 %v6843, %v6839
      %v6845 = vrot.slane %v6844, 4
      %v6847 = vshll.u32 %v6550, 16
      %v6849 = vrot.slane %v6847, 5
      %v6850 = vsel %vm292, %v6845, %v6849
      %v6852 = vshrl.u32 %v6551, 16
      %v6854 = vrot.slane %v6852, 4
      %v6855 = vshll.u32 %v6551, 16
      %v6857 = vrot.slane %v6855, 5
      %v6858 = vor.u32 %v6854, %v6857
      %v6859 = vrot.slane %v6858, 4
      %v6861 = vshll.u32 %v6552, 16
      %v6863 = vrot.slane %v6861, 5
      %v6864 = vsel %vm292, %v6859, %v6863
      %v6865 = vshrl.u32 %v6552, 16
      %v6867 = vrot.slane %v6865, 4
      %v6868 = vor.u32 %v6867, %v6863
      %v6869 = vrot.slane %v6868, 4
      %v6871 = vshll.u32 %v6553, 16
      %v6873 = vrot.slane %v6871, 5
      %v6874 = vsel %vm292, %v6869, %v6873
      %v6876 = vshrl.u32 %v6554, 16
      %v6878 = vrot.slane %v6876, 4
      %v6879 = vshll.u32 %v6554, 16
      %v6881 = vrot.slane %v6879, 5
      %v6882 = vor.u32 %v6878, %v6881
      %v6883 = vrot.slane %v6882, 4
      %v6885 = vshll.u32 %v6555, 16
      %v6887 = vrot.slane %v6885, 5
      %v6888 = vsel %vm292, %v6883, %v6887
      %v6889 = vshrl.u32 %v6555, 16
      %v6891 = vrot.slane %v6889, 4
      %v6892 = vor.u32 %v6891, %v6887
      %v6893 = vrot.slane %v6892, 4
      %v6895 = vshll.u32 %v6556, 16
      %v6897 = vrot.slane %v6895, 5
      %v6898 = vsel %vm292, %v6893, %v6897
      %v6900 = vshrl.u32 %v6557, 16
      %v6902 = vrot.slane %v6900, 4
      %v6903 = vshll.u32 %v6557, 16
      %v6905 = vrot.slane %v6903, 5
      %v6906 = vor.u32 %v6902, %v6905
      %v6907 = vrot.slane %v6906, 4
      %v6909 = vshll.u32 %v6558, 16
      %v6911 = vrot.slane %v6909, 5
      %v6912 = vsel %vm292, %v6907, %v6911
      %v6913 = vshrl.u32 %v6558, 16
      %v6915 = vrot.slane %v6913, 4
      %v6916 = vor.u32 %v6915, %v6911
      %v6917 = vrot.slane %v6916, 4
      %v6919 = vshll.u32 %v6559, 16
      %v6921 = vrot.slane %v6919, 5
      %v6922 = vsel %vm292, %v6917, %v6921
      %v6924 = vshrl.u32 %v6560, 16
      %v6926 = vrot.slane %v6924, 4
      %v6927 = vshll.u32 %v6560, 16
      %v6929 = vrot.slane %v6927, 5
      %v6930 = vor.u32 %v6926, %v6929
      %v6931 = vrot.slane %v6930, 4
      %v6933 = vshll.u32 %v6561, 16
      %v6935 = vrot.slane %v6933, 5
      %v6936 = vsel %vm292, %v6931, %v6935
      %v6937 = vshrl.u32 %v6561, 16
      %v6939 = vrot.slane %v6937, 4
      %v6940 = vor.u32 %v6939, %v6935
      %v6941 = vrot.slane %v6940, 4
      %v6943 = vshll.u32 %v6562, 16
      %v6945 = vrot.slane %v6943, 5
      %v6946 = vsel %vm292, %v6941, %v6945
      %s6947 = scalar_lea.vmem %s2, 256
      %v6948 = vld [vmem:[%s6947] sm:$0xf]
      %v6949 = vld [vmem:[%s6947 + $0x4] sm:$0xf]
      %v6950 = vld [vmem:[%s6947 + $0x8] sm:$0xf]
      %v6951 = vld [vmem:[%s6947 + $0xc] sm:$0xf]
      %v6952 = vld [vmem:[%s6947 + $0x10] sm:$0xf]
      %v6953 = vld [vmem:[%s6947 + $0x14] sm:$0xf]
      %v6954 = vld [vmem:[%s6947 + $0x18] sm:$0xf]
      %v6955 = vld [vmem:[%s6947 + $0x1c] sm:$0xf]
      %v6956 = vld [vmem:[%s6947 + $0x20] sm:$0xf]
      %v6957 = vld [vmem:[%s6947 + $0x24] sm:$0xf]
      %v6958 = vld [vmem:[%s6947 + $0x28] sm:$0xf]
      %v6959 = vld [vmem:[%s6947 + $0x2c] sm:$0xf]
      %v6960 = vld [vmem:[%s6947 + $0x30] sm:$0xf]
      %v6961 = vld [vmem:[%s6947 + $0x34] sm:$0xf]
      %v6962 = vld [vmem:[%s6947 + $0x38] sm:$0xf]
      %v6963 = vld [vmem:[%s6947 + $0x3c] sm:$0xf]
      %v6964 = vunpack.c.l.b16 %v6576
      %v6965 = vunpack.c.l.b16 %v6586
      %v6966 = vunpack.c.l.b16 %v6600
      %v6967 = vunpack.c.l.b16 %v6610
      %v6968 = vunpack.c.l.b16 %v6624
      %v6969 = vunpack.c.l.b16 %v6634
      %v6970 = vunpack.c.l.b16 %v6648
      %v6971 = vunpack.c.l.b16 %v6658
      %v6972 = vunpack.c.l.b16 %v6672
      %v6973 = vunpack.c.l.b16 %v6682
      %v6974 = vunpack.c.l.b16 %v6696
      %v6975 = vunpack.c.l.b16 %v6706
      %v6976 = vunpack.c.l.b16 %v6720
      %v6977 = vunpack.c.l.b16 %v6730
      %v6978 = vunpack.c.l.b16 %v6744
      %v6979 = vunpack.c.l.b16 %v6754
      %v6980 = vunpack.c.l.b16 %v6768
      %v6981 = vunpack.c.l.b16 %v6778
      %v6982 = vunpack.c.l.b16 %v6792
      %v6983 = vunpack.c.l.b16 %v6802
      %v6984 = vunpack.c.l.b16 %v6816
      %v6985 = vunpack.c.l.b16 %v6826
      %v6986 = vunpack.c.l.b16 %v6840
      %v6987 = vunpack.c.l.b16 %v6850
      %v6988 = vunpack.c.l.b16 %v6864
      %v6989 = vunpack.c.l.b16 %v6874
      %v6990 = vunpack.c.l.b16 %v6888
      %v6991 = vunpack.c.l.b16 %v6898
      %v6992 = vunpack.c.l.b16 %v6912
      %v6993 = vunpack.c.l.b16 %v6922
      %v6994 = vunpack.c.l.b16 %v6936
      %v6995 = vunpack.c.l.b16 %v6946
      %v6996 = vpack.c.b16 %v6965, %v6964
      %v6997 = vpack.c.b16 %v6967, %v6966
      %v6998 = vpack.c.b16 %v6969, %v6968
      %v6999 = vpack.c.b16 %v6971, %v6970
      %v7000 = vpack.c.b16 %v6973, %v6972
      %v7001 = vpack.c.b16 %v6975, %v6974
      %v7002 = vpack.c.b16 %v6977, %v6976
      %v7003 = vpack.c.b16 %v6979, %v6978
      %v7004 = vpack.c.b16 %v6981, %v6980
      %v7005 = vpack.c.b16 %v6983, %v6982
      %v7006 = vpack.c.b16 %v6985, %v6984
      %v7007 = vpack.c.b16 %v6987, %v6986
      %v7008 = vpack.c.b16 %v6989, %v6988
      %v7009 = vpack.c.b16 %v6991, %v6990
      %v7010 = vpack.c.b16 %v6993, %v6992
      %v7011 = vpack.c.b16 %v6995, %v6994
      %v7044 = vunpack.c.l.b16 %v6948
      %v7045 = vunpack.c.l.b16 %v6949
      %v7046 = vunpack.c.l.b16 %v6950
      %v7047 = vunpack.c.l.b16 %v6951
      %v7048 = vunpack.c.l.b16 %v6952
      %v7049 = vunpack.c.l.b16 %v6953
      %v7050 = vunpack.c.l.b16 %v6954
      %v7051 = vunpack.c.l.b16 %v6955
      %v7052 = vunpack.c.l.b16 %v6956
      %v7053 = vunpack.c.l.b16 %v6957
      %v7054 = vunpack.c.l.b16 %v6958
      %v7055 = vunpack.c.l.b16 %v6959
      %v7056 = vunpack.c.l.b16 %v6960
      %v7057 = vunpack.c.l.b16 %v6961
      %v7058 = vunpack.c.l.b16 %v6962
      %v7059 = vunpack.c.l.b16 %v6963
      %v7060 = vpack.c.b16 %v7045, %v7044
      %v7061 = vpack.c.b16 %v7047, %v7046
      %v7062 = vpack.c.b16 %v7049, %v7048
      %v7063 = vpack.c.b16 %v7051, %v7050
      %v7064 = vpack.c.b16 %v7053, %v7052
      %v7065 = vpack.c.b16 %v7055, %v7054
      %v7066 = vpack.c.b16 %v7057, %v7056
      %v7067 = vpack.c.b16 %v7059, %v7058
      %7076 = vmatpush.bf16.msra.mxu0 %v7067
      %7077 = vmatpush.bf16.msra.mxu0 %v7066
      %7078 = vmatpush.bf16.msra.mxu0 %v7065
      %7079 = vmatpush.bf16.msra.mxu0 %v7064
      %7080 = vmatpush.bf16.msra.mxu0 %v7063
      %7081 = vmatpush.bf16.msra.mxu0 %v7062
      %7082 = vmatpush.bf16.msra.mxu0 %v7061
      %7083 = vmatpush.bf16.msra.mxu0 %v7060
      %7084 = vmatmul.bf16.gmra.mxu0 %v6996
      %v7085 = vpop.f32.mrf.mxu0
      %v7086 = vadd.f32 0.0, %v7085
      %v7087 = vpop.f32.mrf.mxu0
      %v7088 = vadd.f32 0.0, %v7087
      %7089 = vmatmul.bf16.gmra.mxu0 %v6997
      %v7090 = vpop.f32.mrf.mxu0
      %v7091 = vadd.f32 0.0, %v7090
      %v7092 = vpop.f32.mrf.mxu0
      %v7093 = vadd.f32 0.0, %v7092
      %7094 = vmatmul.bf16.gmra.mxu0 %v6998
      %v7095 = vpop.f32.mrf.mxu0
      %v7096 = vadd.f32 0.0, %v7095
      %v7097 = vpop.f32.mrf.mxu0
      %v7098 = vadd.f32 0.0, %v7097
      %7099 = vmatmul.bf16.gmra.mxu0 %v6999
      %v7100 = vpop.f32.mrf.mxu0
      %v7101 = vadd.f32 0.0, %v7100
      %v7102 = vpop.f32.mrf.mxu0
      %v7103 = vadd.f32 0.0, %v7102
      %7104 = vmatmul.bf16.gmra.mxu0 %v7000
      %v7105 = vpop.f32.mrf.mxu0
      %v7106 = vadd.f32 0.0, %v7105
      %v7107 = vpop.f32.mrf.mxu0
      %v7108 = vadd.f32 0.0, %v7107
      %7109 = vmatmul.bf16.gmra.mxu0 %v7001
      %v7110 = vpop.f32.mrf.mxu0
      %v7111 = vadd.f32 0.0, %v7110
      %v7112 = vpop.f32.mrf.mxu0
      %v7113 = vadd.f32 0.0, %v7112
      %7114 = vmatmul.bf16.gmra.mxu0 %v7002
      %v7115 = vpop.f32.mrf.mxu0
      %v7116 = vadd.f32 0.0, %v7115
      %v7117 = vpop.f32.mrf.mxu0
      %v7118 = vadd.f32 0.0, %v7117
      %7119 = vmatmul.bf16.gmra.mxu0 %v7003
      %v7120 = vpop.f32.mrf.mxu0
      %v7121 = vadd.f32 0.0, %v7120
      %v7122 = vpop.f32.mrf.mxu0
      %v7123 = vadd.f32 0.0, %v7122
      %7124 = vmatmul.bf16.gmra.mxu0 %v7004
      %v7125 = vpop.f32.mrf.mxu0
      %v7126 = vadd.f32 0.0, %v7125
      %v7127 = vpop.f32.mrf.mxu0
      %v7128 = vadd.f32 0.0, %v7127
      %7129 = vmatmul.bf16.gmra.mxu0 %v7005
      %v7130 = vpop.f32.mrf.mxu0
      %v7131 = vadd.f32 0.0, %v7130
      %v7132 = vpop.f32.mrf.mxu0
      %v7133 = vadd.f32 0.0, %v7132
      %7134 = vmatmul.bf16.gmra.mxu0 %v7006
      %v7135 = vpop.f32.mrf.mxu0
      %v7136 = vadd.f32 0.0, %v7135
      %v7137 = vpop.f32.mrf.mxu0
      %v7138 = vadd.f32 0.0, %v7137
      %7139 = vmatmul.bf16.gmra.mxu0 %v7007
      %v7140 = vpop.f32.mrf.mxu0
      %v7141 = vadd.f32 0.0, %v7140
      %v7142 = vpop.f32.mrf.mxu0
      %v7143 = vadd.f32 0.0, %v7142
      %7144 = vmatmul.bf16.gmra.mxu0 %v7008
      %v7145 = vpop.f32.mrf.mxu0
      %v7146 = vadd.f32 0.0, %v7145
      %v7147 = vpop.f32.mrf.mxu0
      %v7148 = vadd.f32 0.0, %v7147
      %7149 = vmatmul.bf16.gmra.mxu0 %v7009
      %v7150 = vpop.f32.mrf.mxu0
      %v7151 = vadd.f32 0.0, %v7150
      %v7152 = vpop.f32.mrf.mxu0
      %v7153 = vadd.f32 0.0, %v7152
      %7154 = vmatmul.bf16.gmra.mxu0 %v7010
      %v7155 = vpop.f32.mrf.mxu0
      %v7156 = vadd.f32 0.0, %v7155
      %v7157 = vpop.f32.mrf.mxu0
      %v7158 = vadd.f32 0.0, %v7157
      %7159 = vmatmul.bf16.gmra.mxu0 %v7011
      %v7160 = vpop.f32.mrf.mxu0
      %v7161 = vadd.f32 0.0, %v7160
      %v7162 = vpop.f32.mrf.mxu0
      %v7163 = vadd.f32 0.0, %v7162
      %7164 = vdwg.mxu0
      %v7165 = vadd.f32 %v6483, %v7086
      %v7166 = vadd.f32 %v6484, %v7088
      %v7167 = vadd.f32 %v6485, %v7091
      %v7168 = vadd.f32 %v6486, %v7093
      %v7169 = vadd.f32 %v6487, %v7096
      %v7170 = vadd.f32 %v6488, %v7098
      %v7171 = vadd.f32 %v6489, %v7101
      %v7172 = vadd.f32 %v6490, %v7103
      %v7173 = vadd.f32 %v6491, %v7106
      %v7174 = vadd.f32 %v6492, %v7108
      %v7175 = vadd.f32 %v6493, %v7111
      %v7176 = vadd.f32 %v6494, %v7113
      %v7177 = vadd.f32 %v6495, %v7116
      %v7178 = vadd.f32 %v6496, %v7118
      %v7179 = vadd.f32 %v6497, %v7121
      %v7180 = vadd.f32 %v6498, %v7123
      %v7181 = vadd.f32 %v6499, %v7126
      %v7182 = vadd.f32 %v6500, %v7128
      %v7183 = vadd.f32 %v6501, %v7131
      %v7184 = vadd.f32 %v6502, %v7133
      %v7185 = vadd.f32 %v6503, %v7136
      %v7186 = vadd.f32 %v6504, %v7138
      %v7187 = vadd.f32 %v6505, %v7141
      %v7188 = vadd.f32 %v6506, %v7143
      %v7189 = vadd.f32 %v6507, %v7146
      %v7190 = vadd.f32 %v6508, %v7148
      %v7191 = vadd.f32 %v6509, %v7151
      %v7192 = vadd.f32 %v6510, %v7153
      %v7193 = vadd.f32 %v6511, %v7156
      %v7194 = vadd.f32 %v6512, %v7158
      %v7195 = vadd.f32 %v6513, %v7161
      %v7196 = vadd.f32 %v6514, %v7163
      %v7197 = vld [vmem:[%s4774] sm:$0xe]
      %v7198 = vld [vmem:[%s4774 + $0xc] sm:$0xe]
      %v7199 = vld [vmem:[%s4774 + $0x18] sm:$0xe]
      %v7200 = vld [vmem:[%s4774 + $0x24] sm:$0xe]
      %v7201 = vld [vmem:[%s4774 + $0x30] sm:$0xe]
      %v7202 = vld [vmem:[%s4774 + $0x3c] sm:$0xe]
      %v7203 = vld [vmem:[%s4774 + $0x48] sm:$0xe]
      %v7204 = vld [vmem:[%s4774 + $0x54] sm:$0xe]
      %v7205 = vld [vmem:[%s4774 + $0x60] sm:$0xe]
      %v7206 = vld [vmem:[%s4774 + $0x6c] sm:$0xe]
      %v7207 = vld [vmem:[%s4774 + $0x78] sm:$0xe]
      %v7208 = vld [vmem:[%s4774 + $0x84] sm:$0xe]
      %v7209 = vld [vmem:[%s4774 + $0x90] sm:$0xe]
      %v7210 = vld [vmem:[%s4774 + $0x9c] sm:$0xe]
      %v7211 = vld [vmem:[%s4774 + $0xa8] sm:$0xe]
      %v7212 = vld [vmem:[%s4774 + $0xb4] sm:$0xe]
      %v7261 = vrot.slane %v7197, 5
      %v7262 = vrot.slane %v7261, 4
      %v7263 = vrot.slane %v6516, 5
      %v7264 = vsel %vm1178, %v7262, %v7263
      %v7265 = vrot.slane %v7263, 4
      %v7266 = vrot.slane %v6517, 5
      %v7267 = vsel %vm1178, %v7265, %v7266
      %v7268 = vrot.slane %v7198, 5
      %v7269 = vrot.slane %v7268, 4
      %v7270 = vrot.slane %v6519, 5
      %v7271 = vsel %vm1178, %v7269, %v7270
      %v7272 = vrot.slane %v7270, 4
      %v7273 = vrot.slane %v6520, 5
      %v7274 = vsel %vm1178, %v7272, %v7273
      %v7275 = vrot.slane %v7199, 5
      %v7276 = vrot.slane %v7275, 4
      %v7277 = vrot.slane %v6522, 5
      %v7278 = vsel %vm1178, %v7276, %v7277
      %v7279 = vrot.slane %v7277, 4
      %v7280 = vrot.slane %v6523, 5
      %v7281 = vsel %vm1178, %v7279, %v7280
      %v7282 = vrot.slane %v7200, 5
      %v7283 = vrot.slane %v7282, 4
      %v7284 = vrot.slane %v6525, 5
      %v7285 = vsel %vm1178, %v7283, %v7284
      %v7286 = vrot.slane %v7284, 4
      %v7287 = vrot.slane %v6526, 5
      %v7288 = vsel %vm1178, %v7286, %v7287
      %v7289 = vrot.slane %v7201, 5
      %v7290 = vrot.slane %v7289, 4
      %v7291 = vrot.slane %v6528, 5
      %v7292 = vsel %vm1178, %v7290, %v7291
      %v7293 = vrot.slane %v7291, 4
      %v7294 = vrot.slane %v6529, 5
      %v7295 = vsel %vm1178, %v7293, %v7294
      %v7296 = vrot.slane %v7202, 5
      %v7297 = vrot.slane %v7296, 4
      %v7298 = vrot.slane %v6531, 5
      %v7299 = vsel %vm1178, %v7297, %v7298
      %v7300 = vrot.slane %v7298, 4
      %v7301 = vrot.slane %v6532, 5
      %v7302 = vsel %vm1178, %v7300, %v7301
      %v7303 = vrot.slane %v7203, 5
      %v7304 = vrot.slane %v7303, 4
      %v7305 = vrot.slane %v6534, 5
      %v7306 = vsel %vm1178, %v7304, %v7305
      %v7307 = vrot.slane %v7305, 4
      %v7308 = vrot.slane %v6535, 5
      %v7309 = vsel %vm1178, %v7307, %v7308
      %v7310 = vrot.slane %v7204, 5
      %v7311 = vrot.slane %v7310, 4
      %v7312 = vrot.slane %v6537, 5
      %v7313 = vsel %vm1178, %v7311, %v7312
      %v7314 = vrot.slane %v7312, 4
      %v7315 = vrot.slane %v6538, 5
      %v7316 = vsel %vm1178, %v7314, %v7315
      %v7317 = vrot.slane %v7205, 5
      %v7318 = vrot.slane %v7317, 4
      %v7319 = vrot.slane %v6540, 5
      %v7320 = vsel %vm1178, %v7318, %v7319
      %v7321 = vrot.slane %v7319, 4
      %v7322 = vrot.slane %v6541, 5
      %v7323 = vsel %vm1178, %v7321, %v7322
      %v7324 = vrot.slane %v7206, 5
      %v7325 = vrot.slane %v7324, 4
      %v7326 = vrot.slane %v6543, 5
      %v7327 = vsel %vm1178, %v7325, %v7326
      %v7328 = vrot.slane %v7326, 4
      %v7329 = vrot.slane %v6544, 5
      %v7330 = vsel %vm1178, %v7328, %v7329
      %v7331 = vrot.slane %v7207, 5
      %v7332 = vrot.slane %v7331, 4
      %v7333 = vrot.slane %v6546, 5
      %v7334 = vsel %vm1178, %v7332, %v7333
      %v7335 = vrot.slane %v7333, 4
      %v7336 = vrot.slane %v6547, 5
      %v7337 = vsel %vm1178, %v7335, %v7336
      %v7338 = vrot.slane %v7208, 5
      %v7339 = vrot.slane %v7338, 4
      %v7340 = vrot.slane %v6549, 5
      %v7341 = vsel %vm1178, %v7339, %v7340
      %v7342 = vrot.slane %v7340, 4
      %v7343 = vrot.slane %v6550, 5
      %v7344 = vsel %vm1178, %v7342, %v7343
      %v7345 = vrot.slane %v7209, 5
      %v7346 = vrot.slane %v7345, 4
      %v7347 = vrot.slane %v6552, 5
      %v7348 = vsel %vm1178, %v7346, %v7347
      %v7349 = vrot.slane %v7347, 4
      %v7350 = vrot.slane %v6553, 5
      %v7351 = vsel %vm1178, %v7349, %v7350
      %v7352 = vrot.slane %v7210, 5
      %v7353 = vrot.slane %v7352, 4
      %v7354 = vrot.slane %v6555, 5
      %v7355 = vsel %vm1178, %v7353, %v7354
      %v7356 = vrot.slane %v7354, 4
      %v7357 = vrot.slane %v6556, 5
      %v7358 = vsel %vm1178, %v7356, %v7357
      %v7359 = vrot.slane %v7211, 5
      %v7360 = vrot.slane %v7359, 4
      %v7361 = vrot.slane %v6558, 5
      %v7362 = vsel %vm1178, %v7360, %v7361
      %v7363 = vrot.slane %v7361, 4
      %v7364 = vrot.slane %v6559, 5
      %v7365 = vsel %vm1178, %v7363, %v7364
      %v7366 = vrot.slane %v7212, 5
      %v7367 = vrot.slane %v7366, 4
      %v7368 = vrot.slane %v6561, 5
      %v7369 = vsel %vm1178, %v7367, %v7368
      %v7370 = vrot.slane %v7368, 4
      %v7371 = vrot.slane %v6562, 5
      %v7372 = vsel %vm1178, %v7370, %v7371
      %s7373 = scalar_lea.vmem %s2, 320
      %v7374 = vld [vmem:[%s7373] sm:$0xf]
      %v7375 = vld [vmem:[%s7373 + $0x4] sm:$0xf]
      %v7376 = vld [vmem:[%s7373 + $0x8] sm:$0xf]
      %v7377 = vld [vmem:[%s7373 + $0xc] sm:$0xf]
      %v7378 = vld [vmem:[%s7373 + $0x10] sm:$0xf]
      %v7379 = vld [vmem:[%s7373 + $0x14] sm:$0xf]
      %v7380 = vld [vmem:[%s7373 + $0x18] sm:$0xf]
      %v7381 = vld [vmem:[%s7373 + $0x1c] sm:$0xf]
      %v7382 = vld [vmem:[%s7373 + $0x20] sm:$0xf]
      %v7383 = vld [vmem:[%s7373 + $0x24] sm:$0xf]
      %v7384 = vld [vmem:[%s7373 + $0x28] sm:$0xf]
      %v7385 = vld [vmem:[%s7373 + $0x2c] sm:$0xf]
      %v7386 = vld [vmem:[%s7373 + $0x30] sm:$0xf]
      %v7387 = vld [vmem:[%s7373 + $0x34] sm:$0xf]
      %v7388 = vld [vmem:[%s7373 + $0x38] sm:$0xf]
      %v7389 = vld [vmem:[%s7373 + $0x3c] sm:$0xf]
      %v7390 = vunpack.c.l.b16 %v7264
      %v7391 = vunpack.c.l.b16 %v7267
      %v7392 = vunpack.c.l.b16 %v7271
      %v7393 = vunpack.c.l.b16 %v7274
      %v7394 = vunpack.c.l.b16 %v7278
      %v7395 = vunpack.c.l.b16 %v7281
      %v7396 = vunpack.c.l.b16 %v7285
      %v7397 = vunpack.c.l.b16 %v7288
      %v7398 = vunpack.c.l.b16 %v7292
      %v7399 = vunpack.c.l.b16 %v7295
      %v7400 = vunpack.c.l.b16 %v7299
      %v7401 = vunpack.c.l.b16 %v7302
      %v7402 = vunpack.c.l.b16 %v7306
      %v7403 = vunpack.c.l.b16 %v7309
      %v7404 = vunpack.c.l.b16 %v7313
      %v7405 = vunpack.c.l.b16 %v7316
      %v7406 = vunpack.c.l.b16 %v7320
      %v7407 = vunpack.c.l.b16 %v7323
      %v7408 = vunpack.c.l.b16 %v7327
      %v7409 = vunpack.c.l.b16 %v7330
      %v7410 = vunpack.c.l.b16 %v7334
      %v7411 = vunpack.c.l.b16 %v7337
      %v7412 = vunpack.c.l.b16 %v7341
      %v7413 = vunpack.c.l.b16 %v7344
      %v7414 = vunpack.c.l.b16 %v7348
      %v7415 = vunpack.c.l.b16 %v7351
      %v7416 = vunpack.c.l.b16 %v7355
      %v7417 = vunpack.c.l.b16 %v7358
      %v7418 = vunpack.c.l.b16 %v7362
      %v7419 = vunpack.c.l.b16 %v7365
      %v7420 = vunpack.c.l.b16 %v7369
      %v7421 = vunpack.c.l.b16 %v7372
      %v7422 = vpack.c.b16 %v7391, %v7390
      %v7423 = vpack.c.b16 %v7393, %v7392
      %v7424 = vpack.c.b16 %v7395, %v7394
      %v7425 = vpack.c.b16 %v7397, %v7396
      %v7426 = vpack.c.b16 %v7399, %v7398
      %v7427 = vpack.c.b16 %v7401, %v7400
      %v7428 = vpack.c.b16 %v7403, %v7402
      %v7429 = vpack.c.b16 %v7405, %v7404
      %v7430 = vpack.c.b16 %v7407, %v7406
      %v7431 = vpack.c.b16 %v7409, %v7408
      %v7432 = vpack.c.b16 %v7411, %v7410
      %v7433 = vpack.c.b16 %v7413, %v7412
      %v7434 = vpack.c.b16 %v7415, %v7414
      %v7435 = vpack.c.b16 %v7417, %v7416
      %v7436 = vpack.c.b16 %v7419, %v7418
      %v7437 = vpack.c.b16 %v7421, %v7420
      %v7470 = vunpack.c.l.b16 %v7374
      %v7471 = vunpack.c.l.b16 %v7375
      %v7472 = vunpack.c.l.b16 %v7376
      %v7473 = vunpack.c.l.b16 %v7377
      %v7474 = vunpack.c.l.b16 %v7378
      %v7475 = vunpack.c.l.b16 %v7379
      %v7476 = vunpack.c.l.b16 %v7380
      %v7477 = vunpack.c.l.b16 %v7381
      %v7478 = vunpack.c.l.b16 %v7382
      %v7479 = vunpack.c.l.b16 %v7383
      %v7480 = vunpack.c.l.b16 %v7384
      %v7481 = vunpack.c.l.b16 %v7385
      %v7482 = vunpack.c.l.b16 %v7386
      %v7483 = vunpack.c.l.b16 %v7387
      %v7484 = vunpack.c.l.b16 %v7388
      %v7485 = vunpack.c.l.b16 %v7389
      %v7486 = vpack.c.b16 %v7471, %v7470
      %v7487 = vpack.c.b16 %v7473, %v7472
      %v7488 = vpack.c.b16 %v7475, %v7474
      %v7489 = vpack.c.b16 %v7477, %v7476
      %v7490 = vpack.c.b16 %v7479, %v7478
      %v7491 = vpack.c.b16 %v7481, %v7480
      %v7492 = vpack.c.b16 %v7483, %v7482
      %v7493 = vpack.c.b16 %v7485, %v7484
      %7502 = vmatpush.bf16.msra.mxu0 %v7493
      %7503 = vmatpush.bf16.msra.mxu0 %v7492
      %7504 = vmatpush.bf16.msra.mxu0 %v7491
      %7505 = vmatpush.bf16.msra.mxu0 %v7490
      %7506 = vmatpush.bf16.msra.mxu0 %v7489
      %7507 = vmatpush.bf16.msra.mxu0 %v7488
      %7508 = vmatpush.bf16.msra.mxu0 %v7487
      %7509 = vmatpush.bf16.msra.mxu0 %v7486
      %7510 = vmatmul.bf16.gmra.mxu0 %v7422
      %v7511 = vpop.f32.mrf.mxu0
      %v7512 = vadd.f32 0.0, %v7511
      %v7513 = vpop.f32.mrf.mxu0
      %v7514 = vadd.f32 0.0, %v7513
      %7515 = vmatmul.bf16.gmra.mxu0 %v7423
      %v7516 = vpop.f32.mrf.mxu0
      %v7517 = vadd.f32 0.0, %v7516
      %v7518 = vpop.f32.mrf.mxu0
      %v7519 = vadd.f32 0.0, %v7518
      %7520 = vmatmul.bf16.gmra.mxu0 %v7424
      %v7521 = vpop.f32.mrf.mxu0
      %v7522 = vadd.f32 0.0, %v7521
      %v7523 = vpop.f32.mrf.mxu0
      %v7524 = vadd.f32 0.0, %v7523
      %7525 = vmatmul.bf16.gmra.mxu0 %v7425
      %v7526 = vpop.f32.mrf.mxu0
      %v7527 = vadd.f32 0.0, %v7526
      %v7528 = vpop.f32.mrf.mxu0
      %v7529 = vadd.f32 0.0, %v7528
      %7530 = vmatmul.bf16.gmra.mxu0 %v7426
      %v7531 = vpop.f32.mrf.mxu0
      %v7532 = vadd.f32 0.0, %v7531
      %v7533 = vpop.f32.mrf.mxu0
      %v7534 = vadd.f32 0.0, %v7533
      %7535 = vmatmul.bf16.gmra.mxu0 %v7427
      %v7536 = vpop.f32.mrf.mxu0
      %v7537 = vadd.f32 0.0, %v7536
      %v7538 = vpop.f32.mrf.mxu0
      %v7539 = vadd.f32 0.0, %v7538
      %7540 = vmatmul.bf16.gmra.mxu0 %v7428
      %v7541 = vpop.f32.mrf.mxu0
      %v7542 = vadd.f32 0.0, %v7541
      %v7543 = vpop.f32.mrf.mxu0
      %v7544 = vadd.f32 0.0, %v7543
      %7545 = vmatmul.bf16.gmra.mxu0 %v7429
      %v7546 = vpop.f32.mrf.mxu0
      %v7547 = vadd.f32 0.0, %v7546
      %v7548 = vpop.f32.mrf.mxu0
      %v7549 = vadd.f32 0.0, %v7548
      %7550 = vmatmul.bf16.gmra.mxu0 %v7430
      %v7551 = vpop.f32.mrf.mxu0
      %v7552 = vadd.f32 0.0, %v7551
      %v7553 = vpop.f32.mrf.mxu0
      %v7554 = vadd.f32 0.0, %v7553
      %7555 = vmatmul.bf16.gmra.mxu0 %v7431
      %v7556 = vpop.f32.mrf.mxu0
      %v7557 = vadd.f32 0.0, %v7556
      %v7558 = vpop.f32.mrf.mxu0
      %v7559 = vadd.f32 0.0, %v7558
      %7560 = vmatmul.bf16.gmra.mxu0 %v7432
      %v7561 = vpop.f32.mrf.mxu0
      %v7562 = vadd.f32 0.0, %v7561
      %v7563 = vpop.f32.mrf.mxu0
      %v7564 = vadd.f32 0.0, %v7563
      %7565 = vmatmul.bf16.gmra.mxu0 %v7433
      %v7566 = vpop.f32.mrf.mxu0
      %v7567 = vadd.f32 0.0, %v7566
      %v7568 = vpop.f32.mrf.mxu0
      %v7569 = vadd.f32 0.0, %v7568
      %7570 = vmatmul.bf16.gmra.mxu0 %v7434
      %v7571 = vpop.f32.mrf.mxu0
      %v7572 = vadd.f32 0.0, %v7571
      %v7573 = vpop.f32.mrf.mxu0
      %v7574 = vadd.f32 0.0, %v7573
      %7575 = vmatmul.bf16.gmra.mxu0 %v7435
      %v7576 = vpop.f32.mrf.mxu0
      %v7577 = vadd.f32 0.0, %v7576
      %v7578 = vpop.f32.mrf.mxu0
      %v7579 = vadd.f32 0.0, %v7578
      %7580 = vmatmul.bf16.gmra.mxu0 %v7436
      %v7581 = vpop.f32.mrf.mxu0
      %v7582 = vadd.f32 0.0, %v7581
      %v7583 = vpop.f32.mrf.mxu0
      %v7584 = vadd.f32 0.0, %v7583
      %7585 = vmatmul.bf16.gmra.mxu0 %v7437
      %v7586 = vpop.f32.mrf.mxu0
      %v7587 = vadd.f32 0.0, %v7586
      %v7588 = vpop.f32.mrf.mxu0
      %v7589 = vadd.f32 0.0, %v7588
      %7590 = vdwg.mxu0
      %v7591 = vadd.f32 %v7165, %v7512
      %v7592 = vadd.f32 %v7166, %v7514
      %v7593 = vadd.f32 %v7167, %v7517
      %v7594 = vadd.f32 %v7168, %v7519
      %v7595 = vadd.f32 %v7169, %v7522
      %v7596 = vadd.f32 %v7170, %v7524
      %v7597 = vadd.f32 %v7171, %v7527
      %v7598 = vadd.f32 %v7172, %v7529
      %v7599 = vadd.f32 %v7173, %v7532
      %v7600 = vadd.f32 %v7174, %v7534
      %v7601 = vadd.f32 %v7175, %v7537
      %v7602 = vadd.f32 %v7176, %v7539
      %v7603 = vadd.f32 %v7177, %v7542
      %v7604 = vadd.f32 %v7178, %v7544
      %v7605 = vadd.f32 %v7179, %v7547
      %v7606 = vadd.f32 %v7180, %v7549
      %v7607 = vadd.f32 %v7181, %v7552
      %v7608 = vadd.f32 %v7182, %v7554
      %v7609 = vadd.f32 %v7183, %v7557
      %v7610 = vadd.f32 %v7184, %v7559
      %v7611 = vadd.f32 %v7185, %v7562
      %v7612 = vadd.f32 %v7186, %v7564
      %v7613 = vadd.f32 %v7187, %v7567
      %v7614 = vadd.f32 %v7188, %v7569
      %v7615 = vadd.f32 %v7189, %v7572
      %v7616 = vadd.f32 %v7190, %v7574
      %v7617 = vadd.f32 %v7191, %v7577
      %v7618 = vadd.f32 %v7192, %v7579
      %v7619 = vadd.f32 %v7193, %v7582
      %v7620 = vadd.f32 %v7194, %v7584
      %v7621 = vadd.f32 %v7195, %v7587
      %v7622 = vadd.f32 %v7196, %v7589
      %s7623 = scalar_lea.vmem [#allocation2], 24
      %v7624 = vld [vmem:[%s7623] sm:$0xf]
      %v7625 = vld [vmem:[%s7623 + $0x4] sm:$0xf]
      %v7626 = vld [vmem:[%s7623 + $0xc] sm:$0xf]
      %v7627 = vld [vmem:[%s7623 + $0x10] sm:$0xf]
      %v7628 = vld [vmem:[%s7623 + $0x18] sm:$0xf]
      %v7629 = vld [vmem:[%s7623 + $0x1c] sm:$0xf]
      %v7630 = vld [vmem:[%s7623 + $0x24] sm:$0xf]
      %v7631 = vld [vmem:[%s7623 + $0x28] sm:$0xf]
      %v7632 = vld [vmem:[%s7623 + $0x30] sm:$0xf]
      %v7633 = vld [vmem:[%s7623 + $0x34] sm:$0xf]
      %v7634 = vld [vmem:[%s7623 + $0x3c] sm:$0xf]
      %v7635 = vld [vmem:[%s7623 + $0x40] sm:$0xf]
      %v7636 = vld [vmem:[%s7623 + $0x48] sm:$0xf]
      %v7637 = vld [vmem:[%s7623 + $0x4c] sm:$0xf]
      %v7638 = vld [vmem:[%s7623 + $0x54] sm:$0xf]
      %v7639 = vld [vmem:[%s7623 + $0x58] sm:$0xf]
      %v7640 = vld [vmem:[%s7623 + $0x60] sm:$0xf]
      %v7641 = vld [vmem:[%s7623 + $0x64] sm:$0xf]
      %v7642 = vld [vmem:[%s7623 + $0x6c] sm:$0xf]
      %v7643 = vld [vmem:[%s7623 + $0x70] sm:$0xf]
      %v7644 = vld [vmem:[%s7623 + $0x78] sm:$0xf]
      %v7645 = vld [vmem:[%s7623 + $0x7c] sm:$0xf]
      %v7646 = vld [vmem:[%s7623 + $0x84] sm:$0xf]
      %v7647 = vld [vmem:[%s7623 + $0x88] sm:$0xf]
      %v7648 = vld [vmem:[%s7623 + $0x90] sm:$0xf]
      %v7649 = vld [vmem:[%s7623 + $0x94] sm:$0xf]
      %v7650 = vld [vmem:[%s7623 + $0x9c] sm:$0xf]
      %v7651 = vld [vmem:[%s7623 + $0xa0] sm:$0xf]
      %v7652 = vld [vmem:[%s7623 + $0xa8] sm:$0xf]
      %v7653 = vld [vmem:[%s7623 + $0xac] sm:$0xf]
      %v7654 = vld [vmem:[%s7623 + $0xb4] sm:$0xf]
      %v7655 = vld [vmem:[%s7623 + $0xb8] sm:$0xf]
      %s7656 = scalar_lea.vmem %s2, 384
      %v7657 = vld [vmem:[%s7656] sm:$0xf]
      %v7658 = vld [vmem:[%s7656 + $0x4] sm:$0xf]
      %v7659 = vld [vmem:[%s7656 + $0x8] sm:$0xf]
      %v7660 = vld [vmem:[%s7656 + $0xc] sm:$0xf]
      %v7661 = vld [vmem:[%s7656 + $0x10] sm:$0xf]
      %v7662 = vld [vmem:[%s7656 + $0x14] sm:$0xf]
      %v7663 = vld [vmem:[%s7656 + $0x18] sm:$0xf]
      %v7664 = vld [vmem:[%s7656 + $0x1c] sm:$0xf]
      %v7665 = vld [vmem:[%s7656 + $0x20] sm:$0xf]
      %v7666 = vld [vmem:[%s7656 + $0x24] sm:$0xf]
      %v7667 = vld [vmem:[%s7656 + $0x28] sm:$0xf]
      %v7668 = vld [vmem:[%s7656 + $0x2c] sm:$0xf]
      %v7669 = vld [vmem:[%s7656 + $0x30] sm:$0xf]
      %v7670 = vld [vmem:[%s7656 + $0x34] sm:$0xf]
      %v7671 = vld [vmem:[%s7656 + $0x38] sm:$0xf]
      %v7672 = vld [vmem:[%s7656 + $0x3c] sm:$0xf]
      %v7705 = vunpack.c.l.b16 %v7624
      %v7706 = vunpack.c.l.b16 %v7625
      %v7707 = vunpack.c.l.b16 %v7626
      %v7708 = vunpack.c.l.b16 %v7627
      %v7709 = vunpack.c.l.b16 %v7628
      %v7710 = vunpack.c.l.b16 %v7629
      %v7711 = vunpack.c.l.b16 %v7630
      %v7712 = vunpack.c.l.b16 %v7631
      %v7713 = vunpack.c.l.b16 %v7632
      %v7714 = vunpack.c.l.b16 %v7633
      %v7715 = vunpack.c.l.b16 %v7634
      %v7716 = vunpack.c.l.b16 %v7635
      %v7717 = vunpack.c.l.b16 %v7636
      %v7718 = vunpack.c.l.b16 %v7637
      %v7719 = vunpack.c.l.b16 %v7638
      %v7720 = vunpack.c.l.b16 %v7639
      %v7721 = vunpack.c.l.b16 %v7640
      %v7722 = vunpack.c.l.b16 %v7641
      %v7723 = vunpack.c.l.b16 %v7642
      %v7724 = vunpack.c.l.b16 %v7643
      %v7725 = vunpack.c.l.b16 %v7644
      %v7726 = vunpack.c.l.b16 %v7645
      %v7727 = vunpack.c.l.b16 %v7646
      %v7728 = vunpack.c.l.b16 %v7647
      %v7729 = vunpack.c.l.b16 %v7648
      %v7730 = vunpack.c.l.b16 %v7649
      %v7731 = vunpack.c.l.b16 %v7650
      %v7732 = vunpack.c.l.b16 %v7651
      %v7733 = vunpack.c.l.b16 %v7652
      %v7734 = vunpack.c.l.b16 %v7653
      %v7735 = vunpack.c.l.b16 %v7654
      %v7736 = vunpack.c.l.b16 %v7655
      %v7737 = vpack.c.b16 %v7706, %v7705
      %v7738 = vpack.c.b16 %v7708, %v7707
      %v7739 = vpack.c.b16 %v7710, %v7709
      %v7740 = vpack.c.b16 %v7712, %v7711
      %v7741 = vpack.c.b16 %v7714, %v7713
      %v7742 = vpack.c.b16 %v7716, %v7715
      %v7743 = vpack.c.b16 %v7718, %v7717
      %v7744 = vpack.c.b16 %v7720, %v7719
      %v7745 = vpack.c.b16 %v7722, %v7721
      %v7746 = vpack.c.b16 %v7724, %v7723
      %v7747 = vpack.c.b16 %v7726, %v7725
      %v7748 = vpack.c.b16 %v7728, %v7727
      %v7749 = vpack.c.b16 %v7730, %v7729
      %v7750 = vpack.c.b16 %v7732, %v7731
      %v7751 = vpack.c.b16 %v7734, %v7733
      %v7752 = vpack.c.b16 %v7736, %v7735
      %v7785 = vunpack.c.l.b16 %v7657
      %v7786 = vunpack.c.l.b16 %v7658
      %v7787 = vunpack.c.l.b16 %v7659
      %v7788 = vunpack.c.l.b16 %v7660
      %v7789 = vunpack.c.l.b16 %v7661
      %v7790 = vunpack.c.l.b16 %v7662
      %v7791 = vunpack.c.l.b16 %v7663
      %v7792 = vunpack.c.l.b16 %v7664
      %v7793 = vunpack.c.l.b16 %v7665
      %v7794 = vunpack.c.l.b16 %v7666
      %v7795 = vunpack.c.l.b16 %v7667
      %v7796 = vunpack.c.l.b16 %v7668
      %v7797 = vunpack.c.l.b16 %v7669
      %v7798 = vunpack.c.l.b16 %v7670
      %v7799 = vunpack.c.l.b16 %v7671
      %v7800 = vunpack.c.l.b16 %v7672
      %v7801 = vpack.c.b16 %v7786, %v7785
      %v7802 = vpack.c.b16 %v7788, %v7787
      %v7803 = vpack.c.b16 %v7790, %v7789
      %v7804 = vpack.c.b16 %v7792, %v7791
      %v7805 = vpack.c.b16 %v7794, %v7793
      %v7806 = vpack.c.b16 %v7796, %v7795
      %v7807 = vpack.c.b16 %v7798, %v7797
      %v7808 = vpack.c.b16 %v7800, %v7799
      %7817 = vmatpush.bf16.msra.mxu0 %v7808
      %7818 = vmatpush.bf16.msra.mxu0 %v7807
      %7819 = vmatpush.bf16.msra.mxu0 %v7806
      %7820 = vmatpush.bf16.msra.mxu0 %v7805
      %7821 = vmatpush.bf16.msra.mxu0 %v7804
      %7822 = vmatpush.bf16.msra.mxu0 %v7803
      %7823 = vmatpush.bf16.msra.mxu0 %v7802
      %7824 = vmatpush.bf16.msra.mxu0 %v7801
      %7825 = vmatmul.bf16.gmra.mxu0 %v7737
      %v7826 = vpop.f32.mrf.mxu0
      %v7827 = vadd.f32 0.0, %v7826
      %v7828 = vpop.f32.mrf.mxu0
      %v7829 = vadd.f32 0.0, %v7828
      %7830 = vmatmul.bf16.gmra.mxu0 %v7738
      %v7831 = vpop.f32.mrf.mxu0
      %v7832 = vadd.f32 0.0, %v7831
      %v7833 = vpop.f32.mrf.mxu0
      %v7834 = vadd.f32 0.0, %v7833
      %7835 = vmatmul.bf16.gmra.mxu0 %v7739
      %v7836 = vpop.f32.mrf.mxu0
      %v7837 = vadd.f32 0.0, %v7836
      %v7838 = vpop.f32.mrf.mxu0
      %v7839 = vadd.f32 0.0, %v7838
      %7840 = vmatmul.bf16.gmra.mxu0 %v7740
      %v7841 = vpop.f32.mrf.mxu0
      %v7842 = vadd.f32 0.0, %v7841
      %v7843 = vpop.f32.mrf.mxu0
      %v7844 = vadd.f32 0.0, %v7843
      %7845 = vmatmul.bf16.gmra.mxu0 %v7741
      %v7846 = vpop.f32.mrf.mxu0
      %v7847 = vadd.f32 0.0, %v7846
      %v7848 = vpop.f32.mrf.mxu0
      %v7849 = vadd.f32 0.0, %v7848
      %7850 = vmatmul.bf16.gmra.mxu0 %v7742
      %v7851 = vpop.f32.mrf.mxu0
      %v7852 = vadd.f32 0.0, %v7851
      %v7853 = vpop.f32.mrf.mxu0
      %v7854 = vadd.f32 0.0, %v7853
      %7855 = vmatmul.bf16.gmra.mxu0 %v7743
      %v7856 = vpop.f32.mrf.mxu0
      %v7857 = vadd.f32 0.0, %v7856
      %v7858 = vpop.f32.mrf.mxu0
      %v7859 = vadd.f32 0.0, %v7858
      %7860 = vmatmul.bf16.gmra.mxu0 %v7744
      %v7861 = vpop.f32.mrf.mxu0
      %v7862 = vadd.f32 0.0, %v7861
      %v7863 = vpop.f32.mrf.mxu0
      %v7864 = vadd.f32 0.0, %v7863
      %7865 = vmatmul.bf16.gmra.mxu0 %v7745
      %v7866 = vpop.f32.mrf.mxu0
      %v7867 = vadd.f32 0.0, %v7866
      %v7868 = vpop.f32.mrf.mxu0
      %v7869 = vadd.f32 0.0, %v7868
      %7870 = vmatmul.bf16.gmra.mxu0 %v7746
      %v7871 = vpop.f32.mrf.mxu0
      %v7872 = vadd.f32 0.0, %v7871
      %v7873 = vpop.f32.mrf.mxu0
      %v7874 = vadd.f32 0.0, %v7873
      %7875 = vmatmul.bf16.gmra.mxu0 %v7747
      %v7876 = vpop.f32.mrf.mxu0
      %v7877 = vadd.f32 0.0, %v7876
      %v7878 = vpop.f32.mrf.mxu0
      %v7879 = vadd.f32 0.0, %v7878
      %7880 = vmatmul.bf16.gmra.mxu0 %v7748
      %v7881 = vpop.f32.mrf.mxu0
      %v7882 = vadd.f32 0.0, %v7881
      %v7883 = vpop.f32.mrf.mxu0
      %v7884 = vadd.f32 0.0, %v7883
      %7885 = vmatmul.bf16.gmra.mxu0 %v7749
      %v7886 = vpop.f32.mrf.mxu0
      %v7887 = vadd.f32 0.0, %v7886
      %v7888 = vpop.f32.mrf.mxu0
      %v7889 = vadd.f32 0.0, %v7888
      %7890 = vmatmul.bf16.gmra.mxu0 %v7750
      %v7891 = vpop.f32.mrf.mxu0
      %v7892 = vadd.f32 0.0, %v7891
      %v7893 = vpop.f32.mrf.mxu0
      %v7894 = vadd.f32 0.0, %v7893
      %7895 = vmatmul.bf16.gmra.mxu0 %v7751
      %v7896 = vpop.f32.mrf.mxu0
      %v7897 = vadd.f32 0.0, %v7896
      %v7898 = vpop.f32.mrf.mxu0
      %v7899 = vadd.f32 0.0, %v7898
      %7900 = vmatmul.bf16.gmra.mxu0 %v7752
      %v7901 = vpop.f32.mrf.mxu0
      %v7902 = vadd.f32 0.0, %v7901
      %v7903 = vpop.f32.mrf.mxu0
      %v7904 = vadd.f32 0.0, %v7903
      %7905 = vdwg.mxu0
      %v7906 = vadd.f32 %v7591, %v7827
      %v7907 = vadd.f32 %v7592, %v7829
      %v7908 = vadd.f32 %v7593, %v7832
      %v7909 = vadd.f32 %v7594, %v7834
      %v7910 = vadd.f32 %v7595, %v7837
      %v7911 = vadd.f32 %v7596, %v7839
      %v7912 = vadd.f32 %v7597, %v7842
      %v7913 = vadd.f32 %v7598, %v7844
      %v7914 = vadd.f32 %v7599, %v7847
      %v7915 = vadd.f32 %v7600, %v7849
      %v7916 = vadd.f32 %v7601, %v7852
      %v7917 = vadd.f32 %v7602, %v7854
      %v7918 = vadd.f32 %v7603, %v7857
      %v7919 = vadd.f32 %v7604, %v7859
      %v7920 = vadd.f32 %v7605, %v7862
      %v7921 = vadd.f32 %v7606, %v7864
      %v7922 = vadd.f32 %v7607, %v7867
      %v7923 = vadd.f32 %v7608, %v7869
      %v7924 = vadd.f32 %v7609, %v7872
      %v7925 = vadd.f32 %v7610, %v7874
      %v7926 = vadd.f32 %v7611, %v7877
      %v7927 = vadd.f32 %v7612, %v7879
      %v7928 = vadd.f32 %v7613, %v7882
      %v7929 = vadd.f32 %v7614, %v7884
      %v7930 = vadd.f32 %v7615, %v7887
      %v7931 = vadd.f32 %v7616, %v7889
      %v7932 = vadd.f32 %v7617, %v7892
      %v7933 = vadd.f32 %v7618, %v7894
      %v7934 = vadd.f32 %v7619, %v7897
      %v7935 = vadd.f32 %v7620, %v7899
      %v7936 = vadd.f32 %v7621, %v7902
      %v7937 = vadd.f32 %v7622, %v7904
      %v7938 = vld [vmem:[%s7623] sm:$0xf]
      %v7939 = vld [vmem:[%s7623 + $0x4] sm:$0xf]
      %v7940 = vld [vmem:[%s7623 + $0x8] sm:$0x1]
      %v7941 = vld [vmem:[%s7623 + $0xc] sm:$0xf]
      %v7942 = vld [vmem:[%s7623 + $0x10] sm:$0xf]
      %v7943 = vld [vmem:[%s7623 + $0x14] sm:$0x1]
      %v7944 = vld [vmem:[%s7623 + $0x18] sm:$0xf]
      %v7945 = vld [vmem:[%s7623 + $0x1c] sm:$0xf]
      %v7946 = vld [vmem:[%s7623 + $0x20] sm:$0x1]
      %v7947 = vld [vmem:[%s7623 + $0x24] sm:$0xf]
      %v7948 = vld [vmem:[%s7623 + $0x28] sm:$0xf]
      %v7949 = vld [vmem:[%s7623 + $0x2c] sm:$0x1]
      %v7950 = vld [vmem:[%s7623 + $0x30] sm:$0xf]
      %v7951 = vld [vmem:[%s7623 + $0x34] sm:$0xf]
      %v7952 = vld [vmem:[%s7623 + $0x38] sm:$0x1]
      %v7953 = vld [vmem:[%s7623 + $0x3c] sm:$0xf]
      %v7954 = vld [vmem:[%s7623 + $0x40] sm:$0xf]
      %v7955 = vld [vmem:[%s7623 + $0x44] sm:$0x1]
      %v7956 = vld [vmem:[%s7623 + $0x48] sm:$0xf]
      %v7957 = vld [vmem:[%s7623 + $0x4c] sm:$0xf]
      %v7958 = vld [vmem:[%s7623 + $0x50] sm:$0x1]
      %v7959 = vld [vmem:[%s7623 + $0x54] sm:$0xf]
      %v7960 = vld [vmem:[%s7623 + $0x58] sm:$0xf]
      %v7961 = vld [vmem:[%s7623 + $0x5c] sm:$0x1]
      %v7962 = vld [vmem:[%s7623 + $0x60] sm:$0xf]
      %v7963 = vld [vmem:[%s7623 + $0x64] sm:$0xf]
      %v7964 = vld [vmem:[%s7623 + $0x68] sm:$0x1]
      %v7965 = vld [vmem:[%s7623 + $0x6c] sm:$0xf]
      %v7966 = vld [vmem:[%s7623 + $0x70] sm:$0xf]
      %v7967 = vld [vmem:[%s7623 + $0x74] sm:$0x1]
      %v7968 = vld [vmem:[%s7623 + $0x78] sm:$0xf]
      %v7969 = vld [vmem:[%s7623 + $0x7c] sm:$0xf]
      %v7970 = vld [vmem:[%s7623 + $0x80] sm:$0x1]
      %v7971 = vld [vmem:[%s7623 + $0x84] sm:$0xf]
      %v7972 = vld [vmem:[%s7623 + $0x88] sm:$0xf]
      %v7973 = vld [vmem:[%s7623 + $0x8c] sm:$0x1]
      %v7974 = vld [vmem:[%s7623 + $0x90] sm:$0xf]
      %v7975 = vld [vmem:[%s7623 + $0x94] sm:$0xf]
      %v7976 = vld [vmem:[%s7623 + $0x98] sm:$0x1]
      %v7977 = vld [vmem:[%s7623 + $0x9c] sm:$0xf]
      %v7978 = vld [vmem:[%s7623 + $0xa0] sm:$0xf]
      %v7979 = vld [vmem:[%s7623 + $0xa4] sm:$0x1]
      %v7980 = vld [vmem:[%s7623 + $0xa8] sm:$0xf]
      %v7981 = vld [vmem:[%s7623 + $0xac] sm:$0xf]
      %v7982 = vld [vmem:[%s7623 + $0xb0] sm:$0x1]
      %v7983 = vld [vmem:[%s7623 + $0xb4] sm:$0xf]
      %v7984 = vld [vmem:[%s7623 + $0xb8] sm:$0xf]
      %v7985 = vld [vmem:[%s7623 + $0xbc] sm:$0x1]
      %v7987 = vshrl.u32 %v7938, 16
      %v7989 = vrot.slane %v7987, 4
      %v7990 = vshll.u32 %v7938, 16
      %v7992 = vrot.slane %v7990, 5
      %v7993 = vor.u32 %v7989, %v7992
      %v7994 = vrot.slane %v7993, 4
      %v7996 = vshll.u32 %v7939, 16
      %v7998 = vrot.slane %v7996, 5
      %v7999 = vsel %vm292, %v7994, %v7998
      %v8000 = vshrl.u32 %v7939, 16
      %v8002 = vrot.slane %v8000, 4
      %v8003 = vor.u32 %v8002, %v7998
      %v8004 = vrot.slane %v8003, 4
      %v8006 = vshll.u32 %v7940, 16
      %v8008 = vrot.slane %v8006, 5
      %v8009 = vsel %vm292, %v8004, %v8008
      %v8011 = vshrl.u32 %v7941, 16
      %v8013 = vrot.slane %v8011, 4
      %v8014 = vshll.u32 %v7941, 16
      %v8016 = vrot.slane %v8014, 5
      %v8017 = vor.u32 %v8013, %v8016
      %v8018 = vrot.slane %v8017, 4
      %v8020 = vshll.u32 %v7942, 16
      %v8022 = vrot.slane %v8020, 5
      %v8023 = vsel %vm292, %v8018, %v8022
      %v8024 = vshrl.u32 %v7942, 16
      %v8026 = vrot.slane %v8024, 4
      %v8027 = vor.u32 %v8026, %v8022
      %v8028 = vrot.slane %v8027, 4
      %v8030 = vshll.u32 %v7943, 16
      %v8032 = vrot.slane %v8030, 5
      %v8033 = vsel %vm292, %v8028, %v8032
      %v8035 = vshrl.u32 %v7944, 16
      %v8037 = vrot.slane %v8035, 4
      %v8038 = vshll.u32 %v7944, 16
      %v8040 = vrot.slane %v8038, 5
      %v8041 = vor.u32 %v8037, %v8040
      %v8042 = vrot.slane %v8041, 4
      %v8044 = vshll.u32 %v7945, 16
      %v8046 = vrot.slane %v8044, 5
      %v8047 = vsel %vm292, %v8042, %v8046
      %v8048 = vshrl.u32 %v7945, 16
      %v8050 = vrot.slane %v8048, 4
      %v8051 = vor.u32 %v8050, %v8046
      %v8052 = vrot.slane %v8051, 4
      %v8054 = vshll.u32 %v7946, 16
      %v8056 = vrot.slane %v8054, 5
      %v8057 = vsel %vm292, %v8052, %v8056
      %v8059 = vshrl.u32 %v7947, 16
      %v8061 = vrot.slane %v8059, 4
      %v8062 = vshll.u32 %v7947, 16
      %v8064 = vrot.slane %v8062, 5
      %v8065 = vor.u32 %v8061, %v8064
      %v8066 = vrot.slane %v8065, 4
      %v8068 = vshll.u32 %v7948, 16
      %v8070 = vrot.slane %v8068, 5
      %v8071 = vsel %vm292, %v8066, %v8070
      %v8072 = vshrl.u32 %v7948, 16
      %v8074 = vrot.slane %v8072, 4
      %v8075 = vor.u32 %v8074, %v8070
      %v8076 = vrot.slane %v8075, 4
      %v8078 = vshll.u32 %v7949, 16
      %v8080 = vrot.slane %v8078, 5
      %v8081 = vsel %vm292, %v8076, %v8080
      %v8083 = vshrl.u32 %v7950, 16
      %v8085 = vrot.slane %v8083, 4
      %v8086 = vshll.u32 %v7950, 16
      %v8088 = vrot.slane %v8086, 5
      %v8089 = vor.u32 %v8085, %v8088
      %v8090 = vrot.slane %v8089, 4
      %v8092 = vshll.u32 %v7951, 16
      %v8094 = vrot.slane %v8092, 5
      %v8095 = vsel %vm292, %v8090, %v8094
      %v8096 = vshrl.u32 %v7951, 16
      %v8098 = vrot.slane %v8096, 4
      %v8099 = vor.u32 %v8098, %v8094
      %v8100 = vrot.slane %v8099, 4
      %v8102 = vshll.u32 %v7952, 16
      %v8104 = vrot.slane %v8102, 5
      %v8105 = vsel %vm292, %v8100, %v8104
      %v8107 = vshrl.u32 %v7953, 16
      %v8109 = vrot.slane %v8107, 4
      %v8110 = vshll.u32 %v7953, 16
      %v8112 = vrot.slane %v8110, 5
      %v8113 = vor.u32 %v8109, %v8112
      %v8114 = vrot.slane %v8113, 4
      %v8116 = vshll.u32 %v7954, 16
      %v8118 = vrot.slane %v8116, 5
      %v8119 = vsel %vm292, %v8114, %v8118
      %v8120 = vshrl.u32 %v7954, 16
      %v8122 = vrot.slane %v8120, 4
      %v8123 = vor.u32 %v8122, %v8118
      %v8124 = vrot.slane %v8123, 4
      %v8126 = vshll.u32 %v7955, 16
      %v8128 = vrot.slane %v8126, 5
      %v8129 = vsel %vm292, %v8124, %v8128
      %v8131 = vshrl.u32 %v7956, 16
      %v8133 = vrot.slane %v8131, 4
      %v8134 = vshll.u32 %v7956, 16
      %v8136 = vrot.slane %v8134, 5
      %v8137 = vor.u32 %v8133, %v8136
      %v8138 = vrot.slane %v8137, 4
      %v8140 = vshll.u32 %v7957, 16
      %v8142 = vrot.slane %v8140, 5
      %v8143 = vsel %vm292, %v8138, %v8142
      %v8144 = vshrl.u32 %v7957, 16
      %v8146 = vrot.slane %v8144, 4
      %v8147 = vor.u32 %v8146, %v8142
      %v8148 = vrot.slane %v8147, 4
      %v8150 = vshll.u32 %v7958, 16
      %v8152 = vrot.slane %v8150, 5
      %v8153 = vsel %vm292, %v8148, %v8152
      %v8155 = vshrl.u32 %v7959, 16
      %v8157 = vrot.slane %v8155, 4
      %v8158 = vshll.u32 %v7959, 16
      %v8160 = vrot.slane %v8158, 5
      %v8161 = vor.u32 %v8157, %v8160
      %v8162 = vrot.slane %v8161, 4
      %v8164 = vshll.u32 %v7960, 16
      %v8166 = vrot.slane %v8164, 5
      %v8167 = vsel %vm292, %v8162, %v8166
      %v8168 = vshrl.u32 %v7960, 16
      %v8170 = vrot.slane %v8168, 4
      %v8171 = vor.u32 %v8170, %v8166
      %v8172 = vrot.slane %v8171, 4
      %v8174 = vshll.u32 %v7961, 16
      %v8176 = vrot.slane %v8174, 5
      %v8177 = vsel %vm292, %v8172, %v8176
      %v8179 = vshrl.u32 %v7962, 16
      %v8181 = vrot.slane %v8179, 4
      %v8182 = vshll.u32 %v7962, 16
      %v8184 = vrot.slane %v8182, 5
      %v8185 = vor.u32 %v8181, %v8184
      %v8186 = vrot.slane %v8185, 4
      %v8188 = vshll.u32 %v7963, 16
      %v8190 = vrot.slane %v8188, 5
      %v8191 = vsel %vm292, %v8186, %v8190
      %v8192 = vshrl.u32 %v7963, 16
      %v8194 = vrot.slane %v8192, 4
      %v8195 = vor.u32 %v8194, %v8190
      %v8196 = vrot.slane %v8195, 4
      %v8198 = vshll.u32 %v7964, 16
      %v8200 = vrot.slane %v8198, 5
      %v8201 = vsel %vm292, %v8196, %v8200
      %v8203 = vshrl.u32 %v7965, 16
      %v8205 = vrot.slane %v8203, 4
      %v8206 = vshll.u32 %v7965, 16
      %v8208 = vrot.slane %v8206, 5
      %v8209 = vor.u32 %v8205, %v8208
      %v8210 = vrot.slane %v8209, 4
      %v8212 = vshll.u32 %v7966, 16
      %v8214 = vrot.slane %v8212, 5
      %v8215 = vsel %vm292, %v8210, %v8214
      %v8216 = vshrl.u32 %v7966, 16
      %v8218 = vrot.slane %v8216, 4
      %v8219 = vor.u32 %v8218, %v8214
      %v8220 = vrot.slane %v8219, 4
      %v8222 = vshll.u32 %v7967, 16
      %v8224 = vrot.slane %v8222, 5
      %v8225 = vsel %vm292, %v8220, %v8224
      %v8227 = vshrl.u32 %v7968, 16
      %v8229 = vrot.slane %v8227, 4
      %v8230 = vshll.u32 %v7968, 16
      %v8232 = vrot.slane %v8230, 5
      %v8233 = vor.u32 %v8229, %v8232
      %v8234 = vrot.slane %v8233, 4
      %v8236 = vshll.u32 %v7969, 16
      %v8238 = vrot.slane %v8236, 5
      %v8239 = vsel %vm292, %v8234, %v8238
      %v8240 = vshrl.u32 %v7969, 16
      %v8242 = vrot.slane %v8240, 4
      %v8243 = vor.u32 %v8242, %v8238
      %v8244 = vrot.slane %v8243, 4
      %v8246 = vshll.u32 %v7970, 16
      %v8248 = vrot.slane %v8246, 5
      %v8249 = vsel %vm292, %v8244, %v8248
      %v8251 = vshrl.u32 %v7971, 16
      %v8253 = vrot.slane %v8251, 4
      %v8254 = vshll.u32 %v7971, 16
      %v8256 = vrot.slane %v8254, 5
      %v8257 = vor.u32 %v8253, %v8256
      %v8258 = vrot.slane %v8257, 4
      %v8260 = vshll.u32 %v7972, 16
      %v8262 = vrot.slane %v8260, 5
      %v8263 = vsel %vm292, %v8258, %v8262
      %v8264 = vshrl.u32 %v7972, 16
      %v8266 = vrot.slane %v8264, 4
      %v8267 = vor.u32 %v8266, %v8262
      %v8268 = vrot.slane %v8267, 4
      %v8270 = vshll.u32 %v7973, 16
      %v8272 = vrot.slane %v8270, 5
      %v8273 = vsel %vm292, %v8268, %v8272
      %v8275 = vshrl.u32 %v7974, 16
      %v8277 = vrot.slane %v8275, 4
      %v8278 = vshll.u32 %v7974, 16
      %v8280 = vrot.slane %v8278, 5
      %v8281 = vor.u32 %v8277, %v8280
      %v8282 = vrot.slane %v8281, 4
      %v8284 = vshll.u32 %v7975, 16
      %v8286 = vrot.slane %v8284, 5
      %v8287 = vsel %vm292, %v8282, %v8286
      %v8288 = vshrl.u32 %v7975, 16
      %v8290 = vrot.slane %v8288, 4
      %v8291 = vor.u32 %v8290, %v8286
      %v8292 = vrot.slane %v8291, 4
      %v8294 = vshll.u32 %v7976, 16
      %v8296 = vrot.slane %v8294, 5
      %v8297 = vsel %vm292, %v8292, %v8296
      %v8299 = vshrl.u32 %v7977, 16
      %v8301 = vrot.slane %v8299, 4
      %v8302 = vshll.u32 %v7977, 16
      %v8304 = vrot.slane %v8302, 5
      %v8305 = vor.u32 %v8301, %v8304
      %v8306 = vrot.slane %v8305, 4
      %v8308 = vshll.u32 %v7978, 16
      %v8310 = vrot.slane %v8308, 5
      %v8311 = vsel %vm292, %v8306, %v8310
      %v8312 = vshrl.u32 %v7978, 16
      %v8314 = vrot.slane %v8312, 4
      %v8315 = vor.u32 %v8314, %v8310
      %v8316 = vrot.slane %v8315, 4
      %v8318 = vshll.u32 %v7979, 16
      %v8320 = vrot.slane %v8318, 5
      %v8321 = vsel %vm292, %v8316, %v8320
      %v8323 = vshrl.u32 %v7980, 16
      %v8325 = vrot.slane %v8323, 4
      %v8326 = vshll.u32 %v7980, 16
      %v8328 = vrot.slane %v8326, 5
      %v8329 = vor.u32 %v8325, %v8328
      %v8330 = vrot.slane %v8329, 4
      %v8332 = vshll.u32 %v7981, 16
      %v8334 = vrot.slane %v8332, 5
      %v8335 = vsel %vm292, %v8330, %v8334
      %v8336 = vshrl.u32 %v7981, 16
      %v8338 = vrot.slane %v8336, 4
      %v8339 = vor.u32 %v8338, %v8334
      %v8340 = vrot.slane %v8339, 4
      %v8342 = vshll.u32 %v7982, 16
      %v8344 = vrot.slane %v8342, 5
      %v8345 = vsel %vm292, %v8340, %v8344
      %v8347 = vshrl.u32 %v7983, 16
      %v8349 = vrot.slane %v8347, 4
      %v8350 = vshll.u32 %v7983, 16
      %v8352 = vrot.slane %v8350, 5
      %v8353 = vor.u32 %v8349, %v8352
      %v8354 = vrot.slane %v8353, 4
      %v8356 = vshll.u32 %v7984, 16
      %v8358 = vrot.slane %v8356, 5
      %v8359 = vsel %vm292, %v8354, %v8358
      %v8360 = vshrl.u32 %v7984, 16
      %v8362 = vrot.slane %v8360, 4
      %v8363 = vor.u32 %v8362, %v8358
      %v8364 = vrot.slane %v8363, 4
      %v8366 = vshll.u32 %v7985, 16
      %v8368 = vrot.slane %v8366, 5
      %v8369 = vsel %vm292, %v8364, %v8368
      %s8370 = scalar_lea.vmem %s2, 448
      %v8371 = vld [vmem:[%s8370] sm:$0xf]
      %v8372 = vld [vmem:[%s8370 + $0x4] sm:$0xf]
      %v8373 = vld [vmem:[%s8370 + $0x8] sm:$0xf]
      %v8374 = vld [vmem:[%s8370 + $0xc] sm:$0xf]
      %v8375 = vld [vmem:[%s8370 + $0x10] sm:$0xf]
      %v8376 = vld [vmem:[%s8370 + $0x14] sm:$0xf]
      %v8377 = vld [vmem:[%s8370 + $0x18] sm:$0xf]
      %v8378 = vld [vmem:[%s8370 + $0x1c] sm:$0xf]
      %v8379 = vld [vmem:[%s8370 + $0x20] sm:$0xf]
      %v8380 = vld [vmem:[%s8370 + $0x24] sm:$0xf]
      %v8381 = vld [vmem:[%s8370 + $0x28] sm:$0xf]
      %v8382 = vld [vmem:[%s8370 + $0x2c] sm:$0xf]
      %v8383 = vld [vmem:[%s8370 + $0x30] sm:$0xf]
      %v8384 = vld [vmem:[%s8370 + $0x34] sm:$0xf]
      %v8385 = vld [vmem:[%s8370 + $0x38] sm:$0xf]
      %v8386 = vld [vmem:[%s8370 + $0x3c] sm:$0xf]
      %v8387 = vunpack.c.l.b16 %v7999
      %v8388 = vunpack.c.l.b16 %v8009
      %v8389 = vunpack.c.l.b16 %v8023
      %v8390 = vunpack.c.l.b16 %v8033
      %v8391 = vunpack.c.l.b16 %v8047
      %v8392 = vunpack.c.l.b16 %v8057
      %v8393 = vunpack.c.l.b16 %v8071
      %v8394 = vunpack.c.l.b16 %v8081
      %v8395 = vunpack.c.l.b16 %v8095
      %v8396 = vunpack.c.l.b16 %v8105
      %v8397 = vunpack.c.l.b16 %v8119
      %v8398 = vunpack.c.l.b16 %v8129
      %v8399 = vunpack.c.l.b16 %v8143
      %v8400 = vunpack.c.l.b16 %v8153
      %v8401 = vunpack.c.l.b16 %v8167
      %v8402 = vunpack.c.l.b16 %v8177
      %v8403 = vunpack.c.l.b16 %v8191
      %v8404 = vunpack.c.l.b16 %v8201
      %v8405 = vunpack.c.l.b16 %v8215
      %v8406 = vunpack.c.l.b16 %v8225
      %v8407 = vunpack.c.l.b16 %v8239
      %v8408 = vunpack.c.l.b16 %v8249
      %v8409 = vunpack.c.l.b16 %v8263
      %v8410 = vunpack.c.l.b16 %v8273
      %v8411 = vunpack.c.l.b16 %v8287
      %v8412 = vunpack.c.l.b16 %v8297
      %v8413 = vunpack.c.l.b16 %v8311
      %v8414 = vunpack.c.l.b16 %v8321
      %v8415 = vunpack.c.l.b16 %v8335
      %v8416 = vunpack.c.l.b16 %v8345
      %v8417 = vunpack.c.l.b16 %v8359
      %v8418 = vunpack.c.l.b16 %v8369
      %v8419 = vpack.c.b16 %v8388, %v8387
      %v8420 = vpack.c.b16 %v8390, %v8389
      %v8421 = vpack.c.b16 %v8392, %v8391
      %v8422 = vpack.c.b16 %v8394, %v8393
      %v8423 = vpack.c.b16 %v8396, %v8395
      %v8424 = vpack.c.b16 %v8398, %v8397
      %v8425 = vpack.c.b16 %v8400, %v8399
      %v8426 = vpack.c.b16 %v8402, %v8401
      %v8427 = vpack.c.b16 %v8404, %v8403
      %v8428 = vpack.c.b16 %v8406, %v8405
      %v8429 = vpack.c.b16 %v8408, %v8407
      %v8430 = vpack.c.b16 %v8410, %v8409
      %v8431 = vpack.c.b16 %v8412, %v8411
      %v8432 = vpack.c.b16 %v8414, %v8413
      %v8433 = vpack.c.b16 %v8416, %v8415
      %v8434 = vpack.c.b16 %v8418, %v8417
      %v8467 = vunpack.c.l.b16 %v8371
      %v8468 = vunpack.c.l.b16 %v8372
      %v8469 = vunpack.c.l.b16 %v8373
      %v8470 = vunpack.c.l.b16 %v8374
      %v8471 = vunpack.c.l.b16 %v8375
      %v8472 = vunpack.c.l.b16 %v8376
      %v8473 = vunpack.c.l.b16 %v8377
      %v8474 = vunpack.c.l.b16 %v8378
      %v8475 = vunpack.c.l.b16 %v8379
      %v8476 = vunpack.c.l.b16 %v8380
      %v8477 = vunpack.c.l.b16 %v8381
      %v8478 = vunpack.c.l.b16 %v8382
      %v8479 = vunpack.c.l.b16 %v8383
      %v8480 = vunpack.c.l.b16 %v8384
      %v8481 = vunpack.c.l.b16 %v8385
      %v8482 = vunpack.c.l.b16 %v8386
      %v8483 = vpack.c.b16 %v8468, %v8467
      %v8484 = vpack.c.b16 %v8470, %v8469
      %v8485 = vpack.c.b16 %v8472, %v8471
      %v8486 = vpack.c.b16 %v8474, %v8473
      %v8487 = vpack.c.b16 %v8476, %v8475
      %v8488 = vpack.c.b16 %v8478, %v8477
      %v8489 = vpack.c.b16 %v8480, %v8479
      %v8490 = vpack.c.b16 %v8482, %v8481
      %8499 = vmatpush.bf16.msra.mxu0 %v8490
      %8500 = vmatpush.bf16.msra.mxu0 %v8489
      %8501 = vmatpush.bf16.msra.mxu0 %v8488
      %8502 = vmatpush.bf16.msra.mxu0 %v8487
      %8503 = vmatpush.bf16.msra.mxu0 %v8486
      %8504 = vmatpush.bf16.msra.mxu0 %v8485
      %8505 = vmatpush.bf16.msra.mxu0 %v8484
      %8506 = vmatpush.bf16.msra.mxu0 %v8483
      %8507 = vmatmul.bf16.gmra.mxu0 %v8419
      %v8508 = vpop.f32.mrf.mxu0
      %v8509 = vadd.f32 0.0, %v8508
      %v8510 = vpop.f32.mrf.mxu0
      %v8511 = vadd.f32 0.0, %v8510
      %8512 = vmatmul.bf16.gmra.mxu0 %v8420
      %v8513 = vpop.f32.mrf.mxu0
      %v8514 = vadd.f32 0.0, %v8513
      %v8515 = vpop.f32.mrf.mxu0
      %v8516 = vadd.f32 0.0, %v8515
      %8517 = vmatmul.bf16.gmra.mxu0 %v8421
      %v8518 = vpop.f32.mrf.mxu0
      %v8519 = vadd.f32 0.0, %v8518
      %v8520 = vpop.f32.mrf.mxu0
      %v8521 = vadd.f32 0.0, %v8520
      %8522 = vmatmul.bf16.gmra.mxu0 %v8422
      %v8523 = vpop.f32.mrf.mxu0
      %v8524 = vadd.f32 0.0, %v8523
      %v8525 = vpop.f32.mrf.mxu0
      %v8526 = vadd.f32 0.0, %v8525
      %8527 = vmatmul.bf16.gmra.mxu0 %v8423
      %v8528 = vpop.f32.mrf.mxu0
      %v8529 = vadd.f32 0.0, %v8528
      %v8530 = vpop.f32.mrf.mxu0
      %v8531 = vadd.f32 0.0, %v8530
      %8532 = vmatmul.bf16.gmra.mxu0 %v8424
      %v8533 = vpop.f32.mrf.mxu0
      %v8534 = vadd.f32 0.0, %v8533
      %v8535 = vpop.f32.mrf.mxu0
      %v8536 = vadd.f32 0.0, %v8535
      %8537 = vmatmul.bf16.gmra.mxu0 %v8425
      %v8538 = vpop.f32.mrf.mxu0
      %v8539 = vadd.f32 0.0, %v8538
      %v8540 = vpop.f32.mrf.mxu0
      %v8541 = vadd.f32 0.0, %v8540
      %8542 = vmatmul.bf16.gmra.mxu0 %v8426
      %v8543 = vpop.f32.mrf.mxu0
      %v8544 = vadd.f32 0.0, %v8543
      %v8545 = vpop.f32.mrf.mxu0
      %v8546 = vadd.f32 0.0, %v8545
      %8547 = vmatmul.bf16.gmra.mxu0 %v8427
      %v8548 = vpop.f32.mrf.mxu0
      %v8549 = vadd.f32 0.0, %v8548
      %v8550 = vpop.f32.mrf.mxu0
      %v8551 = vadd.f32 0.0, %v8550
      %8552 = vmatmul.bf16.gmra.mxu0 %v8428
      %v8553 = vpop.f32.mrf.mxu0
      %v8554 = vadd.f32 0.0, %v8553
      %v8555 = vpop.f32.mrf.mxu0
      %v8556 = vadd.f32 0.0, %v8555
      %8557 = vmatmul.bf16.gmra.mxu0 %v8429
      %v8558 = vpop.f32.mrf.mxu0
      %v8559 = vadd.f32 0.0, %v8558
      %v8560 = vpop.f32.mrf.mxu0
      %v8561 = vadd.f32 0.0, %v8560
      %8562 = vmatmul.bf16.gmra.mxu0 %v8430
      %v8563 = vpop.f32.mrf.mxu0
      %v8564 = vadd.f32 0.0, %v8563
      %v8565 = vpop.f32.mrf.mxu0
      %v8566 = vadd.f32 0.0, %v8565
      %8567 = vmatmul.bf16.gmra.mxu0 %v8431
      %v8568 = vpop.f32.mrf.mxu0
      %v8569 = vadd.f32 0.0, %v8568
      %v8570 = vpop.f32.mrf.mxu0
      %v8571 = vadd.f32 0.0, %v8570
      %8572 = vmatmul.bf16.gmra.mxu0 %v8432
      %v8573 = vpop.f32.mrf.mxu0
      %v8574 = vadd.f32 0.0, %v8573
      %v8575 = vpop.f32.mrf.mxu0
      %v8576 = vadd.f32 0.0, %v8575
      %8577 = vmatmul.bf16.gmra.mxu0 %v8433
      %v8578 = vpop.f32.mrf.mxu0
      %v8579 = vadd.f32 0.0, %v8578
      %v8580 = vpop.f32.mrf.mxu0
      %v8581 = vadd.f32 0.0, %v8580
      %8582 = vmatmul.bf16.gmra.mxu0 %v8434
      %v8583 = vpop.f32.mrf.mxu0
      %v8584 = vadd.f32 0.0, %v8583
      %v8585 = vpop.f32.mrf.mxu0
      %v8586 = vadd.f32 0.0, %v8585
      %8587 = vdwg.mxu0
      %v8588 = vadd.f32 %v7906, %v8509
      %v8589 = vadd.f32 %v7907, %v8511
      %v8590 = vadd.f32 %v7908, %v8514
      %v8591 = vadd.f32 %v7909, %v8516
      %v8592 = vadd.f32 %v7910, %v8519
      %v8593 = vadd.f32 %v7911, %v8521
      %v8594 = vadd.f32 %v7912, %v8524
      %v8595 = vadd.f32 %v7913, %v8526
      %v8596 = vadd.f32 %v7914, %v8529
      %v8597 = vadd.f32 %v7915, %v8531
      %v8598 = vadd.f32 %v7916, %v8534
      %v8599 = vadd.f32 %v7917, %v8536
      %v8600 = vadd.f32 %v7918, %v8539
      %v8601 = vadd.f32 %v7919, %v8541
      %v8602 = vadd.f32 %v7920, %v8544
      %v8603 = vadd.f32 %v7921, %v8546
      %v8604 = vadd.f32 %v7922, %v8549
      %v8605 = vadd.f32 %v7923, %v8551
      %v8606 = vadd.f32 %v7924, %v8554
      %v8607 = vadd.f32 %v7925, %v8556
      %v8608 = vadd.f32 %v7926, %v8559
      %v8609 = vadd.f32 %v7927, %v8561
      %v8610 = vadd.f32 %v7928, %v8564
      %v8611 = vadd.f32 %v7929, %v8566
      %v8612 = vadd.f32 %v7930, %v8569
      %v8613 = vadd.f32 %v7931, %v8571
      %v8614 = vadd.f32 %v7932, %v8574
      %v8615 = vadd.f32 %v7933, %v8576
      %v8616 = vadd.f32 %v7934, %v8579
      %v8617 = vadd.f32 %v7935, %v8581
      %v8618 = vadd.f32 %v7936, %v8584
      %v8619 = vadd.f32 %v7937, %v8586
      %v8620 = vld [vmem:[%s7623] sm:$0xe]
      %v8621 = vld [vmem:[%s7623 + $0xc] sm:$0xe]
      %v8622 = vld [vmem:[%s7623 + $0x18] sm:$0xe]
      %v8623 = vld [vmem:[%s7623 + $0x24] sm:$0xe]
      %v8624 = vld [vmem:[%s7623 + $0x30] sm:$0xe]
      %v8625 = vld [vmem:[%s7623 + $0x3c] sm:$0xe]
      %v8626 = vld [vmem:[%s7623 + $0x48] sm:$0xe]
      %v8627 = vld [vmem:[%s7623 + $0x54] sm:$0xe]
      %v8628 = vld [vmem:[%s7623 + $0x60] sm:$0xe]
      %v8629 = vld [vmem:[%s7623 + $0x6c] sm:$0xe]
      %v8630 = vld [vmem:[%s7623 + $0x78] sm:$0xe]
      %v8631 = vld [vmem:[%s7623 + $0x84] sm:$0xe]
      %v8632 = vld [vmem:[%s7623 + $0x90] sm:$0xe]
      %v8633 = vld [vmem:[%s7623 + $0x9c] sm:$0xe]
      %v8634 = vld [vmem:[%s7623 + $0xa8] sm:$0xe]
      %v8635 = vld [vmem:[%s7623 + $0xb4] sm:$0xe]
      %v8684 = vrot.slane %v8620, 5
      %v8685 = vrot.slane %v8684, 4
      %v8686 = vrot.slane %v7939, 5
      %v8687 = vsel %vm1178, %v8685, %v8686
      %v8688 = vrot.slane %v8686, 4
      %v8689 = vrot.slane %v7940, 5
      %v8690 = vsel %vm1178, %v8688, %v8689
      %v8691 = vrot.slane %v8621, 5
      %v8692 = vrot.slane %v8691, 4
      %v8693 = vrot.slane %v7942, 5
      %v8694 = vsel %vm1178, %v8692, %v8693
      %v8695 = vrot.slane %v8693, 4
      %v8696 = vrot.slane %v7943, 5
      %v8697 = vsel %vm1178, %v8695, %v8696
      %v8698 = vrot.slane %v8622, 5
      %v8699 = vrot.slane %v8698, 4
      %v8700 = vrot.slane %v7945, 5
      %v8701 = vsel %vm1178, %v8699, %v8700
      %v8702 = vrot.slane %v8700, 4
      %v8703 = vrot.slane %v7946, 5
      %v8704 = vsel %vm1178, %v8702, %v8703
      %v8705 = vrot.slane %v8623, 5
      %v8706 = vrot.slane %v8705, 4
      %v8707 = vrot.slane %v7948, 5
      %v8708 = vsel %vm1178, %v8706, %v8707
      %v8709 = vrot.slane %v8707, 4
      %v8710 = vrot.slane %v7949, 5
      %v8711 = vsel %vm1178, %v8709, %v8710
      %v8712 = vrot.slane %v8624, 5
      %v8713 = vrot.slane %v8712, 4
      %v8714 = vrot.slane %v7951, 5
      %v8715 = vsel %vm1178, %v8713, %v8714
      %v8716 = vrot.slane %v8714, 4
      %v8717 = vrot.slane %v7952, 5
      %v8718 = vsel %vm1178, %v8716, %v8717
      %v8719 = vrot.slane %v8625, 5
      %v8720 = vrot.slane %v8719, 4
      %v8721 = vrot.slane %v7954, 5
      %v8722 = vsel %vm1178, %v8720, %v8721
      %v8723 = vrot.slane %v8721, 4
      %v8724 = vrot.slane %v7955, 5
      %v8725 = vsel %vm1178, %v8723, %v8724
      %v8726 = vrot.slane %v8626, 5
      %v8727 = vrot.slane %v8726, 4
      %v8728 = vrot.slane %v7957, 5
      %v8729 = vsel %vm1178, %v8727, %v8728
      %v8730 = vrot.slane %v8728, 4
      %v8731 = vrot.slane %v7958, 5
      %v8732 = vsel %vm1178, %v8730, %v8731
      %v8733 = vrot.slane %v8627, 5
      %v8734 = vrot.slane %v8733, 4
      %v8735 = vrot.slane %v7960, 5
      %v8736 = vsel %vm1178, %v8734, %v8735
      %v8737 = vrot.slane %v8735, 4
      %v8738 = vrot.slane %v7961, 5
      %v8739 = vsel %vm1178, %v8737, %v8738
      %v8740 = vrot.slane %v8628, 5
      %v8741 = vrot.slane %v8740, 4
      %v8742 = vrot.slane %v7963, 5
      %v8743 = vsel %vm1178, %v8741, %v8742
      %v8744 = vrot.slane %v8742, 4
      %v8745 = vrot.slane %v7964, 5
      %v8746 = vsel %vm1178, %v8744, %v8745
      %v8747 = vrot.slane %v8629, 5
      %v8748 = vrot.slane %v8747, 4
      %v8749 = vrot.slane %v7966, 5
      %v8750 = vsel %vm1178, %v8748, %v8749
      %v8751 = vrot.slane %v8749, 4
      %v8752 = vrot.slane %v7967, 5
      %v8753 = vsel %vm1178, %v8751, %v8752
      %v8754 = vrot.slane %v8630, 5
      %v8755 = vrot.slane %v8754, 4
      %v8756 = vrot.slane %v7969, 5
      %v8757 = vsel %vm1178, %v8755, %v8756
      %v8758 = vrot.slane %v8756, 4
      %v8759 = vrot.slane %v7970, 5
      %v8760 = vsel %vm1178, %v8758, %v8759
      %v8761 = vrot.slane %v8631, 5
      %v8762 = vrot.slane %v8761, 4
      %v8763 = vrot.slane %v7972, 5
      %v8764 = vsel %vm1178, %v8762, %v8763
      %v8765 = vrot.slane %v8763, 4
      %v8766 = vrot.slane %v7973, 5
      %v8767 = vsel %vm1178, %v8765, %v8766
      %v8768 = vrot.slane %v8632, 5
      %v8769 = vrot.slane %v8768, 4
      %v8770 = vrot.slane %v7975, 5
      %v8771 = vsel %vm1178, %v8769, %v8770
      %v8772 = vrot.slane %v8770, 4
      %v8773 = vrot.slane %v7976, 5
      %v8774 = vsel %vm1178, %v8772, %v8773
      %v8775 = vrot.slane %v8633, 5
      %v8776 = vrot.slane %v8775, 4
      %v8777 = vrot.slane %v7978, 5
      %v8778 = vsel %vm1178, %v8776, %v8777
      %v8779 = vrot.slane %v8777, 4
      %v8780 = vrot.slane %v7979, 5
      %v8781 = vsel %vm1178, %v8779, %v8780
      %v8782 = vrot.slane %v8634, 5
      %v8783 = vrot.slane %v8782, 4
      %v8784 = vrot.slane %v7981, 5
      %v8785 = vsel %vm1178, %v8783, %v8784
      %v8786 = vrot.slane %v8784, 4
      %v8787 = vrot.slane %v7982, 5
      %v8788 = vsel %vm1178, %v8786, %v8787
      %v8789 = vrot.slane %v8635, 5
      %v8790 = vrot.slane %v8789, 4
      %v8791 = vrot.slane %v7984, 5
      %v8792 = vsel %vm1178, %v8790, %v8791
      %v8793 = vrot.slane %v8791, 4
      %v8794 = vrot.slane %v7985, 5
      %v8795 = vsel %vm1178, %v8793, %v8794
      %s8796 = scalar_lea.vmem %s2, 512
      %v8797 = vld [vmem:[%s8796] sm:$0xf]
      %v8798 = vld [vmem:[%s8796 + $0x4] sm:$0xf]
      %v8799 = vld [vmem:[%s8796 + $0x8] sm:$0xf]
      %v8800 = vld [vmem:[%s8796 + $0xc] sm:$0xf]
      %v8801 = vld [vmem:[%s8796 + $0x10] sm:$0xf]
      %v8802 = vld [vmem:[%s8796 + $0x14] sm:$0xf]
      %v8803 = vld [vmem:[%s8796 + $0x18] sm:$0xf]
      %v8804 = vld [vmem:[%s8796 + $0x1c] sm:$0xf]
      %v8805 = vld [vmem:[%s8796 + $0x20] sm:$0xf]
      %v8806 = vld [vmem:[%s8796 + $0x24] sm:$0xf]
      %v8807 = vld [vmem:[%s8796 + $0x28] sm:$0xf]
      %v8808 = vld [vmem:[%s8796 + $0x2c] sm:$0xf]
      %v8809 = vld [vmem:[%s8796 + $0x30] sm:$0xf]
      %v8810 = vld [vmem:[%s8796 + $0x34] sm:$0xf]
      %v8811 = vld [vmem:[%s8796 + $0x38] sm:$0xf]
      %v8812 = vld [vmem:[%s8796 + $0x3c] sm:$0xf]
      %v8813 = vunpack.c.l.b16 %v8687
      %v8814 = vunpack.c.l.b16 %v8690
      %v8815 = vunpack.c.l.b16 %v8694
      %v8816 = vunpack.c.l.b16 %v8697
      %v8817 = vunpack.c.l.b16 %v8701
      %v8818 = vunpack.c.l.b16 %v8704
      %v8819 = vunpack.c.l.b16 %v8708
      %v8820 = vunpack.c.l.b16 %v8711
      %v8821 = vunpack.c.l.b16 %v8715
      %v8822 = vunpack.c.l.b16 %v8718
      %v8823 = vunpack.c.l.b16 %v8722
      %v8824 = vunpack.c.l.b16 %v8725
      %v8825 = vunpack.c.l.b16 %v8729
      %v8826 = vunpack.c.l.b16 %v8732
      %v8827 = vunpack.c.l.b16 %v8736
      %v8828 = vunpack.c.l.b16 %v8739
      %v8829 = vunpack.c.l.b16 %v8743
      %v8830 = vunpack.c.l.b16 %v8746
      %v8831 = vunpack.c.l.b16 %v8750
      %v8832 = vunpack.c.l.b16 %v8753
      %v8833 = vunpack.c.l.b16 %v8757
      %v8834 = vunpack.c.l.b16 %v8760
      %v8835 = vunpack.c.l.b16 %v8764
      %v8836 = vunpack.c.l.b16 %v8767
      %v8837 = vunpack.c.l.b16 %v8771
      %v8838 = vunpack.c.l.b16 %v8774
      %v8839 = vunpack.c.l.b16 %v8778
      %v8840 = vunpack.c.l.b16 %v8781
      %v8841 = vunpack.c.l.b16 %v8785
      %v8842 = vunpack.c.l.b16 %v8788
      %v8843 = vunpack.c.l.b16 %v8792
      %v8844 = vunpack.c.l.b16 %v8795
      %v8845 = vpack.c.b16 %v8814, %v8813
      %v8846 = vpack.c.b16 %v8816, %v8815
      %v8847 = vpack.c.b16 %v8818, %v8817
      %v8848 = vpack.c.b16 %v8820, %v8819
      %v8849 = vpack.c.b16 %v8822, %v8821
      %v8850 = vpack.c.b16 %v8824, %v8823
      %v8851 = vpack.c.b16 %v8826, %v8825
      %v8852 = vpack.c.b16 %v8828, %v8827
      %v8853 = vpack.c.b16 %v8830, %v8829
      %v8854 = vpack.c.b16 %v8832, %v8831
      %v8855 = vpack.c.b16 %v8834, %v8833
      %v8856 = vpack.c.b16 %v8836, %v8835
      %v8857 = vpack.c.b16 %v8838, %v8837
      %v8858 = vpack.c.b16 %v8840, %v8839
      %v8859 = vpack.c.b16 %v8842, %v8841
      %v8860 = vpack.c.b16 %v8844, %v8843
      %v8893 = vunpack.c.l.b16 %v8797
      %v8894 = vunpack.c.l.b16 %v8798
      %v8895 = vunpack.c.l.b16 %v8799
      %v8896 = vunpack.c.l.b16 %v8800
      %v8897 = vunpack.c.l.b16 %v8801
      %v8898 = vunpack.c.l.b16 %v8802
      %v8899 = vunpack.c.l.b16 %v8803
      %v8900 = vunpack.c.l.b16 %v8804
      %v8901 = vunpack.c.l.b16 %v8805
      %v8902 = vunpack.c.l.b16 %v8806
      %v8903 = vunpack.c.l.b16 %v8807
      %v8904 = vunpack.c.l.b16 %v8808
      %v8905 = vunpack.c.l.b16 %v8809
      %v8906 = vunpack.c.l.b16 %v8810
      %v8907 = vunpack.c.l.b16 %v8811
      %v8908 = vunpack.c.l.b16 %v8812
      %v8909 = vpack.c.b16 %v8894, %v8893
      %v8910 = vpack.c.b16 %v8896, %v8895
      %v8911 = vpack.c.b16 %v8898, %v8897
      %v8912 = vpack.c.b16 %v8900, %v8899
      %v8913 = vpack.c.b16 %v8902, %v8901
      %v8914 = vpack.c.b16 %v8904, %v8903
      %v8915 = vpack.c.b16 %v8906, %v8905
      %v8916 = vpack.c.b16 %v8908, %v8907
      %8925 = vmatpush.bf16.msra.mxu0 %v8916
      %8926 = vmatpush.bf16.msra.mxu0 %v8915
      %8927 = vmatpush.bf16.msra.mxu0 %v8914
      %8928 = vmatpush.bf16.msra.mxu0 %v8913
      %8929 = vmatpush.bf16.msra.mxu0 %v8912
      %8930 = vmatpush.bf16.msra.mxu0 %v8911
      %8931 = vmatpush.bf16.msra.mxu0 %v8910
      %8932 = vmatpush.bf16.msra.mxu0 %v8909
      %8933 = vmatmul.bf16.gmra.mxu0 %v8845
      %v8934 = vpop.f32.mrf.mxu0
      %v8935 = vadd.f32 0.0, %v8934
      %v8936 = vpop.f32.mrf.mxu0
      %v8937 = vadd.f32 0.0, %v8936
      %8938 = vmatmul.bf16.gmra.mxu0 %v8846
      %v8939 = vpop.f32.mrf.mxu0
      %v8940 = vadd.f32 0.0, %v8939
      %v8941 = vpop.f32.mrf.mxu0
      %v8942 = vadd.f32 0.0, %v8941
      %8943 = vmatmul.bf16.gmra.mxu0 %v8847
      %v8944 = vpop.f32.mrf.mxu0
      %v8945 = vadd.f32 0.0, %v8944
      %v8946 = vpop.f32.mrf.mxu0
      %v8947 = vadd.f32 0.0, %v8946
      %8948 = vmatmul.bf16.gmra.mxu0 %v8848
      %v8949 = vpop.f32.mrf.mxu0
      %v8950 = vadd.f32 0.0, %v8949
      %v8951 = vpop.f32.mrf.mxu0
      %v8952 = vadd.f32 0.0, %v8951
      %8953 = vmatmul.bf16.gmra.mxu0 %v8849
      %v8954 = vpop.f32.mrf.mxu0
      %v8955 = vadd.f32 0.0, %v8954
      %v8956 = vpop.f32.mrf.mxu0
      %v8957 = vadd.f32 0.0, %v8956
      %8958 = vmatmul.bf16.gmra.mxu0 %v8850
      %v8959 = vpop.f32.mrf.mxu0
      %v8960 = vadd.f32 0.0, %v8959
      %v8961 = vpop.f32.mrf.mxu0
      %v8962 = vadd.f32 0.0, %v8961
      %8963 = vmatmul.bf16.gmra.mxu0 %v8851
      %v8964 = vpop.f32.mrf.mxu0
      %v8965 = vadd.f32 0.0, %v8964
      %v8966 = vpop.f32.mrf.mxu0
      %v8967 = vadd.f32 0.0, %v8966
      %8968 = vmatmul.bf16.gmra.mxu0 %v8852
      %v8969 = vpop.f32.mrf.mxu0
      %v8970 = vadd.f32 0.0, %v8969
      %v8971 = vpop.f32.mrf.mxu0
      %v8972 = vadd.f32 0.0, %v8971
      %8973 = vmatmul.bf16.gmra.mxu0 %v8853
      %v8974 = vpop.f32.mrf.mxu0
      %v8975 = vadd.f32 0.0, %v8974
      %v8976 = vpop.f32.mrf.mxu0
      %v8977 = vadd.f32 0.0, %v8976
      %8978 = vmatmul.bf16.gmra.mxu0 %v8854
      %v8979 = vpop.f32.mrf.mxu0
      %v8980 = vadd.f32 0.0, %v8979
      %v8981 = vpop.f32.mrf.mxu0
      %v8982 = vadd.f32 0.0, %v8981
      %8983 = vmatmul.bf16.gmra.mxu0 %v8855
      %v8984 = vpop.f32.mrf.mxu0
      %v8985 = vadd.f32 0.0, %v8984
      %v8986 = vpop.f32.mrf.mxu0
      %v8987 = vadd.f32 0.0, %v8986
      %8988 = vmatmul.bf16.gmra.mxu0 %v8856
      %v8989 = vpop.f32.mrf.mxu0
      %v8990 = vadd.f32 0.0, %v8989
      %v8991 = vpop.f32.mrf.mxu0
      %v8992 = vadd.f32 0.0, %v8991
      %8993 = vmatmul.bf16.gmra.mxu0 %v8857
      %v8994 = vpop.f32.mrf.mxu0
      %v8995 = vadd.f32 0.0, %v8994
      %v8996 = vpop.f32.mrf.mxu0
      %v8997 = vadd.f32 0.0, %v8996
      %8998 = vmatmul.bf16.gmra.mxu0 %v8858
      %v8999 = vpop.f32.mrf.mxu0
      %v9000 = vadd.f32 0.0, %v8999
      %v9001 = vpop.f32.mrf.mxu0
      %v9002 = vadd.f32 0.0, %v9001
      %9003 = vmatmul.bf16.gmra.mxu0 %v8859
      %v9004 = vpop.f32.mrf.mxu0
      %v9005 = vadd.f32 0.0, %v9004
      %v9006 = vpop.f32.mrf.mxu0
      %v9007 = vadd.f32 0.0, %v9006
      %9008 = vmatmul.bf16.gmra.mxu0 %v8860
      %v9009 = vpop.f32.mrf.mxu0
      %v9010 = vadd.f32 0.0, %v9009
      %v9011 = vpop.f32.mrf.mxu0
      %v9012 = vadd.f32 0.0, %v9011
      %9013 = vdwg.mxu0
      %v9014 = vadd.f32 %v8588, %v8935
      %v9015 = vadd.f32 %v8589, %v8937
      %v9016 = vadd.f32 %v8590, %v8940
      %v9017 = vadd.f32 %v8591, %v8942
      %v9018 = vadd.f32 %v8592, %v8945
      %v9019 = vadd.f32 %v8593, %v8947
      %v9020 = vadd.f32 %v8594, %v8950
      %v9021 = vadd.f32 %v8595, %v8952
      %v9022 = vadd.f32 %v8596, %v8955
      %v9023 = vadd.f32 %v8597, %v8957
      %v9024 = vadd.f32 %v8598, %v8960
      %v9025 = vadd.f32 %v8599, %v8962
      %v9026 = vadd.f32 %v8600, %v8965
      %v9027 = vadd.f32 %v8601, %v8967
      %v9028 = vadd.f32 %v8602, %v8970
      %v9029 = vadd.f32 %v8603, %v8972
      %v9030 = vadd.f32 %v8604, %v8975
      %v9031 = vadd.f32 %v8605, %v8977
      %v9032 = vadd.f32 %v8606, %v8980
      %v9033 = vadd.f32 %v8607, %v8982
      %v9034 = vadd.f32 %v8608, %v8985
      %v9035 = vadd.f32 %v8609, %v8987
      %v9036 = vadd.f32 %v8610, %v8990
      %v9037 = vadd.f32 %v8611, %v8992
      %v9038 = vadd.f32 %v8612, %v8995
      %v9039 = vadd.f32 %v8613, %v8997
      %v9040 = vadd.f32 %v8614, %v9000
      %v9041 = vadd.f32 %v8615, %v9002
      %v9042 = vadd.f32 %v8616, %v9005
      %v9043 = vadd.f32 %v8617, %v9007
      %v9044 = vadd.f32 %v8618, %v9010
      %v9045 = vadd.f32 %v8619, %v9012
      %v9046 = vld [vmem:[%s1541] sm:$0xf]
      %v9047 = vld [vmem:[%s1541 + $0x4] sm:$0xf]
      %v9048 = vld [vmem:[%s1541 + $0x8] sm:$0x1]
      %v9049 = vld [vmem:[%s1541 + $0xc] sm:$0xf]
      %v9050 = vld [vmem:[%s1541 + $0x10] sm:$0xf]
      %v9051 = vld [vmem:[%s1541 + $0x14] sm:$0x1]
      %v9052 = vld [vmem:[%s1541 + $0x18] sm:$0xf]
      %v9053 = vld [vmem:[%s1541 + $0x1c] sm:$0xf]
      %v9054 = vld [vmem:[%s1541 + $0x20] sm:$0x1]
      %v9055 = vld [vmem:[%s1541 + $0x24] sm:$0xf]
      %v9056 = vld [vmem:[%s1541 + $0x28] sm:$0xf]
      %v9057 = vld [vmem:[%s1541 + $0x2c] sm:$0x1]
      %v9058 = vld [vmem:[%s1541 + $0x30] sm:$0xf]
      %v9059 = vld [vmem:[%s1541 + $0x34] sm:$0xf]
      %v9060 = vld [vmem:[%s1541 + $0x38] sm:$0x1]
      %v9061 = vld [vmem:[%s1541 + $0x3c] sm:$0xf]
      %v9062 = vld [vmem:[%s1541 + $0x40] sm:$0xf]
      %v9063 = vld [vmem:[%s1541 + $0x44] sm:$0x1]
      %v9064 = vld [vmem:[%s1541 + $0x48] sm:$0xf]
      %v9065 = vld [vmem:[%s1541 + $0x4c] sm:$0xf]
      %v9066 = vld [vmem:[%s1541 + $0x50] sm:$0x1]
      %v9067 = vld [vmem:[%s1541 + $0x54] sm:$0xf]
      %v9068 = vld [vmem:[%s1541 + $0x58] sm:$0xf]
      %v9069 = vld [vmem:[%s1541 + $0x5c] sm:$0x1]
      %v9070 = vld [vmem:[%s1541 + $0x60] sm:$0xf]
      %v9071 = vld [vmem:[%s1541 + $0x64] sm:$0xf]
      %v9072 = vld [vmem:[%s1541 + $0x68] sm:$0x1]
      %v9073 = vld [vmem:[%s1541 + $0x6c] sm:$0xf]
      %v9074 = vld [vmem:[%s1541 + $0x70] sm:$0xf]
      %v9075 = vld [vmem:[%s1541 + $0x74] sm:$0x1]
      %v9076 = vld [vmem:[%s1541 + $0x78] sm:$0xf]
      %v9077 = vld [vmem:[%s1541 + $0x7c] sm:$0xf]
      %v9078 = vld [vmem:[%s1541 + $0x80] sm:$0x1]
      %v9079 = vld [vmem:[%s1541 + $0x84] sm:$0xf]
      %v9080 = vld [vmem:[%s1541 + $0x88] sm:$0xf]
      %v9081 = vld [vmem:[%s1541 + $0x8c] sm:$0x1]
      %v9082 = vld [vmem:[%s1541 + $0x90] sm:$0xf]
      %v9083 = vld [vmem:[%s1541 + $0x94] sm:$0xf]
      %v9084 = vld [vmem:[%s1541 + $0x98] sm:$0x1]
      %v9085 = vld [vmem:[%s1541 + $0x9c] sm:$0xf]
      %v9086 = vld [vmem:[%s1541 + $0xa0] sm:$0xf]
      %v9087 = vld [vmem:[%s1541 + $0xa4] sm:$0x1]
      %v9088 = vld [vmem:[%s1541 + $0xa8] sm:$0xf]
      %v9089 = vld [vmem:[%s1541 + $0xac] sm:$0xf]
      %v9090 = vld [vmem:[%s1541 + $0xb0] sm:$0x1]
      %v9091 = vld [vmem:[%s1541 + $0xb4] sm:$0xf]
      %v9092 = vld [vmem:[%s1541 + $0xb8] sm:$0xf]
      %v9093 = vld [vmem:[%s1541 + $0xbc] sm:$0x1]
      %v9095 = vshrl.u32 %v9046, 16
      %v9097 = vrot.slane %v9095, 4
      %v9098 = vshll.u32 %v9046, 16
      %v9100 = vrot.slane %v9098, 5
      %v9101 = vor.u32 %v9097, %v9100
      %v9102 = vrot.slane %v9101, 4
      %v9104 = vshll.u32 %v9047, 16
      %v9106 = vrot.slane %v9104, 5
      %v9107 = vsel %vm292, %v9102, %v9106
      %v9108 = vshrl.u32 %v9047, 16
      %v9110 = vrot.slane %v9108, 4
      %v9111 = vor.u32 %v9110, %v9106
      %v9112 = vrot.slane %v9111, 4
      %v9114 = vshll.u32 %v9048, 16
      %v9116 = vrot.slane %v9114, 5
      %v9117 = vsel %vm292, %v9112, %v9116
      %v9119 = vshrl.u32 %v9049, 16
      %v9121 = vrot.slane %v9119, 4
      %v9122 = vshll.u32 %v9049, 16
      %v9124 = vrot.slane %v9122, 5
      %v9125 = vor.u32 %v9121, %v9124
      %v9126 = vrot.slane %v9125, 4
      %v9128 = vshll.u32 %v9050, 16
      %v9130 = vrot.slane %v9128, 5
      %v9131 = vsel %vm292, %v9126, %v9130
      %v9132 = vshrl.u32 %v9050, 16
      %v9134 = vrot.slane %v9132, 4
      %v9135 = vor.u32 %v9134, %v9130
      %v9136 = vrot.slane %v9135, 4
      %v9138 = vshll.u32 %v9051, 16
      %v9140 = vrot.slane %v9138, 5
      %v9141 = vsel %vm292, %v9136, %v9140
      %v9143 = vshrl.u32 %v9052, 16
      %v9145 = vrot.slane %v9143, 4
      %v9146 = vshll.u32 %v9052, 16
      %v9148 = vrot.slane %v9146, 5
      %v9149 = vor.u32 %v9145, %v9148
      %v9150 = vrot.slane %v9149, 4
      %v9152 = vshll.u32 %v9053, 16
      %v9154 = vrot.slane %v9152, 5
      %v9155 = vsel %vm292, %v9150, %v9154
      %v9156 = vshrl.u32 %v9053, 16
      %v9158 = vrot.slane %v9156, 4
      %v9159 = vor.u32 %v9158, %v9154
      %v9160 = vrot.slane %v9159, 4
      %v9162 = vshll.u32 %v9054, 16
      %v9164 = vrot.slane %v9162, 5
      %v9165 = vsel %vm292, %v9160, %v9164
      %v9167 = vshrl.u32 %v9055, 16
      %v9169 = vrot.slane %v9167, 4
      %v9170 = vshll.u32 %v9055, 16
      %v9172 = vrot.slane %v9170, 5
      %v9173 = vor.u32 %v9169, %v9172
      %v9174 = vrot.slane %v9173, 4
      %v9176 = vshll.u32 %v9056, 16
      %v9178 = vrot.slane %v9176, 5
      %v9179 = vsel %vm292, %v9174, %v9178
      %v9180 = vshrl.u32 %v9056, 16
      %v9182 = vrot.slane %v9180, 4
      %v9183 = vor.u32 %v9182, %v9178
      %v9184 = vrot.slane %v9183, 4
      %v9186 = vshll.u32 %v9057, 16
      %v9188 = vrot.slane %v9186, 5
      %v9189 = vsel %vm292, %v9184, %v9188
      %v9191 = vshrl.u32 %v9058, 16
      %v9193 = vrot.slane %v9191, 4
      %v9194 = vshll.u32 %v9058, 16
      %v9196 = vrot.slane %v9194, 5
      %v9197 = vor.u32 %v9193, %v9196
      %v9198 = vrot.slane %v9197, 4
      %v9200 = vshll.u32 %v9059, 16
      %v9202 = vrot.slane %v9200, 5
      %v9203 = vsel %vm292, %v9198, %v9202
      %v9204 = vshrl.u32 %v9059, 16
      %v9206 = vrot.slane %v9204, 4
      %v9207 = vor.u32 %v9206, %v9202
      %v9208 = vrot.slane %v9207, 4
      %v9210 = vshll.u32 %v9060, 16
      %v9212 = vrot.slane %v9210, 5
      %v9213 = vsel %vm292, %v9208, %v9212
      %v9215 = vshrl.u32 %v9061, 16
      %v9217 = vrot.slane %v9215, 4
      %v9218 = vshll.u32 %v9061, 16
      %v9220 = vrot.slane %v9218, 5
      %v9221 = vor.u32 %v9217, %v9220
      %v9222 = vrot.slane %v9221, 4
      %v9224 = vshll.u32 %v9062, 16
      %v9226 = vrot.slane %v9224, 5
      %v9227 = vsel %vm292, %v9222, %v9226
      %v9228 = vshrl.u32 %v9062, 16
      %v9230 = vrot.slane %v9228, 4
      %v9231 = vor.u32 %v9230, %v9226
      %v9232 = vrot.slane %v9231, 4
      %v9234 = vshll.u32 %v9063, 16
      %v9236 = vrot.slane %v9234, 5
      %v9237 = vsel %vm292, %v9232, %v9236
      %v9239 = vshrl.u32 %v9064, 16
      %v9241 = vrot.slane %v9239, 4
      %v9242 = vshll.u32 %v9064, 16
      %v9244 = vrot.slane %v9242, 5
      %v9245 = vor.u32 %v9241, %v9244
      %v9246 = vrot.slane %v9245, 4
      %v9248 = vshll.u32 %v9065, 16
      %v9250 = vrot.slane %v9248, 5
      %v9251 = vsel %vm292, %v9246, %v9250
      %v9252 = vshrl.u32 %v9065, 16
      %v9254 = vrot.slane %v9252, 4
      %v9255 = vor.u32 %v9254, %v9250
      %v9256 = vrot.slane %v9255, 4
      %v9258 = vshll.u32 %v9066, 16
      %v9260 = vrot.slane %v9258, 5
      %v9261 = vsel %vm292, %v9256, %v9260
      %v9263 = vshrl.u32 %v9067, 16
      %v9265 = vrot.slane %v9263, 4
      %v9266 = vshll.u32 %v9067, 16
      %v9268 = vrot.slane %v9266, 5
      %v9269 = vor.u32 %v9265, %v9268
      %v9270 = vrot.slane %v9269, 4
      %v9272 = vshll.u32 %v9068, 16
      %v9274 = vrot.slane %v9272, 5
      %v9275 = vsel %vm292, %v9270, %v9274
      %v9276 = vshrl.u32 %v9068, 16
      %v9278 = vrot.slane %v9276, 4
      %v9279 = vor.u32 %v9278, %v9274
      %v9280 = vrot.slane %v9279, 4
      %v9282 = vshll.u32 %v9069, 16
      %v9284 = vrot.slane %v9282, 5
      %v9285 = vsel %vm292, %v9280, %v9284
      %v9287 = vshrl.u32 %v9070, 16
      %v9289 = vrot.slane %v9287, 4
      %v9290 = vshll.u32 %v9070, 16
      %v9292 = vrot.slane %v9290, 5
      %v9293 = vor.u32 %v9289, %v9292
      %v9294 = vrot.slane %v9293, 4
      %v9296 = vshll.u32 %v9071, 16
      %v9298 = vrot.slane %v9296, 5
      %v9299 = vsel %vm292, %v9294, %v9298
      %v9300 = vshrl.u32 %v9071, 16
      %v9302 = vrot.slane %v9300, 4
      %v9303 = vor.u32 %v9302, %v9298
      %v9304 = vrot.slane %v9303, 4
      %v9306 = vshll.u32 %v9072, 16
      %v9308 = vrot.slane %v9306, 5
      %v9309 = vsel %vm292, %v9304, %v9308
      %v9311 = vshrl.u32 %v9073, 16
      %v9313 = vrot.slane %v9311, 4
      %v9314 = vshll.u32 %v9073, 16
      %v9316 = vrot.slane %v9314, 5
      %v9317 = vor.u32 %v9313, %v9316
      %v9318 = vrot.slane %v9317, 4
      %v9320 = vshll.u32 %v9074, 16
      %v9322 = vrot.slane %v9320, 5
      %v9323 = vsel %vm292, %v9318, %v9322
      %v9324 = vshrl.u32 %v9074, 16
      %v9326 = vrot.slane %v9324, 4
      %v9327 = vor.u32 %v9326, %v9322
      %v9328 = vrot.slane %v9327, 4
      %v9330 = vshll.u32 %v9075, 16
      %v9332 = vrot.slane %v9330, 5
      %v9333 = vsel %vm292, %v9328, %v9332
      %v9335 = vshrl.u32 %v9076, 16
      %v9337 = vrot.slane %v9335, 4
      %v9338 = vshll.u32 %v9076, 16
      %v9340 = vrot.slane %v9338, 5
      %v9341 = vor.u32 %v9337, %v9340
      %v9342 = vrot.slane %v9341, 4
      %v9344 = vshll.u32 %v9077, 16
      %v9346 = vrot.slane %v9344, 5
      %v9347 = vsel %vm292, %v9342, %v9346
      %v9348 = vshrl.u32 %v9077, 16
      %v9350 = vrot.slane %v9348, 4
      %v9351 = vor.u32 %v9350, %v9346
      %v9352 = vrot.slane %v9351, 4
      %v9354 = vshll.u32 %v9078, 16
      %v9356 = vrot.slane %v9354, 5
      %v9357 = vsel %vm292, %v9352, %v9356
      %v9359 = vshrl.u32 %v9079, 16
      %v9361 = vrot.slane %v9359, 4
      %v9362 = vshll.u32 %v9079, 16
      %v9364 = vrot.slane %v9362, 5
      %v9365 = vor.u32 %v9361, %v9364
      %v9366 = vrot.slane %v9365, 4
      %v9368 = vshll.u32 %v9080, 16
      %v9370 = vrot.slane %v9368, 5
      %v9371 = vsel %vm292, %v9366, %v9370
      %v9372 = vshrl.u32 %v9080, 16
      %v9374 = vrot.slane %v9372, 4
      %v9375 = vor.u32 %v9374, %v9370
      %v9376 = vrot.slane %v9375, 4
      %v9378 = vshll.u32 %v9081, 16
      %v9380 = vrot.slane %v9378, 5
      %v9381 = vsel %vm292, %v9376, %v9380
      %v9383 = vshrl.u32 %v9082, 16
      %v9385 = vrot.slane %v9383, 4
      %v9386 = vshll.u32 %v9082, 16
      %v9388 = vrot.slane %v9386, 5
      %v9389 = vor.u32 %v9385, %v9388
      %v9390 = vrot.slane %v9389, 4
      %v9392 = vshll.u32 %v9083, 16
      %v9394 = vrot.slane %v9392, 5
      %v9395 = vsel %vm292, %v9390, %v9394
      %v9396 = vshrl.u32 %v9083, 16
      %v9398 = vrot.slane %v9396, 4
      %v9399 = vor.u32 %v9398, %v9394
      %v9400 = vrot.slane %v9399, 4
      %v9402 = vshll.u32 %v9084, 16
      %v9404 = vrot.slane %v9402, 5
      %v9405 = vsel %vm292, %v9400, %v9404
      %v9407 = vshrl.u32 %v9085, 16
      %v9409 = vrot.slane %v9407, 4
      %v9410 = vshll.u32 %v9085, 16
      %v9412 = vrot.slane %v9410, 5
      %v9413 = vor.u32 %v9409, %v9412
      %v9414 = vrot.slane %v9413, 4
      %v9416 = vshll.u32 %v9086, 16
      %v9418 = vrot.slane %v9416, 5
      %v9419 = vsel %vm292, %v9414, %v9418
      %v9420 = vshrl.u32 %v9086, 16
      %v9422 = vrot.slane %v9420, 4
      %v9423 = vor.u32 %v9422, %v9418
      %v9424 = vrot.slane %v9423, 4
      %v9426 = vshll.u32 %v9087, 16
      %v9428 = vrot.slane %v9426, 5
      %v9429 = vsel %vm292, %v9424, %v9428
      %v9431 = vshrl.u32 %v9088, 16
      %v9433 = vrot.slane %v9431, 4
      %v9434 = vshll.u32 %v9088, 16
      %v9436 = vrot.slane %v9434, 5
      %v9437 = vor.u32 %v9433, %v9436
      %v9438 = vrot.slane %v9437, 4
      %v9440 = vshll.u32 %v9089, 16
      %v9442 = vrot.slane %v9440, 5
      %v9443 = vsel %vm292, %v9438, %v9442
      %v9444 = vshrl.u32 %v9089, 16
      %v9446 = vrot.slane %v9444, 4
      %v9447 = vor.u32 %v9446, %v9442
      %v9448 = vrot.slane %v9447, 4
      %v9450 = vshll.u32 %v9090, 16
      %v9452 = vrot.slane %v9450, 5
      %v9453 = vsel %vm292, %v9448, %v9452
      %v9455 = vshrl.u32 %v9091, 16
      %v9457 = vrot.slane %v9455, 4
      %v9458 = vshll.u32 %v9091, 16
      %v9460 = vrot.slane %v9458, 5
      %v9461 = vor.u32 %v9457, %v9460
      %v9462 = vrot.slane %v9461, 4
      %v9464 = vshll.u32 %v9092, 16
      %v9466 = vrot.slane %v9464, 5
      %v9467 = vsel %vm292, %v9462, %v9466
      %v9468 = vshrl.u32 %v9092, 16
      %v9470 = vrot.slane %v9468, 4
      %v9471 = vor.u32 %v9470, %v9466
      %v9472 = vrot.slane %v9471, 4
      %v9474 = vshll.u32 %v9093, 16
      %v9476 = vrot.slane %v9474, 5
      %v9477 = vsel %vm292, %v9472, %v9476
      %v9510 = vunpack.c.l.bf16 %v9107
      %v9511 = vunpack.c.l.bf16 %v9117
      %v9512 = vunpack.c.l.bf16 %v9131
      %v9513 = vunpack.c.l.bf16 %v9141
      %v9514 = vunpack.c.l.bf16 %v9155
      %v9515 = vunpack.c.l.bf16 %v9165
      %v9516 = vunpack.c.l.bf16 %v9179
      %v9517 = vunpack.c.l.bf16 %v9189
      %v9518 = vunpack.c.l.bf16 %v9203
      %v9519 = vunpack.c.l.bf16 %v9213
      %v9520 = vunpack.c.l.bf16 %v9227
      %v9521 = vunpack.c.l.bf16 %v9237
      %v9522 = vunpack.c.l.bf16 %v9251
      %v9523 = vunpack.c.l.bf16 %v9261
      %v9524 = vunpack.c.l.bf16 %v9275
      %v9525 = vunpack.c.l.bf16 %v9285
      %v9526 = vunpack.c.l.bf16 %v9299
      %v9527 = vunpack.c.l.bf16 %v9309
      %v9528 = vunpack.c.l.bf16 %v9323
      %v9529 = vunpack.c.l.bf16 %v9333
      %v9530 = vunpack.c.l.bf16 %v9347
      %v9531 = vunpack.c.l.bf16 %v9357
      %v9532 = vunpack.c.l.bf16 %v9371
      %v9533 = vunpack.c.l.bf16 %v9381
      %v9534 = vunpack.c.l.bf16 %v9395
      %v9535 = vunpack.c.l.bf16 %v9405
      %v9536 = vunpack.c.l.bf16 %v9419
      %v9537 = vunpack.c.l.bf16 %v9429
      %v9538 = vunpack.c.l.bf16 %v9443
      %v9539 = vunpack.c.l.bf16 %v9453
      %v9540 = vunpack.c.l.bf16 %v9467
      %v9541 = vunpack.c.l.bf16 %v9477
      %v9542 = vadd.f32 %v9014, %v9510
      %v9543 = vadd.f32 %v9015, %v9511
      %v9544 = vadd.f32 %v9016, %v9512
      %v9545 = vadd.f32 %v9017, %v9513
      %v9546 = vadd.f32 %v9018, %v9514
      %v9547 = vadd.f32 %v9019, %v9515
      %v9548 = vadd.f32 %v9020, %v9516
      %v9549 = vadd.f32 %v9021, %v9517
      %v9550 = vadd.f32 %v9022, %v9518
      %v9551 = vadd.f32 %v9023, %v9519
      %v9552 = vadd.f32 %v9024, %v9520
      %v9553 = vadd.f32 %v9025, %v9521
      %v9554 = vadd.f32 %v9026, %v9522
      %v9555 = vadd.f32 %v9027, %v9523
      %v9556 = vadd.f32 %v9028, %v9524
      %v9557 = vadd.f32 %v9029, %v9525
      %v9558 = vadd.f32 %v9030, %v9526
      %v9559 = vadd.f32 %v9031, %v9527
      %v9560 = vadd.f32 %v9032, %v9528
      %v9561 = vadd.f32 %v9033, %v9529
      %v9562 = vadd.f32 %v9034, %v9530
      %v9563 = vadd.f32 %v9035, %v9531
      %v9564 = vadd.f32 %v9036, %v9532
      %v9565 = vadd.f32 %v9037, %v9533
      %v9566 = vadd.f32 %v9038, %v9534
      %v9567 = vadd.f32 %v9039, %v9535
      %v9568 = vadd.f32 %v9040, %v9536
      %v9569 = vadd.f32 %v9041, %v9537
      %v9570 = vadd.f32 %v9042, %v9538
      %v9571 = vadd.f32 %v9043, %v9539
      %v9572 = vadd.f32 %v9044, %v9540
      %v9573 = vadd.f32 %v9045, %v9541
      %v9574 = vmax.f32 %v9542, 0.0
      %v9575 = vmax.f32 %v9543, 0.0
      %v9576 = vmax.f32 %v9544, 0.0
      %v9577 = vmax.f32 %v9545, 0.0
      %v9578 = vmax.f32 %v9546, 0.0
      %v9579 = vmax.f32 %v9547, 0.0
      %v9580 = vmax.f32 %v9548, 0.0
      %v9581 = vmax.f32 %v9549, 0.0
      %v9582 = vmax.f32 %v9550, 0.0
      %v9583 = vmax.f32 %v9551, 0.0
      %v9584 = vmax.f32 %v9552, 0.0
      %v9585 = vmax.f32 %v9553, 0.0
      %v9586 = vmax.f32 %v9554, 0.0
      %v9587 = vmax.f32 %v9555, 0.0
      %v9588 = vmax.f32 %v9556, 0.0
      %v9589 = vmax.f32 %v9557, 0.0
      %v9590 = vmax.f32 %v9558, 0.0
      %v9591 = vmax.f32 %v9559, 0.0
      %v9592 = vmax.f32 %v9560, 0.0
      %v9593 = vmax.f32 %v9561, 0.0
      %v9594 = vmax.f32 %v9562, 0.0
      %v9595 = vmax.f32 %v9563, 0.0
      %v9596 = vmax.f32 %v9564, 0.0
      %v9597 = vmax.f32 %v9565, 0.0
      %v9598 = vmax.f32 %v9566, 0.0
      %v9599 = vmax.f32 %v9567, 0.0
      %v9600 = vmax.f32 %v9568, 0.0
      %v9601 = vmax.f32 %v9569, 0.0
      %v9602 = vmax.f32 %v9570, 0.0
      %v9603 = vmax.f32 %v9571, 0.0
      %v9604 = vmax.f32 %v9572, 0.0
      %v9605 = vmax.f32 %v9573, 0.0
      %9606 = vst [vmem:[%s170] sm:$0xff] %v9574
      %9607 = vst [vmem:[%s170 + $0x8] sm:$0xff] %v9575
      %9608 = vst [vmem:[%s170 + $0x10] sm:$0xff] %v9576
      %9609 = vst [vmem:[%s170 + $0x18] sm:$0xff] %v9577
      %9610 = vst [vmem:[%s170 + $0x20] sm:$0xff] %v9578
      %9611 = vst [vmem:[%s170 + $0x28] sm:$0xff] %v9579
      %9612 = vst [vmem:[%s170 + $0x30] sm:$0xff] %v9580
      %9613 = vst [vmem:[%s170 + $0x38] sm:$0xff] %v9581
      %9614 = vst [vmem:[%s170 + $0x40] sm:$0xff] %v9582
      %9615 = vst [vmem:[%s170 + $0x48] sm:$0xff] %v9583
      %9616 = vst [vmem:[%s170 + $0x50] sm:$0xff] %v9584
      %9617 = vst [vmem:[%s170 + $0x58] sm:$0xff] %v9585
      %9618 = vst [vmem:[%s170 + $0x60] sm:$0xff] %v9586
      %9619 = vst [vmem:[%s170 + $0x68] sm:$0xff] %v9587
      %9620 = vst [vmem:[%s170 + $0x70] sm:$0xff] %v9588
      %9621 = vst [vmem:[%s170 + $0x78] sm:$0xff] %v9589
      %9622 = vst [vmem:[%s170 + $0x80] sm:$0xff] %v9590
      %9623 = vst [vmem:[%s170 + $0x88] sm:$0xff] %v9591
      %9624 = vst [vmem:[%s170 + $0x90] sm:$0xff] %v9592
      %9625 = vst [vmem:[%s170 + $0x98] sm:$0xff] %v9593
      %9626 = vst [vmem:[%s170 + $0xa0] sm:$0xff] %v9594
      %9627 = vst [vmem:[%s170 + $0xa8] sm:$0xff] %v9595
      %9628 = vst [vmem:[%s170 + $0xb0] sm:$0xff] %v9596
      %9629 = vst [vmem:[%s170 + $0xb8] sm:$0xff] %v9597
      %9630 = vst [vmem:[%s170 + $0xc0] sm:$0xff] %v9598
      %9631 = vst [vmem:[%s170 + $0xc8] sm:$0xff] %v9599
      %9632 = vst [vmem:[%s170 + $0xd0] sm:$0xff] %v9600
      %9633 = vst [vmem:[%s170 + $0xd8] sm:$0xff] %v9601
      %9634 = vst [vmem:[%s170 + $0xe0] sm:$0xff] %v9602
      %9635 = vst [vmem:[%s170 + $0xe8] sm:$0xff] %v9603
      %9636 = vst [vmem:[%s170 + $0xf0] sm:$0xff] %v9604
      %9637 = vst [vmem:[%s170 + $0xf8] sm:$0xff] %v9605
      %p9638 = scmp.lt.s32.totalorder %s14, 1
      %s9639 = scalar_select %p9638, %s14, 1
      %s9640 = smul.addr %s9639, 32
      %s9641 = smul.addr %s9640, 8
      %s9642 = scalar_lea.vmem %s3, %s9641
      // Predicated region
      $region33: #{basic_block_forward.1} parent=31 // pred_check
        %p9643 = pneg %p100
      $region34: #{basic_block_forward.1} parent=31 // pred_check_branch
        %9645 = sbr.rel (%p9643) target = $region36
      $region35: #{basic_block_forward.1} parent=31 // pred_region
        _
      $region36: #{basic_block_forward.1} parent=31 // pred_fallthru
        _
    $region32: #{basic_block_forward.1} parent=5 // pred_fallthru
      _
    %p9646 = scmp.le.s32.totalorder 2, %s9
    // Predicated region
    $region37: #{basic_block_forward.1} parent=5 // pred_check
      %p9647 = pneg %p9646
    $region38: #{basic_block_forward.1} parent=5 // pred_check_branch
      %9649 = sbr.rel (%p9647) target = $region40
    $region39: #{basic_block_forward.1} parent=5 // pred_region
      %s9650 = ssub.s32 %s9, 2
      // Predicated region
      $region41: #{basic_block_forward.1} parent=39 // pred_check
        %p9651 = pneg %p106
      $region42: #{basic_block_forward.1} parent=39 // pred_check_branch
        %9653 = sbr.rel (%p9651) target = $region44
      $region43: #{basic_block_forward.1} parent=39 // pred_region
        %p9654 = scmp.lt.s32.totalorder %s15, 1
        %s9655 = scalar_select %p9654, %s15, 1
        %s9656 = smul.addr %s9655, 32
        %s9657 = smul.addr %s9656, 8
        %s9658 = scalar_lea.vmem %s3, %s9657
      $region44: #{basic_block_forward.1} parent=39 // pred_fallthru
        _
    $region40: #{basic_block_forward.1} parent=5 // pred_fallthru
      _
  $region6: #{basic_block_forward.1} parent=0 // loop_footer
    %s13 = sadd.s32 1, %s9
  $region7: #{basic_block_forward.1} parent=0 // loop_footer_branch
    %8 = sbr.rel target = $region3
  $region8: #{basic_block_forward.1} parent=0 // loop_exit
    _

</llo_original>
